<compile_context>
chip_gen: v7x
topology: tpu7x:2x2x1
jax: 0.10.0
libtpu: 0.0.40
codegen_flags: <defaults>
</compile_context>

<pallas_src>
import jax
import jax.numpy as jnp
from jax.experimental import pallas as pl
from jax.experimental.pallas import tpu as pltpu

EPS = 1e-5


# ------------------------------- fused kernel --------------------------------

def _make_filter_block_kernel(has_proj: bool):
    """Builds the fused FilterBlock kernel (closure over the static `proj` flag)."""

    def kernel(x_ref, w1_ref, w2_ref, g1_ref, bt1_ref, g2_ref, bt2_ref, *rest):
        if has_proj:
            wp_ref, bp_ref, out_ref, xpad_ref, hpad_ref, p1_ref, p2_ref = rest
        else:
            out_ref, xpad_ref, hpad_ref, p1_ref, p2_ref = rest

        B, Cin, H, W = x_ref.shape
        Cout = out_ref.shape[1]
        HW = H * W
        N = B * HW                      # BatchNorm population size (N*H*W)

        # --- helpers: activations are (C, B*H*W) f32 slabs (C on sublanes, BHW on lanes)

        def im2col(pad_ref, patch_ref, C):
            # patch[t*C + c, b*HW + i*W + j] = pad[b, c, i + dy_t, j + dx_t]
            # All indices are static Python ints -> fully unrolled static slices.
            for dy in range(3):
                for dx in range(3):
                    t = dy * 3 + dx
                    for b in range(B):
                        blk = pad_ref[b, :, dy:dy + H, dx:dx + W].reshape(C, HW)
                        patch_ref[t * C:(t + 1) * C, b * HW:(b + 1) * HW] = blk

        def conv(w_ref, patch_ref):
            # bf16 MXU operands, f32 accumulation -> (Cout, B*HW) f32
            return jnp.dot(w_ref[...], patch_ref[...].astype(jnp.bfloat16),
                           preferred_element_type=jnp.float32)

        def batchnorm(y, g_ref, b_ref):
            # One-pass stats over the lane axis (batch+spatial); biased variance,
            # matching PyTorch BatchNorm2d normalization in training mode.
            inv_n = 1.0 / N
            mean = jnp.sum(y, axis=1, keepdims=True) * inv_n                    # (Cout, 1)
            var = jnp.sum(y * y, axis=1, keepdims=True) * inv_n - mean * mean
            var = jnp.maximum(var, 0.0)
            return (y - mean) * jax.lax.rsqrt(var + EPS) * g_ref[...] + b_ref[...]

        # --- in-kernel zero padding of x -------------------------------------------
        x = x_ref[...]                                           # (B, Cin, H, W) f32
        xpad_ref[...] = jnp.zeros_like(xpad_ref)
        for b in range(B):
            xpad_ref[b, :, 1:H + 1, 1:W + 1] = x[b]

        # --- conv1 -> BN -> ReLU  (no conv bias: cancelled by batch-stat BN) --------
        im2col(xpad_ref, p1_ref, Cin)
        h = batchnorm(conv(w1_ref, p1_ref), g1_ref, bt1_ref)
        h = jnp.maximum(h, 0.0)                                  # (Cout, B*HW) f32

        # --- conv2 (pad h in-kernel, second im2col matmul) --------------------------
        hpad_ref[...] = jnp.zeros_like(hpad_ref)
        for b in range(B):
            hpad_ref[b, :, 1:H + 1, 1:W + 1] = h[:, b * HW:(b + 1) * HW].reshape(Cout, H, W)
        im2col(hpad_ref, p2_ref, Cout)
        y = conv(w2_ref, p2_ref)                                 # (Cout, B*HW) f32

        # --- residual path -----------------------------------------------------------
        # The centre tap of the conv1 patch matrix is exactly the (Cin, B*HW) input slab,
        # so the residual (and the 1x1 projection's input) is read back for free.
        x_slab = p1_ref[4 * Cin:5 * Cin, :]
        if has_proj:
            res = jnp.dot(wp_ref[...], x_slab.astype(jnp.bfloat16),
                          preferred_element_type=jnp.float32) + bp_ref[...]
        else:
            res = x_slab                                         # exact f32 residual

        # --- BN + add + ReLU, lane-dense (256-wide) stores ---------------------------
        out = jnp.maximum(batchnorm(y, g2_ref, bt2_ref) + res, 0.0)
        for b in range(B):
            out_ref[b] = out[:, b * HW:(b + 1) * HW]             # (Cout, HW) unmasked vst

    return kernel


# --------------------------------- wrapper -----------------------------------

def filter_block_apply(params, x_nchw):
    """Forward pass of FilterBlock.  Input/output are NCHW (PyTorch convention)."""
    B, Cin, H, W = x_nchw.shape
    Cout = params["w1"].shape[0]
    HW = H * W
    has_proj = "wp" in params

    args = [x_nchw.astype(jnp.float32), params["w1"], params["w2"],
            params["g1"], params["bt1"], params["g2"], params["bt2"]]
    if has_proj:
        args += [params["wp"], params["bp"]]

    out = pl.pallas_call(
        _make_filter_block_kernel(has_proj),
        out_shape=jax.ShapeDtypeStruct((B, Cout, HW), jnp.float32),
        scratch_shapes=[
            pltpu.VMEM((B, Cin, H + 2, W + 2), jnp.float32),    # zero-padded x
            pltpu.VMEM((B, Cout, H + 2, W + 2), jnp.float32),   # zero-padded h1
            pltpu.VMEM((9 * Cin, B * HW), jnp.float32),         # im2col patches, conv1
            pltpu.VMEM((9 * Cout, B * HW), jnp.float32),        # im2col patches, conv2
        ],
    )(*args)
    # (B, Cout, H*W) -> (B, Cout, H, W): same row-major layout, free metadata reshape.
    return out.reshape(B, Cout, H, W)


def init_params(key, in_channels, out_channels):
    """3x3 weights stored as (Cout, 9*Cin) bf16 with row index (dy*3+dx)*Cin + c.
    Conv biases of the two 3x3 convs are omitted (exactly cancelled by training-mode BN)."""
    ks = jax.random.split(key, 6)
    p = {
        "w1": (0.1 * jax.random.normal(ks[0], (out_channels, 9 * in_channels),
                                       jnp.float32)).astype(jnp.bfloat16),
        "w2": (0.1 * jax.random.normal(ks[1], (out_channels, 9 * out_channels),
                                       jnp.float32)).astype(jnp.bfloat16),
        "g1": 1.0 + 0.1 * jax.random.normal(ks[2], (out_channels, 1), jnp.float32),
        "bt1": 0.1 * jax.random.normal(ks[3], (out_channels, 1), jnp.float32),
        "g2": jnp.ones((out_channels, 1), jnp.float32),
        "bt2": jnp.zeros((out_channels, 1), jnp.float32),
    }
    if in_channels != out_channels:
        p["wp"] = (0.1 * jax.random.normal(ks[4], (out_channels, in_channels),
                                           jnp.float32)).astype(jnp.bfloat16),
        p["wp"] = p["wp"][0] if isinstance(p["wp"], tuple) else p["wp"]
        p["bp"] = 0.1 * jax.random.normal(ks[5], (out_channels, 1), jnp.float32)
    return p


# -------------------------------- reference ----------------------------------

def _reference(params, x_nchw):
    """Pure-JAX f32 reference of FilterBlock.forward (training-mode BatchNorm)."""
    x = x_nchw.astype(jnp.float32)

    def conv3x3(inp, w_flat):
        cout, cin = w_flat.shape[0], w_flat.shape[1] // 9
        w = w_flat.astype(jnp.float32).reshape(cout, 3, 3, cin)   # [o, dy, dx, c]
        w = jnp.transpose(w, (0, 3, 1, 2))                        # OIHW
        return jax.lax.conv_general_dilated(
            inp, w, (1, 1), "SAME", dimension_numbers=("NCHW", "OIHW", "NCHW"))

    def bn(t, g, b):
        m = jnp.mean(t, axis=(0, 2, 3), keepdims=True)
        v = jnp.mean((t - m) ** 2, axis=(0, 2, 3), keepdims=True)
        return (t - m) * jax.lax.rsqrt(v + EPS) * g.reshape(1, -1, 1, 1) + b.reshape(1, -1, 1, 1)

    h = jax.nn.relu(bn(conv3x3(x, params["w1"]), params["g1"], params["bt1"]))
    h = bn(conv3x3(h, params["w2"]), params["g2"], params["bt2"])
    res = x
    if "wp" in params:
        res = jnp.einsum("oc,bchw->bohw", params["wp"].astype(jnp.float32), x) \
              + params["bp"].reshape(1, -1, 1, 1)
    return jax.nn.relu(h + res)


# ----------------------------------- main -------------------------------------

if __name__ == "__main__":
    B, Cin, Cout, H, W = 2, 4, 8, 16, 16
    key = jax.random.PRNGKey(0)
    kx, kp = jax.random.split(key)
    x = jax.random.normal(kx, (B, Cin, H, W), jnp.float32)        # NCHW like PyTorch
    params = init_params(kp, Cin, Cout)

    out = jax.block_until_ready(filter_block_apply(params, x))
    ref = _reference(params, x)

    assert out.shape == (B, Cout, H, W)
    # bf16 MXU operands (f32 accumulation / BN / residual) agree with the all-f32
    # reference to ~1e-2 after two conv+BN stages; 5e-2 leaves comfortable margin.
    err = float(jnp.max(jnp.abs(out - ref)))
    assert err < 5e-2, f"mismatch vs reference: max abs err = {err}"

    print("KERNEL_OK")
</pallas_src>

<mosaic_0001>
module attributes {stable_mosaic.version = 11 : i64} {
  func.func @kernel(%arg0: memref<2x4x16x16xf32, #tpu.memory_space<vmem>>, %arg1: memref<8x36xbf16, #tpu.memory_space<vmem>>, %arg2: memref<8x72xbf16, #tpu.memory_space<vmem>>, %arg3: memref<8x1xf32, #tpu.memory_space<vmem>>, %arg4: memref<8x1xf32, #tpu.memory_space<vmem>>, %arg5: memref<8x1xf32, #tpu.memory_space<vmem>>, %arg6: memref<8x1xf32, #tpu.memory_space<vmem>>, %arg7: memref<8x4xbf16, #tpu.memory_space<vmem>>, %arg8: memref<8x1xf32, #tpu.memory_space<vmem>>, %arg9: memref<2x8x256xf32, #tpu.memory_space<vmem>>, %arg10: memref<2x4x18x18xf32, #tpu.memory_space<vmem>>, %arg11: memref<2x8x18x18xf32, #tpu.memory_space<vmem>>, %arg12: memref<36x512xf32, #tpu.memory_space<vmem>>, %arg13: memref<72x512xf32, #tpu.memory_space<vmem>>) attributes {dimension_semantics = [], scalar_prefetch = 0 : i64, scratch_operands = 4 : i64, tpu.core_type = #tpu.core_type<tc>} {
    %c0 = arith.constant 0 : index
    %c0_0 = arith.constant 0 : index
    %c0_1 = arith.constant 0 : index
    %c0_2 = arith.constant 0 : index
    %0 = vector.load %arg0[%c0, %c0_0, %c0_1, %c0_2] : memref<2x4x16x16xf32, #tpu.memory_space<vmem>>, vector<2x4x16x16xf32>
    %cst = arith.constant 0.000000e+00 : f32
    %1 = vector.broadcast %cst : f32 to vector<2x4x18x18xf32>
    %c0_3 = arith.constant 0 : index
    %c0_4 = arith.constant 0 : index
    %c0_5 = arith.constant 0 : index
    %c0_6 = arith.constant 0 : index
    %2 = vector.load %arg10[%c0_3, %c0_4, %c0_5, %c0_6] : memref<2x4x18x18xf32, #tpu.memory_space<vmem>>, vector<2x4x18x18xf32>
    tpu.vector_store %arg10[%c0_3, %c0_4, %c0_5, %c0_6], %1 {strides = array<i32>} : memref<2x4x18x18xf32, #tpu.memory_space<vmem>>, vector<2x4x18x18xf32>,
    %3 = vector.extract_strided_slice %0 {offsets = [0, 0, 0, 0], sizes = [1, 4, 16, 16], strides = [1, 1, 1, 1]} : vector<2x4x16x16xf32> to vector<1x4x16x16xf32>
    %4 = vector.shape_cast %3 : vector<1x4x16x16xf32> to vector<4x16x16xf32>
    %c0_7 = arith.constant 0 : index
    %c0_8 = arith.constant 0 : index
    %c1 = arith.constant 1 : index
    %c1_9 = arith.constant 1 : index
    %5 = vector.load %arg10[%c0_7, %c0_8, %c1, %c1_9] : memref<2x4x18x18xf32, #tpu.memory_space<vmem>>, vector<1x4x16x16xf32>
    %6 = vector.shape_cast %5 : vector<1x4x16x16xf32> to vector<4x16x16xf32>
    %7 = vector.shape_cast %4 : vector<4x16x16xf32> to vector<1x4x16x16xf32>
    tpu.vector_store %arg10[%c0_7, %c0_8, %c1, %c1_9], %7 {strides = array<i32>} : memref<2x4x18x18xf32, #tpu.memory_space<vmem>>, vector<1x4x16x16xf32>,
    %8 = vector.extract_strided_slice %0 {offsets = [1, 0, 0, 0], sizes = [1, 4, 16, 16], strides = [1, 1, 1, 1]} : vector<2x4x16x16xf32> to vector<1x4x16x16xf32>
    %9 = vector.shape_cast %8 : vector<1x4x16x16xf32> to vector<4x16x16xf32>
    %c1_10 = arith.constant 1 : index
    %c0_11 = arith.constant 0 : index
    %c1_12 = arith.constant 1 : index
    %c1_13 = arith.constant 1 : index
    %10 = vector.load %arg10[%c1_10, %c0_11, %c1_12, %c1_13] : memref<2x4x18x18xf32, #tpu.memory_space<vmem>>, vector<1x4x16x16xf32>
    %11 = vector.shape_cast %10 : vector<1x4x16x16xf32> to vector<4x16x16xf32>
    %12 = vector.shape_cast %9 : vector<4x16x16xf32> to vector<1x4x16x16xf32>
    tpu.vector_store %arg10[%c1_10, %c0_11, %c1_12, %c1_13], %12 {strides = array<i32>} : memref<2x4x18x18xf32, #tpu.memory_space<vmem>>, vector<1x4x16x16xf32>,
    %c0_14 = arith.constant 0 : index
    %c0_15 = arith.constant 0 : index
    %c0_16 = arith.constant 0 : index
    %c0_17 = arith.constant 0 : index
    %13 = vector.load %arg10[%c0_14, %c0_15, %c0_16, %c0_17] : memref<2x4x18x18xf32, #tpu.memory_space<vmem>>, vector<1x4x16x16xf32>
    %14 = vector.shape_cast %13 : vector<1x4x16x16xf32> to vector<4x16x16xf32>
    %15 = vector.shape_cast %14 : vector<4x16x16xf32> to vector<4x256xf32>
    %c0_18 = arith.constant 0 : index
    %c0_19 = arith.constant 0 : index
    %16 = vector.load %arg12[%c0_18, %c0_19] : memref<36x512xf32, #tpu.memory_space<vmem>>, vector<4x256xf32>
    tpu.vector_store %arg12[%c0_18, %c0_19], %15 {strides = array<i32>} : memref<36x512xf32, #tpu.memory_space<vmem>>, vector<4x256xf32>,
    %c1_20 = arith.constant 1 : index
    %c0_21 = arith.constant 0 : index
    %c0_22 = arith.constant 0 : index
    %c0_23 = arith.constant 0 : index
    %17 = vector.load %arg10[%c1_20, %c0_21, %c0_22, %c0_23] : memref<2x4x18x18xf32, #tpu.memory_space<vmem>>, vector<1x4x16x16xf32>
    %18 = vector.shape_cast %17 : vector<1x4x16x16xf32> to vector<4x16x16xf32>
    %19 = vector.shape_cast %18 : vector<4x16x16xf32> to vector<4x256xf32>
    %c0_24 = arith.constant 0 : index
    %c256 = arith.constant 256 : index
    %20 = vector.load %arg12[%c0_24, %c256] : memref<36x512xf32, #tpu.memory_space<vmem>>, vector<4x256xf32>
    tpu.vector_store %arg12[%c0_24, %c256], %19 {strides = array<i32>} : memref<36x512xf32, #tpu.memory_space<vmem>>, vector<4x256xf32>,
    %c0_25 = arith.constant 0 : index
    %c0_26 = arith.constant 0 : index
    %c0_27 = arith.constant 0 : index
    %c1_28 = arith.constant 1 : index
    %21 = vector.load %arg10[%c0_25, %c0_26, %c0_27, %c1_28] : memref<2x4x18x18xf32, #tpu.memory_space<vmem>>, vector<1x4x16x16xf32>
    %22 = vector.shape_cast %21 : vector<1x4x16x16xf32> to vector<4x16x16xf32>
    %23 = vector.shape_cast %22 : vector<4x16x16xf32> to vector<4x256xf32>
    %c4 = arith.constant 4 : index
    %c0_29 = arith.constant 0 : index
    %24 = vector.load %arg12[%c4, %c0_29] : memref<36x512xf32, #tpu.memory_space<vmem>>, vector<4x256xf32>
    tpu.vector_store %arg12[%c4, %c0_29], %23 {strides = array<i32>} : memref<36x512xf32, #tpu.memory_space<vmem>>, vector<4x256xf32>,
    %c1_30 = arith.constant 1 : index
    %c0_31 = arith.constant 0 : index
    %c0_32 = arith.constant 0 : index
    %c1_33 = arith.constant 1 : index
    %25 = vector.load %arg10[%c1_30, %c0_31, %c0_32, %c1_33] : memref<2x4x18x18xf32, #tpu.memory_space<vmem>>, vector<1x4x16x16xf32>
    %26 = vector.shape_cast %25 : vector<1x4x16x16xf32> to vector<4x16x16xf32>
    %27 = vector.shape_cast %26 : vector<4x16x16xf32> to vector<4x256xf32>
    %c4_34 = arith.constant 4 : index
    %c256_35 = arith.constant 256 : index
    %28 = vector.load %arg12[%c4_34, %c256_35] : memref<36x512xf32, #tpu.memory_space<vmem>>, vector<4x256xf32>
    tpu.vector_store %arg12[%c4_34, %c256_35], %27 {strides = array<i32>} : memref<36x512xf32, #tpu.memory_space<vmem>>, vector<4x256xf32>,
    %c0_36 = arith.constant 0 : index
    %c0_37 = arith.constant 0 : index
    %c0_38 = arith.constant 0 : index
    %c2 = arith.constant 2 : index
    %29 = vector.load %arg10[%c0_36, %c0_37, %c0_38, %c2] : memref<2x4x18x18xf32, #tpu.memory_space<vmem>>, vector<1x4x16x16xf32>
    %30 = vector.shape_cast %29 : vector<1x4x16x16xf32> to vector<4x16x16xf32>
    %31 = vector.shape_cast %30 : vector<4x16x16xf32> to vector<4x256xf32>
    %c8 = arith.constant 8 : index
    %c0_39 = arith.constant 0 : index
    %32 = vector.load %arg12[%c8, %c0_39] : memref<36x512xf32, #tpu.memory_space<vmem>>, vector<4x256xf32>
    tpu.vector_store %arg12[%c8, %c0_39], %31 {strides = array<i32>} : memref<36x512xf32, #tpu.memory_space<vmem>>, vector<4x256xf32>,
    %c1_40 = arith.constant 1 : index
    %c0_41 = arith.constant 0 : index
    %c0_42 = arith.constant 0 : index
    %c2_43 = arith.constant 2 : index
    %33 = vector.load %arg10[%c1_40, %c0_41, %c0_42, %c2_43] : memref<2x4x18x18xf32, #tpu.memory_space<vmem>>, vector<1x4x16x16xf32>
    %34 = vector.shape_cast %33 : vector<1x4x16x16xf32> to vector<4x16x16xf32>
    %35 = vector.shape_cast %34 : vector<4x16x16xf32> to vector<4x256xf32>
    %c8_44 = arith.constant 8 : index
    %c256_45 = arith.constant 256 : index
    %36 = vector.load %arg12[%c8_44, %c256_45] : memref<36x512xf32, #tpu.memory_space<vmem>>, vector<4x256xf32>
    tpu.vector_store %arg12[%c8_44, %c256_45], %35 {strides = array<i32>} : memref<36x512xf32, #tpu.memory_space<vmem>>, vector<4x256xf32>,
    %c0_46 = arith.constant 0 : index
    %c0_47 = arith.constant 0 : index
    %c1_48 = arith.constant 1 : index
    %c0_49 = arith.constant 0 : index
    %37 = vector.load %arg10[%c0_46, %c0_47, %c1_48, %c0_49] : memref<2x4x18x18xf32, #tpu.memory_space<vmem>>, vector<1x4x16x16xf32>
    %38 = vector.shape_cast %37 : vector<1x4x16x16xf32> to vector<4x16x16xf32>
    %39 = vector.shape_cast %38 : vector<4x16x16xf32> to vector<4x256xf32>
    %c12 = arith.constant 12 : index
    %c0_50 = arith.constant 0 : index
    %40 = vector.load %arg12[%c12, %c0_50] : memref<36x512xf32, #tpu.memory_space<vmem>>, vector<4x256xf32>
    tpu.vector_store %arg12[%c12, %c0_50], %39 {strides = array<i32>} : memref<36x512xf32, #tpu.memory_space<vmem>>, vector<4x256xf32>,
    %c1_51 = arith.constant 1 : index
    %c0_52 = arith.constant 0 : index
    %c1_53 = arith.constant 1 : index
    %c0_54 = arith.constant 0 : index
    %41 = vector.load %arg10[%c1_51, %c0_52, %c1_53, %c0_54] : memref<2x4x18x18xf32, #tpu.memory_space<vmem>>, vector<1x4x16x16xf32>
    %42 = vector.shape_cast %41 : vector<1x4x16x16xf32> to vector<4x16x16xf32>
    %43 = vector.shape_cast %42 : vector<4x16x16xf32> to vector<4x256xf32>
    %c12_55 = arith.constant 12 : index
    %c256_56 = arith.constant 256 : index
    %44 = vector.load %arg12[%c12_55, %c256_56] : memref<36x512xf32, #tpu.memory_space<vmem>>, vector<4x256xf32>
    tpu.vector_store %arg12[%c12_55, %c256_56], %43 {strides = array<i32>} : memref<36x512xf32, #tpu.memory_space<vmem>>, vector<4x256xf32>,
    %c0_57 = arith.constant 0 : index
    %c0_58 = arith.constant 0 : index
    %c1_59 = arith.constant 1 : index
    %c1_60 = arith.constant 1 : index
    %45 = vector.load %arg10[%c0_57, %c0_58, %c1_59, %c1_60] : memref<2x4x18x18xf32, #tpu.memory_space<vmem>>, vector<1x4x16x16xf32>
    %46 = vector.shape_cast %45 : vector<1x4x16x16xf32> to vector<4x16x16xf32>
    %47 = vector.shape_cast %46 : vector<4x16x16xf32> to vector<4x256xf32>
    %c16 = arith.constant 16 : index
    %c0_61 = arith.constant 0 : index
    %48 = vector.load %arg12[%c16, %c0_61] : memref<36x512xf32, #tpu.memory_space<vmem>>, vector<4x256xf32>
    tpu.vector_store %arg12[%c16, %c0_61], %47 {strides = array<i32>} : memref<36x512xf32, #tpu.memory_space<vmem>>, vector<4x256xf32>,
    %c1_62 = arith.constant 1 : index
    %c0_63 = arith.constant 0 : index
    %c1_64 = arith.constant 1 : index
    %c1_65 = arith.constant 1 : index
    %49 = vector.load %arg10[%c1_62, %c0_63, %c1_64, %c1_65] : memref<2x4x18x18xf32, #tpu.memory_space<vmem>>, vector<1x4x16x16xf32>
    %50 = vector.shape_cast %49 : vector<1x4x16x16xf32> to vector<4x16x16xf32>
    %51 = vector.shape_cast %50 : vector<4x16x16xf32> to vector<4x256xf32>
    %c16_66 = arith.constant 16 : index
    %c256_67 = arith.constant 256 : index
    %52 = vector.load %arg12[%c16_66, %c256_67] : memref<36x512xf32, #tpu.memory_space<vmem>>, vector<4x256xf32>
    tpu.vector_store %arg12[%c16_66, %c256_67], %51 {strides = array<i32>} : memref<36x512xf32, #tpu.memory_space<vmem>>, vector<4x256xf32>,
    %c0_68 = arith.constant 0 : index
    %c0_69 = arith.constant 0 : index
    %c1_70 = arith.constant 1 : index
    %c2_71 = arith.constant 2 : index
    %53 = vector.load %arg10[%c0_68, %c0_69, %c1_70, %c2_71] : memref<2x4x18x18xf32, #tpu.memory_space<vmem>>, vector<1x4x16x16xf32>
    %54 = vector.shape_cast %53 : vector<1x4x16x16xf32> to vector<4x16x16xf32>
    %55 = vector.shape_cast %54 : vector<4x16x16xf32> to vector<4x256xf32>
    %c20 = arith.constant 20 : index
    %c0_72 = arith.constant 0 : index
    %56 = vector.load %arg12[%c20, %c0_72] : memref<36x512xf32, #tpu.memory_space<vmem>>, vector<4x256xf32>
    tpu.vector_store %arg12[%c20, %c0_72], %55 {strides = array<i32>} : memref<36x512xf32, #tpu.memory_space<vmem>>, vector<4x256xf32>,
    %c1_73 = arith.constant 1 : index
    %c0_74 = arith.constant 0 : index
    %c1_75 = arith.constant 1 : index
    %c2_76 = arith.constant 2 : index
    %57 = vector.load %arg10[%c1_73, %c0_74, %c1_75, %c2_76] : memref<2x4x18x18xf32, #tpu.memory_space<vmem>>, vector<1x4x16x16xf32>
    %58 = vector.shape_cast %57 : vector<1x4x16x16xf32> to vector<4x16x16xf32>
    %59 = vector.shape_cast %58 : vector<4x16x16xf32> to vector<4x256xf32>
    %c20_77 = arith.constant 20 : index
    %c256_78 = arith.constant 256 : index
    %60 = vector.load %arg12[%c20_77, %c256_78] : memref<36x512xf32, #tpu.memory_space<vmem>>, vector<4x256xf32>
    tpu.vector_store %arg12[%c20_77, %c256_78], %59 {strides = array<i32>} : memref<36x512xf32, #tpu.memory_space<vmem>>, vector<4x256xf32>,
    %c0_79 = arith.constant 0 : index
    %c0_80 = arith.constant 0 : index
    %c2_81 = arith.constant 2 : index
    %c0_82 = arith.constant 0 : index
    %61 = vector.load %arg10[%c0_79, %c0_80, %c2_81, %c0_82] : memref<2x4x18x18xf32, #tpu.memory_space<vmem>>, vector<1x4x16x16xf32>
    %62 = vector.shape_cast %61 : vector<1x4x16x16xf32> to vector<4x16x16xf32>
    %63 = vector.shape_cast %62 : vector<4x16x16xf32> to vector<4x256xf32>
    %c24 = arith.constant 24 : index
    %c0_83 = arith.constant 0 : index
    %64 = vector.load %arg12[%c24, %c0_83] : memref<36x512xf32, #tpu.memory_space<vmem>>, vector<4x256xf32>
    tpu.vector_store %arg12[%c24, %c0_83], %63 {strides = array<i32>} : memref<36x512xf32, #tpu.memory_space<vmem>>, vector<4x256xf32>,
    %c1_84 = arith.constant 1 : index
    %c0_85 = arith.constant 0 : index
    %c2_86 = arith.constant 2 : index
    %c0_87 = arith.constant 0 : index
    %65 = vector.load %arg10[%c1_84, %c0_85, %c2_86, %c0_87] : memref<2x4x18x18xf32, #tpu.memory_space<vmem>>, vector<1x4x16x16xf32>
    %66 = vector.shape_cast %65 : vector<1x4x16x16xf32> to vector<4x16x16xf32>
    %67 = vector.shape_cast %66 : vector<4x16x16xf32> to vector<4x256xf32>
    %c24_88 = arith.constant 24 : index
    %c256_89 = arith.constant 256 : index
    %68 = vector.load %arg12[%c24_88, %c256_89] : memref<36x512xf32, #tpu.memory_space<vmem>>, vector<4x256xf32>
    tpu.vector_store %arg12[%c24_88, %c256_89], %67 {strides = array<i32>} : memref<36x512xf32, #tpu.memory_space<vmem>>, vector<4x256xf32>,
    %c0_90 = arith.constant 0 : index
    %c0_91 = arith.constant 0 : index
    %c2_92 = arith.constant 2 : index
    %c1_93 = arith.constant 1 : index
    %69 = vector.load %arg10[%c0_90, %c0_91, %c2_92, %c1_93] : memref<2x4x18x18xf32, #tpu.memory_space<vmem>>, vector<1x4x16x16xf32>
    %70 = vector.shape_cast %69 : vector<1x4x16x16xf32> to vector<4x16x16xf32>
    %71 = vector.shape_cast %70 : vector<4x16x16xf32> to vector<4x256xf32>
    %c28 = arith.constant 28 : index
    %c0_94 = arith.constant 0 : index
    %72 = vector.load %arg12[%c28, %c0_94] : memref<36x512xf32, #tpu.memory_space<vmem>>, vector<4x256xf32>
    tpu.vector_store %arg12[%c28, %c0_94], %71 {strides = array<i32>} : memref<36x512xf32, #tpu.memory_space<vmem>>, vector<4x256xf32>,
    %c1_95 = arith.constant 1 : index
    %c0_96 = arith.constant 0 : index
    %c2_97 = arith.constant 2 : index
    %c1_98 = arith.constant 1 : index
    %73 = vector.load %arg10[%c1_95, %c0_96, %c2_97, %c1_98] : memref<2x4x18x18xf32, #tpu.memory_space<vmem>>, vector<1x4x16x16xf32>
    %74 = vector.shape_cast %73 : vector<1x4x16x16xf32> to vector<4x16x16xf32>
    %75 = vector.shape_cast %74 : vector<4x16x16xf32> to vector<4x256xf32>
    %c28_99 = arith.constant 28 : index
    %c256_100 = arith.constant 256 : index
    %76 = vector.load %arg12[%c28_99, %c256_100] : memref<36x512xf32, #tpu.memory_space<vmem>>, vector<4x256xf32>
    tpu.vector_store %arg12[%c28_99, %c256_100], %75 {strides = array<i32>} : memref<36x512xf32, #tpu.memory_space<vmem>>, vector<4x256xf32>,
    %c0_101 = arith.constant 0 : index
    %c0_102 = arith.constant 0 : index
    %c2_103 = arith.constant 2 : index
    %c2_104 = arith.constant 2 : index
    %77 = vector.load %arg10[%c0_101, %c0_102, %c2_103, %c2_104] : memref<2x4x18x18xf32, #tpu.memory_space<vmem>>, vector<1x4x16x16xf32>
    %78 = vector.shape_cast %77 : vector<1x4x16x16xf32> to vector<4x16x16xf32>
    %79 = vector.shape_cast %78 : vector<4x16x16xf32> to vector<4x256xf32>
    %c32 = arith.constant 32 : index
    %c0_105 = arith.constant 0 : index
    %80 = vector.load %arg12[%c32, %c0_105] : memref<36x512xf32, #tpu.memory_space<vmem>>, vector<4x256xf32>
    tpu.vector_store %arg12[%c32, %c0_105], %79 {strides = array<i32>} : memref<36x512xf32, #tpu.memory_space<vmem>>, vector<4x256xf32>,
    %c1_106 = arith.constant 1 : index
    %c0_107 = arith.constant 0 : index
    %c2_108 = arith.constant 2 : index
    %c2_109 = arith.constant 2 : index
    %81 = vector.load %arg10[%c1_106, %c0_107, %c2_108, %c2_109] : memref<2x4x18x18xf32, #tpu.memory_space<vmem>>, vector<1x4x16x16xf32>
    %82 = vector.shape_cast %81 : vector<1x4x16x16xf32> to vector<4x16x16xf32>
    %83 = vector.shape_cast %82 : vector<4x16x16xf32> to vector<4x256xf32>
    %c32_110 = arith.constant 32 : index
    %c256_111 = arith.constant 256 : index
    %84 = vector.load %arg12[%c32_110, %c256_111] : memref<36x512xf32, #tpu.memory_space<vmem>>, vector<4x256xf32>
    tpu.vector_store %arg12[%c32_110, %c256_111], %83 {strides = array<i32>} : memref<36x512xf32, #tpu.memory_space<vmem>>, vector<4x256xf32>,
    %c0_112 = arith.constant 0 : index
    %c0_113 = arith.constant 0 : index
    %85 = vector.load %arg1[%c0_112, %c0_113] : memref<8x36xbf16, #tpu.memory_space<vmem>>, vector<8x36xbf16>
    %c0_114 = arith.constant 0 : index
    %c0_115 = arith.constant 0 : index
    %86 = vector.load %arg12[%c0_114, %c0_115] : memref<36x512xf32, #tpu.memory_space<vmem>>, vector<36x512xf32>
    %87 = arith.truncf %86 : vector<36x512xf32> to vector<36x512xbf16>
    %cst_116 = arith.constant dense<0.000000e+00> : vector<8x512xf32>
    %88 = tpu.matmul %85, %87, %cst_116 {dimension_numbers = #tpu.dot_dimension_numbers<[1], [0], [0], [1], [0, 0, 1, 1], [], []>} : vector<8x36xbf16>, vector<36x512xbf16>, vector<8x512xf32> -> vector<8x512xf32>
    %cst_117 = arith.constant dense<0.000000e+00> : vector<8xf32>
    %89 = vector.multi_reduction <add>, %88, %cst_117 [1] : vector<8x512xf32> to vector<8xf32>
    %90 = vector.shape_cast %89 : vector<8xf32> to vector<8x1xf32>
    %cst_118 = arith.constant 0.001953125 : f32
    %91 = vector.broadcast %cst_118 : f32 to vector<8x1xf32>
    %92 = arith.mulf %90, %91 : vector<8x1xf32>
    %93 = arith.mulf %88, %88 : vector<8x512xf32>
    %cst_119 = arith.constant dense<0.000000e+00> : vector<8xf32>
    %94 = vector.multi_reduction <add>, %93, %cst_119 [1] : vector<8x512xf32> to vector<8xf32>
    %95 = vector.shape_cast %94 : vector<8xf32> to vector<8x1xf32>
    %cst_120 = arith.constant 0.001953125 : f32
    %96 = vector.broadcast %cst_120 : f32 to vector<8x1xf32>
    %97 = arith.mulf %95, %96 : vector<8x1xf32>
    %98 = arith.mulf %92, %92 : vector<8x1xf32>
    %99 = arith.subf %97, %98 : vector<8x1xf32>
    %cst_121 = arith.constant 0.000000e+00 : f32
    %100 = vector.broadcast %cst_121 : f32 to vector<8x1xf32>
    %101 = arith.maximumf %99, %100 : vector<8x1xf32>
    %102 = vector.broadcast %92 : vector<8x1xf32> to vector<8x512xf32>
    %103 = arith.subf %88, %102 : vector<8x512xf32>
    %cst_122 = arith.constant 9.99999974E-6 : f32
    %104 = vector.broadcast %cst_122 : f32 to vector<8x1xf32>
    %105 = arith.addf %101, %104 : vector<8x1xf32>
    %106 = math.rsqrt %105 : vector<8x1xf32>
    %107 = vector.broadcast %106 : vector<8x1xf32> to vector<8x512xf32>
    %108 = arith.mulf %103, %107 : vector<8x512xf32>
    %c0_123 = arith.constant 0 : index
    %c0_124 = arith.constant 0 : index
    %109 = vector.load %arg3[%c0_123, %c0_124] : memref<8x1xf32, #tpu.memory_space<vmem>>, vector<8x1xf32>
    %110 = vector.broadcast %109 : vector<8x1xf32> to vector<8x512xf32>
    %111 = arith.mulf %108, %110 : vector<8x512xf32>
    %c0_125 = arith.constant 0 : index
    %c0_126 = arith.constant 0 : index
    %112 = vector.load %arg4[%c0_125, %c0_126] : memref<8x1xf32, #tpu.memory_space<vmem>>, vector<8x1xf32>
    %113 = vector.broadcast %112 : vector<8x1xf32> to vector<8x512xf32>
    %114 = arith.addf %111, %113 : vector<8x512xf32>
    %cst_127 = arith.constant 0.000000e+00 : f32
    %115 = vector.broadcast %cst_127 : f32 to vector<8x512xf32>
    %116 = arith.maximumf %114, %115 : vector<8x512xf32>
    %cst_128 = arith.constant 0.000000e+00 : f32
    %117 = vector.broadcast %cst_128 : f32 to vector<2x8x18x18xf32>
    %c0_129 = arith.constant 0 : index
    %c0_130 = arith.constant 0 : index
    %c0_131 = arith.constant 0 : index
    %c0_132 = arith.constant 0 : index
    %118 = vector.load %arg11[%c0_129, %c0_130, %c0_131, %c0_132] : memref<2x8x18x18xf32, #tpu.memory_space<vmem>>, vector<2x8x18x18xf32>
    tpu.vector_store %arg11[%c0_129, %c0_130, %c0_131, %c0_132], %117 {strides = array<i32>} : memref<2x8x18x18xf32, #tpu.memory_space<vmem>>, vector<2x8x18x18xf32>,
    %119 = vector.extract_strided_slice %116 {offsets = [0, 0], sizes = [8, 256], strides = [1, 1]} : vector<8x512xf32> to vector<8x256xf32>
    %120 = vector.shape_cast %119 : vector<8x256xf32> to vector<8x16x16xf32>
    %c0_133 = arith.constant 0 : index
    %c0_134 = arith.constant 0 : index
    %c1_135 = arith.constant 1 : index
    %c1_136 = arith.constant 1 : index
    %121 = vector.load %arg11[%c0_133, %c0_134, %c1_135, %c1_136] : memref<2x8x18x18xf32, #tpu.memory_space<vmem>>, vector<1x8x16x16xf32>
    %122 = vector.shape_cast %121 : vector<1x8x16x16xf32> to vector<8x16x16xf32>
    %123 = vector.shape_cast %120 : vector<8x16x16xf32> to vector<1x8x16x16xf32>
    tpu.vector_store %arg11[%c0_133, %c0_134, %c1_135, %c1_136], %123 {strides = array<i32>} : memref<2x8x18x18xf32, #tpu.memory_space<vmem>>, vector<1x8x16x16xf32>,
    %124 = vector.extract_strided_slice %116 {offsets = [0, 256], sizes = [8, 256], strides = [1, 1]} : vector<8x512xf32> to vector<8x256xf32>
    %125 = vector.shape_cast %124 : vector<8x256xf32> to vector<8x16x16xf32>
    %c1_137 = arith.constant 1 : index
    %c0_138 = arith.constant 0 : index
    %c1_139 = arith.constant 1 : index
    %c1_140 = arith.constant 1 : index
    %126 = vector.load %arg11[%c1_137, %c0_138, %c1_139, %c1_140] : memref<2x8x18x18xf32, #tpu.memory_space<vmem>>, vector<1x8x16x16xf32>
    %127 = vector.shape_cast %126 : vector<1x8x16x16xf32> to vector<8x16x16xf32>
    %128 = vector.shape_cast %125 : vector<8x16x16xf32> to vector<1x8x16x16xf32>
    tpu.vector_store %arg11[%c1_137, %c0_138, %c1_139, %c1_140], %128 {strides = array<i32>} : memref<2x8x18x18xf32, #tpu.memory_space<vmem>>, vector<1x8x16x16xf32>,
    %c0_141 = arith.constant 0 : index
    %c0_142 = arith.constant 0 : index
    %c0_143 = arith.constant 0 : index
    %c0_144 = arith.constant 0 : index
    %129 = vector.load %arg11[%c0_141, %c0_142, %c0_143, %c0_144] : memref<2x8x18x18xf32, #tpu.memory_space<vmem>>, vector<1x8x16x16xf32>
    %130 = vector.shape_cast %129 : vector<1x8x16x16xf32> to vector<8x16x16xf32>
    %131 = vector.shape_cast %130 : vector<8x16x16xf32> to vector<8x256xf32>
    %c0_145 = arith.constant 0 : index
    %c0_146 = arith.constant 0 : index
    %132 = vector.load %arg13[%c0_145, %c0_146] : memref<72x512xf32, #tpu.memory_space<vmem>>, vector<8x256xf32>
    tpu.vector_store %arg13[%c0_145, %c0_146], %131 {strides = array<i32>} : memref<72x512xf32, #tpu.memory_space<vmem>>, vector<8x256xf32>,
    %c1_147 = arith.constant 1 : index
    %c0_148 = arith.constant 0 : index
    %c0_149 = arith.constant 0 : index
    %c0_150 = arith.constant 0 : index
    %133 = vector.load %arg11[%c1_147, %c0_148, %c0_149, %c0_150] : memref<2x8x18x18xf32, #tpu.memory_space<vmem>>, vector<1x8x16x16xf32>
    %134 = vector.shape_cast %133 : vector<1x8x16x16xf32> to vector<8x16x16xf32>
    %135 = vector.shape_cast %134 : vector<8x16x16xf32> to vector<8x256xf32>
    %c0_151 = arith.constant 0 : index
    %c256_152 = arith.constant 256 : index
    %136 = vector.load %arg13[%c0_151, %c256_152] : memref<72x512xf32, #tpu.memory_space<vmem>>, vector<8x256xf32>
    tpu.vector_store %arg13[%c0_151, %c256_152], %135 {strides = array<i32>} : memref<72x512xf32, #tpu.memory_space<vmem>>, vector<8x256xf32>,
    %c0_153 = arith.constant 0 : index
    %c0_154 = arith.constant 0 : index
    %c0_155 = arith.constant 0 : index
    %c1_156 = arith.constant 1 : index
    %137 = vector.load %arg11[%c0_153, %c0_154, %c0_155, %c1_156] : memref<2x8x18x18xf32, #tpu.memory_space<vmem>>, vector<1x8x16x16xf32>
    %138 = vector.shape_cast %137 : vector<1x8x16x16xf32> to vector<8x16x16xf32>
    %139 = vector.shape_cast %138 : vector<8x16x16xf32> to vector<8x256xf32>
    %c8_157 = arith.constant 8 : index
    %c0_158 = arith.constant 0 : index
    %140 = vector.load %arg13[%c8_157, %c0_158] : memref<72x512xf32, #tpu.memory_space<vmem>>, vector<8x256xf32>
    tpu.vector_store %arg13[%c8_157, %c0_158], %139 {strides = array<i32>} : memref<72x512xf32, #tpu.memory_space<vmem>>, vector<8x256xf32>,
    %c1_159 = arith.constant 1 : index
    %c0_160 = arith.constant 0 : index
    %c0_161 = arith.constant 0 : index
    %c1_162 = arith.constant 1 : index
    %141 = vector.load %arg11[%c1_159, %c0_160, %c0_161, %c1_162] : memref<2x8x18x18xf32, #tpu.memory_space<vmem>>, vector<1x8x16x16xf32>
    %142 = vector.shape_cast %141 : vector<1x8x16x16xf32> to vector<8x16x16xf32>
    %143 = vector.shape_cast %142 : vector<8x16x16xf32> to vector<8x256xf32>
    %c8_163 = arith.constant 8 : index
    %c256_164 = arith.constant 256 : index
    %144 = vector.load %arg13[%c8_163, %c256_164] : memref<72x512xf32, #tpu.memory_space<vmem>>, vector<8x256xf32>
    tpu.vector_store %arg13[%c8_163, %c256_164], %143 {strides = array<i32>} : memref<72x512xf32, #tpu.memory_space<vmem>>, vector<8x256xf32>,
    %c0_165 = arith.constant 0 : index
    %c0_166 = arith.constant 0 : index
    %c0_167 = arith.constant 0 : index
    %c2_168 = arith.constant 2 : index
    %145 = vector.load %arg11[%c0_165, %c0_166, %c0_167, %c2_168] : memref<2x8x18x18xf32, #tpu.memory_space<vmem>>, vector<1x8x16x16xf32>
    %146 = vector.shape_cast %145 : vector<1x8x16x16xf32> to vector<8x16x16xf32>
    %147 = vector.shape_cast %146 : vector<8x16x16xf32> to vector<8x256xf32>
    %c16_169 = arith.constant 16 : index
    %c0_170 = arith.constant 0 : index
    %148 = vector.load %arg13[%c16_169, %c0_170] : memref<72x512xf32, #tpu.memory_space<vmem>>, vector<8x256xf32>
    tpu.vector_store %arg13[%c16_169, %c0_170], %147 {strides = array<i32>} : memref<72x512xf32, #tpu.memory_space<vmem>>, vector<8x256xf32>,
    %c1_171 = arith.constant 1 : index
    %c0_172 = arith.constant 0 : index
    %c0_173 = arith.constant 0 : index
    %c2_174 = arith.constant 2 : index
    %149 = vector.load %arg11[%c1_171, %c0_172, %c0_173, %c2_174] : memref<2x8x18x18xf32, #tpu.memory_space<vmem>>, vector<1x8x16x16xf32>
    %150 = vector.shape_cast %149 : vector<1x8x16x16xf32> to vector<8x16x16xf32>
    %151 = vector.shape_cast %150 : vector<8x16x16xf32> to vector<8x256xf32>
    %c16_175 = arith.constant 16 : index
    %c256_176 = arith.constant 256 : index
    %152 = vector.load %arg13[%c16_175, %c256_176] : memref<72x512xf32, #tpu.memory_space<vmem>>, vector<8x256xf32>
    tpu.vector_store %arg13[%c16_175, %c256_176], %151 {strides = array<i32>} : memref<72x512xf32, #tpu.memory_space<vmem>>, vector<8x256xf32>,
    %c0_177 = arith.constant 0 : index
    %c0_178 = arith.constant 0 : index
    %c1_179 = arith.constant 1 : index
    %c0_180 = arith.constant 0 : index
    %153 = vector.load %arg11[%c0_177, %c0_178, %c1_179, %c0_180] : memref<2x8x18x18xf32, #tpu.memory_space<vmem>>, vector<1x8x16x16xf32>
    %154 = vector.shape_cast %153 : vector<1x8x16x16xf32> to vector<8x16x16xf32>
    %155 = vector.shape_cast %154 : vector<8x16x16xf32> to vector<8x256xf32>
    %c24_181 = arith.constant 24 : index
    %c0_182 = arith.constant 0 : index
    %156 = vector.load %arg13[%c24_181, %c0_182] : memref<72x512xf32, #tpu.memory_space<vmem>>, vector<8x256xf32>
    tpu.vector_store %arg13[%c24_181, %c0_182], %155 {strides = array<i32>} : memref<72x512xf32, #tpu.memory_space<vmem>>, vector<8x256xf32>,
    %c1_183 = arith.constant 1 : index
    %c0_184 = arith.constant 0 : index
    %c1_185 = arith.constant 1 : index
    %c0_186 = arith.constant 0 : index
    %157 = vector.load %arg11[%c1_183, %c0_184, %c1_185, %c0_186] : memref<2x8x18x18xf32, #tpu.memory_space<vmem>>, vector<1x8x16x16xf32>
    %158 = vector.shape_cast %157 : vector<1x8x16x16xf32> to vector<8x16x16xf32>
    %159 = vector.shape_cast %158 : vector<8x16x16xf32> to vector<8x256xf32>
    %c24_187 = arith.constant 24 : index
    %c256_188 = arith.constant 256 : index
    %160 = vector.load %arg13[%c24_187, %c256_188] : memref<72x512xf32, #tpu.memory_space<vmem>>, vector<8x256xf32>
    tpu.vector_store %arg13[%c24_187, %c256_188], %159 {strides = array<i32>} : memref<72x512xf32, #tpu.memory_space<vmem>>, vector<8x256xf32>,
    %c0_189 = arith.constant 0 : index
    %c0_190 = arith.constant 0 : index
    %c1_191 = arith.constant 1 : index
    %c1_192 = arith.constant 1 : index
    %161 = vector.load %arg11[%c0_189, %c0_190, %c1_191, %c1_192] : memref<2x8x18x18xf32, #tpu.memory_space<vmem>>, vector<1x8x16x16xf32>
    %162 = vector.shape_cast %161 : vector<1x8x16x16xf32> to vector<8x16x16xf32>
    %163 = vector.shape_cast %162 : vector<8x16x16xf32> to vector<8x256xf32>
    %c32_193 = arith.constant 32 : index
    %c0_194 = arith.constant 0 : index
    %164 = vector.load %arg13[%c32_193, %c0_194] : memref<72x512xf32, #tpu.memory_space<vmem>>, vector<8x256xf32>
    tpu.vector_store %arg13[%c32_193, %c0_194], %163 {strides = array<i32>} : memref<72x512xf32, #tpu.memory_space<vmem>>, vector<8x256xf32>,
    %c1_195 = arith.constant 1 : index
    %c0_196 = arith.constant 0 : index
    %c1_197 = arith.constant 1 : index
    %c1_198 = arith.constant 1 : index
    %165 = vector.load %arg11[%c1_195, %c0_196, %c1_197, %c1_198] : memref<2x8x18x18xf32, #tpu.memory_space<vmem>>, vector<1x8x16x16xf32>
    %166 = vector.shape_cast %165 : vector<1x8x16x16xf32> to vector<8x16x16xf32>
    %167 = vector.shape_cast %166 : vector<8x16x16xf32> to vector<8x256xf32>
    %c32_199 = arith.constant 32 : index
    %c256_200 = arith.constant 256 : index
    %168 = vector.load %arg13[%c32_199, %c256_200] : memref<72x512xf32, #tpu.memory_space<vmem>>, vector<8x256xf32>
    tpu.vector_store %arg13[%c32_199, %c256_200], %167 {strides = array<i32>} : memref<72x512xf32, #tpu.memory_space<vmem>>, vector<8x256xf32>,
    %c0_201 = arith.constant 0 : index
    %c0_202 = arith.constant 0 : index
    %c1_203 = arith.constant 1 : index
    %c2_204 = arith.constant 2 : index
    %169 = vector.load %arg11[%c0_201, %c0_202, %c1_203, %c2_204] : memref<2x8x18x18xf32, #tpu.memory_space<vmem>>, vector<1x8x16x16xf32>
    %170 = vector.shape_cast %169 : vector<1x8x16x16xf32> to vector<8x16x16xf32>
    %171 = vector.shape_cast %170 : vector<8x16x16xf32> to vector<8x256xf32>
    %c40 = arith.constant 40 : index
    %c0_205 = arith.constant 0 : index
    %172 = vector.load %arg13[%c40, %c0_205] : memref<72x512xf32, #tpu.memory_space<vmem>>, vector<8x256xf32>
    tpu.vector_store %arg13[%c40, %c0_205], %171 {strides = array<i32>} : memref<72x512xf32, #tpu.memory_space<vmem>>, vector<8x256xf32>,
    %c1_206 = arith.constant 1 : index
    %c0_207 = arith.constant 0 : index
    %c1_208 = arith.constant 1 : index
    %c2_209 = arith.constant 2 : index
    %173 = vector.load %arg11[%c1_206, %c0_207, %c1_208, %c2_209] : memref<2x8x18x18xf32, #tpu.memory_space<vmem>>, vector<1x8x16x16xf32>
    %174 = vector.shape_cast %173 : vector<1x8x16x16xf32> to vector<8x16x16xf32>
    %175 = vector.shape_cast %174 : vector<8x16x16xf32> to vector<8x256xf32>
    %c40_210 = arith.constant 40 : index
    %c256_211 = arith.constant 256 : index
    %176 = vector.load %arg13[%c40_210, %c256_211] : memref<72x512xf32, #tpu.memory_space<vmem>>, vector<8x256xf32>
    tpu.vector_store %arg13[%c40_210, %c256_211], %175 {strides = array<i32>} : memref<72x512xf32, #tpu.memory_space<vmem>>, vector<8x256xf32>,
    %c0_212 = arith.constant 0 : index
    %c0_213 = arith.constant 0 : index
    %c2_214 = arith.constant 2 : index
    %c0_215 = arith.constant 0 : index
    %177 = vector.load %arg11[%c0_212, %c0_213, %c2_214, %c0_215] : memref<2x8x18x18xf32, #tpu.memory_space<vmem>>, vector<1x8x16x16xf32>
    %178 = vector.shape_cast %177 : vector<1x8x16x16xf32> to vector<8x16x16xf32>
    %179 = vector.shape_cast %178 : vector<8x16x16xf32> to vector<8x256xf32>
    %c48 = arith.constant 48 : index
    %c0_216 = arith.constant 0 : index
    %180 = vector.load %arg13[%c48, %c0_216] : memref<72x512xf32, #tpu.memory_space<vmem>>, vector<8x256xf32>
    tpu.vector_store %arg13[%c48, %c0_216], %179 {strides = array<i32>} : memref<72x512xf32, #tpu.memory_space<vmem>>, vector<8x256xf32>,
    %c1_217 = arith.constant 1 : index
    %c0_218 = arith.constant 0 : index
    %c2_219 = arith.constant 2 : index
    %c0_220 = arith.constant 0 : index
    %181 = vector.load %arg11[%c1_217, %c0_218, %c2_219, %c0_220] : memref<2x8x18x18xf32, #tpu.memory_space<vmem>>, vector<1x8x16x16xf32>
    %182 = vector.shape_cast %181 : vector<1x8x16x16xf32> to vector<8x16x16xf32>
    %183 = vector.shape_cast %182 : vector<8x16x16xf32> to vector<8x256xf32>
    %c48_221 = arith.constant 48 : index
    %c256_222 = arith.constant 256 : index
    %184 = vector.load %arg13[%c48_221, %c256_222] : memref<72x512xf32, #tpu.memory_space<vmem>>, vector<8x256xf32>
    tpu.vector_store %arg13[%c48_221, %c256_222], %183 {strides = array<i32>} : memref<72x512xf32, #tpu.memory_space<vmem>>, vector<8x256xf32>,
    %c0_223 = arith.constant 0 : index
    %c0_224 = arith.constant 0 : index
    %c2_225 = arith.constant 2 : index
    %c1_226 = arith.constant 1 : index
    %185 = vector.load %arg11[%c0_223, %c0_224, %c2_225, %c1_226] : memref<2x8x18x18xf32, #tpu.memory_space<vmem>>, vector<1x8x16x16xf32>
    %186 = vector.shape_cast %185 : vector<1x8x16x16xf32> to vector<8x16x16xf32>
    %187 = vector.shape_cast %186 : vector<8x16x16xf32> to vector<8x256xf32>
    %c56 = arith.constant 56 : index
    %c0_227 = arith.constant 0 : index
    %188 = vector.load %arg13[%c56, %c0_227] : memref<72x512xf32, #tpu.memory_space<vmem>>, vector<8x256xf32>
    tpu.vector_store %arg13[%c56, %c0_227], %187 {strides = array<i32>} : memref<72x512xf32, #tpu.memory_space<vmem>>, vector<8x256xf32>,
    %c1_228 = arith.constant 1 : index
    %c0_229 = arith.constant 0 : index
    %c2_230 = arith.constant 2 : index
    %c1_231 = arith.constant 1 : index
    %189 = vector.load %arg11[%c1_228, %c0_229, %c2_230, %c1_231] : memref<2x8x18x18xf32, #tpu.memory_space<vmem>>, vector<1x8x16x16xf32>
    %190 = vector.shape_cast %189 : vector<1x8x16x16xf32> to vector<8x16x16xf32>
    %191 = vector.shape_cast %190 : vector<8x16x16xf32> to vector<8x256xf32>
    %c56_232 = arith.constant 56 : index
    %c256_233 = arith.constant 256 : index
    %192 = vector.load %arg13[%c56_232, %c256_233] : memref<72x512xf32, #tpu.memory_space<vmem>>, vector<8x256xf32>
    tpu.vector_store %arg13[%c56_232, %c256_233], %191 {strides = array<i32>} : memref<72x512xf32, #tpu.memory_space<vmem>>, vector<8x256xf32>,
    %c0_234 = arith.constant 0 : index
    %c0_235 = arith.constant 0 : index
    %c2_236 = arith.constant 2 : index
    %c2_237 = arith.constant 2 : index
    %193 = vector.load %arg11[%c0_234, %c0_235, %c2_236, %c2_237] : memref<2x8x18x18xf32, #tpu.memory_space<vmem>>, vector<1x8x16x16xf32>
    %194 = vector.shape_cast %193 : vector<1x8x16x16xf32> to vector<8x16x16xf32>
    %195 = vector.shape_cast %194 : vector<8x16x16xf32> to vector<8x256xf32>
    %c64 = arith.constant 64 : index
    %c0_238 = arith.constant 0 : index
    %196 = vector.load %arg13[%c64, %c0_238] : memref<72x512xf32, #tpu.memory_space<vmem>>, vector<8x256xf32>
    tpu.vector_store %arg13[%c64, %c0_238], %195 {strides = array<i32>} : memref<72x512xf32, #tpu.memory_space<vmem>>, vector<8x256xf32>,
    %c1_239 = arith.constant 1 : index
    %c0_240 = arith.constant 0 : index
    %c2_241 = arith.constant 2 : index
    %c2_242 = arith.constant 2 : index
    %197 = vector.load %arg11[%c1_239, %c0_240, %c2_241, %c2_242] : memref<2x8x18x18xf32, #tpu.memory_space<vmem>>, vector<1x8x16x16xf32>
    %198 = vector.shape_cast %197 : vector<1x8x16x16xf32> to vector<8x16x16xf32>
    %199 = vector.shape_cast %198 : vector<8x16x16xf32> to vector<8x256xf32>
    %c64_243 = arith.constant 64 : index
    %c256_244 = arith.constant 256 : index
    %200 = vector.load %arg13[%c64_243, %c256_244] : memref<72x512xf32, #tpu.memory_space<vmem>>, vector<8x256xf32>
    tpu.vector_store %arg13[%c64_243, %c256_244], %199 {strides = array<i32>} : memref<72x512xf32, #tpu.memory_space<vmem>>, vector<8x256xf32>,
    %c0_245 = arith.constant 0 : index
    %c0_246 = arith.constant 0 : index
    %201 = vector.load %arg2[%c0_245, %c0_246] : memref<8x72xbf16, #tpu.memory_space<vmem>>, vector<8x72xbf16>
    %c0_247 = arith.constant 0 : index
    %c0_248 = arith.constant 0 : index
    %202 = vector.load %arg13[%c0_247, %c0_248] : memref<72x512xf32, #tpu.memory_space<vmem>>, vector<72x512xf32>
    %203 = arith.truncf %202 : vector<72x512xf32> to vector<72x512xbf16>
    %cst_249 = arith.constant dense<0.000000e+00> : vector<8x512xf32>
    %204 = tpu.matmul %201, %203, %cst_249 {dimension_numbers = #tpu.dot_dimension_numbers<[1], [0], [0], [1], [0, 0, 1, 1], [], []>} : vector<8x72xbf16>, vector<72x512xbf16>, vector<8x512xf32> -> vector<8x512xf32>
    %c16_250 = arith.constant 16 : index
    %c0_251 = arith.constant 0 : index
    %205 = vector.load %arg12[%c16_250, %c0_251] : memref<36x512xf32, #tpu.memory_space<vmem>>, vector<4x512xf32>
    %c0_252 = arith.constant 0 : index
    %c0_253 = arith.constant 0 : index
    %206 = vector.load %arg7[%c0_252, %c0_253] : memref<8x4xbf16, #tpu.memory_space<vmem>>, vector<8x4xbf16>
    %207 = arith.truncf %205 : vector<4x512xf32> to vector<4x512xbf16>
    %cst_254 = arith.constant dense<0.000000e+00> : vector<8x512xf32>
    %208 = tpu.matmul %206, %207, %cst_254 {dimension_numbers = #tpu.dot_dimension_numbers<[1], [0], [0], [1], [0, 0, 1, 1], [], []>} : vector<8x4xbf16>, vector<4x512xbf16>, vector<8x512xf32> -> vector<8x512xf32>
    %c0_255 = arith.constant 0 : index
    %c0_256 = arith.constant 0 : index
    %209 = vector.load %arg8[%c0_255, %c0_256] : memref<8x1xf32, #tpu.memory_space<vmem>>, vector<8x1xf32>
    %210 = vector.broadcast %209 : vector<8x1xf32> to vector<8x512xf32>
    %211 = arith.addf %208, %210 : vector<8x512xf32>
    %cst_257 = arith.constant dense<0.000000e+00> : vector<8xf32>
    %212 = vector.multi_reduction <add>, %204, %cst_257 [1] : vector<8x512xf32> to vector<8xf32>
    %213 = vector.shape_cast %212 : vector<8xf32> to vector<8x1xf32>
    %cst_258 = arith.constant 0.001953125 : f32
    %214 = vector.broadcast %cst_258 : f32 to vector<8x1xf32>
    %215 = arith.mulf %213, %214 : vector<8x1xf32>
    %216 = arith.mulf %204, %204 : vector<8x512xf32>
    %cst_259 = arith.constant dense<0.000000e+00> : vector<8xf32>
    %217 = vector.multi_reduction <add>, %216, %cst_259 [1] : vector<8x512xf32> to vector<8xf32>
    %218 = vector.shape_cast %217 : vector<8xf32> to vector<8x1xf32>
    %cst_260 = arith.constant 0.001953125 : f32
    %219 = vector.broadcast %cst_260 : f32 to vector<8x1xf32>
    %220 = arith.mulf %218, %219 : vector<8x1xf32>
    %221 = arith.mulf %215, %215 : vector<8x1xf32>
    %222 = arith.subf %220, %221 : vector<8x1xf32>
    %cst_261 = arith.constant 0.000000e+00 : f32
    %223 = vector.broadcast %cst_261 : f32 to vector<8x1xf32>
    %224 = arith.maximumf %222, %223 : vector<8x1xf32>
    %225 = vector.broadcast %215 : vector<8x1xf32> to vector<8x512xf32>
    %226 = arith.subf %204, %225 : vector<8x512xf32>
    %cst_262 = arith.constant 9.99999974E-6 : f32
    %227 = vector.broadcast %cst_262 : f32 to vector<8x1xf32>
    %228 = arith.addf %224, %227 : vector<8x1xf32>
    %229 = math.rsqrt %228 : vector<8x1xf32>
    %230 = vector.broadcast %229 : vector<8x1xf32> to vector<8x512xf32>
    %231 = arith.mulf %226, %230 : vector<8x512xf32>
    %c0_263 = arith.constant 0 : index
    %c0_264 = arith.constant 0 : index
    %232 = vector.load %arg5[%c0_263, %c0_264] : memref<8x1xf32, #tpu.memory_space<vmem>>, vector<8x1xf32>
    %233 = vector.broadcast %232 : vector<8x1xf32> to vector<8x512xf32>
    %234 = arith.mulf %231, %233 : vector<8x512xf32>
    %c0_265 = arith.constant 0 : index
    %c0_266 = arith.constant 0 : index
    %235 = vector.load %arg6[%c0_265, %c0_266] : memref<8x1xf32, #tpu.memory_space<vmem>>, vector<8x1xf32>
    %236 = vector.broadcast %235 : vector<8x1xf32> to vector<8x512xf32>
    %237 = arith.addf %234, %236 : vector<8x512xf32>
    %238 = arith.addf %237, %211 : vector<8x512xf32>
    %cst_267 = arith.constant 0.000000e+00 : f32
    %239 = vector.broadcast %cst_267 : f32 to vector<8x512xf32>
    %240 = arith.maximumf %238, %239 : vector<8x512xf32>
    %241 = vector.extract_strided_slice %240 {offsets = [0, 0], sizes = [8, 256], strides = [1, 1]} : vector<8x512xf32> to vector<8x256xf32>
    %c0_268 = arith.constant 0 : index
    %c0_269 = arith.constant 0 : index
    %c0_270 = arith.constant 0 : index
    %242 = vector.load %arg9[%c0_268, %c0_269, %c0_270] : memref<2x8x256xf32, #tpu.memory_space<vmem>>, vector<1x8x256xf32>
    %243 = vector.shape_cast %242 : vector<1x8x256xf32> to vector<8x256xf32>
    %244 = vector.shape_cast %241 : vector<8x256xf32> to vector<1x8x256xf32>
    tpu.vector_store %arg9[%c0_268, %c0_269, %c0_270], %244 {strides = array<i32>} : memref<2x8x256xf32, #tpu.memory_space<vmem>>, vector<1x8x256xf32>,
    %245 = vector.extract_strided_slice %240 {offsets = [0, 256], sizes = [8, 256], strides = [1, 1]} : vector<8x512xf32> to vector<8x256xf32>
    %c1_271 = arith.constant 1 : index
    %c0_272 = arith.constant 0 : index
    %c0_273 = arith.constant 0 : index
    %246 = vector.load %arg9[%c1_271, %c0_272, %c0_273] : memref<2x8x256xf32, #tpu.memory_space<vmem>>, vector<1x8x256xf32>
    %247 = vector.shape_cast %246 : vector<1x8x256xf32> to vector<8x256xf32>
    %248 = vector.shape_cast %245 : vector<8x256xf32> to vector<1x8x256xf32>
    tpu.vector_store %arg9[%c1_271, %c0_272, %c0_273], %248 {strides = array<i32>} : memref<2x8x256xf32, #tpu.memory_space<vmem>>, vector<1x8x256xf32>,
    return
  }
}

</mosaic_0001>

<llo_original>
// kernel: tpu_custom_call.1
$region0: #{tpu_custom_call.1}
  #allocation0 [shape = 'u32[]', space=smem, size = 0x4, offset = 0x4, fixed_abs, tag = 'smem constant byte address 0x4 - core index']
  #allocation1 [shape = 'u32[144,128]{1,0:T(1,128)}', space=vmem, size = 0x12000, scoped, tag = 'internal scratch']
  #allocation2 [shape = 'f32[2,4,18,18]{3,2,1,0:T(8,128)}', space=vmem, size = 0x18000, scoped, tag = 'scratch operand']
  #allocation3 [shape = 'f32[2,8,18,18]{3,2,1,0:T(8,128)}', space=vmem, size = 0x30000, scoped, tag = 'scratch operand']
  #allocation4 [shape = 'f32[36,512]{1,0:T(8,128)}', space=vmem, size = 0x14000, scoped, tag = 'scratch operand']
  #allocation5 [shape = 'f32[72,512]{1,0:T(8,128)}', space=vmem, size = 0x24000, scoped, tag = 'scratch operand']
  %s0 = inlined_call_operand.hbm [shape: f32[2,4,16,16], index: 0, kind: input, shape index: {}]
  %s1 = inlined_call_operand.vmem [shape: bf16[8,36], index: 1, kind: input, shape index: {}]
  %s2 = inlined_call_operand.vmem [shape: bf16[8,72], index: 2, kind: input, shape index: {}]
  %s3 = inlined_call_operand.vmem [shape: f32[8,1], index: 3, kind: input, shape index: {}]
  %s4 = inlined_call_operand.vmem [shape: f32[8,1], index: 4, kind: input, shape index: {}]
  %s5 = inlined_call_operand.vmem [shape: f32[8,1], index: 5, kind: input, shape index: {}]
  %s6 = inlined_call_operand.vmem [shape: f32[8,1], index: 6, kind: input, shape index: {}]
  %s7 = inlined_call_operand.vmem [shape: bf16[8,4], index: 7, kind: input, shape index: {}]
  %s8 = inlined_call_operand.vmem [shape: f32[8,1], index: 8, kind: input, shape index: {}]
  %s9 = inlined_call_operand.hbm [shape: f32[2,8,256], index: 9, kind: output, shape index: {}]
  %s10 = sld [smem:[#allocation0]]
  $region50: #{tpu_custom_call.1} parent=0
    _
  %s12 = ssub.s32 1, %s10
  %s13 = scalar_select 0, %s12, %s10
  $region1: #{tpu_custom_call.1} parent=0
    #allocation6 [shape = 'u8[65536]{0}', space=vmem, size = 0x10000, scoped, tag = 'input window, operand 0, single buffered']
    #allocation7 [shape = 's32[1]{0}', space=sflag, size = 0x4, scoped, tag = 'scoped memory for tpu_custom_call.1']
    #allocation8 [shape = 's32[1]{0}', space=sflag, size = 0x4, scoped, tag = 'scoped memory for tpu_custom_call.1']
    #allocation9 [shape = 'u8[16384]{0}', space=vmem, size = 0x4000, scoped, tag = 'output window, operand 0, single buffered']
    %14 = vsyncpa [#allocation7], 0
    %15 = vsyncpa [#allocation8], 0
    // Predicated region
    $region2: #{tpu_custom_call.1} parent=1 // pred_check
      _
    $region3: #{tpu_custom_call.1} parent=1 // pred_check_branch
      %17 = sbr.rel (0) target = $region5
    $region4: #{tpu_custom_call.1} parent=1 // pred_region
      %s19 = ssub.s32 2048, 2048
      %20 = vsyncadd [#allocation7], %s19
      %s21 = sshll.u32 [#allocation6], 4
      %s22 = int_to_ptr.vmem [resolvable:$true] %s21
      %27 = dma.hbm_to_vmem [thread:$0]  %s0, 2048, %s22, [#allocation7], 128, 128, 8
    $region5: #{tpu_custom_call.1} parent=1 // pred_fallthru
      _
    // Predicated region
    $region6: #{tpu_custom_call.1} parent=1 // pred_check
      _
    $region7: #{tpu_custom_call.1} parent=1 // pred_check_branch
      %29 = sbr.rel (0) target = $region9
    $region8: #{tpu_custom_call.1} parent=1 // pred_region
      _
    $region9: #{tpu_custom_call.1} parent=1 // pred_fallthru
      _
    // Predicated region
    $region10: #{tpu_custom_call.1} parent=1 // pred_check
      _
    $region11: #{tpu_custom_call.1} parent=1 // pred_check_branch
      %31 = sbr.rel (0) target = $region13
    $region12: #{tpu_custom_call.1} parent=1 // pred_region
      _
    $region13: #{tpu_custom_call.1} parent=1 // pred_fallthru
      _
    // Predicated region
    $region14: #{tpu_custom_call.1} parent=1 // pred_check
      _
    $region15: #{tpu_custom_call.1} parent=1 // pred_check_branch
      %33 = sbr.rel (0) target = $region17
    $region16: #{tpu_custom_call.1} parent=1 // pred_region
      _
    $region17: #{tpu_custom_call.1} parent=1 // pred_fallthru
      _
    // Predicated region
    $region18: #{tpu_custom_call.1} parent=1 // pred_check
      _
    $region19: #{tpu_custom_call.1} parent=1 // pred_check_branch
      %35 = sbr.rel (0) target = $region21
    $region20: #{tpu_custom_call.1} parent=1 // pred_region
      _
    $region21: #{tpu_custom_call.1} parent=1 // pred_fallthru
      _
    // Predicated region
    $region22: #{tpu_custom_call.1} parent=1 // pred_check
      _
    $region23: #{tpu_custom_call.1} parent=1 // pred_check_branch
      %37 = sbr.rel (0) target = $region25
    $region24: #{tpu_custom_call.1} parent=1 // pred_region
      _
    $region25: #{tpu_custom_call.1} parent=1 // pred_fallthru
      _
    // Predicated region
    $region26: #{tpu_custom_call.1} parent=1 // pred_check
      _
    $region27: #{tpu_custom_call.1} parent=1 // pred_check_branch
      %39 = sbr.rel (0) target = $region29
    $region28: #{tpu_custom_call.1} parent=1 // pred_region
      _
    $region29: #{tpu_custom_call.1} parent=1 // pred_fallthru
      _
    // Predicated region
    $region30: #{tpu_custom_call.1} parent=1 // pred_check
      _
    $region31: #{tpu_custom_call.1} parent=1 // pred_check_branch
      %41 = sbr.rel (0) target = $region33
    $region32: #{tpu_custom_call.1} parent=1 // pred_region
      _
    $region33: #{tpu_custom_call.1} parent=1 // pred_fallthru
      _
    // Predicated region
    $region34: #{tpu_custom_call.1} parent=1 // pred_check
      _
    $region35: #{tpu_custom_call.1} parent=1 // pred_check_branch
      %43 = sbr.rel (0) target = $region37
    $region36: #{tpu_custom_call.1} parent=1 // pred_region
      _
    $region37: #{tpu_custom_call.1} parent=1 // pred_fallthru
      _
    // Predicated region
    $region38: #{tpu_custom_call.1} parent=1 // pred_check
      _
    $region39: #{tpu_custom_call.1} parent=1 // pred_check_branch
      %45 = sbr.rel (0) target = $region41
    $region40: #{tpu_custom_call.1} parent=1 // pred_region
      %46 = dma.done [#allocation7], 2048
    $region41: #{tpu_custom_call.1} parent=1 // pred_fallthru
      _
    %v48 = vld [vmem:[#allocation6] sm:$0xff]
    %v49 = vld [vmem:[#allocation6 + $0x8] sm:$0xff]
    %v50 = vld [vmem:[#allocation6 + $0x10] sm:$0xff]
    %v51 = vld [vmem:[#allocation6 + $0x18] sm:$0xff]
    %v52 = vld [vmem:[#allocation6 + $0x20] sm:$0xff]
    %v53 = vld [vmem:[#allocation6 + $0x28] sm:$0xff]
    %v54 = vld [vmem:[#allocation6 + $0x30] sm:$0xff]
    %v55 = vld [vmem:[#allocation6 + $0x38] sm:$0xff]
    %v56 = vld [vmem:[#allocation6 + $0x40] sm:$0xff]
    %v57 = vld [vmem:[#allocation6 + $0x48] sm:$0xff]
    %v58 = vld [vmem:[#allocation6 + $0x50] sm:$0xff]
    %v59 = vld [vmem:[#allocation6 + $0x58] sm:$0xff]
    %v60 = vld [vmem:[#allocation6 + $0x60] sm:$0xff]
    %v61 = vld [vmem:[#allocation6 + $0x68] sm:$0xff]
    %v62 = vld [vmem:[#allocation6 + $0x70] sm:$0xff]
    %v63 = vld [vmem:[#allocation6 + $0x78] sm:$0xff]
    %vm64 = vcmask 146432
    %65 = vst.msk [vmem:[#allocation2] sm:$0xff] %vm64, 0.0
    %66 = vst.msk [vmem:[#allocation2 + $0x8] sm:$0xff] %vm64, 0.0
    %vm67 = vcmask 140288
    %68 = vst.msk [vmem:[#allocation2 + $0x10] sm:$0x3] %vm67, 0.0
    %69 = vst.msk [vmem:[#allocation2 + $0x18] sm:$0xff] %vm64, 0.0
    %70 = vst.msk [vmem:[#allocation2 + $0x20] sm:$0xff] %vm64, 0.0
    %71 = vst.msk [vmem:[#allocation2 + $0x28] sm:$0x3] %vm67, 0.0
    %72 = vst.msk [vmem:[#allocation2 + $0x30] sm:$0xff] %vm64, 0.0
    %73 = vst.msk [vmem:[#allocation2 + $0x38] sm:$0xff] %vm64, 0.0
    %74 = vst.msk [vmem:[#allocation2 + $0x40] sm:$0x3] %vm67, 0.0
    %75 = vst.msk [vmem:[#allocation2 + $0x48] sm:$0xff] %vm64, 0.0
    %76 = vst.msk [vmem:[#allocation2 + $0x50] sm:$0xff] %vm64, 0.0
    %77 = vst.msk [vmem:[#allocation2 + $0x58] sm:$0x3] %vm67, 0.0
    %78 = vst.msk [vmem:[#allocation2 + $0x60] sm:$0xff] %vm64, 0.0
    %79 = vst.msk [vmem:[#allocation2 + $0x68] sm:$0xff] %vm64, 0.0
    %80 = vst.msk [vmem:[#allocation2 + $0x70] sm:$0x3] %vm67, 0.0
    %81 = vst.msk [vmem:[#allocation2 + $0x78] sm:$0xff] %vm64, 0.0
    %82 = vst.msk [vmem:[#allocation2 + $0x80] sm:$0xff] %vm64, 0.0
    %83 = vst.msk [vmem:[#allocation2 + $0x88] sm:$0x3] %vm67, 0.0
    %84 = vst.msk [vmem:[#allocation2 + $0x90] sm:$0xff] %vm64, 0.0
    %85 = vst.msk [vmem:[#allocation2 + $0x98] sm:$0xff] %vm64, 0.0
    %86 = vst.msk [vmem:[#allocation2 + $0xa0] sm:$0x3] %vm67, 0.0
    %87 = vst.msk [vmem:[#allocation2 + $0xa8] sm:$0xff] %vm64, 0.0
    %88 = vst.msk [vmem:[#allocation2 + $0xb0] sm:$0xff] %vm64, 0.0
    %89 = vst.msk [vmem:[#allocation2 + $0xb8] sm:$0x3] %vm67, 0.0
    %98 = vrot.lane.b32.xlu0 %v48, 1
    %v99 = vpop.permute.xlu0 %98
    %100 = vrot.lane.b32.xlu0 %v49, 1
    %v101 = vpop.permute.xlu0 %100
    %102 = vrot.lane.b32.xlu0 %v50, 1
    %v103 = vpop.permute.xlu0 %102
    %104 = vrot.lane.b32.xlu0 %v51, 1
    %v105 = vpop.permute.xlu0 %104
    %106 = vrot.lane.b32.xlu0 %v52, 1
    %v107 = vpop.permute.xlu0 %106
    %108 = vrot.lane.b32.xlu0 %v53, 1
    %v109 = vpop.permute.xlu0 %108
    %110 = vrot.lane.b32.xlu0 %v54, 1
    %v111 = vpop.permute.xlu0 %110
    %112 = vrot.lane.b32.xlu0 %v55, 1
    %v113 = vpop.permute.xlu0 %112
    %vm122 = vcmask 138248
    %123 = vst.msk [vmem:[#allocation2 + $0x1] sm:$0xff] %vm122, %v99
    %124 = vst.msk [vmem:[#allocation2 + $0x9] sm:$0xff] %vm122, %v101
    %125 = vst.msk [vmem:[#allocation2 + $0x19] sm:$0xff] %vm122, %v103
    %126 = vst.msk [vmem:[#allocation2 + $0x21] sm:$0xff] %vm122, %v105
    %127 = vst.msk [vmem:[#allocation2 + $0x31] sm:$0xff] %vm122, %v107
    %128 = vst.msk [vmem:[#allocation2 + $0x39] sm:$0xff] %vm122, %v109
    %129 = vst.msk [vmem:[#allocation2 + $0x49] sm:$0xff] %vm122, %v111
    %130 = vst.msk [vmem:[#allocation2 + $0x51] sm:$0xff] %vm122, %v113
    %139 = vrot.lane.b32.xlu0 %v56, 1
    %v140 = vpop.permute.xlu0 %139
    %141 = vrot.lane.b32.xlu0 %v57, 1
    %v142 = vpop.permute.xlu0 %141
    %143 = vrot.lane.b32.xlu0 %v58, 1
    %v144 = vpop.permute.xlu0 %143
    %145 = vrot.lane.b32.xlu0 %v59, 1
    %v146 = vpop.permute.xlu0 %145
    %147 = vrot.lane.b32.xlu0 %v60, 1
    %v148 = vpop.permute.xlu0 %147
    %149 = vrot.lane.b32.xlu0 %v61, 1
    %v150 = vpop.permute.xlu0 %149
    %151 = vrot.lane.b32.xlu0 %v62, 1
    %v152 = vpop.permute.xlu0 %151
    %153 = vrot.lane.b32.xlu0 %v63, 1
    %v154 = vpop.permute.xlu0 %153
    %s163 = scalar_lea.vmem [#allocation2], 96
    %164 = vst.msk [vmem:[%s163 + $0x1] sm:$0xff] %vm122, %v140
    %165 = vst.msk [vmem:[%s163 + $0x9] sm:$0xff] %vm122, %v142
    %166 = vst.msk [vmem:[%s163 + $0x19] sm:$0xff] %vm122, %v144
    %167 = vst.msk [vmem:[%s163 + $0x21] sm:$0xff] %vm122, %v146
    %168 = vst.msk [vmem:[%s163 + $0x31] sm:$0xff] %vm122, %v148
    %169 = vst.msk [vmem:[%s163 + $0x39] sm:$0xff] %vm122, %v150
    %170 = vst.msk [vmem:[%s163 + $0x49] sm:$0xff] %vm122, %v152
    %171 = vst.msk [vmem:[%s163 + $0x51] sm:$0xff] %vm122, %v154
    %v172 = vld [vmem:[#allocation2] sm:$0xff]
    %v173 = vld [vmem:[#allocation2 + $0x8] sm:$0xff]
    %v174 = vld [vmem:[#allocation2 + $0x18] sm:$0xff]
    %v175 = vld [vmem:[#allocation2 + $0x20] sm:$0xff]
    %v176 = vld [vmem:[#allocation2 + $0x30] sm:$0xff]
    %v177 = vld [vmem:[#allocation2 + $0x38] sm:$0xff]
    %v178 = vld [vmem:[#allocation2 + $0x48] sm:$0xff]
    %v179 = vld [vmem:[#allocation2 + $0x50] sm:$0xff]
    %v180 = vcombine.low %v172, %v176
    %v181 = vcombine.high %v172, %v176
    %v183 = vunpack.c.l.s4 1983009808
    %v184 = vunpack.c.0.s8 %v183
    %v185 = vlaneseq
    %v186 = vshrl.u32 %v185, 7
    %v187 = vsub.s32 %v184, %v186
    %v188 = vrot.slane %v180, %v187
    %v190 = vunpack.c.l.s4 1983009808
    %v191 = vunpack.c.0.s8 %v190
    %v192 = vlaneseq
    %v193 = vshrl.u32 %v192, 7
    %v194 = vsub.s32 %v191, %v193
    %v195 = vrot.slane %v181, %v194
    %v196 = vcombine.low %v174, %v178
    %v197 = vcombine.high %v174, %v178
    %v199 = vunpack.c.l.s4 1983009808
    %v200 = vunpack.c.0.s8 %v199
    %v201 = vlaneseq
    %v202 = vshrl.u32 %v201, 7
    %v203 = vsub.s32 %v200, %v202
    %v204 = vrot.slane %v196, %v203
    %v206 = vunpack.c.l.s4 1983009808
    %v207 = vunpack.c.0.s8 %v206
    %v208 = vlaneseq
    %v209 = vshrl.u32 %v208, 7
    %v210 = vsub.s32 %v207, %v209
    %v211 = vrot.slane %v197, %v210
    %v212 = vcombine.low %v188, %v204
    %v213 = vcombine.high %v188, %v204
    %v215 = vunpack.c.l.s4 1934713408
    %v216 = vunpack.c.0.s8 %v215
    %v217 = vlaneseq
    %v218 = vshrl.u32 %v217, 7
    %v219 = vsub.s32 %v216, %v218
    %v220 = vrot.slane %v212, %v219
    %v222 = vunpack.c.l.s4 1934713408
    %v223 = vunpack.c.0.s8 %v222
    %v224 = vlaneseq
    %v225 = vshrl.u32 %v224, 7
    %v226 = vsub.s32 %v223, %v225
    %v227 = vrot.slane %v213, %v226
    %v228 = vcombine.low %v195, %v211
    %v229 = vcombine.high %v195, %v211
    %v231 = vunpack.c.l.s4 1934713408
    %v232 = vunpack.c.0.s8 %v231
    %v233 = vlaneseq
    %v234 = vshrl.u32 %v233, 7
    %v235 = vsub.s32 %v232, %v234
    %v236 = vrot.slane %v228, %v235
    %v238 = vunpack.c.l.s4 1934713408
    %v239 = vunpack.c.0.s8 %v238
    %v240 = vlaneseq
    %v241 = vshrl.u32 %v240, 7
    %v242 = vsub.s32 %v239, %v241
    %v243 = vrot.slane %v229, %v242
    %v244 = vcombine.high %v220, 0.0
    %v245 = vcombine.high %v227, 0.0
    %v246 = vcombine.high %v236, 0.0
    %v247 = vcombine.high %v243, 0.0
    %v248 = vcombine.low %v173, %v177
    %v249 = vcombine.high %v173, %v177
    %v251 = vunpack.c.l.s4 1983009808
    %v252 = vunpack.c.0.s8 %v251
    %v253 = vlaneseq
    %v254 = vshrl.u32 %v253, 7
    %v255 = vsub.s32 %v252, %v254
    %v256 = vrot.slane %v248, %v255
    %v258 = vunpack.c.l.s4 1983009808
    %v259 = vunpack.c.0.s8 %v258
    %v260 = vlaneseq
    %v261 = vshrl.u32 %v260, 7
    %v262 = vsub.s32 %v259, %v261
    %v263 = vrot.slane %v249, %v262
    %v264 = vcombine.low %v175, %v179
    %v265 = vcombine.high %v175, %v179
    %v267 = vunpack.c.l.s4 1983009808
    %v268 = vunpack.c.0.s8 %v267
    %v269 = vlaneseq
    %v270 = vshrl.u32 %v269, 7
    %v271 = vsub.s32 %v268, %v270
    %v272 = vrot.slane %v264, %v271
    %v274 = vunpack.c.l.s4 1983009808
    %v275 = vunpack.c.0.s8 %v274
    %v276 = vlaneseq
    %v277 = vshrl.u32 %v276, 7
    %v278 = vsub.s32 %v275, %v277
    %v279 = vrot.slane %v265, %v278
    %v280 = vcombine.low %v256, %v272
    %v281 = vcombine.high %v256, %v272
    %v283 = vunpack.c.l.s4 1934713408
    %v284 = vunpack.c.0.s8 %v283
    %v285 = vlaneseq
    %v286 = vshrl.u32 %v285, 7
    %v287 = vsub.s32 %v284, %v286
    %v288 = vrot.slane %v280, %v287
    %v290 = vunpack.c.l.s4 1934713408
    %v291 = vunpack.c.0.s8 %v290
    %v292 = vlaneseq
    %v293 = vshrl.u32 %v292, 7
    %v294 = vsub.s32 %v291, %v293
    %v295 = vrot.slane %v281, %v294
    %v296 = vcombine.low %v263, %v279
    %v297 = vcombine.high %v263, %v279
    %v299 = vunpack.c.l.s4 1934713408
    %v300 = vunpack.c.0.s8 %v299
    %v301 = vlaneseq
    %v302 = vshrl.u32 %v301, 7
    %v303 = vsub.s32 %v300, %v302
    %v304 = vrot.slane %v296, %v303
    %v306 = vunpack.c.l.s4 1934713408
    %v307 = vunpack.c.0.s8 %v306
    %v308 = vlaneseq
    %v309 = vshrl.u32 %v308, 7
    %v310 = vsub.s32 %v307, %v309
    %v311 = vrot.slane %v297, %v310
    %v312 = vcombine.high %v288, 0.0
    %v313 = vcombine.high %v295, 0.0
    %v314 = vcombine.high %v304, 0.0
    %v315 = vcombine.high %v311, 0.0
    %317 = vrot.lane.b32.xlu0 %v244, 16
    %v318 = vpop.permute.xlu0 %317
    %321 = vrot.lane.b32.xlu0 %v227, 32
    %v322 = vpop.permute.xlu0 %321
    %325 = vrot.lane.b32.xlu0 %v245, 48
    %v326 = vpop.permute.xlu0 %325
    %329 = vrot.lane.b32.xlu0 %v236, 64
    %v330 = vpop.permute.xlu0 %329
    %333 = vrot.lane.b32.xlu0 %v246, 80
    %v334 = vpop.permute.xlu0 %333
    %337 = vrot.lane.b32.xlu0 %v243, 96
    %v338 = vpop.permute.xlu0 %337
    %341 = vrot.lane.b32.xlu0 %v247, 112
    %v342 = vpop.permute.xlu0 %341
    %345 = vrot.lane.b32.xlu0 %v312, 16
    %v346 = vpop.permute.xlu0 %345
    %349 = vrot.lane.b32.xlu0 %v295, 32
    %v350 = vpop.permute.xlu0 %349
    %353 = vrot.lane.b32.xlu0 %v313, 48
    %v354 = vpop.permute.xlu0 %353
    %357 = vrot.lane.b32.xlu0 %v304, 64
    %v358 = vpop.permute.xlu0 %357
    %361 = vrot.lane.b32.xlu0 %v314, 80
    %v362 = vpop.permute.xlu0 %361
    %365 = vrot.lane.b32.xlu0 %v311, 96
    %v366 = vpop.permute.xlu0 %365
    %369 = vrot.lane.b32.xlu0 %v315, 112
    %v370 = vpop.permute.xlu0 %369
    %vm372 = vcmask 130048
    %v373 = vsel %vm372, %v220, %v318
    %vm374 = vcmask 261120
    %v375 = vsel %vm374, %v373, %v322
    %vm376 = vcmask 392192
    %v377 = vsel %vm376, %v375, %v326
    %vm378 = vcmask 523264
    %v379 = vsel %vm378, %v377, %v330
    %vm380 = vcmask 654336
    %v381 = vsel %vm380, %v379, %v334
    %vm382 = vcmask 785408
    %v383 = vsel %vm382, %v381, %v338
    %vm384 = vcmask 916480
    %v385 = vsel %vm384, %v383, %v342
    %v386 = vsel %vm372, %v288, %v346
    %v387 = vsel %vm374, %v386, %v350
    %v388 = vsel %vm376, %v387, %v354
    %v389 = vsel %vm378, %v388, %v358
    %v390 = vsel %vm380, %v389, %v362
    %v391 = vsel %vm382, %v390, %v366
    %v392 = vsel %vm384, %v391, %v370
    %393 = vst [vmem:[#allocation4] sm:$0xf] %v385
    %394 = vst [vmem:[#allocation4 + $0x8] sm:$0xf] %v392
    %v395 = vld [vmem:[%s163] sm:$0xff]
    %v396 = vld [vmem:[%s163 + $0x8] sm:$0xff]
    %v397 = vld [vmem:[%s163 + $0x18] sm:$0xff]
    %v398 = vld [vmem:[%s163 + $0x20] sm:$0xff]
    %v399 = vld [vmem:[%s163 + $0x30] sm:$0xff]
    %v400 = vld [vmem:[%s163 + $0x38] sm:$0xff]
    %v401 = vld [vmem:[%s163 + $0x48] sm:$0xff]
    %v402 = vld [vmem:[%s163 + $0x50] sm:$0xff]
    %v403 = vcombine.low %v395, %v399
    %v404 = vcombine.high %v395, %v399
    %v406 = vunpack.c.l.s4 1983009808
    %v407 = vunpack.c.0.s8 %v406
    %v408 = vlaneseq
    %v409 = vshrl.u32 %v408, 7
    %v410 = vsub.s32 %v407, %v409
    %v411 = vrot.slane %v403, %v410
    %v413 = vunpack.c.l.s4 1983009808
    %v414 = vunpack.c.0.s8 %v413
    %v415 = vlaneseq
    %v416 = vshrl.u32 %v415, 7
    %v417 = vsub.s32 %v414, %v416
    %v418 = vrot.slane %v404, %v417
    %v419 = vcombine.low %v397, %v401
    %v420 = vcombine.high %v397, %v401
    %v422 = vunpack.c.l.s4 1983009808
    %v423 = vunpack.c.0.s8 %v422
    %v424 = vlaneseq
    %v425 = vshrl.u32 %v424, 7
    %v426 = vsub.s32 %v423, %v425
    %v427 = vrot.slane %v419, %v426
    %v429 = vunpack.c.l.s4 1983009808
    %v430 = vunpack.c.0.s8 %v429
    %v431 = vlaneseq
    %v432 = vshrl.u32 %v431, 7
    %v433 = vsub.s32 %v430, %v432
    %v434 = vrot.slane %v420, %v433
    %v435 = vcombine.low %v411, %v427
    %v436 = vcombine.high %v411, %v427
    %v438 = vunpack.c.l.s4 1934713408
    %v439 = vunpack.c.0.s8 %v438
    %v440 = vlaneseq
    %v441 = vshrl.u32 %v440, 7
    %v442 = vsub.s32 %v439, %v441
    %v443 = vrot.slane %v435, %v442
    %v445 = vunpack.c.l.s4 1934713408
    %v446 = vunpack.c.0.s8 %v445
    %v447 = vlaneseq
    %v448 = vshrl.u32 %v447, 7
    %v449 = vsub.s32 %v446, %v448
    %v450 = vrot.slane %v436, %v449
    %v451 = vcombine.low %v418, %v434
    %v452 = vcombine.high %v418, %v434
    %v454 = vunpack.c.l.s4 1934713408
    %v455 = vunpack.c.0.s8 %v454
    %v456 = vlaneseq
    %v457 = vshrl.u32 %v456, 7
    %v458 = vsub.s32 %v455, %v457
    %v459 = vrot.slane %v451, %v458
    %v461 = vunpack.c.l.s4 1934713408
    %v462 = vunpack.c.0.s8 %v461
    %v463 = vlaneseq
    %v464 = vshrl.u32 %v463, 7
    %v465 = vsub.s32 %v462, %v464
    %v466 = vrot.slane %v452, %v465
    %v467 = vcombine.high %v443, 0.0
    %v468 = vcombine.high %v450, 0.0
    %v469 = vcombine.high %v459, 0.0
    %v470 = vcombine.high %v466, 0.0
    %v471 = vcombine.low %v396, %v400
    %v472 = vcombine.high %v396, %v400
    %v474 = vunpack.c.l.s4 1983009808
    %v475 = vunpack.c.0.s8 %v474
    %v476 = vlaneseq
    %v477 = vshrl.u32 %v476, 7
    %v478 = vsub.s32 %v475, %v477
    %v479 = vrot.slane %v471, %v478
    %v481 = vunpack.c.l.s4 1983009808
    %v482 = vunpack.c.0.s8 %v481
    %v483 = vlaneseq
    %v484 = vshrl.u32 %v483, 7
    %v485 = vsub.s32 %v482, %v484
    %v486 = vrot.slane %v472, %v485
    %v487 = vcombine.low %v398, %v402
    %v488 = vcombine.high %v398, %v402
    %v490 = vunpack.c.l.s4 1983009808
    %v491 = vunpack.c.0.s8 %v490
    %v492 = vlaneseq
    %v493 = vshrl.u32 %v492, 7
    %v494 = vsub.s32 %v491, %v493
    %v495 = vrot.slane %v487, %v494
    %v497 = vunpack.c.l.s4 1983009808
    %v498 = vunpack.c.0.s8 %v497
    %v499 = vlaneseq
    %v500 = vshrl.u32 %v499, 7
    %v501 = vsub.s32 %v498, %v500
    %v502 = vrot.slane %v488, %v501
    %v503 = vcombine.low %v479, %v495
    %v504 = vcombine.high %v479, %v495
    %v506 = vunpack.c.l.s4 1934713408
    %v507 = vunpack.c.0.s8 %v506
    %v508 = vlaneseq
    %v509 = vshrl.u32 %v508, 7
    %v510 = vsub.s32 %v507, %v509
    %v511 = vrot.slane %v503, %v510
    %v513 = vunpack.c.l.s4 1934713408
    %v514 = vunpack.c.0.s8 %v513
    %v515 = vlaneseq
    %v516 = vshrl.u32 %v515, 7
    %v517 = vsub.s32 %v514, %v516
    %v518 = vrot.slane %v504, %v517
    %v519 = vcombine.low %v486, %v502
    %v520 = vcombine.high %v486, %v502
    %v522 = vunpack.c.l.s4 1934713408
    %v523 = vunpack.c.0.s8 %v522
    %v524 = vlaneseq
    %v525 = vshrl.u32 %v524, 7
    %v526 = vsub.s32 %v523, %v525
    %v527 = vrot.slane %v519, %v526
    %v529 = vunpack.c.l.s4 1934713408
    %v530 = vunpack.c.0.s8 %v529
    %v531 = vlaneseq
    %v532 = vshrl.u32 %v531, 7
    %v533 = vsub.s32 %v530, %v532
    %v534 = vrot.slane %v520, %v533
    %v535 = vcombine.high %v511, 0.0
    %v536 = vcombine.high %v518, 0.0
    %v537 = vcombine.high %v527, 0.0
    %v538 = vcombine.high %v534, 0.0
    %540 = vrot.lane.b32.xlu0 %v467, 16
    %v541 = vpop.permute.xlu0 %540
    %544 = vrot.lane.b32.xlu0 %v450, 32
    %v545 = vpop.permute.xlu0 %544
    %548 = vrot.lane.b32.xlu0 %v468, 48
    %v549 = vpop.permute.xlu0 %548
    %552 = vrot.lane.b32.xlu0 %v459, 64
    %v553 = vpop.permute.xlu0 %552
    %556 = vrot.lane.b32.xlu0 %v469, 80
    %v557 = vpop.permute.xlu0 %556
    %560 = vrot.lane.b32.xlu0 %v466, 96
    %v561 = vpop.permute.xlu0 %560
    %564 = vrot.lane.b32.xlu0 %v470, 112
    %v565 = vpop.permute.xlu0 %564
    %568 = vrot.lane.b32.xlu0 %v535, 16
    %v569 = vpop.permute.xlu0 %568
    %572 = vrot.lane.b32.xlu0 %v518, 32
    %v573 = vpop.permute.xlu0 %572
    %576 = vrot.lane.b32.xlu0 %v536, 48
    %v577 = vpop.permute.xlu0 %576
    %580 = vrot.lane.b32.xlu0 %v527, 64
    %v581 = vpop.permute.xlu0 %580
    %584 = vrot.lane.b32.xlu0 %v537, 80
    %v585 = vpop.permute.xlu0 %584
    %588 = vrot.lane.b32.xlu0 %v534, 96
    %v589 = vpop.permute.xlu0 %588
    %592 = vrot.lane.b32.xlu0 %v538, 112
    %v593 = vpop.permute.xlu0 %592
    %v595 = vsel %vm372, %v443, %v541
    %v596 = vsel %vm374, %v595, %v545
    %v597 = vsel %vm376, %v596, %v549
    %v598 = vsel %vm378, %v597, %v553
    %v599 = vsel %vm380, %v598, %v557
    %v600 = vsel %vm382, %v599, %v561
    %v601 = vsel %vm384, %v600, %v565
    %v602 = vsel %vm372, %v511, %v569
    %v603 = vsel %vm374, %v602, %v573
    %v604 = vsel %vm376, %v603, %v577
    %v605 = vsel %vm378, %v604, %v581
    %v606 = vsel %vm380, %v605, %v585
    %v607 = vsel %vm382, %v606, %v589
    %v608 = vsel %vm384, %v607, %v593
    %609 = vst [vmem:[#allocation4 + $0x10] sm:$0xf] %v601
    %610 = vst [vmem:[#allocation4 + $0x18] sm:$0xf] %v608
    %v611 = vld [vmem:[#allocation2] sm:$0xff]
    %v612 = vld [vmem:[#allocation2 + $0x8] sm:$0xff]
    %v613 = vld [vmem:[#allocation2 + $0x18] sm:$0xff]
    %v614 = vld [vmem:[#allocation2 + $0x20] sm:$0xff]
    %v615 = vld [vmem:[#allocation2 + $0x30] sm:$0xff]
    %v616 = vld [vmem:[#allocation2 + $0x38] sm:$0xff]
    %v617 = vld [vmem:[#allocation2 + $0x48] sm:$0xff]
    %v618 = vld [vmem:[#allocation2 + $0x50] sm:$0xff]
    %627 = vrot.lane.b32.xlu0 %v611, 127
    %v628 = vpop.permute.xlu0 %627
    %629 = vrot.lane.b32.xlu0 %v612, 127
    %v630 = vpop.permute.xlu0 %629
    %631 = vrot.lane.b32.xlu0 %v613, 127
    %v632 = vpop.permute.xlu0 %631
    %633 = vrot.lane.b32.xlu0 %v614, 127
    %v634 = vpop.permute.xlu0 %633
    %635 = vrot.lane.b32.xlu0 %v615, 127
    %v636 = vpop.permute.xlu0 %635
    %637 = vrot.lane.b32.xlu0 %v616, 127
    %v638 = vpop.permute.xlu0 %637
    %639 = vrot.lane.b32.xlu0 %v617, 127
    %v640 = vpop.permute.xlu0 %639
    %641 = vrot.lane.b32.xlu0 %v618, 127
    %v642 = vpop.permute.xlu0 %641
    %v651 = vcombine.low %v628, %v636
    %v652 = vcombine.high %v628, %v636
    %v654 = vunpack.c.l.s4 1983009808
    %v655 = vunpack.c.0.s8 %v654
    %v656 = vlaneseq
    %v657 = vshrl.u32 %v656, 7
    %v658 = vsub.s32 %v655, %v657
    %v659 = vrot.slane %v651, %v658
    %v661 = vunpack.c.l.s4 1983009808
    %v662 = vunpack.c.0.s8 %v661
    %v663 = vlaneseq
    %v664 = vshrl.u32 %v663, 7
    %v665 = vsub.s32 %v662, %v664
    %v666 = vrot.slane %v652, %v665
    %v667 = vcombine.low %v632, %v640
    %v668 = vcombine.high %v632, %v640
    %v670 = vunpack.c.l.s4 1983009808
    %v671 = vunpack.c.0.s8 %v670
    %v672 = vlaneseq
    %v673 = vshrl.u32 %v672, 7
    %v674 = vsub.s32 %v671, %v673
    %v675 = vrot.slane %v667, %v674
    %v677 = vunpack.c.l.s4 1983009808
    %v678 = vunpack.c.0.s8 %v677
    %v679 = vlaneseq
    %v680 = vshrl.u32 %v679, 7
    %v681 = vsub.s32 %v678, %v680
    %v682 = vrot.slane %v668, %v681
    %v683 = vcombine.low %v659, %v675
    %v684 = vcombine.high %v659, %v675
    %v686 = vunpack.c.l.s4 1934713408
    %v687 = vunpack.c.0.s8 %v686
    %v688 = vlaneseq
    %v689 = vshrl.u32 %v688, 7
    %v690 = vsub.s32 %v687, %v689
    %v691 = vrot.slane %v683, %v690
    %v693 = vunpack.c.l.s4 1934713408
    %v694 = vunpack.c.0.s8 %v693
    %v695 = vlaneseq
    %v696 = vshrl.u32 %v695, 7
    %v697 = vsub.s32 %v694, %v696
    %v698 = vrot.slane %v684, %v697
    %v699 = vcombine.low %v666, %v682
    %v700 = vcombine.high %v666, %v682
    %v702 = vunpack.c.l.s4 1934713408
    %v703 = vunpack.c.0.s8 %v702
    %v704 = vlaneseq
    %v705 = vshrl.u32 %v704, 7
    %v706 = vsub.s32 %v703, %v705
    %v707 = vrot.slane %v699, %v706
    %v709 = vunpack.c.l.s4 1934713408
    %v710 = vunpack.c.0.s8 %v709
    %v711 = vlaneseq
    %v712 = vshrl.u32 %v711, 7
    %v713 = vsub.s32 %v710, %v712
    %v714 = vrot.slane %v700, %v713
    %v715 = vcombine.high %v691, 0.0
    %v716 = vcombine.high %v698, 0.0
    %v717 = vcombine.high %v707, 0.0
    %v718 = vcombine.high %v714, 0.0
    %v719 = vcombine.low %v630, %v638
    %v720 = vcombine.high %v630, %v638
    %v722 = vunpack.c.l.s4 1983009808
    %v723 = vunpack.c.0.s8 %v722
    %v724 = vlaneseq
    %v725 = vshrl.u32 %v724, 7
    %v726 = vsub.s32 %v723, %v725
    %v727 = vrot.slane %v719, %v726
    %v729 = vunpack.c.l.s4 1983009808
    %v730 = vunpack.c.0.s8 %v729
    %v731 = vlaneseq
    %v732 = vshrl.u32 %v731, 7
    %v733 = vsub.s32 %v730, %v732
    %v734 = vrot.slane %v720, %v733
    %v735 = vcombine.low %v634, %v642
    %v736 = vcombine.high %v634, %v642
    %v738 = vunpack.c.l.s4 1983009808
    %v739 = vunpack.c.0.s8 %v738
    %v740 = vlaneseq
    %v741 = vshrl.u32 %v740, 7
    %v742 = vsub.s32 %v739, %v741
    %v743 = vrot.slane %v735, %v742
    %v745 = vunpack.c.l.s4 1983009808
    %v746 = vunpack.c.0.s8 %v745
    %v747 = vlaneseq
    %v748 = vshrl.u32 %v747, 7
    %v749 = vsub.s32 %v746, %v748
    %v750 = vrot.slane %v736, %v749
    %v751 = vcombine.low %v727, %v743
    %v752 = vcombine.high %v727, %v743
    %v754 = vunpack.c.l.s4 1934713408
    %v755 = vunpack.c.0.s8 %v754
    %v756 = vlaneseq
    %v757 = vshrl.u32 %v756, 7
    %v758 = vsub.s32 %v755, %v757
    %v759 = vrot.slane %v751, %v758
    %v761 = vunpack.c.l.s4 1934713408
    %v762 = vunpack.c.0.s8 %v761
    %v763 = vlaneseq
    %v764 = vshrl.u32 %v763, 7
    %v765 = vsub.s32 %v762, %v764
    %v766 = vrot.slane %v752, %v765
    %v767 = vcombine.low %v734, %v750
    %v768 = vcombine.high %v734, %v750
    %v770 = vunpack.c.l.s4 1934713408
    %v771 = vunpack.c.0.s8 %v770
    %v772 = vlaneseq
    %v773 = vshrl.u32 %v772, 7
    %v774 = vsub.s32 %v771, %v773
    %v775 = vrot.slane %v767, %v774
    %v777 = vunpack.c.l.s4 1934713408
    %v778 = vunpack.c.0.s8 %v777
    %v779 = vlaneseq
    %v780 = vshrl.u32 %v779, 7
    %v781 = vsub.s32 %v778, %v780
    %v782 = vrot.slane %v768, %v781
    %v783 = vcombine.high %v759, 0.0
    %v784 = vcombine.high %v766, 0.0
    %v785 = vcombine.high %v775, 0.0
    %v786 = vcombine.high %v782, 0.0
    %788 = vrot.lane.b32.xlu0 %v715, 16
    %v789 = vpop.permute.xlu0 %788
    %792 = vrot.lane.b32.xlu0 %v698, 32
    %v793 = vpop.permute.xlu0 %792
    %796 = vrot.lane.b32.xlu0 %v716, 48
    %v797 = vpop.permute.xlu0 %796
    %800 = vrot.lane.b32.xlu0 %v707, 64
    %v801 = vpop.permute.xlu0 %800
    %804 = vrot.lane.b32.xlu0 %v717, 80
    %v805 = vpop.permute.xlu0 %804
    %808 = vrot.lane.b32.xlu0 %v714, 96
    %v809 = vpop.permute.xlu0 %808
    %812 = vrot.lane.b32.xlu0 %v718, 112
    %v813 = vpop.permute.xlu0 %812
    %816 = vrot.lane.b32.xlu0 %v783, 16
    %v817 = vpop.permute.xlu0 %816
    %820 = vrot.lane.b32.xlu0 %v766, 32
    %v821 = vpop.permute.xlu0 %820
    %824 = vrot.lane.b32.xlu0 %v784, 48
    %v825 = vpop.permute.xlu0 %824
    %828 = vrot.lane.b32.xlu0 %v775, 64
    %v829 = vpop.permute.xlu0 %828
    %832 = vrot.lane.b32.xlu0 %v785, 80
    %v833 = vpop.permute.xlu0 %832
    %836 = vrot.lane.b32.xlu0 %v782, 96
    %v837 = vpop.permute.xlu0 %836
    %840 = vrot.lane.b32.xlu0 %v786, 112
    %v841 = vpop.permute.xlu0 %840
    %v843 = vsel %vm372, %v691, %v789
    %v844 = vsel %vm374, %v843, %v793
    %v845 = vsel %vm376, %v844, %v797
    %v846 = vsel %vm378, %v845, %v801
    %v847 = vsel %vm380, %v846, %v805
    %v848 = vsel %vm382, %v847, %v809
    %v849 = vsel %vm384, %v848, %v813
    %v850 = vsel %vm372, %v759, %v817
    %v851 = vsel %vm374, %v850, %v821
    %v852 = vsel %vm376, %v851, %v825
    %v853 = vsel %vm378, %v852, %v829
    %v854 = vsel %vm380, %v853, %v833
    %v855 = vsel %vm382, %v854, %v837
    %v856 = vsel %vm384, %v855, %v841
    %v859 = vrot.slane %v849, 4
    %v860 = vrot.slane %v856, 4
    %863 = vst [vmem:[#allocation4] sm:$0xf0] %v859
    %864 = vst [vmem:[#allocation4 + $0x8] sm:$0xf0] %v860
    %v865 = vld [vmem:[%s163] sm:$0xff]
    %v866 = vld [vmem:[%s163 + $0x8] sm:$0xff]
    %v867 = vld [vmem:[%s163 + $0x18] sm:$0xff]
    %v868 = vld [vmem:[%s163 + $0x20] sm:$0xff]
    %v869 = vld [vmem:[%s163 + $0x30] sm:$0xff]
    %v870 = vld [vmem:[%s163 + $0x38] sm:$0xff]
    %v871 = vld [vmem:[%s163 + $0x48] sm:$0xff]
    %v872 = vld [vmem:[%s163 + $0x50] sm:$0xff]
    %881 = vrot.lane.b32.xlu0 %v865, 127
    %v882 = vpop.permute.xlu0 %881
    %883 = vrot.lane.b32.xlu0 %v866, 127
    %v884 = vpop.permute.xlu0 %883
    %885 = vrot.lane.b32.xlu0 %v867, 127
    %v886 = vpop.permute.xlu0 %885
    %887 = vrot.lane.b32.xlu0 %v868, 127
    %v888 = vpop.permute.xlu0 %887
    %889 = vrot.lane.b32.xlu0 %v869, 127
    %v890 = vpop.permute.xlu0 %889
    %891 = vrot.lane.b32.xlu0 %v870, 127
    %v892 = vpop.permute.xlu0 %891
    %893 = vrot.lane.b32.xlu0 %v871, 127
    %v894 = vpop.permute.xlu0 %893
    %895 = vrot.lane.b32.xlu0 %v872, 127
    %v896 = vpop.permute.xlu0 %895
    %v905 = vcombine.low %v882, %v890
    %v906 = vcombine.high %v882, %v890
    %v908 = vunpack.c.l.s4 1983009808
    %v909 = vunpack.c.0.s8 %v908
    %v910 = vlaneseq
    %v911 = vshrl.u32 %v910, 7
    %v912 = vsub.s32 %v909, %v911
    %v913 = vrot.slane %v905, %v912
    %v915 = vunpack.c.l.s4 1983009808
    %v916 = vunpack.c.0.s8 %v915
    %v917 = vlaneseq
    %v918 = vshrl.u32 %v917, 7
    %v919 = vsub.s32 %v916, %v918
    %v920 = vrot.slane %v906, %v919
    %v921 = vcombine.low %v886, %v894
    %v922 = vcombine.high %v886, %v894
    %v924 = vunpack.c.l.s4 1983009808
    %v925 = vunpack.c.0.s8 %v924
    %v926 = vlaneseq
    %v927 = vshrl.u32 %v926, 7
    %v928 = vsub.s32 %v925, %v927
    %v929 = vrot.slane %v921, %v928
    %v931 = vunpack.c.l.s4 1983009808
    %v932 = vunpack.c.0.s8 %v931
    %v933 = vlaneseq
    %v934 = vshrl.u32 %v933, 7
    %v935 = vsub.s32 %v932, %v934
    %v936 = vrot.slane %v922, %v935
    %v937 = vcombine.low %v913, %v929
    %v938 = vcombine.high %v913, %v929
    %v940 = vunpack.c.l.s4 1934713408
    %v941 = vunpack.c.0.s8 %v940
    %v942 = vlaneseq
    %v943 = vshrl.u32 %v942, 7
    %v944 = vsub.s32 %v941, %v943
    %v945 = vrot.slane %v937, %v944
    %v947 = vunpack.c.l.s4 1934713408
    %v948 = vunpack.c.0.s8 %v947
    %v949 = vlaneseq
    %v950 = vshrl.u32 %v949, 7
    %v951 = vsub.s32 %v948, %v950
    %v952 = vrot.slane %v938, %v951
    %v953 = vcombine.low %v920, %v936
    %v954 = vcombine.high %v920, %v936
    %v956 = vunpack.c.l.s4 1934713408
    %v957 = vunpack.c.0.s8 %v956
    %v958 = vlaneseq
    %v959 = vshrl.u32 %v958, 7
    %v960 = vsub.s32 %v957, %v959
    %v961 = vrot.slane %v953, %v960
    %v963 = vunpack.c.l.s4 1934713408
    %v964 = vunpack.c.0.s8 %v963
    %v965 = vlaneseq
    %v966 = vshrl.u32 %v965, 7
    %v967 = vsub.s32 %v964, %v966
    %v968 = vrot.slane %v954, %v967
    %v969 = vcombine.high %v945, 0.0
    %v970 = vcombine.high %v952, 0.0
    %v971 = vcombine.high %v961, 0.0
    %v972 = vcombine.high %v968, 0.0
    %v973 = vcombine.low %v884, %v892
    %v974 = vcombine.high %v884, %v892
    %v976 = vunpack.c.l.s4 1983009808
    %v977 = vunpack.c.0.s8 %v976
    %v978 = vlaneseq
    %v979 = vshrl.u32 %v978, 7
    %v980 = vsub.s32 %v977, %v979
    %v981 = vrot.slane %v973, %v980
    %v983 = vunpack.c.l.s4 1983009808
    %v984 = vunpack.c.0.s8 %v983
    %v985 = vlaneseq
    %v986 = vshrl.u32 %v985, 7
    %v987 = vsub.s32 %v984, %v986
    %v988 = vrot.slane %v974, %v987
    %v989 = vcombine.low %v888, %v896
    %v990 = vcombine.high %v888, %v896
    %v992 = vunpack.c.l.s4 1983009808
    %v993 = vunpack.c.0.s8 %v992
    %v994 = vlaneseq
    %v995 = vshrl.u32 %v994, 7
    %v996 = vsub.s32 %v993, %v995
    %v997 = vrot.slane %v989, %v996
    %v999 = vunpack.c.l.s4 1983009808
    %v1000 = vunpack.c.0.s8 %v999
    %v1001 = vlaneseq
    %v1002 = vshrl.u32 %v1001, 7
    %v1003 = vsub.s32 %v1000, %v1002
    %v1004 = vrot.slane %v990, %v1003
    %v1005 = vcombine.low %v981, %v997
    %v1006 = vcombine.high %v981, %v997
    %v1008 = vunpack.c.l.s4 1934713408
    %v1009 = vunpack.c.0.s8 %v1008
    %v1010 = vlaneseq
    %v1011 = vshrl.u32 %v1010, 7
    %v1012 = vsub.s32 %v1009, %v1011
    %v1013 = vrot.slane %v1005, %v1012
    %v1015 = vunpack.c.l.s4 1934713408
    %v1016 = vunpack.c.0.s8 %v1015
    %v1017 = vlaneseq
    %v1018 = vshrl.u32 %v1017, 7
    %v1019 = vsub.s32 %v1016, %v1018
    %v1020 = vrot.slane %v1006, %v1019
    %v1021 = vcombine.low %v988, %v1004
    %v1022 = vcombine.high %v988, %v1004
    %v1024 = vunpack.c.l.s4 1934713408
    %v1025 = vunpack.c.0.s8 %v1024
    %v1026 = vlaneseq
    %v1027 = vshrl.u32 %v1026, 7
    %v1028 = vsub.s32 %v1025, %v1027
    %v1029 = vrot.slane %v1021, %v1028
    %v1031 = vunpack.c.l.s4 1934713408
    %v1032 = vunpack.c.0.s8 %v1031
    %v1033 = vlaneseq
    %v1034 = vshrl.u32 %v1033, 7
    %v1035 = vsub.s32 %v1032, %v1034
    %v1036 = vrot.slane %v1022, %v1035
    %v1037 = vcombine.high %v1013, 0.0
    %v1038 = vcombine.high %v1020, 0.0
    %v1039 = vcombine.high %v1029, 0.0
    %v1040 = vcombine.high %v1036, 0.0
    %1042 = vrot.lane.b32.xlu0 %v969, 16
    %v1043 = vpop.permute.xlu0 %1042
    %1046 = vrot.lane.b32.xlu0 %v952, 32
    %v1047 = vpop.permute.xlu0 %1046
    %1050 = vrot.lane.b32.xlu0 %v970, 48
    %v1051 = vpop.permute.xlu0 %1050
    %1054 = vrot.lane.b32.xlu0 %v961, 64
    %v1055 = vpop.permute.xlu0 %1054
    %1058 = vrot.lane.b32.xlu0 %v971, 80
    %v1059 = vpop.permute.xlu0 %1058
    %1062 = vrot.lane.b32.xlu0 %v968, 96
    %v1063 = vpop.permute.xlu0 %1062
    %1066 = vrot.lane.b32.xlu0 %v972, 112
    %v1067 = vpop.permute.xlu0 %1066
    %1070 = vrot.lane.b32.xlu0 %v1037, 16
    %v1071 = vpop.permute.xlu0 %1070
    %1074 = vrot.lane.b32.xlu0 %v1020, 32
    %v1075 = vpop.permute.xlu0 %1074
    %1078 = vrot.lane.b32.xlu0 %v1038, 48
    %v1079 = vpop.permute.xlu0 %1078
    %1082 = vrot.lane.b32.xlu0 %v1029, 64
    %v1083 = vpop.permute.xlu0 %1082
    %1086 = vrot.lane.b32.xlu0 %v1039, 80
    %v1087 = vpop.permute.xlu0 %1086
    %1090 = vrot.lane.b32.xlu0 %v1036, 96
    %v1091 = vpop.permute.xlu0 %1090
    %1094 = vrot.lane.b32.xlu0 %v1040, 112
    %v1095 = vpop.permute.xlu0 %1094
    %v1097 = vsel %vm372, %v945, %v1043
    %v1098 = vsel %vm374, %v1097, %v1047
    %v1099 = vsel %vm376, %v1098, %v1051
    %v1100 = vsel %vm378, %v1099, %v1055
    %v1101 = vsel %vm380, %v1100, %v1059
    %v1102 = vsel %vm382, %v1101, %v1063
    %v1103 = vsel %vm384, %v1102, %v1067
    %v1104 = vsel %vm372, %v1013, %v1071
    %v1105 = vsel %vm374, %v1104, %v1075
    %v1106 = vsel %vm376, %v1105, %v1079
    %v1107 = vsel %vm378, %v1106, %v1083
    %v1108 = vsel %vm380, %v1107, %v1087
    %v1109 = vsel %vm382, %v1108, %v1091
    %v1110 = vsel %vm384, %v1109, %v1095
    %v1113 = vrot.slane %v1103, 4
    %v1114 = vrot.slane %v1110, 4
    %1117 = vst [vmem:[#allocation4 + $0x10] sm:$0xf0] %v1113
    %1118 = vst [vmem:[#allocation4 + $0x18] sm:$0xf0] %v1114
    %v1119 = vld [vmem:[#allocation2] sm:$0xff]
    %v1120 = vld [vmem:[#allocation2 + $0x8] sm:$0xff]
    %v1121 = vld [vmem:[#allocation2 + $0x18] sm:$0xff]
    %v1122 = vld [vmem:[#allocation2 + $0x20] sm:$0xff]
    %v1123 = vld [vmem:[#allocation2 + $0x30] sm:$0xff]
    %v1124 = vld [vmem:[#allocation2 + $0x38] sm:$0xff]
    %v1125 = vld [vmem:[#allocation2 + $0x48] sm:$0xff]
    %v1126 = vld [vmem:[#allocation2 + $0x50] sm:$0xff]
    %1135 = vrot.lane.b32.xlu0 %v1119, 126
    %v1136 = vpop.permute.xlu0 %1135
    %1137 = vrot.lane.b32.xlu0 %v1120, 126
    %v1138 = vpop.permute.xlu0 %1137
    %1139 = vrot.lane.b32.xlu0 %v1121, 126
    %v1140 = vpop.permute.xlu0 %1139
    %1141 = vrot.lane.b32.xlu0 %v1122, 126
    %v1142 = vpop.permute.xlu0 %1141
    %1143 = vrot.lane.b32.xlu0 %v1123, 126
    %v1144 = vpop.permute.xlu0 %1143
    %1145 = vrot.lane.b32.xlu0 %v1124, 126
    %v1146 = vpop.permute.xlu0 %1145
    %1147 = vrot.lane.b32.xlu0 %v1125, 126
    %v1148 = vpop.permute.xlu0 %1147
    %1149 = vrot.lane.b32.xlu0 %v1126, 126
    %v1150 = vpop.permute.xlu0 %1149
    %v1159 = vcombine.low %v1136, %v1144
    %v1160 = vcombine.high %v1136, %v1144
    %v1162 = vunpack.c.l.s4 1983009808
    %v1163 = vunpack.c.0.s8 %v1162
    %v1164 = vlaneseq
    %v1165 = vshrl.u32 %v1164, 7
    %v1166 = vsub.s32 %v1163, %v1165
    %v1167 = vrot.slane %v1159, %v1166
    %v1169 = vunpack.c.l.s4 1983009808
    %v1170 = vunpack.c.0.s8 %v1169
    %v1171 = vlaneseq
    %v1172 = vshrl.u32 %v1171, 7
    %v1173 = vsub.s32 %v1170, %v1172
    %v1174 = vrot.slane %v1160, %v1173
    %v1175 = vcombine.low %v1140, %v1148
    %v1176 = vcombine.high %v1140, %v1148
    %v1178 = vunpack.c.l.s4 1983009808
    %v1179 = vunpack.c.0.s8 %v1178
    %v1180 = vlaneseq
    %v1181 = vshrl.u32 %v1180, 7
    %v1182 = vsub.s32 %v1179, %v1181
    %v1183 = vrot.slane %v1175, %v1182
    %v1185 = vunpack.c.l.s4 1983009808
    %v1186 = vunpack.c.0.s8 %v1185
    %v1187 = vlaneseq
    %v1188 = vshrl.u32 %v1187, 7
    %v1189 = vsub.s32 %v1186, %v1188
    %v1190 = vrot.slane %v1176, %v1189
    %v1191 = vcombine.low %v1167, %v1183
    %v1192 = vcombine.high %v1167, %v1183
    %v1194 = vunpack.c.l.s4 1934713408
    %v1195 = vunpack.c.0.s8 %v1194
    %v1196 = vlaneseq
    %v1197 = vshrl.u32 %v1196, 7
    %v1198 = vsub.s32 %v1195, %v1197
    %v1199 = vrot.slane %v1191, %v1198
    %v1201 = vunpack.c.l.s4 1934713408
    %v1202 = vunpack.c.0.s8 %v1201
    %v1203 = vlaneseq
    %v1204 = vshrl.u32 %v1203, 7
    %v1205 = vsub.s32 %v1202, %v1204
    %v1206 = vrot.slane %v1192, %v1205
    %v1207 = vcombine.low %v1174, %v1190
    %v1208 = vcombine.high %v1174, %v1190
    %v1210 = vunpack.c.l.s4 1934713408
    %v1211 = vunpack.c.0.s8 %v1210
    %v1212 = vlaneseq
    %v1213 = vshrl.u32 %v1212, 7
    %v1214 = vsub.s32 %v1211, %v1213
    %v1215 = vrot.slane %v1207, %v1214
    %v1217 = vunpack.c.l.s4 1934713408
    %v1218 = vunpack.c.0.s8 %v1217
    %v1219 = vlaneseq
    %v1220 = vshrl.u32 %v1219, 7
    %v1221 = vsub.s32 %v1218, %v1220
    %v1222 = vrot.slane %v1208, %v1221
    %v1223 = vcombine.high %v1199, 0.0
    %v1224 = vcombine.high %v1206, 0.0
    %v1225 = vcombine.high %v1215, 0.0
    %v1226 = vcombine.high %v1222, 0.0
    %v1227 = vcombine.low %v1138, %v1146
    %v1228 = vcombine.high %v1138, %v1146
    %v1230 = vunpack.c.l.s4 1983009808
    %v1231 = vunpack.c.0.s8 %v1230
    %v1232 = vlaneseq
    %v1233 = vshrl.u32 %v1232, 7
    %v1234 = vsub.s32 %v1231, %v1233
    %v1235 = vrot.slane %v1227, %v1234
    %v1237 = vunpack.c.l.s4 1983009808
    %v1238 = vunpack.c.0.s8 %v1237
    %v1239 = vlaneseq
    %v1240 = vshrl.u32 %v1239, 7
    %v1241 = vsub.s32 %v1238, %v1240
    %v1242 = vrot.slane %v1228, %v1241
    %v1243 = vcombine.low %v1142, %v1150
    %v1244 = vcombine.high %v1142, %v1150
    %v1246 = vunpack.c.l.s4 1983009808
    %v1247 = vunpack.c.0.s8 %v1246
    %v1248 = vlaneseq
    %v1249 = vshrl.u32 %v1248, 7
    %v1250 = vsub.s32 %v1247, %v1249
    %v1251 = vrot.slane %v1243, %v1250
    %v1253 = vunpack.c.l.s4 1983009808
    %v1254 = vunpack.c.0.s8 %v1253
    %v1255 = vlaneseq
    %v1256 = vshrl.u32 %v1255, 7
    %v1257 = vsub.s32 %v1254, %v1256
    %v1258 = vrot.slane %v1244, %v1257
    %v1259 = vcombine.low %v1235, %v1251
    %v1260 = vcombine.high %v1235, %v1251
    %v1262 = vunpack.c.l.s4 1934713408
    %v1263 = vunpack.c.0.s8 %v1262
    %v1264 = vlaneseq
    %v1265 = vshrl.u32 %v1264, 7
    %v1266 = vsub.s32 %v1263, %v1265
    %v1267 = vrot.slane %v1259, %v1266
    %v1269 = vunpack.c.l.s4 1934713408
    %v1270 = vunpack.c.0.s8 %v1269
    %v1271 = vlaneseq
    %v1272 = vshrl.u32 %v1271, 7
    %v1273 = vsub.s32 %v1270, %v1272
    %v1274 = vrot.slane %v1260, %v1273
    %v1275 = vcombine.low %v1242, %v1258
    %v1276 = vcombine.high %v1242, %v1258
    %v1278 = vunpack.c.l.s4 1934713408
    %v1279 = vunpack.c.0.s8 %v1278
    %v1280 = vlaneseq
    %v1281 = vshrl.u32 %v1280, 7
    %v1282 = vsub.s32 %v1279, %v1281
    %v1283 = vrot.slane %v1275, %v1282
    %v1285 = vunpack.c.l.s4 1934713408
    %v1286 = vunpack.c.0.s8 %v1285
    %v1287 = vlaneseq
    %v1288 = vshrl.u32 %v1287, 7
    %v1289 = vsub.s32 %v1286, %v1288
    %v1290 = vrot.slane %v1276, %v1289
    %v1291 = vcombine.high %v1267, 0.0
    %v1292 = vcombine.high %v1274, 0.0
    %v1293 = vcombine.high %v1283, 0.0
    %v1294 = vcombine.high %v1290, 0.0
    %1296 = vrot.lane.b32.xlu0 %v1223, 16
    %v1297 = vpop.permute.xlu0 %1296
    %1300 = vrot.lane.b32.xlu0 %v1206, 32
    %v1301 = vpop.permute.xlu0 %1300
    %1304 = vrot.lane.b32.xlu0 %v1224, 48
    %v1305 = vpop.permute.xlu0 %1304
    %1308 = vrot.lane.b32.xlu0 %v1215, 64
    %v1309 = vpop.permute.xlu0 %1308
    %1312 = vrot.lane.b32.xlu0 %v1225, 80
    %v1313 = vpop.permute.xlu0 %1312
    %1316 = vrot.lane.b32.xlu0 %v1222, 96
    %v1317 = vpop.permute.xlu0 %1316
    %1320 = vrot.lane.b32.xlu0 %v1226, 112
    %v1321 = vpop.permute.xlu0 %1320
    %1324 = vrot.lane.b32.xlu0 %v1291, 16
    %v1325 = vpop.permute.xlu0 %1324
    %1328 = vrot.lane.b32.xlu0 %v1274, 32
    %v1329 = vpop.permute.xlu0 %1328
    %1332 = vrot.lane.b32.xlu0 %v1292, 48
    %v1333 = vpop.permute.xlu0 %1332
    %1336 = vrot.lane.b32.xlu0 %v1283, 64
    %v1337 = vpop.permute.xlu0 %1336
    %1340 = vrot.lane.b32.xlu0 %v1293, 80
    %v1341 = vpop.permute.xlu0 %1340
    %1344 = vrot.lane.b32.xlu0 %v1290, 96
    %v1345 = vpop.permute.xlu0 %1344
    %1348 = vrot.lane.b32.xlu0 %v1294, 112
    %v1349 = vpop.permute.xlu0 %1348
    %v1351 = vsel %vm372, %v1199, %v1297
    %v1352 = vsel %vm374, %v1351, %v1301
    %v1353 = vsel %vm376, %v1352, %v1305
    %v1354 = vsel %vm378, %v1353, %v1309
    %v1355 = vsel %vm380, %v1354, %v1313
    %v1356 = vsel %vm382, %v1355, %v1317
    %v1357 = vsel %vm384, %v1356, %v1321
    %v1358 = vsel %vm372, %v1267, %v1325
    %v1359 = vsel %vm374, %v1358, %v1329
    %v1360 = vsel %vm376, %v1359, %v1333
    %v1361 = vsel %vm378, %v1360, %v1337
    %v1362 = vsel %vm380, %v1361, %v1341
    %v1363 = vsel %vm382, %v1362, %v1345
    %v1364 = vsel %vm384, %v1363, %v1349
    %1365 = vst [vmem:[#allocation4 + $0x20] sm:$0xf] %v1357
    %1366 = vst [vmem:[#allocation4 + $0x28] sm:$0xf] %v1364
    %v1367 = vld [vmem:[%s163] sm:$0xff]
    %v1368 = vld [vmem:[%s163 + $0x8] sm:$0xff]
    %v1369 = vld [vmem:[%s163 + $0x18] sm:$0xff]
    %v1370 = vld [vmem:[%s163 + $0x20] sm:$0xff]
    %v1371 = vld [vmem:[%s163 + $0x30] sm:$0xff]
    %v1372 = vld [vmem:[%s163 + $0x38] sm:$0xff]
    %v1373 = vld [vmem:[%s163 + $0x48] sm:$0xff]
    %v1374 = vld [vmem:[%s163 + $0x50] sm:$0xff]
    %1383 = vrot.lane.b32.xlu0 %v1367, 126
    %v1384 = vpop.permute.xlu0 %1383
    %1385 = vrot.lane.b32.xlu0 %v1368, 126
    %v1386 = vpop.permute.xlu0 %1385
    %1387 = vrot.lane.b32.xlu0 %v1369, 126
    %v1388 = vpop.permute.xlu0 %1387
    %1389 = vrot.lane.b32.xlu0 %v1370, 126
    %v1390 = vpop.permute.xlu0 %1389
    %1391 = vrot.lane.b32.xlu0 %v1371, 126
    %v1392 = vpop.permute.xlu0 %1391
    %1393 = vrot.lane.b32.xlu0 %v1372, 126
    %v1394 = vpop.permute.xlu0 %1393
    %1395 = vrot.lane.b32.xlu0 %v1373, 126
    %v1396 = vpop.permute.xlu0 %1395
    %1397 = vrot.lane.b32.xlu0 %v1374, 126
    %v1398 = vpop.permute.xlu0 %1397
    %v1407 = vcombine.low %v1384, %v1392
    %v1408 = vcombine.high %v1384, %v1392
    %v1410 = vunpack.c.l.s4 1983009808
    %v1411 = vunpack.c.0.s8 %v1410
    %v1412 = vlaneseq
    %v1413 = vshrl.u32 %v1412, 7
    %v1414 = vsub.s32 %v1411, %v1413
    %v1415 = vrot.slane %v1407, %v1414
    %v1417 = vunpack.c.l.s4 1983009808
    %v1418 = vunpack.c.0.s8 %v1417
    %v1419 = vlaneseq
    %v1420 = vshrl.u32 %v1419, 7
    %v1421 = vsub.s32 %v1418, %v1420
    %v1422 = vrot.slane %v1408, %v1421
    %v1423 = vcombine.low %v1388, %v1396
    %v1424 = vcombine.high %v1388, %v1396
    %v1426 = vunpack.c.l.s4 1983009808
    %v1427 = vunpack.c.0.s8 %v1426
    %v1428 = vlaneseq
    %v1429 = vshrl.u32 %v1428, 7
    %v1430 = vsub.s32 %v1427, %v1429
    %v1431 = vrot.slane %v1423, %v1430
    %v1433 = vunpack.c.l.s4 1983009808
    %v1434 = vunpack.c.0.s8 %v1433
    %v1435 = vlaneseq
    %v1436 = vshrl.u32 %v1435, 7
    %v1437 = vsub.s32 %v1434, %v1436
    %v1438 = vrot.slane %v1424, %v1437
    %v1439 = vcombine.low %v1415, %v1431
    %v1440 = vcombine.high %v1415, %v1431
    %v1442 = vunpack.c.l.s4 1934713408
    %v1443 = vunpack.c.0.s8 %v1442
    %v1444 = vlaneseq
    %v1445 = vshrl.u32 %v1444, 7
    %v1446 = vsub.s32 %v1443, %v1445
    %v1447 = vrot.slane %v1439, %v1446
    %v1449 = vunpack.c.l.s4 1934713408
    %v1450 = vunpack.c.0.s8 %v1449
    %v1451 = vlaneseq
    %v1452 = vshrl.u32 %v1451, 7
    %v1453 = vsub.s32 %v1450, %v1452
    %v1454 = vrot.slane %v1440, %v1453
    %v1455 = vcombine.low %v1422, %v1438
    %v1456 = vcombine.high %v1422, %v1438
    %v1458 = vunpack.c.l.s4 1934713408
    %v1459 = vunpack.c.0.s8 %v1458
    %v1460 = vlaneseq
    %v1461 = vshrl.u32 %v1460, 7
    %v1462 = vsub.s32 %v1459, %v1461
    %v1463 = vrot.slane %v1455, %v1462
    %v1465 = vunpack.c.l.s4 1934713408
    %v1466 = vunpack.c.0.s8 %v1465
    %v1467 = vlaneseq
    %v1468 = vshrl.u32 %v1467, 7
    %v1469 = vsub.s32 %v1466, %v1468
    %v1470 = vrot.slane %v1456, %v1469
    %v1471 = vcombine.high %v1447, 0.0
    %v1472 = vcombine.high %v1454, 0.0
    %v1473 = vcombine.high %v1463, 0.0
    %v1474 = vcombine.high %v1470, 0.0
    %v1475 = vcombine.low %v1386, %v1394
    %v1476 = vcombine.high %v1386, %v1394
    %v1478 = vunpack.c.l.s4 1983009808
    %v1479 = vunpack.c.0.s8 %v1478
    %v1480 = vlaneseq
    %v1481 = vshrl.u32 %v1480, 7
    %v1482 = vsub.s32 %v1479, %v1481
    %v1483 = vrot.slane %v1475, %v1482
    %v1485 = vunpack.c.l.s4 1983009808
    %v1486 = vunpack.c.0.s8 %v1485
    %v1487 = vlaneseq
    %v1488 = vshrl.u32 %v1487, 7
    %v1489 = vsub.s32 %v1486, %v1488
    %v1490 = vrot.slane %v1476, %v1489
    %v1491 = vcombine.low %v1390, %v1398
    %v1492 = vcombine.high %v1390, %v1398
    %v1494 = vunpack.c.l.s4 1983009808
    %v1495 = vunpack.c.0.s8 %v1494
    %v1496 = vlaneseq
    %v1497 = vshrl.u32 %v1496, 7
    %v1498 = vsub.s32 %v1495, %v1497
    %v1499 = vrot.slane %v1491, %v1498
    %v1501 = vunpack.c.l.s4 1983009808
    %v1502 = vunpack.c.0.s8 %v1501
    %v1503 = vlaneseq
    %v1504 = vshrl.u32 %v1503, 7
    %v1505 = vsub.s32 %v1502, %v1504
    %v1506 = vrot.slane %v1492, %v1505
    %v1507 = vcombine.low %v1483, %v1499
    %v1508 = vcombine.high %v1483, %v1499
    %v1510 = vunpack.c.l.s4 1934713408
    %v1511 = vunpack.c.0.s8 %v1510
    %v1512 = vlaneseq
    %v1513 = vshrl.u32 %v1512, 7
    %v1514 = vsub.s32 %v1511, %v1513
    %v1515 = vrot.slane %v1507, %v1514
    %v1517 = vunpack.c.l.s4 1934713408
    %v1518 = vunpack.c.0.s8 %v1517
    %v1519 = vlaneseq
    %v1520 = vshrl.u32 %v1519, 7
    %v1521 = vsub.s32 %v1518, %v1520
    %v1522 = vrot.slane %v1508, %v1521
    %v1523 = vcombine.low %v1490, %v1506
    %v1524 = vcombine.high %v1490, %v1506
    %v1526 = vunpack.c.l.s4 1934713408
    %v1527 = vunpack.c.0.s8 %v1526
    %v1528 = vlaneseq
    %v1529 = vshrl.u32 %v1528, 7
    %v1530 = vsub.s32 %v1527, %v1529
    %v1531 = vrot.slane %v1523, %v1530
    %v1533 = vunpack.c.l.s4 1934713408
    %v1534 = vunpack.c.0.s8 %v1533
    %v1535 = vlaneseq
    %v1536 = vshrl.u32 %v1535, 7
    %v1537 = vsub.s32 %v1534, %v1536
    %v1538 = vrot.slane %v1524, %v1537
    %v1539 = vcombine.high %v1515, 0.0
    %v1540 = vcombine.high %v1522, 0.0
    %v1541 = vcombine.high %v1531, 0.0
    %v1542 = vcombine.high %v1538, 0.0
    %1544 = vrot.lane.b32.xlu0 %v1471, 16
    %v1545 = vpop.permute.xlu0 %1544
    %1548 = vrot.lane.b32.xlu0 %v1454, 32
    %v1549 = vpop.permute.xlu0 %1548
    %1552 = vrot.lane.b32.xlu0 %v1472, 48
    %v1553 = vpop.permute.xlu0 %1552
    %1556 = vrot.lane.b32.xlu0 %v1463, 64
    %v1557 = vpop.permute.xlu0 %1556
    %1560 = vrot.lane.b32.xlu0 %v1473, 80
    %v1561 = vpop.permute.xlu0 %1560
    %1564 = vrot.lane.b32.xlu0 %v1470, 96
    %v1565 = vpop.permute.xlu0 %1564
    %1568 = vrot.lane.b32.xlu0 %v1474, 112
    %v1569 = vpop.permute.xlu0 %1568
    %1572 = vrot.lane.b32.xlu0 %v1539, 16
    %v1573 = vpop.permute.xlu0 %1572
    %1576 = vrot.lane.b32.xlu0 %v1522, 32
    %v1577 = vpop.permute.xlu0 %1576
    %1580 = vrot.lane.b32.xlu0 %v1540, 48
    %v1581 = vpop.permute.xlu0 %1580
    %1584 = vrot.lane.b32.xlu0 %v1531, 64
    %v1585 = vpop.permute.xlu0 %1584
    %1588 = vrot.lane.b32.xlu0 %v1541, 80
    %v1589 = vpop.permute.xlu0 %1588
    %1592 = vrot.lane.b32.xlu0 %v1538, 96
    %v1593 = vpop.permute.xlu0 %1592
    %1596 = vrot.lane.b32.xlu0 %v1542, 112
    %v1597 = vpop.permute.xlu0 %1596
    %v1599 = vsel %vm372, %v1447, %v1545
    %v1600 = vsel %vm374, %v1599, %v1549
    %v1601 = vsel %vm376, %v1600, %v1553
    %v1602 = vsel %vm378, %v1601, %v1557
    %v1603 = vsel %vm380, %v1602, %v1561
    %v1604 = vsel %vm382, %v1603, %v1565
    %v1605 = vsel %vm384, %v1604, %v1569
    %v1606 = vsel %vm372, %v1515, %v1573
    %v1607 = vsel %vm374, %v1606, %v1577
    %v1608 = vsel %vm376, %v1607, %v1581
    %v1609 = vsel %vm378, %v1608, %v1585
    %v1610 = vsel %vm380, %v1609, %v1589
    %v1611 = vsel %vm382, %v1610, %v1593
    %v1612 = vsel %vm384, %v1611, %v1597
    %1613 = vst [vmem:[#allocation4 + $0x30] sm:$0xf] %v1605
    %1614 = vst [vmem:[#allocation4 + $0x38] sm:$0xf] %v1612
    %v1615 = vld [vmem:[#allocation2 + $0x1] sm:$0xff]
    %v1616 = vld [vmem:[#allocation2 + $0x9] sm:$0xff]
    %v1617 = vld [vmem:[#allocation2 + $0x19] sm:$0xff]
    %v1618 = vld [vmem:[#allocation2 + $0x21] sm:$0xff]
    %v1619 = vld [vmem:[#allocation2 + $0x31] sm:$0xff]
    %v1620 = vld [vmem:[#allocation2 + $0x39] sm:$0xff]
    %v1621 = vld [vmem:[#allocation2 + $0x49] sm:$0xff]
    %v1622 = vld [vmem:[#allocation2 + $0x51] sm:$0xff]
    %v1623 = vcombine.low %v1615, %v1619
    %v1624 = vcombine.high %v1615, %v1619
    %v1626 = vunpack.c.l.s4 1983009808
    %v1627 = vunpack.c.0.s8 %v1626
    %v1628 = vlaneseq
    %v1629 = vshrl.u32 %v1628, 7
    %v1630 = vsub.s32 %v1627, %v1629
    %v1631 = vrot.slane %v1623, %v1630
    %v1633 = vunpack.c.l.s4 1983009808
    %v1634 = vunpack.c.0.s8 %v1633
    %v1635 = vlaneseq
    %v1636 = vshrl.u32 %v1635, 7
    %v1637 = vsub.s32 %v1634, %v1636
    %v1638 = vrot.slane %v1624, %v1637
    %v1639 = vcombine.low %v1617, %v1621
    %v1640 = vcombine.high %v1617, %v1621
    %v1642 = vunpack.c.l.s4 1983009808
    %v1643 = vunpack.c.0.s8 %v1642
    %v1644 = vlaneseq
    %v1645 = vshrl.u32 %v1644, 7
    %v1646 = vsub.s32 %v1643, %v1645
    %v1647 = vrot.slane %v1639, %v1646
    %v1649 = vunpack.c.l.s4 1983009808
    %v1650 = vunpack.c.0.s8 %v1649
    %v1651 = vlaneseq
    %v1652 = vshrl.u32 %v1651, 7
    %v1653 = vsub.s32 %v1650, %v1652
    %v1654 = vrot.slane %v1640, %v1653
    %v1655 = vcombine.low %v1631, %v1647
    %v1656 = vcombine.high %v1631, %v1647
    %v1658 = vunpack.c.l.s4 1934713408
    %v1659 = vunpack.c.0.s8 %v1658
    %v1660 = vlaneseq
    %v1661 = vshrl.u32 %v1660, 7
    %v1662 = vsub.s32 %v1659, %v1661
    %v1663 = vrot.slane %v1655, %v1662
    %v1665 = vunpack.c.l.s4 1934713408
    %v1666 = vunpack.c.0.s8 %v1665
    %v1667 = vlaneseq
    %v1668 = vshrl.u32 %v1667, 7
    %v1669 = vsub.s32 %v1666, %v1668
    %v1670 = vrot.slane %v1656, %v1669
    %v1671 = vcombine.low %v1638, %v1654
    %v1672 = vcombine.high %v1638, %v1654
    %v1674 = vunpack.c.l.s4 1934713408
    %v1675 = vunpack.c.0.s8 %v1674
    %v1676 = vlaneseq
    %v1677 = vshrl.u32 %v1676, 7
    %v1678 = vsub.s32 %v1675, %v1677
    %v1679 = vrot.slane %v1671, %v1678
    %v1681 = vunpack.c.l.s4 1934713408
    %v1682 = vunpack.c.0.s8 %v1681
    %v1683 = vlaneseq
    %v1684 = vshrl.u32 %v1683, 7
    %v1685 = vsub.s32 %v1682, %v1684
    %v1686 = vrot.slane %v1672, %v1685
    %v1687 = vcombine.high %v1663, 0.0
    %v1688 = vcombine.high %v1670, 0.0
    %v1689 = vcombine.high %v1679, 0.0
    %v1690 = vcombine.high %v1686, 0.0
    %v1691 = vcombine.low %v1616, %v1620
    %v1692 = vcombine.high %v1616, %v1620
    %v1694 = vunpack.c.l.s4 1983009808
    %v1695 = vunpack.c.0.s8 %v1694
    %v1696 = vlaneseq
    %v1697 = vshrl.u32 %v1696, 7
    %v1698 = vsub.s32 %v1695, %v1697
    %v1699 = vrot.slane %v1691, %v1698
    %v1701 = vunpack.c.l.s4 1983009808
    %v1702 = vunpack.c.0.s8 %v1701
    %v1703 = vlaneseq
    %v1704 = vshrl.u32 %v1703, 7
    %v1705 = vsub.s32 %v1702, %v1704
    %v1706 = vrot.slane %v1692, %v1705
    %v1707 = vcombine.low %v1618, %v1622
    %v1708 = vcombine.high %v1618, %v1622
    %v1710 = vunpack.c.l.s4 1983009808
    %v1711 = vunpack.c.0.s8 %v1710
    %v1712 = vlaneseq
    %v1713 = vshrl.u32 %v1712, 7
    %v1714 = vsub.s32 %v1711, %v1713
    %v1715 = vrot.slane %v1707, %v1714
    %v1717 = vunpack.c.l.s4 1983009808
    %v1718 = vunpack.c.0.s8 %v1717
    %v1719 = vlaneseq
    %v1720 = vshrl.u32 %v1719, 7
    %v1721 = vsub.s32 %v1718, %v1720
    %v1722 = vrot.slane %v1708, %v1721
    %v1723 = vcombine.low %v1699, %v1715
    %v1724 = vcombine.high %v1699, %v1715
    %v1726 = vunpack.c.l.s4 1934713408
    %v1727 = vunpack.c.0.s8 %v1726
    %v1728 = vlaneseq
    %v1729 = vshrl.u32 %v1728, 7
    %v1730 = vsub.s32 %v1727, %v1729
    %v1731 = vrot.slane %v1723, %v1730
    %v1733 = vunpack.c.l.s4 1934713408
    %v1734 = vunpack.c.0.s8 %v1733
    %v1735 = vlaneseq
    %v1736 = vshrl.u32 %v1735, 7
    %v1737 = vsub.s32 %v1734, %v1736
    %v1738 = vrot.slane %v1724, %v1737
    %v1739 = vcombine.low %v1706, %v1722
    %v1740 = vcombine.high %v1706, %v1722
    %v1742 = vunpack.c.l.s4 1934713408
    %v1743 = vunpack.c.0.s8 %v1742
    %v1744 = vlaneseq
    %v1745 = vshrl.u32 %v1744, 7
    %v1746 = vsub.s32 %v1743, %v1745
    %v1747 = vrot.slane %v1739, %v1746
    %v1749 = vunpack.c.l.s4 1934713408
    %v1750 = vunpack.c.0.s8 %v1749
    %v1751 = vlaneseq
    %v1752 = vshrl.u32 %v1751, 7
    %v1753 = vsub.s32 %v1750, %v1752
    %v1754 = vrot.slane %v1740, %v1753
    %v1755 = vcombine.high %v1731, 0.0
    %v1756 = vcombine.high %v1738, 0.0
    %v1757 = vcombine.high %v1747, 0.0
    %v1758 = vcombine.high %v1754, 0.0
    %1760 = vrot.lane.b32.xlu0 %v1687, 16
    %v1761 = vpop.permute.xlu0 %1760
    %1764 = vrot.lane.b32.xlu0 %v1670, 32
    %v1765 = vpop.permute.xlu0 %1764
    %1768 = vrot.lane.b32.xlu0 %v1688, 48
    %v1769 = vpop.permute.xlu0 %1768
    %1772 = vrot.lane.b32.xlu0 %v1679, 64
    %v1773 = vpop.permute.xlu0 %1772
    %1776 = vrot.lane.b32.xlu0 %v1689, 80
    %v1777 = vpop.permute.xlu0 %1776
    %1780 = vrot.lane.b32.xlu0 %v1686, 96
    %v1781 = vpop.permute.xlu0 %1780
    %1784 = vrot.lane.b32.xlu0 %v1690, 112
    %v1785 = vpop.permute.xlu0 %1784
    %1788 = vrot.lane.b32.xlu0 %v1755, 16
    %v1789 = vpop.permute.xlu0 %1788
    %1792 = vrot.lane.b32.xlu0 %v1738, 32
    %v1793 = vpop.permute.xlu0 %1792
    %1796 = vrot.lane.b32.xlu0 %v1756, 48
    %v1797 = vpop.permute.xlu0 %1796
    %1800 = vrot.lane.b32.xlu0 %v1747, 64
    %v1801 = vpop.permute.xlu0 %1800
    %1804 = vrot.lane.b32.xlu0 %v1757, 80
    %v1805 = vpop.permute.xlu0 %1804
    %1808 = vrot.lane.b32.xlu0 %v1754, 96
    %v1809 = vpop.permute.xlu0 %1808
    %1812 = vrot.lane.b32.xlu0 %v1758, 112
    %v1813 = vpop.permute.xlu0 %1812
    %v1815 = vsel %vm372, %v1663, %v1761
    %v1816 = vsel %vm374, %v1815, %v1765
    %v1817 = vsel %vm376, %v1816, %v1769
    %v1818 = vsel %vm378, %v1817, %v1773
    %v1819 = vsel %vm380, %v1818, %v1777
    %v1820 = vsel %vm382, %v1819, %v1781
    %v1821 = vsel %vm384, %v1820, %v1785
    %v1822 = vsel %vm372, %v1731, %v1789
    %v1823 = vsel %vm374, %v1822, %v1793
    %v1824 = vsel %vm376, %v1823, %v1797
    %v1825 = vsel %vm378, %v1824, %v1801
    %v1826 = vsel %vm380, %v1825, %v1805
    %v1827 = vsel %vm382, %v1826, %v1809
    %v1828 = vsel %vm384, %v1827, %v1813
    %v1831 = vrot.slane %v1821, 4
    %v1832 = vrot.slane %v1828, 4
    %1835 = vst [vmem:[#allocation4 + $0x20] sm:$0xf0] %v1831
    %1836 = vst [vmem:[#allocation4 + $0x28] sm:$0xf0] %v1832
    %v1837 = vld [vmem:[%s163 + $0x1] sm:$0xff]
    %v1838 = vld [vmem:[%s163 + $0x9] sm:$0xff]
    %v1839 = vld [vmem:[%s163 + $0x19] sm:$0xff]
    %v1840 = vld [vmem:[%s163 + $0x21] sm:$0xff]
    %v1841 = vld [vmem:[%s163 + $0x31] sm:$0xff]
    %v1842 = vld [vmem:[%s163 + $0x39] sm:$0xff]
    %v1843 = vld [vmem:[%s163 + $0x49] sm:$0xff]
    %v1844 = vld [vmem:[%s163 + $0x51] sm:$0xff]
    %v1845 = vcombine.low %v1837, %v1841
    %v1846 = vcombine.high %v1837, %v1841
    %v1848 = vunpack.c.l.s4 1983009808
    %v1849 = vunpack.c.0.s8 %v1848
    %v1850 = vlaneseq
    %v1851 = vshrl.u32 %v1850, 7
    %v1852 = vsub.s32 %v1849, %v1851
    %v1853 = vrot.slane %v1845, %v1852
    %v1855 = vunpack.c.l.s4 1983009808
    %v1856 = vunpack.c.0.s8 %v1855
    %v1857 = vlaneseq
    %v1858 = vshrl.u32 %v1857, 7
    %v1859 = vsub.s32 %v1856, %v1858
    %v1860 = vrot.slane %v1846, %v1859
    %v1861 = vcombine.low %v1839, %v1843
    %v1862 = vcombine.high %v1839, %v1843
    %v1864 = vunpack.c.l.s4 1983009808
    %v1865 = vunpack.c.0.s8 %v1864
    %v1866 = vlaneseq
    %v1867 = vshrl.u32 %v1866, 7
    %v1868 = vsub.s32 %v1865, %v1867
    %v1869 = vrot.slane %v1861, %v1868
    %v1871 = vunpack.c.l.s4 1983009808
    %v1872 = vunpack.c.0.s8 %v1871
    %v1873 = vlaneseq
    %v1874 = vshrl.u32 %v1873, 7
    %v1875 = vsub.s32 %v1872, %v1874
    %v1876 = vrot.slane %v1862, %v1875
    %v1877 = vcombine.low %v1853, %v1869
    %v1878 = vcombine.high %v1853, %v1869
    %v1880 = vunpack.c.l.s4 1934713408
    %v1881 = vunpack.c.0.s8 %v1880
    %v1882 = vlaneseq
    %v1883 = vshrl.u32 %v1882, 7
    %v1884 = vsub.s32 %v1881, %v1883
    %v1885 = vrot.slane %v1877, %v1884
    %v1887 = vunpack.c.l.s4 1934713408
    %v1888 = vunpack.c.0.s8 %v1887
    %v1889 = vlaneseq
    %v1890 = vshrl.u32 %v1889, 7
    %v1891 = vsub.s32 %v1888, %v1890
    %v1892 = vrot.slane %v1878, %v1891
    %v1893 = vcombine.low %v1860, %v1876
    %v1894 = vcombine.high %v1860, %v1876
    %v1896 = vunpack.c.l.s4 1934713408
    %v1897 = vunpack.c.0.s8 %v1896
    %v1898 = vlaneseq
    %v1899 = vshrl.u32 %v1898, 7
    %v1900 = vsub.s32 %v1897, %v1899
    %v1901 = vrot.slane %v1893, %v1900
    %v1903 = vunpack.c.l.s4 1934713408
    %v1904 = vunpack.c.0.s8 %v1903
    %v1905 = vlaneseq
    %v1906 = vshrl.u32 %v1905, 7
    %v1907 = vsub.s32 %v1904, %v1906
    %v1908 = vrot.slane %v1894, %v1907
    %v1909 = vcombine.high %v1885, 0.0
    %v1910 = vcombine.high %v1892, 0.0
    %v1911 = vcombine.high %v1901, 0.0
    %v1912 = vcombine.high %v1908, 0.0
    %v1913 = vcombine.low %v1838, %v1842
    %v1914 = vcombine.high %v1838, %v1842
    %v1916 = vunpack.c.l.s4 1983009808
    %v1917 = vunpack.c.0.s8 %v1916
    %v1918 = vlaneseq
    %v1919 = vshrl.u32 %v1918, 7
    %v1920 = vsub.s32 %v1917, %v1919
    %v1921 = vrot.slane %v1913, %v1920
    %v1923 = vunpack.c.l.s4 1983009808
    %v1924 = vunpack.c.0.s8 %v1923
    %v1925 = vlaneseq
    %v1926 = vshrl.u32 %v1925, 7
    %v1927 = vsub.s32 %v1924, %v1926
    %v1928 = vrot.slane %v1914, %v1927
    %v1929 = vcombine.low %v1840, %v1844
    %v1930 = vcombine.high %v1840, %v1844
    %v1932 = vunpack.c.l.s4 1983009808
    %v1933 = vunpack.c.0.s8 %v1932
    %v1934 = vlaneseq
    %v1935 = vshrl.u32 %v1934, 7
    %v1936 = vsub.s32 %v1933, %v1935
    %v1937 = vrot.slane %v1929, %v1936
    %v1939 = vunpack.c.l.s4 1983009808
    %v1940 = vunpack.c.0.s8 %v1939
    %v1941 = vlaneseq
    %v1942 = vshrl.u32 %v1941, 7
    %v1943 = vsub.s32 %v1940, %v1942
    %v1944 = vrot.slane %v1930, %v1943
    %v1945 = vcombine.low %v1921, %v1937
    %v1946 = vcombine.high %v1921, %v1937
    %v1948 = vunpack.c.l.s4 1934713408
    %v1949 = vunpack.c.0.s8 %v1948
    %v1950 = vlaneseq
    %v1951 = vshrl.u32 %v1950, 7
    %v1952 = vsub.s32 %v1949, %v1951
    %v1953 = vrot.slane %v1945, %v1952
    %v1955 = vunpack.c.l.s4 1934713408
    %v1956 = vunpack.c.0.s8 %v1955
    %v1957 = vlaneseq
    %v1958 = vshrl.u32 %v1957, 7
    %v1959 = vsub.s32 %v1956, %v1958
    %v1960 = vrot.slane %v1946, %v1959
    %v1961 = vcombine.low %v1928, %v1944
    %v1962 = vcombine.high %v1928, %v1944
    %v1964 = vunpack.c.l.s4 1934713408
    %v1965 = vunpack.c.0.s8 %v1964
    %v1966 = vlaneseq
    %v1967 = vshrl.u32 %v1966, 7
    %v1968 = vsub.s32 %v1965, %v1967
    %v1969 = vrot.slane %v1961, %v1968
    %v1971 = vunpack.c.l.s4 1934713408
    %v1972 = vunpack.c.0.s8 %v1971
    %v1973 = vlaneseq
    %v1974 = vshrl.u32 %v1973, 7
    %v1975 = vsub.s32 %v1972, %v1974
    %v1976 = vrot.slane %v1962, %v1975
    %v1977 = vcombine.high %v1953, 0.0
    %v1978 = vcombine.high %v1960, 0.0
    %v1979 = vcombine.high %v1969, 0.0
    %v1980 = vcombine.high %v1976, 0.0
    %1982 = vrot.lane.b32.xlu0 %v1909, 16
    %v1983 = vpop.permute.xlu0 %1982
    %1986 = vrot.lane.b32.xlu0 %v1892, 32
    %v1987 = vpop.permute.xlu0 %1986
    %1990 = vrot.lane.b32.xlu0 %v1910, 48
    %v1991 = vpop.permute.xlu0 %1990
    %1994 = vrot.lane.b32.xlu0 %v1901, 64
    %v1995 = vpop.permute.xlu0 %1994
    %1998 = vrot.lane.b32.xlu0 %v1911, 80
    %v1999 = vpop.permute.xlu0 %1998
    %2002 = vrot.lane.b32.xlu0 %v1908, 96
    %v2003 = vpop.permute.xlu0 %2002
    %2006 = vrot.lane.b32.xlu0 %v1912, 112
    %v2007 = vpop.permute.xlu0 %2006
    %2010 = vrot.lane.b32.xlu0 %v1977, 16
    %v2011 = vpop.permute.xlu0 %2010
    %2014 = vrot.lane.b32.xlu0 %v1960, 32
    %v2015 = vpop.permute.xlu0 %2014
    %2018 = vrot.lane.b32.xlu0 %v1978, 48
    %v2019 = vpop.permute.xlu0 %2018
    %2022 = vrot.lane.b32.xlu0 %v1969, 64
    %v2023 = vpop.permute.xlu0 %2022
    %2026 = vrot.lane.b32.xlu0 %v1979, 80
    %v2027 = vpop.permute.xlu0 %2026
    %2030 = vrot.lane.b32.xlu0 %v1976, 96
    %v2031 = vpop.permute.xlu0 %2030
    %2034 = vrot.lane.b32.xlu0 %v1980, 112
    %v2035 = vpop.permute.xlu0 %2034
    %v2037 = vsel %vm372, %v1885, %v1983
    %v2038 = vsel %vm374, %v2037, %v1987
    %v2039 = vsel %vm376, %v2038, %v1991
    %v2040 = vsel %vm378, %v2039, %v1995
    %v2041 = vsel %vm380, %v2040, %v1999
    %v2042 = vsel %vm382, %v2041, %v2003
    %v2043 = vsel %vm384, %v2042, %v2007
    %v2044 = vsel %vm372, %v1953, %v2011
    %v2045 = vsel %vm374, %v2044, %v2015
    %v2046 = vsel %vm376, %v2045, %v2019
    %v2047 = vsel %vm378, %v2046, %v2023
    %v2048 = vsel %vm380, %v2047, %v2027
    %v2049 = vsel %vm382, %v2048, %v2031
    %v2050 = vsel %vm384, %v2049, %v2035
    %v2053 = vrot.slane %v2043, 4
    %v2054 = vrot.slane %v2050, 4
    %2057 = vst [vmem:[#allocation4 + $0x30] sm:$0xf0] %v2053
    %2058 = vst [vmem:[#allocation4 + $0x38] sm:$0xf0] %v2054
    %v2059 = vld [vmem:[#allocation2 + $0x1] sm:$0xff]
    %v2060 = vld [vmem:[#allocation2 + $0x9] sm:$0xff]
    %v2061 = vld [vmem:[#allocation2 + $0x19] sm:$0xff]
    %v2062 = vld [vmem:[#allocation2 + $0x21] sm:$0xff]
    %v2063 = vld [vmem:[#allocation2 + $0x31] sm:$0xff]
    %v2064 = vld [vmem:[#allocation2 + $0x39] sm:$0xff]
    %v2065 = vld [vmem:[#allocation2 + $0x49] sm:$0xff]
    %v2066 = vld [vmem:[#allocation2 + $0x51] sm:$0xff]
    %2075 = vrot.lane.b32.xlu0 %v2059, 127
    %v2076 = vpop.permute.xlu0 %2075
    %2077 = vrot.lane.b32.xlu0 %v2060, 127
    %v2078 = vpop.permute.xlu0 %2077
    %2079 = vrot.lane.b32.xlu0 %v2061, 127
    %v2080 = vpop.permute.xlu0 %2079
    %2081 = vrot.lane.b32.xlu0 %v2062, 127
    %v2082 = vpop.permute.xlu0 %2081
    %2083 = vrot.lane.b32.xlu0 %v2063, 127
    %v2084 = vpop.permute.xlu0 %2083
    %2085 = vrot.lane.b32.xlu0 %v2064, 127
    %v2086 = vpop.permute.xlu0 %2085
    %2087 = vrot.lane.b32.xlu0 %v2065, 127
    %v2088 = vpop.permute.xlu0 %2087
    %2089 = vrot.lane.b32.xlu0 %v2066, 127
    %v2090 = vpop.permute.xlu0 %2089
    %v2099 = vcombine.low %v2076, %v2084
    %v2100 = vcombine.high %v2076, %v2084
    %v2102 = vunpack.c.l.s4 1983009808
    %v2103 = vunpack.c.0.s8 %v2102
    %v2104 = vlaneseq
    %v2105 = vshrl.u32 %v2104, 7
    %v2106 = vsub.s32 %v2103, %v2105
    %v2107 = vrot.slane %v2099, %v2106
    %v2109 = vunpack.c.l.s4 1983009808
    %v2110 = vunpack.c.0.s8 %v2109
    %v2111 = vlaneseq
    %v2112 = vshrl.u32 %v2111, 7
    %v2113 = vsub.s32 %v2110, %v2112
    %v2114 = vrot.slane %v2100, %v2113
    %v2115 = vcombine.low %v2080, %v2088
    %v2116 = vcombine.high %v2080, %v2088
    %v2118 = vunpack.c.l.s4 1983009808
    %v2119 = vunpack.c.0.s8 %v2118
    %v2120 = vlaneseq
    %v2121 = vshrl.u32 %v2120, 7
    %v2122 = vsub.s32 %v2119, %v2121
    %v2123 = vrot.slane %v2115, %v2122
    %v2125 = vunpack.c.l.s4 1983009808
    %v2126 = vunpack.c.0.s8 %v2125
    %v2127 = vlaneseq
    %v2128 = vshrl.u32 %v2127, 7
    %v2129 = vsub.s32 %v2126, %v2128
    %v2130 = vrot.slane %v2116, %v2129
    %v2131 = vcombine.low %v2107, %v2123
    %v2132 = vcombine.high %v2107, %v2123
    %v2134 = vunpack.c.l.s4 1934713408
    %v2135 = vunpack.c.0.s8 %v2134
    %v2136 = vlaneseq
    %v2137 = vshrl.u32 %v2136, 7
    %v2138 = vsub.s32 %v2135, %v2137
    %v2139 = vrot.slane %v2131, %v2138
    %v2141 = vunpack.c.l.s4 1934713408
    %v2142 = vunpack.c.0.s8 %v2141
    %v2143 = vlaneseq
    %v2144 = vshrl.u32 %v2143, 7
    %v2145 = vsub.s32 %v2142, %v2144
    %v2146 = vrot.slane %v2132, %v2145
    %v2147 = vcombine.low %v2114, %v2130
    %v2148 = vcombine.high %v2114, %v2130
    %v2150 = vunpack.c.l.s4 1934713408
    %v2151 = vunpack.c.0.s8 %v2150
    %v2152 = vlaneseq
    %v2153 = vshrl.u32 %v2152, 7
    %v2154 = vsub.s32 %v2151, %v2153
    %v2155 = vrot.slane %v2147, %v2154
    %v2157 = vunpack.c.l.s4 1934713408
    %v2158 = vunpack.c.0.s8 %v2157
    %v2159 = vlaneseq
    %v2160 = vshrl.u32 %v2159, 7
    %v2161 = vsub.s32 %v2158, %v2160
    %v2162 = vrot.slane %v2148, %v2161
    %v2163 = vcombine.high %v2139, 0.0
    %v2164 = vcombine.high %v2146, 0.0
    %v2165 = vcombine.high %v2155, 0.0
    %v2166 = vcombine.high %v2162, 0.0
    %v2167 = vcombine.low %v2078, %v2086
    %v2168 = vcombine.high %v2078, %v2086
    %v2170 = vunpack.c.l.s4 1983009808
    %v2171 = vunpack.c.0.s8 %v2170
    %v2172 = vlaneseq
    %v2173 = vshrl.u32 %v2172, 7
    %v2174 = vsub.s32 %v2171, %v2173
    %v2175 = vrot.slane %v2167, %v2174
    %v2177 = vunpack.c.l.s4 1983009808
    %v2178 = vunpack.c.0.s8 %v2177
    %v2179 = vlaneseq
    %v2180 = vshrl.u32 %v2179, 7
    %v2181 = vsub.s32 %v2178, %v2180
    %v2182 = vrot.slane %v2168, %v2181
    %v2183 = vcombine.low %v2082, %v2090
    %v2184 = vcombine.high %v2082, %v2090
    %v2186 = vunpack.c.l.s4 1983009808
    %v2187 = vunpack.c.0.s8 %v2186
    %v2188 = vlaneseq
    %v2189 = vshrl.u32 %v2188, 7
    %v2190 = vsub.s32 %v2187, %v2189
    %v2191 = vrot.slane %v2183, %v2190
    %v2193 = vunpack.c.l.s4 1983009808
    %v2194 = vunpack.c.0.s8 %v2193
    %v2195 = vlaneseq
    %v2196 = vshrl.u32 %v2195, 7
    %v2197 = vsub.s32 %v2194, %v2196
    %v2198 = vrot.slane %v2184, %v2197
    %v2199 = vcombine.low %v2175, %v2191
    %v2200 = vcombine.high %v2175, %v2191
    %v2202 = vunpack.c.l.s4 1934713408
    %v2203 = vunpack.c.0.s8 %v2202
    %v2204 = vlaneseq
    %v2205 = vshrl.u32 %v2204, 7
    %v2206 = vsub.s32 %v2203, %v2205
    %v2207 = vrot.slane %v2199, %v2206
    %v2209 = vunpack.c.l.s4 1934713408
    %v2210 = vunpack.c.0.s8 %v2209
    %v2211 = vlaneseq
    %v2212 = vshrl.u32 %v2211, 7
    %v2213 = vsub.s32 %v2210, %v2212
    %v2214 = vrot.slane %v2200, %v2213
    %v2215 = vcombine.low %v2182, %v2198
    %v2216 = vcombine.high %v2182, %v2198
    %v2218 = vunpack.c.l.s4 1934713408
    %v2219 = vunpack.c.0.s8 %v2218
    %v2220 = vlaneseq
    %v2221 = vshrl.u32 %v2220, 7
    %v2222 = vsub.s32 %v2219, %v2221
    %v2223 = vrot.slane %v2215, %v2222
    %v2225 = vunpack.c.l.s4 1934713408
    %v2226 = vunpack.c.0.s8 %v2225
    %v2227 = vlaneseq
    %v2228 = vshrl.u32 %v2227, 7
    %v2229 = vsub.s32 %v2226, %v2228
    %v2230 = vrot.slane %v2216, %v2229
    %v2231 = vcombine.high %v2207, 0.0
    %v2232 = vcombine.high %v2214, 0.0
    %v2233 = vcombine.high %v2223, 0.0
    %v2234 = vcombine.high %v2230, 0.0
    %2236 = vrot.lane.b32.xlu0 %v2163, 16
    %v2237 = vpop.permute.xlu0 %2236
    %2240 = vrot.lane.b32.xlu0 %v2146, 32
    %v2241 = vpop.permute.xlu0 %2240
    %2244 = vrot.lane.b32.xlu0 %v2164, 48
    %v2245 = vpop.permute.xlu0 %2244
    %2248 = vrot.lane.b32.xlu0 %v2155, 64
    %v2249 = vpop.permute.xlu0 %2248
    %2252 = vrot.lane.b32.xlu0 %v2165, 80
    %v2253 = vpop.permute.xlu0 %2252
    %2256 = vrot.lane.b32.xlu0 %v2162, 96
    %v2257 = vpop.permute.xlu0 %2256
    %2260 = vrot.lane.b32.xlu0 %v2166, 112
    %v2261 = vpop.permute.xlu0 %2260
    %2264 = vrot.lane.b32.xlu0 %v2231, 16
    %v2265 = vpop.permute.xlu0 %2264
    %2268 = vrot.lane.b32.xlu0 %v2214, 32
    %v2269 = vpop.permute.xlu0 %2268
    %2272 = vrot.lane.b32.xlu0 %v2232, 48
    %v2273 = vpop.permute.xlu0 %2272
    %2276 = vrot.lane.b32.xlu0 %v2223, 64
    %v2277 = vpop.permute.xlu0 %2276
    %2280 = vrot.lane.b32.xlu0 %v2233, 80
    %v2281 = vpop.permute.xlu0 %2280
    %2284 = vrot.lane.b32.xlu0 %v2230, 96
    %v2285 = vpop.permute.xlu0 %2284
    %2288 = vrot.lane.b32.xlu0 %v2234, 112
    %v2289 = vpop.permute.xlu0 %2288
    %v2291 = vsel %vm372, %v2139, %v2237
    %v2292 = vsel %vm374, %v2291, %v2241
    %v2293 = vsel %vm376, %v2292, %v2245
    %v2294 = vsel %vm378, %v2293, %v2249
    %v2295 = vsel %vm380, %v2294, %v2253
    %v2296 = vsel %vm382, %v2295, %v2257
    %v2297 = vsel %vm384, %v2296, %v2261
    %v2298 = vsel %vm372, %v2207, %v2265
    %v2299 = vsel %vm374, %v2298, %v2269
    %v2300 = vsel %vm376, %v2299, %v2273
    %v2301 = vsel %vm378, %v2300, %v2277
    %v2302 = vsel %vm380, %v2301, %v2281
    %v2303 = vsel %vm382, %v2302, %v2285
    %v2304 = vsel %vm384, %v2303, %v2289
    %2305 = vst [vmem:[#allocation4 + $0x40] sm:$0xf] %v2297
    %2306 = vst [vmem:[#allocation4 + $0x48] sm:$0xf] %v2304
    %v2307 = vld [vmem:[%s163 + $0x1] sm:$0xff]
    %v2308 = vld [vmem:[%s163 + $0x9] sm:$0xff]
    %v2309 = vld [vmem:[%s163 + $0x19] sm:$0xff]
    %v2310 = vld [vmem:[%s163 + $0x21] sm:$0xff]
    %v2311 = vld [vmem:[%s163 + $0x31] sm:$0xff]
    %v2312 = vld [vmem:[%s163 + $0x39] sm:$0xff]
    %v2313 = vld [vmem:[%s163 + $0x49] sm:$0xff]
    %v2314 = vld [vmem:[%s163 + $0x51] sm:$0xff]
    %2323 = vrot.lane.b32.xlu0 %v2307, 127
    %v2324 = vpop.permute.xlu0 %2323
    %2325 = vrot.lane.b32.xlu0 %v2308, 127
    %v2326 = vpop.permute.xlu0 %2325
    %2327 = vrot.lane.b32.xlu0 %v2309, 127
    %v2328 = vpop.permute.xlu0 %2327
    %2329 = vrot.lane.b32.xlu0 %v2310, 127
    %v2330 = vpop.permute.xlu0 %2329
    %2331 = vrot.lane.b32.xlu0 %v2311, 127
    %v2332 = vpop.permute.xlu0 %2331
    %2333 = vrot.lane.b32.xlu0 %v2312, 127
    %v2334 = vpop.permute.xlu0 %2333
    %2335 = vrot.lane.b32.xlu0 %v2313, 127
    %v2336 = vpop.permute.xlu0 %2335
    %2337 = vrot.lane.b32.xlu0 %v2314, 127
    %v2338 = vpop.permute.xlu0 %2337
    %v2347 = vcombine.low %v2324, %v2332
    %v2348 = vcombine.high %v2324, %v2332
    %v2350 = vunpack.c.l.s4 1983009808
    %v2351 = vunpack.c.0.s8 %v2350
    %v2352 = vlaneseq
    %v2353 = vshrl.u32 %v2352, 7
    %v2354 = vsub.s32 %v2351, %v2353
    %v2355 = vrot.slane %v2347, %v2354
    %v2357 = vunpack.c.l.s4 1983009808
    %v2358 = vunpack.c.0.s8 %v2357
    %v2359 = vlaneseq
    %v2360 = vshrl.u32 %v2359, 7
    %v2361 = vsub.s32 %v2358, %v2360
    %v2362 = vrot.slane %v2348, %v2361
    %v2363 = vcombine.low %v2328, %v2336
    %v2364 = vcombine.high %v2328, %v2336
    %v2366 = vunpack.c.l.s4 1983009808
    %v2367 = vunpack.c.0.s8 %v2366
    %v2368 = vlaneseq
    %v2369 = vshrl.u32 %v2368, 7
    %v2370 = vsub.s32 %v2367, %v2369
    %v2371 = vrot.slane %v2363, %v2370
    %v2373 = vunpack.c.l.s4 1983009808
    %v2374 = vunpack.c.0.s8 %v2373
    %v2375 = vlaneseq
    %v2376 = vshrl.u32 %v2375, 7
    %v2377 = vsub.s32 %v2374, %v2376
    %v2378 = vrot.slane %v2364, %v2377
    %v2379 = vcombine.low %v2355, %v2371
    %v2380 = vcombine.high %v2355, %v2371
    %v2382 = vunpack.c.l.s4 1934713408
    %v2383 = vunpack.c.0.s8 %v2382
    %v2384 = vlaneseq
    %v2385 = vshrl.u32 %v2384, 7
    %v2386 = vsub.s32 %v2383, %v2385
    %v2387 = vrot.slane %v2379, %v2386
    %v2389 = vunpack.c.l.s4 1934713408
    %v2390 = vunpack.c.0.s8 %v2389
    %v2391 = vlaneseq
    %v2392 = vshrl.u32 %v2391, 7
    %v2393 = vsub.s32 %v2390, %v2392
    %v2394 = vrot.slane %v2380, %v2393
    %v2395 = vcombine.low %v2362, %v2378
    %v2396 = vcombine.high %v2362, %v2378
    %v2398 = vunpack.c.l.s4 1934713408
    %v2399 = vunpack.c.0.s8 %v2398
    %v2400 = vlaneseq
    %v2401 = vshrl.u32 %v2400, 7
    %v2402 = vsub.s32 %v2399, %v2401
    %v2403 = vrot.slane %v2395, %v2402
    %v2405 = vunpack.c.l.s4 1934713408
    %v2406 = vunpack.c.0.s8 %v2405
    %v2407 = vlaneseq
    %v2408 = vshrl.u32 %v2407, 7
    %v2409 = vsub.s32 %v2406, %v2408
    %v2410 = vrot.slane %v2396, %v2409
    %v2411 = vcombine.high %v2387, 0.0
    %v2412 = vcombine.high %v2394, 0.0
    %v2413 = vcombine.high %v2403, 0.0
    %v2414 = vcombine.high %v2410, 0.0
    %v2415 = vcombine.low %v2326, %v2334
    %v2416 = vcombine.high %v2326, %v2334
    %v2418 = vunpack.c.l.s4 1983009808
    %v2419 = vunpack.c.0.s8 %v2418
    %v2420 = vlaneseq
    %v2421 = vshrl.u32 %v2420, 7
    %v2422 = vsub.s32 %v2419, %v2421
    %v2423 = vrot.slane %v2415, %v2422
    %v2425 = vunpack.c.l.s4 1983009808
    %v2426 = vunpack.c.0.s8 %v2425
    %v2427 = vlaneseq
    %v2428 = vshrl.u32 %v2427, 7
    %v2429 = vsub.s32 %v2426, %v2428
    %v2430 = vrot.slane %v2416, %v2429
    %v2431 = vcombine.low %v2330, %v2338
    %v2432 = vcombine.high %v2330, %v2338
    %v2434 = vunpack.c.l.s4 1983009808
    %v2435 = vunpack.c.0.s8 %v2434
    %v2436 = vlaneseq
    %v2437 = vshrl.u32 %v2436, 7
    %v2438 = vsub.s32 %v2435, %v2437
    %v2439 = vrot.slane %v2431, %v2438
    %v2441 = vunpack.c.l.s4 1983009808
    %v2442 = vunpack.c.0.s8 %v2441
    %v2443 = vlaneseq
    %v2444 = vshrl.u32 %v2443, 7
    %v2445 = vsub.s32 %v2442, %v2444
    %v2446 = vrot.slane %v2432, %v2445
    %v2447 = vcombine.low %v2423, %v2439
    %v2448 = vcombine.high %v2423, %v2439
    %v2450 = vunpack.c.l.s4 1934713408
    %v2451 = vunpack.c.0.s8 %v2450
    %v2452 = vlaneseq
    %v2453 = vshrl.u32 %v2452, 7
    %v2454 = vsub.s32 %v2451, %v2453
    %v2455 = vrot.slane %v2447, %v2454
    %v2457 = vunpack.c.l.s4 1934713408
    %v2458 = vunpack.c.0.s8 %v2457
    %v2459 = vlaneseq
    %v2460 = vshrl.u32 %v2459, 7
    %v2461 = vsub.s32 %v2458, %v2460
    %v2462 = vrot.slane %v2448, %v2461
    %v2463 = vcombine.low %v2430, %v2446
    %v2464 = vcombine.high %v2430, %v2446
    %v2466 = vunpack.c.l.s4 1934713408
    %v2467 = vunpack.c.0.s8 %v2466
    %v2468 = vlaneseq
    %v2469 = vshrl.u32 %v2468, 7
    %v2470 = vsub.s32 %v2467, %v2469
    %v2471 = vrot.slane %v2463, %v2470
    %v2473 = vunpack.c.l.s4 1934713408
    %v2474 = vunpack.c.0.s8 %v2473
    %v2475 = vlaneseq
    %v2476 = vshrl.u32 %v2475, 7
    %v2477 = vsub.s32 %v2474, %v2476
    %v2478 = vrot.slane %v2464, %v2477
    %v2479 = vcombine.high %v2455, 0.0
    %v2480 = vcombine.high %v2462, 0.0
    %v2481 = vcombine.high %v2471, 0.0
    %v2482 = vcombine.high %v2478, 0.0
    %2484 = vrot.lane.b32.xlu0 %v2411, 16
    %v2485 = vpop.permute.xlu0 %2484
    %2488 = vrot.lane.b32.xlu0 %v2394, 32
    %v2489 = vpop.permute.xlu0 %2488
    %2492 = vrot.lane.b32.xlu0 %v2412, 48
    %v2493 = vpop.permute.xlu0 %2492
    %2496 = vrot.lane.b32.xlu0 %v2403, 64
    %v2497 = vpop.permute.xlu0 %2496
    %2500 = vrot.lane.b32.xlu0 %v2413, 80
    %v2501 = vpop.permute.xlu0 %2500
    %2504 = vrot.lane.b32.xlu0 %v2410, 96
    %v2505 = vpop.permute.xlu0 %2504
    %2508 = vrot.lane.b32.xlu0 %v2414, 112
    %v2509 = vpop.permute.xlu0 %2508
    %2512 = vrot.lane.b32.xlu0 %v2479, 16
    %v2513 = vpop.permute.xlu0 %2512
    %2516 = vrot.lane.b32.xlu0 %v2462, 32
    %v2517 = vpop.permute.xlu0 %2516
    %2520 = vrot.lane.b32.xlu0 %v2480, 48
    %v2521 = vpop.permute.xlu0 %2520
    %2524 = vrot.lane.b32.xlu0 %v2471, 64
    %v2525 = vpop.permute.xlu0 %2524
    %2528 = vrot.lane.b32.xlu0 %v2481, 80
    %v2529 = vpop.permute.xlu0 %2528
    %2532 = vrot.lane.b32.xlu0 %v2478, 96
    %v2533 = vpop.permute.xlu0 %2532
    %2536 = vrot.lane.b32.xlu0 %v2482, 112
    %v2537 = vpop.permute.xlu0 %2536
    %v2539 = vsel %vm372, %v2387, %v2485
    %v2540 = vsel %vm374, %v2539, %v2489
    %v2541 = vsel %vm376, %v2540, %v2493
    %v2542 = vsel %vm378, %v2541, %v2497
    %v2543 = vsel %vm380, %v2542, %v2501
    %v2544 = vsel %vm382, %v2543, %v2505
    %v2545 = vsel %vm384, %v2544, %v2509
    %v2546 = vsel %vm372, %v2455, %v2513
    %v2547 = vsel %vm374, %v2546, %v2517
    %v2548 = vsel %vm376, %v2547, %v2521
    %v2549 = vsel %vm378, %v2548, %v2525
    %v2550 = vsel %vm380, %v2549, %v2529
    %v2551 = vsel %vm382, %v2550, %v2533
    %v2552 = vsel %vm384, %v2551, %v2537
    %2553 = vst [vmem:[#allocation4 + $0x50] sm:$0xf] %v2545
    %2554 = vst [vmem:[#allocation4 + $0x58] sm:$0xf] %v2552
    %v2555 = vld [vmem:[#allocation2 + $0x1] sm:$0xff]
    %v2556 = vld [vmem:[#allocation2 + $0x9] sm:$0xff]
    %v2557 = vld [vmem:[#allocation2 + $0x19] sm:$0xff]
    %v2558 = vld [vmem:[#allocation2 + $0x21] sm:$0xff]
    %v2559 = vld [vmem:[#allocation2 + $0x31] sm:$0xff]
    %v2560 = vld [vmem:[#allocation2 + $0x39] sm:$0xff]
    %v2561 = vld [vmem:[#allocation2 + $0x49] sm:$0xff]
    %v2562 = vld [vmem:[#allocation2 + $0x51] sm:$0xff]
    %2571 = vrot.lane.b32.xlu0 %v2555, 126
    %v2572 = vpop.permute.xlu0 %2571
    %2573 = vrot.lane.b32.xlu0 %v2556, 126
    %v2574 = vpop.permute.xlu0 %2573
    %2575 = vrot.lane.b32.xlu0 %v2557, 126
    %v2576 = vpop.permute.xlu0 %2575
    %2577 = vrot.lane.b32.xlu0 %v2558, 126
    %v2578 = vpop.permute.xlu0 %2577
    %2579 = vrot.lane.b32.xlu0 %v2559, 126
    %v2580 = vpop.permute.xlu0 %2579
    %2581 = vrot.lane.b32.xlu0 %v2560, 126
    %v2582 = vpop.permute.xlu0 %2581
    %2583 = vrot.lane.b32.xlu0 %v2561, 126
    %v2584 = vpop.permute.xlu0 %2583
    %2585 = vrot.lane.b32.xlu0 %v2562, 126
    %v2586 = vpop.permute.xlu0 %2585
    %v2595 = vcombine.low %v2572, %v2580
    %v2596 = vcombine.high %v2572, %v2580
    %v2598 = vunpack.c.l.s4 1983009808
    %v2599 = vunpack.c.0.s8 %v2598
    %v2600 = vlaneseq
    %v2601 = vshrl.u32 %v2600, 7
    %v2602 = vsub.s32 %v2599, %v2601
    %v2603 = vrot.slane %v2595, %v2602
    %v2605 = vunpack.c.l.s4 1983009808
    %v2606 = vunpack.c.0.s8 %v2605
    %v2607 = vlaneseq
    %v2608 = vshrl.u32 %v2607, 7
    %v2609 = vsub.s32 %v2606, %v2608
    %v2610 = vrot.slane %v2596, %v2609
    %v2611 = vcombine.low %v2576, %v2584
    %v2612 = vcombine.high %v2576, %v2584
    %v2614 = vunpack.c.l.s4 1983009808
    %v2615 = vunpack.c.0.s8 %v2614
    %v2616 = vlaneseq
    %v2617 = vshrl.u32 %v2616, 7
    %v2618 = vsub.s32 %v2615, %v2617
    %v2619 = vrot.slane %v2611, %v2618
    %v2621 = vunpack.c.l.s4 1983009808
    %v2622 = vunpack.c.0.s8 %v2621
    %v2623 = vlaneseq
    %v2624 = vshrl.u32 %v2623, 7
    %v2625 = vsub.s32 %v2622, %v2624
    %v2626 = vrot.slane %v2612, %v2625
    %v2627 = vcombine.low %v2603, %v2619
    %v2628 = vcombine.high %v2603, %v2619
    %v2630 = vunpack.c.l.s4 1934713408
    %v2631 = vunpack.c.0.s8 %v2630
    %v2632 = vlaneseq
    %v2633 = vshrl.u32 %v2632, 7
    %v2634 = vsub.s32 %v2631, %v2633
    %v2635 = vrot.slane %v2627, %v2634
    %v2637 = vunpack.c.l.s4 1934713408
    %v2638 = vunpack.c.0.s8 %v2637
    %v2639 = vlaneseq
    %v2640 = vshrl.u32 %v2639, 7
    %v2641 = vsub.s32 %v2638, %v2640
    %v2642 = vrot.slane %v2628, %v2641
    %v2643 = vcombine.low %v2610, %v2626
    %v2644 = vcombine.high %v2610, %v2626
    %v2646 = vunpack.c.l.s4 1934713408
    %v2647 = vunpack.c.0.s8 %v2646
    %v2648 = vlaneseq
    %v2649 = vshrl.u32 %v2648, 7
    %v2650 = vsub.s32 %v2647, %v2649
    %v2651 = vrot.slane %v2643, %v2650
    %v2653 = vunpack.c.l.s4 1934713408
    %v2654 = vunpack.c.0.s8 %v2653
    %v2655 = vlaneseq
    %v2656 = vshrl.u32 %v2655, 7
    %v2657 = vsub.s32 %v2654, %v2656
    %v2658 = vrot.slane %v2644, %v2657
    %v2659 = vcombine.high %v2635, 0.0
    %v2660 = vcombine.high %v2642, 0.0
    %v2661 = vcombine.high %v2651, 0.0
    %v2662 = vcombine.high %v2658, 0.0
    %v2663 = vcombine.low %v2574, %v2582
    %v2664 = vcombine.high %v2574, %v2582
    %v2666 = vunpack.c.l.s4 1983009808
    %v2667 = vunpack.c.0.s8 %v2666
    %v2668 = vlaneseq
    %v2669 = vshrl.u32 %v2668, 7
    %v2670 = vsub.s32 %v2667, %v2669
    %v2671 = vrot.slane %v2663, %v2670
    %v2673 = vunpack.c.l.s4 1983009808
    %v2674 = vunpack.c.0.s8 %v2673
    %v2675 = vlaneseq
    %v2676 = vshrl.u32 %v2675, 7
    %v2677 = vsub.s32 %v2674, %v2676
    %v2678 = vrot.slane %v2664, %v2677
    %v2679 = vcombine.low %v2578, %v2586
    %v2680 = vcombine.high %v2578, %v2586
    %v2682 = vunpack.c.l.s4 1983009808
    %v2683 = vunpack.c.0.s8 %v2682
    %v2684 = vlaneseq
    %v2685 = vshrl.u32 %v2684, 7
    %v2686 = vsub.s32 %v2683, %v2685
    %v2687 = vrot.slane %v2679, %v2686
    %v2689 = vunpack.c.l.s4 1983009808
    %v2690 = vunpack.c.0.s8 %v2689
    %v2691 = vlaneseq
    %v2692 = vshrl.u32 %v2691, 7
    %v2693 = vsub.s32 %v2690, %v2692
    %v2694 = vrot.slane %v2680, %v2693
    %v2695 = vcombine.low %v2671, %v2687
    %v2696 = vcombine.high %v2671, %v2687
    %v2698 = vunpack.c.l.s4 1934713408
    %v2699 = vunpack.c.0.s8 %v2698
    %v2700 = vlaneseq
    %v2701 = vshrl.u32 %v2700, 7
    %v2702 = vsub.s32 %v2699, %v2701
    %v2703 = vrot.slane %v2695, %v2702
    %v2705 = vunpack.c.l.s4 1934713408
    %v2706 = vunpack.c.0.s8 %v2705
    %v2707 = vlaneseq
    %v2708 = vshrl.u32 %v2707, 7
    %v2709 = vsub.s32 %v2706, %v2708
    %v2710 = vrot.slane %v2696, %v2709
    %v2711 = vcombine.low %v2678, %v2694
    %v2712 = vcombine.high %v2678, %v2694
    %v2714 = vunpack.c.l.s4 1934713408
    %v2715 = vunpack.c.0.s8 %v2714
    %v2716 = vlaneseq
    %v2717 = vshrl.u32 %v2716, 7
    %v2718 = vsub.s32 %v2715, %v2717
    %v2719 = vrot.slane %v2711, %v2718
    %v2721 = vunpack.c.l.s4 1934713408
    %v2722 = vunpack.c.0.s8 %v2721
    %v2723 = vlaneseq
    %v2724 = vshrl.u32 %v2723, 7
    %v2725 = vsub.s32 %v2722, %v2724
    %v2726 = vrot.slane %v2712, %v2725
    %v2727 = vcombine.high %v2703, 0.0
    %v2728 = vcombine.high %v2710, 0.0
    %v2729 = vcombine.high %v2719, 0.0
    %v2730 = vcombine.high %v2726, 0.0
    %2732 = vrot.lane.b32.xlu0 %v2659, 16
    %v2733 = vpop.permute.xlu0 %2732
    %2736 = vrot.lane.b32.xlu0 %v2642, 32
    %v2737 = vpop.permute.xlu0 %2736
    %2740 = vrot.lane.b32.xlu0 %v2660, 48
    %v2741 = vpop.permute.xlu0 %2740
    %2744 = vrot.lane.b32.xlu0 %v2651, 64
    %v2745 = vpop.permute.xlu0 %2744
    %2748 = vrot.lane.b32.xlu0 %v2661, 80
    %v2749 = vpop.permute.xlu0 %2748
    %2752 = vrot.lane.b32.xlu0 %v2658, 96
    %v2753 = vpop.permute.xlu0 %2752
    %2756 = vrot.lane.b32.xlu0 %v2662, 112
    %v2757 = vpop.permute.xlu0 %2756
    %2760 = vrot.lane.b32.xlu0 %v2727, 16
    %v2761 = vpop.permute.xlu0 %2760
    %2764 = vrot.lane.b32.xlu0 %v2710, 32
    %v2765 = vpop.permute.xlu0 %2764
    %2768 = vrot.lane.b32.xlu0 %v2728, 48
    %v2769 = vpop.permute.xlu0 %2768
    %2772 = vrot.lane.b32.xlu0 %v2719, 64
    %v2773 = vpop.permute.xlu0 %2772
    %2776 = vrot.lane.b32.xlu0 %v2729, 80
    %v2777 = vpop.permute.xlu0 %2776
    %2780 = vrot.lane.b32.xlu0 %v2726, 96
    %v2781 = vpop.permute.xlu0 %2780
    %2784 = vrot.lane.b32.xlu0 %v2730, 112
    %v2785 = vpop.permute.xlu0 %2784
    %v2787 = vsel %vm372, %v2635, %v2733
    %v2788 = vsel %vm374, %v2787, %v2737
    %v2789 = vsel %vm376, %v2788, %v2741
    %v2790 = vsel %vm378, %v2789, %v2745
    %v2791 = vsel %vm380, %v2790, %v2749
    %v2792 = vsel %vm382, %v2791, %v2753
    %v2793 = vsel %vm384, %v2792, %v2757
    %v2794 = vsel %vm372, %v2703, %v2761
    %v2795 = vsel %vm374, %v2794, %v2765
    %v2796 = vsel %vm376, %v2795, %v2769
    %v2797 = vsel %vm378, %v2796, %v2773
    %v2798 = vsel %vm380, %v2797, %v2777
    %v2799 = vsel %vm382, %v2798, %v2781
    %v2800 = vsel %vm384, %v2799, %v2785
    %v2803 = vrot.slane %v2793, 4
    %v2804 = vrot.slane %v2800, 4
    %2807 = vst [vmem:[#allocation4 + $0x40] sm:$0xf0] %v2803
    %2808 = vst [vmem:[#allocation4 + $0x48] sm:$0xf0] %v2804
    %v2809 = vld [vmem:[%s163 + $0x1] sm:$0xff]
    %v2810 = vld [vmem:[%s163 + $0x9] sm:$0xff]
    %v2811 = vld [vmem:[%s163 + $0x19] sm:$0xff]
    %v2812 = vld [vmem:[%s163 + $0x21] sm:$0xff]
    %v2813 = vld [vmem:[%s163 + $0x31] sm:$0xff]
    %v2814 = vld [vmem:[%s163 + $0x39] sm:$0xff]
    %v2815 = vld [vmem:[%s163 + $0x49] sm:$0xff]
    %v2816 = vld [vmem:[%s163 + $0x51] sm:$0xff]
    %2825 = vrot.lane.b32.xlu0 %v2809, 126
    %v2826 = vpop.permute.xlu0 %2825
    %2827 = vrot.lane.b32.xlu0 %v2810, 126
    %v2828 = vpop.permute.xlu0 %2827
    %2829 = vrot.lane.b32.xlu0 %v2811, 126
    %v2830 = vpop.permute.xlu0 %2829
    %2831 = vrot.lane.b32.xlu0 %v2812, 126
    %v2832 = vpop.permute.xlu0 %2831
    %2833 = vrot.lane.b32.xlu0 %v2813, 126
    %v2834 = vpop.permute.xlu0 %2833
    %2835 = vrot.lane.b32.xlu0 %v2814, 126
    %v2836 = vpop.permute.xlu0 %2835
    %2837 = vrot.lane.b32.xlu0 %v2815, 126
    %v2838 = vpop.permute.xlu0 %2837
    %2839 = vrot.lane.b32.xlu0 %v2816, 126
    %v2840 = vpop.permute.xlu0 %2839
    %v2849 = vcombine.low %v2826, %v2834
    %v2850 = vcombine.high %v2826, %v2834
    %v2852 = vunpack.c.l.s4 1983009808
    %v2853 = vunpack.c.0.s8 %v2852
    %v2854 = vlaneseq
    %v2855 = vshrl.u32 %v2854, 7
    %v2856 = vsub.s32 %v2853, %v2855
    %v2857 = vrot.slane %v2849, %v2856
    %v2859 = vunpack.c.l.s4 1983009808
    %v2860 = vunpack.c.0.s8 %v2859
    %v2861 = vlaneseq
    %v2862 = vshrl.u32 %v2861, 7
    %v2863 = vsub.s32 %v2860, %v2862
    %v2864 = vrot.slane %v2850, %v2863
    %v2865 = vcombine.low %v2830, %v2838
    %v2866 = vcombine.high %v2830, %v2838
    %v2868 = vunpack.c.l.s4 1983009808
    %v2869 = vunpack.c.0.s8 %v2868
    %v2870 = vlaneseq
    %v2871 = vshrl.u32 %v2870, 7
    %v2872 = vsub.s32 %v2869, %v2871
    %v2873 = vrot.slane %v2865, %v2872
    %v2875 = vunpack.c.l.s4 1983009808
    %v2876 = vunpack.c.0.s8 %v2875
    %v2877 = vlaneseq
    %v2878 = vshrl.u32 %v2877, 7
    %v2879 = vsub.s32 %v2876, %v2878
    %v2880 = vrot.slane %v2866, %v2879
    %v2881 = vcombine.low %v2857, %v2873
    %v2882 = vcombine.high %v2857, %v2873
    %v2884 = vunpack.c.l.s4 1934713408
    %v2885 = vunpack.c.0.s8 %v2884
    %v2886 = vlaneseq
    %v2887 = vshrl.u32 %v2886, 7
    %v2888 = vsub.s32 %v2885, %v2887
    %v2889 = vrot.slane %v2881, %v2888
    %v2891 = vunpack.c.l.s4 1934713408
    %v2892 = vunpack.c.0.s8 %v2891
    %v2893 = vlaneseq
    %v2894 = vshrl.u32 %v2893, 7
    %v2895 = vsub.s32 %v2892, %v2894
    %v2896 = vrot.slane %v2882, %v2895
    %v2897 = vcombine.low %v2864, %v2880
    %v2898 = vcombine.high %v2864, %v2880
    %v2900 = vunpack.c.l.s4 1934713408
    %v2901 = vunpack.c.0.s8 %v2900
    %v2902 = vlaneseq
    %v2903 = vshrl.u32 %v2902, 7
    %v2904 = vsub.s32 %v2901, %v2903
    %v2905 = vrot.slane %v2897, %v2904
    %v2907 = vunpack.c.l.s4 1934713408
    %v2908 = vunpack.c.0.s8 %v2907
    %v2909 = vlaneseq
    %v2910 = vshrl.u32 %v2909, 7
    %v2911 = vsub.s32 %v2908, %v2910
    %v2912 = vrot.slane %v2898, %v2911
    %v2913 = vcombine.high %v2889, 0.0
    %v2914 = vcombine.high %v2896, 0.0
    %v2915 = vcombine.high %v2905, 0.0
    %v2916 = vcombine.high %v2912, 0.0
    %v2917 = vcombine.low %v2828, %v2836
    %v2918 = vcombine.high %v2828, %v2836
    %v2920 = vunpack.c.l.s4 1983009808
    %v2921 = vunpack.c.0.s8 %v2920
    %v2922 = vlaneseq
    %v2923 = vshrl.u32 %v2922, 7
    %v2924 = vsub.s32 %v2921, %v2923
    %v2925 = vrot.slane %v2917, %v2924
    %v2927 = vunpack.c.l.s4 1983009808
    %v2928 = vunpack.c.0.s8 %v2927
    %v2929 = vlaneseq
    %v2930 = vshrl.u32 %v2929, 7
    %v2931 = vsub.s32 %v2928, %v2930
    %v2932 = vrot.slane %v2918, %v2931
    %v2933 = vcombine.low %v2832, %v2840
    %v2934 = vcombine.high %v2832, %v2840
    %v2936 = vunpack.c.l.s4 1983009808
    %v2937 = vunpack.c.0.s8 %v2936
    %v2938 = vlaneseq
    %v2939 = vshrl.u32 %v2938, 7
    %v2940 = vsub.s32 %v2937, %v2939
    %v2941 = vrot.slane %v2933, %v2940
    %v2943 = vunpack.c.l.s4 1983009808
    %v2944 = vunpack.c.0.s8 %v2943
    %v2945 = vlaneseq
    %v2946 = vshrl.u32 %v2945, 7
    %v2947 = vsub.s32 %v2944, %v2946
    %v2948 = vrot.slane %v2934, %v2947
    %v2949 = vcombine.low %v2925, %v2941
    %v2950 = vcombine.high %v2925, %v2941
    %v2952 = vunpack.c.l.s4 1934713408
    %v2953 = vunpack.c.0.s8 %v2952
    %v2954 = vlaneseq
    %v2955 = vshrl.u32 %v2954, 7
    %v2956 = vsub.s32 %v2953, %v2955
    %v2957 = vrot.slane %v2949, %v2956
    %v2959 = vunpack.c.l.s4 1934713408
    %v2960 = vunpack.c.0.s8 %v2959
    %v2961 = vlaneseq
    %v2962 = vshrl.u32 %v2961, 7
    %v2963 = vsub.s32 %v2960, %v2962
    %v2964 = vrot.slane %v2950, %v2963
    %v2965 = vcombine.low %v2932, %v2948
    %v2966 = vcombine.high %v2932, %v2948
    %v2968 = vunpack.c.l.s4 1934713408
    %v2969 = vunpack.c.0.s8 %v2968
    %v2970 = vlaneseq
    %v2971 = vshrl.u32 %v2970, 7
    %v2972 = vsub.s32 %v2969, %v2971
    %v2973 = vrot.slane %v2965, %v2972
    %v2975 = vunpack.c.l.s4 1934713408
    %v2976 = vunpack.c.0.s8 %v2975
    %v2977 = vlaneseq
    %v2978 = vshrl.u32 %v2977, 7
    %v2979 = vsub.s32 %v2976, %v2978
    %v2980 = vrot.slane %v2966, %v2979
    %v2981 = vcombine.high %v2957, 0.0
    %v2982 = vcombine.high %v2964, 0.0
    %v2983 = vcombine.high %v2973, 0.0
    %v2984 = vcombine.high %v2980, 0.0
    %2986 = vrot.lane.b32.xlu0 %v2913, 16
    %v2987 = vpop.permute.xlu0 %2986
    %2990 = vrot.lane.b32.xlu0 %v2896, 32
    %v2991 = vpop.permute.xlu0 %2990
    %2994 = vrot.lane.b32.xlu0 %v2914, 48
    %v2995 = vpop.permute.xlu0 %2994
    %2998 = vrot.lane.b32.xlu0 %v2905, 64
    %v2999 = vpop.permute.xlu0 %2998
    %3002 = vrot.lane.b32.xlu0 %v2915, 80
    %v3003 = vpop.permute.xlu0 %3002
    %3006 = vrot.lane.b32.xlu0 %v2912, 96
    %v3007 = vpop.permute.xlu0 %3006
    %3010 = vrot.lane.b32.xlu0 %v2916, 112
    %v3011 = vpop.permute.xlu0 %3010
    %3014 = vrot.lane.b32.xlu0 %v2981, 16
    %v3015 = vpop.permute.xlu0 %3014
    %3018 = vrot.lane.b32.xlu0 %v2964, 32
    %v3019 = vpop.permute.xlu0 %3018
    %3022 = vrot.lane.b32.xlu0 %v2982, 48
    %v3023 = vpop.permute.xlu0 %3022
    %3026 = vrot.lane.b32.xlu0 %v2973, 64
    %v3027 = vpop.permute.xlu0 %3026
    %3030 = vrot.lane.b32.xlu0 %v2983, 80
    %v3031 = vpop.permute.xlu0 %3030
    %3034 = vrot.lane.b32.xlu0 %v2980, 96
    %v3035 = vpop.permute.xlu0 %3034
    %3038 = vrot.lane.b32.xlu0 %v2984, 112
    %v3039 = vpop.permute.xlu0 %3038
    %v3041 = vsel %vm372, %v2889, %v2987
    %v3042 = vsel %vm374, %v3041, %v2991
    %v3043 = vsel %vm376, %v3042, %v2995
    %v3044 = vsel %vm378, %v3043, %v2999
    %v3045 = vsel %vm380, %v3044, %v3003
    %v3046 = vsel %vm382, %v3045, %v3007
    %v3047 = vsel %vm384, %v3046, %v3011
    %v3048 = vsel %vm372, %v2957, %v3015
    %v3049 = vsel %vm374, %v3048, %v3019
    %v3050 = vsel %vm376, %v3049, %v3023
    %v3051 = vsel %vm378, %v3050, %v3027
    %v3052 = vsel %vm380, %v3051, %v3031
    %v3053 = vsel %vm382, %v3052, %v3035
    %v3054 = vsel %vm384, %v3053, %v3039
    %v3057 = vrot.slane %v3047, 4
    %v3058 = vrot.slane %v3054, 4
    %3061 = vst [vmem:[#allocation4 + $0x50] sm:$0xf0] %v3057
    %3062 = vst [vmem:[#allocation4 + $0x58] sm:$0xf0] %v3058
    %v3063 = vld [vmem:[#allocation2 + $0x2] sm:$0xff]
    %v3064 = vld [vmem:[#allocation2 + $0xa] sm:$0xff]
    %v3065 = vld [vmem:[#allocation2 + $0x1a] sm:$0xff]
    %v3066 = vld [vmem:[#allocation2 + $0x22] sm:$0xff]
    %v3067 = vld [vmem:[#allocation2 + $0x32] sm:$0xff]
    %v3068 = vld [vmem:[#allocation2 + $0x3a] sm:$0xff]
    %v3069 = vld [vmem:[#allocation2 + $0x4a] sm:$0xff]
    %v3070 = vld [vmem:[#allocation2 + $0x52] sm:$0xff]
    %v3071 = vcombine.low %v3063, %v3067
    %v3072 = vcombine.high %v3063, %v3067
    %v3074 = vunpack.c.l.s4 1983009808
    %v3075 = vunpack.c.0.s8 %v3074
    %v3076 = vlaneseq
    %v3077 = vshrl.u32 %v3076, 7
    %v3078 = vsub.s32 %v3075, %v3077
    %v3079 = vrot.slane %v3071, %v3078
    %v3081 = vunpack.c.l.s4 1983009808
    %v3082 = vunpack.c.0.s8 %v3081
    %v3083 = vlaneseq
    %v3084 = vshrl.u32 %v3083, 7
    %v3085 = vsub.s32 %v3082, %v3084
    %v3086 = vrot.slane %v3072, %v3085
    %v3087 = vcombine.low %v3065, %v3069
    %v3088 = vcombine.high %v3065, %v3069
    %v3090 = vunpack.c.l.s4 1983009808
    %v3091 = vunpack.c.0.s8 %v3090
    %v3092 = vlaneseq
    %v3093 = vshrl.u32 %v3092, 7
    %v3094 = vsub.s32 %v3091, %v3093
    %v3095 = vrot.slane %v3087, %v3094
    %v3097 = vunpack.c.l.s4 1983009808
    %v3098 = vunpack.c.0.s8 %v3097
    %v3099 = vlaneseq
    %v3100 = vshrl.u32 %v3099, 7
    %v3101 = vsub.s32 %v3098, %v3100
    %v3102 = vrot.slane %v3088, %v3101
    %v3103 = vcombine.low %v3079, %v3095
    %v3104 = vcombine.high %v3079, %v3095
    %v3106 = vunpack.c.l.s4 1934713408
    %v3107 = vunpack.c.0.s8 %v3106
    %v3108 = vlaneseq
    %v3109 = vshrl.u32 %v3108, 7
    %v3110 = vsub.s32 %v3107, %v3109
    %v3111 = vrot.slane %v3103, %v3110
    %v3113 = vunpack.c.l.s4 1934713408
    %v3114 = vunpack.c.0.s8 %v3113
    %v3115 = vlaneseq
    %v3116 = vshrl.u32 %v3115, 7
    %v3117 = vsub.s32 %v3114, %v3116
    %v3118 = vrot.slane %v3104, %v3117
    %v3119 = vcombine.low %v3086, %v3102
    %v3120 = vcombine.high %v3086, %v3102
    %v3122 = vunpack.c.l.s4 1934713408
    %v3123 = vunpack.c.0.s8 %v3122
    %v3124 = vlaneseq
    %v3125 = vshrl.u32 %v3124, 7
    %v3126 = vsub.s32 %v3123, %v3125
    %v3127 = vrot.slane %v3119, %v3126
    %v3129 = vunpack.c.l.s4 1934713408
    %v3130 = vunpack.c.0.s8 %v3129
    %v3131 = vlaneseq
    %v3132 = vshrl.u32 %v3131, 7
    %v3133 = vsub.s32 %v3130, %v3132
    %v3134 = vrot.slane %v3120, %v3133
    %v3135 = vcombine.high %v3111, 0.0
    %v3136 = vcombine.high %v3118, 0.0
    %v3137 = vcombine.high %v3127, 0.0
    %v3138 = vcombine.high %v3134, 0.0
    %v3139 = vcombine.low %v3064, %v3068
    %v3140 = vcombine.high %v3064, %v3068
    %v3142 = vunpack.c.l.s4 1983009808
    %v3143 = vunpack.c.0.s8 %v3142
    %v3144 = vlaneseq
    %v3145 = vshrl.u32 %v3144, 7
    %v3146 = vsub.s32 %v3143, %v3145
    %v3147 = vrot.slane %v3139, %v3146
    %v3149 = vunpack.c.l.s4 1983009808
    %v3150 = vunpack.c.0.s8 %v3149
    %v3151 = vlaneseq
    %v3152 = vshrl.u32 %v3151, 7
    %v3153 = vsub.s32 %v3150, %v3152
    %v3154 = vrot.slane %v3140, %v3153
    %v3155 = vcombine.low %v3066, %v3070
    %v3156 = vcombine.high %v3066, %v3070
    %v3158 = vunpack.c.l.s4 1983009808
    %v3159 = vunpack.c.0.s8 %v3158
    %v3160 = vlaneseq
    %v3161 = vshrl.u32 %v3160, 7
    %v3162 = vsub.s32 %v3159, %v3161
    %v3163 = vrot.slane %v3155, %v3162
    %v3165 = vunpack.c.l.s4 1983009808
    %v3166 = vunpack.c.0.s8 %v3165
    %v3167 = vlaneseq
    %v3168 = vshrl.u32 %v3167, 7
    %v3169 = vsub.s32 %v3166, %v3168
    %v3170 = vrot.slane %v3156, %v3169
    %v3171 = vcombine.low %v3147, %v3163
    %v3172 = vcombine.high %v3147, %v3163
    %v3174 = vunpack.c.l.s4 1934713408
    %v3175 = vunpack.c.0.s8 %v3174
    %v3176 = vlaneseq
    %v3177 = vshrl.u32 %v3176, 7
    %v3178 = vsub.s32 %v3175, %v3177
    %v3179 = vrot.slane %v3171, %v3178
    %v3181 = vunpack.c.l.s4 1934713408
    %v3182 = vunpack.c.0.s8 %v3181
    %v3183 = vlaneseq
    %v3184 = vshrl.u32 %v3183, 7
    %v3185 = vsub.s32 %v3182, %v3184
    %v3186 = vrot.slane %v3172, %v3185
    %v3187 = vcombine.low %v3154, %v3170
    %v3188 = vcombine.high %v3154, %v3170
    %v3190 = vunpack.c.l.s4 1934713408
    %v3191 = vunpack.c.0.s8 %v3190
    %v3192 = vlaneseq
    %v3193 = vshrl.u32 %v3192, 7
    %v3194 = vsub.s32 %v3191, %v3193
    %v3195 = vrot.slane %v3187, %v3194
    %v3197 = vunpack.c.l.s4 1934713408
    %v3198 = vunpack.c.0.s8 %v3197
    %v3199 = vlaneseq
    %v3200 = vshrl.u32 %v3199, 7
    %v3201 = vsub.s32 %v3198, %v3200
    %v3202 = vrot.slane %v3188, %v3201
    %v3203 = vcombine.high %v3179, 0.0
    %v3204 = vcombine.high %v3186, 0.0
    %v3205 = vcombine.high %v3195, 0.0
    %v3206 = vcombine.high %v3202, 0.0
    %3208 = vrot.lane.b32.xlu0 %v3135, 16
    %v3209 = vpop.permute.xlu0 %3208
    %3212 = vrot.lane.b32.xlu0 %v3118, 32
    %v3213 = vpop.permute.xlu0 %3212
    %3216 = vrot.lane.b32.xlu0 %v3136, 48
    %v3217 = vpop.permute.xlu0 %3216
    %3220 = vrot.lane.b32.xlu0 %v3127, 64
    %v3221 = vpop.permute.xlu0 %3220
    %3224 = vrot.lane.b32.xlu0 %v3137, 80
    %v3225 = vpop.permute.xlu0 %3224
    %3228 = vrot.lane.b32.xlu0 %v3134, 96
    %v3229 = vpop.permute.xlu0 %3228
    %3232 = vrot.lane.b32.xlu0 %v3138, 112
    %v3233 = vpop.permute.xlu0 %3232
    %3236 = vrot.lane.b32.xlu0 %v3203, 16
    %v3237 = vpop.permute.xlu0 %3236
    %3240 = vrot.lane.b32.xlu0 %v3186, 32
    %v3241 = vpop.permute.xlu0 %3240
    %3244 = vrot.lane.b32.xlu0 %v3204, 48
    %v3245 = vpop.permute.xlu0 %3244
    %3248 = vrot.lane.b32.xlu0 %v3195, 64
    %v3249 = vpop.permute.xlu0 %3248
    %3252 = vrot.lane.b32.xlu0 %v3205, 80
    %v3253 = vpop.permute.xlu0 %3252
    %3256 = vrot.lane.b32.xlu0 %v3202, 96
    %v3257 = vpop.permute.xlu0 %3256
    %3260 = vrot.lane.b32.xlu0 %v3206, 112
    %v3261 = vpop.permute.xlu0 %3260
    %v3263 = vsel %vm372, %v3111, %v3209
    %v3264 = vsel %vm374, %v3263, %v3213
    %v3265 = vsel %vm376, %v3264, %v3217
    %v3266 = vsel %vm378, %v3265, %v3221
    %v3267 = vsel %vm380, %v3266, %v3225
    %v3268 = vsel %vm382, %v3267, %v3229
    %v3269 = vsel %vm384, %v3268, %v3233
    %v3270 = vsel %vm372, %v3179, %v3237
    %v3271 = vsel %vm374, %v3270, %v3241
    %v3272 = vsel %vm376, %v3271, %v3245
    %v3273 = vsel %vm378, %v3272, %v3249
    %v3274 = vsel %vm380, %v3273, %v3253
    %v3275 = vsel %vm382, %v3274, %v3257
    %v3276 = vsel %vm384, %v3275, %v3261
    %3277 = vst [vmem:[#allocation4 + $0x60] sm:$0xf] %v3269
    %3278 = vst [vmem:[#allocation4 + $0x68] sm:$0xf] %v3276
    %v3279 = vld [vmem:[%s163 + $0x2] sm:$0xff]
    %v3280 = vld [vmem:[%s163 + $0xa] sm:$0xff]
    %v3281 = vld [vmem:[%s163 + $0x1a] sm:$0xff]
    %v3282 = vld [vmem:[%s163 + $0x22] sm:$0xff]
    %v3283 = vld [vmem:[%s163 + $0x32] sm:$0xff]
    %v3284 = vld [vmem:[%s163 + $0x3a] sm:$0xff]
    %v3285 = vld [vmem:[%s163 + $0x4a] sm:$0xff]
    %v3286 = vld [vmem:[%s163 + $0x52] sm:$0xff]
    %v3287 = vcombine.low %v3279, %v3283
    %v3288 = vcombine.high %v3279, %v3283
    %v3290 = vunpack.c.l.s4 1983009808
    %v3291 = vunpack.c.0.s8 %v3290
    %v3292 = vlaneseq
    %v3293 = vshrl.u32 %v3292, 7
    %v3294 = vsub.s32 %v3291, %v3293
    %v3295 = vrot.slane %v3287, %v3294
    %v3297 = vunpack.c.l.s4 1983009808
    %v3298 = vunpack.c.0.s8 %v3297
    %v3299 = vlaneseq
    %v3300 = vshrl.u32 %v3299, 7
    %v3301 = vsub.s32 %v3298, %v3300
    %v3302 = vrot.slane %v3288, %v3301
    %v3303 = vcombine.low %v3281, %v3285
    %v3304 = vcombine.high %v3281, %v3285
    %v3306 = vunpack.c.l.s4 1983009808
    %v3307 = vunpack.c.0.s8 %v3306
    %v3308 = vlaneseq
    %v3309 = vshrl.u32 %v3308, 7
    %v3310 = vsub.s32 %v3307, %v3309
    %v3311 = vrot.slane %v3303, %v3310
    %v3313 = vunpack.c.l.s4 1983009808
    %v3314 = vunpack.c.0.s8 %v3313
    %v3315 = vlaneseq
    %v3316 = vshrl.u32 %v3315, 7
    %v3317 = vsub.s32 %v3314, %v3316
    %v3318 = vrot.slane %v3304, %v3317
    %v3319 = vcombine.low %v3295, %v3311
    %v3320 = vcombine.high %v3295, %v3311
    %v3322 = vunpack.c.l.s4 1934713408
    %v3323 = vunpack.c.0.s8 %v3322
    %v3324 = vlaneseq
    %v3325 = vshrl.u32 %v3324, 7
    %v3326 = vsub.s32 %v3323, %v3325
    %v3327 = vrot.slane %v3319, %v3326
    %v3329 = vunpack.c.l.s4 1934713408
    %v3330 = vunpack.c.0.s8 %v3329
    %v3331 = vlaneseq
    %v3332 = vshrl.u32 %v3331, 7
    %v3333 = vsub.s32 %v3330, %v3332
    %v3334 = vrot.slane %v3320, %v3333
    %v3335 = vcombine.low %v3302, %v3318
    %v3336 = vcombine.high %v3302, %v3318
    %v3338 = vunpack.c.l.s4 1934713408
    %v3339 = vunpack.c.0.s8 %v3338
    %v3340 = vlaneseq
    %v3341 = vshrl.u32 %v3340, 7
    %v3342 = vsub.s32 %v3339, %v3341
    %v3343 = vrot.slane %v3335, %v3342
    %v3345 = vunpack.c.l.s4 1934713408
    %v3346 = vunpack.c.0.s8 %v3345
    %v3347 = vlaneseq
    %v3348 = vshrl.u32 %v3347, 7
    %v3349 = vsub.s32 %v3346, %v3348
    %v3350 = vrot.slane %v3336, %v3349
    %v3351 = vcombine.high %v3327, 0.0
    %v3352 = vcombine.high %v3334, 0.0
    %v3353 = vcombine.high %v3343, 0.0
    %v3354 = vcombine.high %v3350, 0.0
    %v3355 = vcombine.low %v3280, %v3284
    %v3356 = vcombine.high %v3280, %v3284
    %v3358 = vunpack.c.l.s4 1983009808
    %v3359 = vunpack.c.0.s8 %v3358
    %v3360 = vlaneseq
    %v3361 = vshrl.u32 %v3360, 7
    %v3362 = vsub.s32 %v3359, %v3361
    %v3363 = vrot.slane %v3355, %v3362
    %v3365 = vunpack.c.l.s4 1983009808
    %v3366 = vunpack.c.0.s8 %v3365
    %v3367 = vlaneseq
    %v3368 = vshrl.u32 %v3367, 7
    %v3369 = vsub.s32 %v3366, %v3368
    %v3370 = vrot.slane %v3356, %v3369
    %v3371 = vcombine.low %v3282, %v3286
    %v3372 = vcombine.high %v3282, %v3286
    %v3374 = vunpack.c.l.s4 1983009808
    %v3375 = vunpack.c.0.s8 %v3374
    %v3376 = vlaneseq
    %v3377 = vshrl.u32 %v3376, 7
    %v3378 = vsub.s32 %v3375, %v3377
    %v3379 = vrot.slane %v3371, %v3378
    %v3381 = vunpack.c.l.s4 1983009808
    %v3382 = vunpack.c.0.s8 %v3381
    %v3383 = vlaneseq
    %v3384 = vshrl.u32 %v3383, 7
    %v3385 = vsub.s32 %v3382, %v3384
    %v3386 = vrot.slane %v3372, %v3385
    %v3387 = vcombine.low %v3363, %v3379
    %v3388 = vcombine.high %v3363, %v3379
    %v3390 = vunpack.c.l.s4 1934713408
    %v3391 = vunpack.c.0.s8 %v3390
    %v3392 = vlaneseq
    %v3393 = vshrl.u32 %v3392, 7
    %v3394 = vsub.s32 %v3391, %v3393
    %v3395 = vrot.slane %v3387, %v3394
    %v3397 = vunpack.c.l.s4 1934713408
    %v3398 = vunpack.c.0.s8 %v3397
    %v3399 = vlaneseq
    %v3400 = vshrl.u32 %v3399, 7
    %v3401 = vsub.s32 %v3398, %v3400
    %v3402 = vrot.slane %v3388, %v3401
    %v3403 = vcombine.low %v3370, %v3386
    %v3404 = vcombine.high %v3370, %v3386
    %v3406 = vunpack.c.l.s4 1934713408
    %v3407 = vunpack.c.0.s8 %v3406
    %v3408 = vlaneseq
    %v3409 = vshrl.u32 %v3408, 7
    %v3410 = vsub.s32 %v3407, %v3409
    %v3411 = vrot.slane %v3403, %v3410
    %v3413 = vunpack.c.l.s4 1934713408
    %v3414 = vunpack.c.0.s8 %v3413
    %v3415 = vlaneseq
    %v3416 = vshrl.u32 %v3415, 7
    %v3417 = vsub.s32 %v3414, %v3416
    %v3418 = vrot.slane %v3404, %v3417
    %v3419 = vcombine.high %v3395, 0.0
    %v3420 = vcombine.high %v3402, 0.0
    %v3421 = vcombine.high %v3411, 0.0
    %v3422 = vcombine.high %v3418, 0.0
    %3424 = vrot.lane.b32.xlu0 %v3351, 16
    %v3425 = vpop.permute.xlu0 %3424
    %3428 = vrot.lane.b32.xlu0 %v3334, 32
    %v3429 = vpop.permute.xlu0 %3428
    %3432 = vrot.lane.b32.xlu0 %v3352, 48
    %v3433 = vpop.permute.xlu0 %3432
    %3436 = vrot.lane.b32.xlu0 %v3343, 64
    %v3437 = vpop.permute.xlu0 %3436
    %3440 = vrot.lane.b32.xlu0 %v3353, 80
    %v3441 = vpop.permute.xlu0 %3440
    %3444 = vrot.lane.b32.xlu0 %v3350, 96
    %v3445 = vpop.permute.xlu0 %3444
    %3448 = vrot.lane.b32.xlu0 %v3354, 112
    %v3449 = vpop.permute.xlu0 %3448
    %3452 = vrot.lane.b32.xlu0 %v3419, 16
    %v3453 = vpop.permute.xlu0 %3452
    %3456 = vrot.lane.b32.xlu0 %v3402, 32
    %v3457 = vpop.permute.xlu0 %3456
    %3460 = vrot.lane.b32.xlu0 %v3420, 48
    %v3461 = vpop.permute.xlu0 %3460
    %3464 = vrot.lane.b32.xlu0 %v3411, 64
    %v3465 = vpop.permute.xlu0 %3464
    %3468 = vrot.lane.b32.xlu0 %v3421, 80
    %v3469 = vpop.permute.xlu0 %3468
    %3472 = vrot.lane.b32.xlu0 %v3418, 96
    %v3473 = vpop.permute.xlu0 %3472
    %3476 = vrot.lane.b32.xlu0 %v3422, 112
    %v3477 = vpop.permute.xlu0 %3476
    %v3479 = vsel %vm372, %v3327, %v3425
    %v3480 = vsel %vm374, %v3479, %v3429
    %v3481 = vsel %vm376, %v3480, %v3433
    %v3482 = vsel %vm378, %v3481, %v3437
    %v3483 = vsel %vm380, %v3482, %v3441
    %v3484 = vsel %vm382, %v3483, %v3445
    %v3485 = vsel %vm384, %v3484, %v3449
    %v3486 = vsel %vm372, %v3395, %v3453
    %v3487 = vsel %vm374, %v3486, %v3457
    %v3488 = vsel %vm376, %v3487, %v3461
    %v3489 = vsel %vm378, %v3488, %v3465
    %v3490 = vsel %vm380, %v3489, %v3469
    %v3491 = vsel %vm382, %v3490, %v3473
    %v3492 = vsel %vm384, %v3491, %v3477
    %3493 = vst [vmem:[#allocation4 + $0x70] sm:$0xf] %v3485
    %3494 = vst [vmem:[#allocation4 + $0x78] sm:$0xf] %v3492
    %v3495 = vld [vmem:[#allocation2 + $0x2] sm:$0xff]
    %v3496 = vld [vmem:[#allocation2 + $0xa] sm:$0xff]
    %v3497 = vld [vmem:[#allocation2 + $0x1a] sm:$0xff]
    %v3498 = vld [vmem:[#allocation2 + $0x22] sm:$0xff]
    %v3499 = vld [vmem:[#allocation2 + $0x32] sm:$0xff]
    %v3500 = vld [vmem:[#allocation2 + $0x3a] sm:$0xff]
    %v3501 = vld [vmem:[#allocation2 + $0x4a] sm:$0xff]
    %v3502 = vld [vmem:[#allocation2 + $0x52] sm:$0xff]
    %3511 = vrot.lane.b32.xlu0 %v3495, 127
    %v3512 = vpop.permute.xlu0 %3511
    %3513 = vrot.lane.b32.xlu0 %v3496, 127
    %v3514 = vpop.permute.xlu0 %3513
    %3515 = vrot.lane.b32.xlu0 %v3497, 127
    %v3516 = vpop.permute.xlu0 %3515
    %3517 = vrot.lane.b32.xlu0 %v3498, 127
    %v3518 = vpop.permute.xlu0 %3517
    %3519 = vrot.lane.b32.xlu0 %v3499, 127
    %v3520 = vpop.permute.xlu0 %3519
    %3521 = vrot.lane.b32.xlu0 %v3500, 127
    %v3522 = vpop.permute.xlu0 %3521
    %3523 = vrot.lane.b32.xlu0 %v3501, 127
    %v3524 = vpop.permute.xlu0 %3523
    %3525 = vrot.lane.b32.xlu0 %v3502, 127
    %v3526 = vpop.permute.xlu0 %3525
    %v3535 = vcombine.low %v3512, %v3520
    %v3536 = vcombine.high %v3512, %v3520
    %v3538 = vunpack.c.l.s4 1983009808
    %v3539 = vunpack.c.0.s8 %v3538
    %v3540 = vlaneseq
    %v3541 = vshrl.u32 %v3540, 7
    %v3542 = vsub.s32 %v3539, %v3541
    %v3543 = vrot.slane %v3535, %v3542
    %v3545 = vunpack.c.l.s4 1983009808
    %v3546 = vunpack.c.0.s8 %v3545
    %v3547 = vlaneseq
    %v3548 = vshrl.u32 %v3547, 7
    %v3549 = vsub.s32 %v3546, %v3548
    %v3550 = vrot.slane %v3536, %v3549
    %v3551 = vcombine.low %v3516, %v3524
    %v3552 = vcombine.high %v3516, %v3524
    %v3554 = vunpack.c.l.s4 1983009808
    %v3555 = vunpack.c.0.s8 %v3554
    %v3556 = vlaneseq
    %v3557 = vshrl.u32 %v3556, 7
    %v3558 = vsub.s32 %v3555, %v3557
    %v3559 = vrot.slane %v3551, %v3558
    %v3561 = vunpack.c.l.s4 1983009808
    %v3562 = vunpack.c.0.s8 %v3561
    %v3563 = vlaneseq
    %v3564 = vshrl.u32 %v3563, 7
    %v3565 = vsub.s32 %v3562, %v3564
    %v3566 = vrot.slane %v3552, %v3565
    %v3567 = vcombine.low %v3543, %v3559
    %v3568 = vcombine.high %v3543, %v3559
    %v3570 = vunpack.c.l.s4 1934713408
    %v3571 = vunpack.c.0.s8 %v3570
    %v3572 = vlaneseq
    %v3573 = vshrl.u32 %v3572, 7
    %v3574 = vsub.s32 %v3571, %v3573
    %v3575 = vrot.slane %v3567, %v3574
    %v3577 = vunpack.c.l.s4 1934713408
    %v3578 = vunpack.c.0.s8 %v3577
    %v3579 = vlaneseq
    %v3580 = vshrl.u32 %v3579, 7
    %v3581 = vsub.s32 %v3578, %v3580
    %v3582 = vrot.slane %v3568, %v3581
    %v3583 = vcombine.low %v3550, %v3566
    %v3584 = vcombine.high %v3550, %v3566
    %v3586 = vunpack.c.l.s4 1934713408
    %v3587 = vunpack.c.0.s8 %v3586
    %v3588 = vlaneseq
    %v3589 = vshrl.u32 %v3588, 7
    %v3590 = vsub.s32 %v3587, %v3589
    %v3591 = vrot.slane %v3583, %v3590
    %v3593 = vunpack.c.l.s4 1934713408
    %v3594 = vunpack.c.0.s8 %v3593
    %v3595 = vlaneseq
    %v3596 = vshrl.u32 %v3595, 7
    %v3597 = vsub.s32 %v3594, %v3596
    %v3598 = vrot.slane %v3584, %v3597
    %v3599 = vcombine.high %v3575, 0.0
    %v3600 = vcombine.high %v3582, 0.0
    %v3601 = vcombine.high %v3591, 0.0
    %v3602 = vcombine.high %v3598, 0.0
    %v3603 = vcombine.low %v3514, %v3522
    %v3604 = vcombine.high %v3514, %v3522
    %v3606 = vunpack.c.l.s4 1983009808
    %v3607 = vunpack.c.0.s8 %v3606
    %v3608 = vlaneseq
    %v3609 = vshrl.u32 %v3608, 7
    %v3610 = vsub.s32 %v3607, %v3609
    %v3611 = vrot.slane %v3603, %v3610
    %v3613 = vunpack.c.l.s4 1983009808
    %v3614 = vunpack.c.0.s8 %v3613
    %v3615 = vlaneseq
    %v3616 = vshrl.u32 %v3615, 7
    %v3617 = vsub.s32 %v3614, %v3616
    %v3618 = vrot.slane %v3604, %v3617
    %v3619 = vcombine.low %v3518, %v3526
    %v3620 = vcombine.high %v3518, %v3526
    %v3622 = vunpack.c.l.s4 1983009808
    %v3623 = vunpack.c.0.s8 %v3622
    %v3624 = vlaneseq
    %v3625 = vshrl.u32 %v3624, 7
    %v3626 = vsub.s32 %v3623, %v3625
    %v3627 = vrot.slane %v3619, %v3626
    %v3629 = vunpack.c.l.s4 1983009808
    %v3630 = vunpack.c.0.s8 %v3629
    %v3631 = vlaneseq
    %v3632 = vshrl.u32 %v3631, 7
    %v3633 = vsub.s32 %v3630, %v3632
    %v3634 = vrot.slane %v3620, %v3633
    %v3635 = vcombine.low %v3611, %v3627
    %v3636 = vcombine.high %v3611, %v3627
    %v3638 = vunpack.c.l.s4 1934713408
    %v3639 = vunpack.c.0.s8 %v3638
    %v3640 = vlaneseq
    %v3641 = vshrl.u32 %v3640, 7
    %v3642 = vsub.s32 %v3639, %v3641
    %v3643 = vrot.slane %v3635, %v3642
    %v3645 = vunpack.c.l.s4 1934713408
    %v3646 = vunpack.c.0.s8 %v3645
    %v3647 = vlaneseq
    %v3648 = vshrl.u32 %v3647, 7
    %v3649 = vsub.s32 %v3646, %v3648
    %v3650 = vrot.slane %v3636, %v3649
    %v3651 = vcombine.low %v3618, %v3634
    %v3652 = vcombine.high %v3618, %v3634
    %v3654 = vunpack.c.l.s4 1934713408
    %v3655 = vunpack.c.0.s8 %v3654
    %v3656 = vlaneseq
    %v3657 = vshrl.u32 %v3656, 7
    %v3658 = vsub.s32 %v3655, %v3657
    %v3659 = vrot.slane %v3651, %v3658
    %v3661 = vunpack.c.l.s4 1934713408
    %v3662 = vunpack.c.0.s8 %v3661
    %v3663 = vlaneseq
    %v3664 = vshrl.u32 %v3663, 7
    %v3665 = vsub.s32 %v3662, %v3664
    %v3666 = vrot.slane %v3652, %v3665
    %v3667 = vcombine.high %v3643, 0.0
    %v3668 = vcombine.high %v3650, 0.0
    %v3669 = vcombine.high %v3659, 0.0
    %v3670 = vcombine.high %v3666, 0.0
    %3672 = vrot.lane.b32.xlu0 %v3599, 16
    %v3673 = vpop.permute.xlu0 %3672
    %3676 = vrot.lane.b32.xlu0 %v3582, 32
    %v3677 = vpop.permute.xlu0 %3676
    %3680 = vrot.lane.b32.xlu0 %v3600, 48
    %v3681 = vpop.permute.xlu0 %3680
    %3684 = vrot.lane.b32.xlu0 %v3591, 64
    %v3685 = vpop.permute.xlu0 %3684
    %3688 = vrot.lane.b32.xlu0 %v3601, 80
    %v3689 = vpop.permute.xlu0 %3688
    %3692 = vrot.lane.b32.xlu0 %v3598, 96
    %v3693 = vpop.permute.xlu0 %3692
    %3696 = vrot.lane.b32.xlu0 %v3602, 112
    %v3697 = vpop.permute.xlu0 %3696
    %3700 = vrot.lane.b32.xlu0 %v3667, 16
    %v3701 = vpop.permute.xlu0 %3700
    %3704 = vrot.lane.b32.xlu0 %v3650, 32
    %v3705 = vpop.permute.xlu0 %3704
    %3708 = vrot.lane.b32.xlu0 %v3668, 48
    %v3709 = vpop.permute.xlu0 %3708
    %3712 = vrot.lane.b32.xlu0 %v3659, 64
    %v3713 = vpop.permute.xlu0 %3712
    %3716 = vrot.lane.b32.xlu0 %v3669, 80
    %v3717 = vpop.permute.xlu0 %3716
    %3720 = vrot.lane.b32.xlu0 %v3666, 96
    %v3721 = vpop.permute.xlu0 %3720
    %3724 = vrot.lane.b32.xlu0 %v3670, 112
    %v3725 = vpop.permute.xlu0 %3724
    %v3727 = vsel %vm372, %v3575, %v3673
    %v3728 = vsel %vm374, %v3727, %v3677
    %v3729 = vsel %vm376, %v3728, %v3681
    %v3730 = vsel %vm378, %v3729, %v3685
    %v3731 = vsel %vm380, %v3730, %v3689
    %v3732 = vsel %vm382, %v3731, %v3693
    %v3733 = vsel %vm384, %v3732, %v3697
    %v3734 = vsel %vm372, %v3643, %v3701
    %v3735 = vsel %vm374, %v3734, %v3705
    %v3736 = vsel %vm376, %v3735, %v3709
    %v3737 = vsel %vm378, %v3736, %v3713
    %v3738 = vsel %vm380, %v3737, %v3717
    %v3739 = vsel %vm382, %v3738, %v3721
    %v3740 = vsel %vm384, %v3739, %v3725
    %v3743 = vrot.slane %v3733, 4
    %v3744 = vrot.slane %v3740, 4
    %3747 = vst [vmem:[#allocation4 + $0x60] sm:$0xf0] %v3743
    %3748 = vst [vmem:[#allocation4 + $0x68] sm:$0xf0] %v3744
    %v3749 = vld [vmem:[%s163 + $0x2] sm:$0xff]
    %v3750 = vld [vmem:[%s163 + $0xa] sm:$0xff]
    %v3751 = vld [vmem:[%s163 + $0x1a] sm:$0xff]
    %v3752 = vld [vmem:[%s163 + $0x22] sm:$0xff]
    %v3753 = vld [vmem:[%s163 + $0x32] sm:$0xff]
    %v3754 = vld [vmem:[%s163 + $0x3a] sm:$0xff]
    %v3755 = vld [vmem:[%s163 + $0x4a] sm:$0xff]
    %v3756 = vld [vmem:[%s163 + $0x52] sm:$0xff]
    %3765 = vrot.lane.b32.xlu0 %v3749, 127
    %v3766 = vpop.permute.xlu0 %3765
    %3767 = vrot.lane.b32.xlu0 %v3750, 127
    %v3768 = vpop.permute.xlu0 %3767
    %3769 = vrot.lane.b32.xlu0 %v3751, 127
    %v3770 = vpop.permute.xlu0 %3769
    %3771 = vrot.lane.b32.xlu0 %v3752, 127
    %v3772 = vpop.permute.xlu0 %3771
    %3773 = vrot.lane.b32.xlu0 %v3753, 127
    %v3774 = vpop.permute.xlu0 %3773
    %3775 = vrot.lane.b32.xlu0 %v3754, 127
    %v3776 = vpop.permute.xlu0 %3775
    %3777 = vrot.lane.b32.xlu0 %v3755, 127
    %v3778 = vpop.permute.xlu0 %3777
    %3779 = vrot.lane.b32.xlu0 %v3756, 127
    %v3780 = vpop.permute.xlu0 %3779
    %v3789 = vcombine.low %v3766, %v3774
    %v3790 = vcombine.high %v3766, %v3774
    %v3792 = vunpack.c.l.s4 1983009808
    %v3793 = vunpack.c.0.s8 %v3792
    %v3794 = vlaneseq
    %v3795 = vshrl.u32 %v3794, 7
    %v3796 = vsub.s32 %v3793, %v3795
    %v3797 = vrot.slane %v3789, %v3796
    %v3799 = vunpack.c.l.s4 1983009808
    %v3800 = vunpack.c.0.s8 %v3799
    %v3801 = vlaneseq
    %v3802 = vshrl.u32 %v3801, 7
    %v3803 = vsub.s32 %v3800, %v3802
    %v3804 = vrot.slane %v3790, %v3803
    %v3805 = vcombine.low %v3770, %v3778
    %v3806 = vcombine.high %v3770, %v3778
    %v3808 = vunpack.c.l.s4 1983009808
    %v3809 = vunpack.c.0.s8 %v3808
    %v3810 = vlaneseq
    %v3811 = vshrl.u32 %v3810, 7
    %v3812 = vsub.s32 %v3809, %v3811
    %v3813 = vrot.slane %v3805, %v3812
    %v3815 = vunpack.c.l.s4 1983009808
    %v3816 = vunpack.c.0.s8 %v3815
    %v3817 = vlaneseq
    %v3818 = vshrl.u32 %v3817, 7
    %v3819 = vsub.s32 %v3816, %v3818
    %v3820 = vrot.slane %v3806, %v3819
    %v3821 = vcombine.low %v3797, %v3813
    %v3822 = vcombine.high %v3797, %v3813
    %v3824 = vunpack.c.l.s4 1934713408
    %v3825 = vunpack.c.0.s8 %v3824
    %v3826 = vlaneseq
    %v3827 = vshrl.u32 %v3826, 7
    %v3828 = vsub.s32 %v3825, %v3827
    %v3829 = vrot.slane %v3821, %v3828
    %v3831 = vunpack.c.l.s4 1934713408
    %v3832 = vunpack.c.0.s8 %v3831
    %v3833 = vlaneseq
    %v3834 = vshrl.u32 %v3833, 7
    %v3835 = vsub.s32 %v3832, %v3834
    %v3836 = vrot.slane %v3822, %v3835
    %v3837 = vcombine.low %v3804, %v3820
    %v3838 = vcombine.high %v3804, %v3820
    %v3840 = vunpack.c.l.s4 1934713408
    %v3841 = vunpack.c.0.s8 %v3840
    %v3842 = vlaneseq
    %v3843 = vshrl.u32 %v3842, 7
    %v3844 = vsub.s32 %v3841, %v3843
    %v3845 = vrot.slane %v3837, %v3844
    %v3847 = vunpack.c.l.s4 1934713408
    %v3848 = vunpack.c.0.s8 %v3847
    %v3849 = vlaneseq
    %v3850 = vshrl.u32 %v3849, 7
    %v3851 = vsub.s32 %v3848, %v3850
    %v3852 = vrot.slane %v3838, %v3851
    %v3853 = vcombine.high %v3829, 0.0
    %v3854 = vcombine.high %v3836, 0.0
    %v3855 = vcombine.high %v3845, 0.0
    %v3856 = vcombine.high %v3852, 0.0
    %v3857 = vcombine.low %v3768, %v3776
    %v3858 = vcombine.high %v3768, %v3776
    %v3860 = vunpack.c.l.s4 1983009808
    %v3861 = vunpack.c.0.s8 %v3860
    %v3862 = vlaneseq
    %v3863 = vshrl.u32 %v3862, 7
    %v3864 = vsub.s32 %v3861, %v3863
    %v3865 = vrot.slane %v3857, %v3864
    %v3867 = vunpack.c.l.s4 1983009808
    %v3868 = vunpack.c.0.s8 %v3867
    %v3869 = vlaneseq
    %v3870 = vshrl.u32 %v3869, 7
    %v3871 = vsub.s32 %v3868, %v3870
    %v3872 = vrot.slane %v3858, %v3871
    %v3873 = vcombine.low %v3772, %v3780
    %v3874 = vcombine.high %v3772, %v3780
    %v3876 = vunpack.c.l.s4 1983009808
    %v3877 = vunpack.c.0.s8 %v3876
    %v3878 = vlaneseq
    %v3879 = vshrl.u32 %v3878, 7
    %v3880 = vsub.s32 %v3877, %v3879
    %v3881 = vrot.slane %v3873, %v3880
    %v3883 = vunpack.c.l.s4 1983009808
    %v3884 = vunpack.c.0.s8 %v3883
    %v3885 = vlaneseq
    %v3886 = vshrl.u32 %v3885, 7
    %v3887 = vsub.s32 %v3884, %v3886
    %v3888 = vrot.slane %v3874, %v3887
    %v3889 = vcombine.low %v3865, %v3881
    %v3890 = vcombine.high %v3865, %v3881
    %v3892 = vunpack.c.l.s4 1934713408
    %v3893 = vunpack.c.0.s8 %v3892
    %v3894 = vlaneseq
    %v3895 = vshrl.u32 %v3894, 7
    %v3896 = vsub.s32 %v3893, %v3895
    %v3897 = vrot.slane %v3889, %v3896
    %v3899 = vunpack.c.l.s4 1934713408
    %v3900 = vunpack.c.0.s8 %v3899
    %v3901 = vlaneseq
    %v3902 = vshrl.u32 %v3901, 7
    %v3903 = vsub.s32 %v3900, %v3902
    %v3904 = vrot.slane %v3890, %v3903
    %v3905 = vcombine.low %v3872, %v3888
    %v3906 = vcombine.high %v3872, %v3888
    %v3908 = vunpack.c.l.s4 1934713408
    %v3909 = vunpack.c.0.s8 %v3908
    %v3910 = vlaneseq
    %v3911 = vshrl.u32 %v3910, 7
    %v3912 = vsub.s32 %v3909, %v3911
    %v3913 = vrot.slane %v3905, %v3912
    %v3915 = vunpack.c.l.s4 1934713408
    %v3916 = vunpack.c.0.s8 %v3915
    %v3917 = vlaneseq
    %v3918 = vshrl.u32 %v3917, 7
    %v3919 = vsub.s32 %v3916, %v3918
    %v3920 = vrot.slane %v3906, %v3919
    %v3921 = vcombine.high %v3897, 0.0
    %v3922 = vcombine.high %v3904, 0.0
    %v3923 = vcombine.high %v3913, 0.0
    %v3924 = vcombine.high %v3920, 0.0
    %3926 = vrot.lane.b32.xlu0 %v3853, 16
    %v3927 = vpop.permute.xlu0 %3926
    %3930 = vrot.lane.b32.xlu0 %v3836, 32
    %v3931 = vpop.permute.xlu0 %3930
    %3934 = vrot.lane.b32.xlu0 %v3854, 48
    %v3935 = vpop.permute.xlu0 %3934
    %3938 = vrot.lane.b32.xlu0 %v3845, 64
    %v3939 = vpop.permute.xlu0 %3938
    %3942 = vrot.lane.b32.xlu0 %v3855, 80
    %v3943 = vpop.permute.xlu0 %3942
    %3946 = vrot.lane.b32.xlu0 %v3852, 96
    %v3947 = vpop.permute.xlu0 %3946
    %3950 = vrot.lane.b32.xlu0 %v3856, 112
    %v3951 = vpop.permute.xlu0 %3950
    %3954 = vrot.lane.b32.xlu0 %v3921, 16
    %v3955 = vpop.permute.xlu0 %3954
    %3958 = vrot.lane.b32.xlu0 %v3904, 32
    %v3959 = vpop.permute.xlu0 %3958
    %3962 = vrot.lane.b32.xlu0 %v3922, 48
    %v3963 = vpop.permute.xlu0 %3962
    %3966 = vrot.lane.b32.xlu0 %v3913, 64
    %v3967 = vpop.permute.xlu0 %3966
    %3970 = vrot.lane.b32.xlu0 %v3923, 80
    %v3971 = vpop.permute.xlu0 %3970
    %3974 = vrot.lane.b32.xlu0 %v3920, 96
    %v3975 = vpop.permute.xlu0 %3974
    %3978 = vrot.lane.b32.xlu0 %v3924, 112
    %v3979 = vpop.permute.xlu0 %3978
    %v3981 = vsel %vm372, %v3829, %v3927
    %v3982 = vsel %vm374, %v3981, %v3931
    %v3983 = vsel %vm376, %v3982, %v3935
    %v3984 = vsel %vm378, %v3983, %v3939
    %v3985 = vsel %vm380, %v3984, %v3943
    %v3986 = vsel %vm382, %v3985, %v3947
    %v3987 = vsel %vm384, %v3986, %v3951
    %v3988 = vsel %vm372, %v3897, %v3955
    %v3989 = vsel %vm374, %v3988, %v3959
    %v3990 = vsel %vm376, %v3989, %v3963
    %v3991 = vsel %vm378, %v3990, %v3967
    %v3992 = vsel %vm380, %v3991, %v3971
    %v3993 = vsel %vm382, %v3992, %v3975
    %v3994 = vsel %vm384, %v3993, %v3979
    %v3997 = vrot.slane %v3987, 4
    %v3998 = vrot.slane %v3994, 4
    %4001 = vst [vmem:[#allocation4 + $0x70] sm:$0xf0] %v3997
    %4002 = vst [vmem:[#allocation4 + $0x78] sm:$0xf0] %v3998
    %v4003 = vld [vmem:[#allocation2 + $0x2] sm:$0xff]
    %v4004 = vld [vmem:[#allocation2 + $0xa] sm:$0xff]
    %v4005 = vld [vmem:[#allocation2 + $0x1a] sm:$0xff]
    %v4006 = vld [vmem:[#allocation2 + $0x22] sm:$0xff]
    %v4007 = vld [vmem:[#allocation2 + $0x32] sm:$0xff]
    %v4008 = vld [vmem:[#allocation2 + $0x3a] sm:$0xff]
    %v4009 = vld [vmem:[#allocation2 + $0x4a] sm:$0xff]
    %v4010 = vld [vmem:[#allocation2 + $0x52] sm:$0xff]
    %4019 = vrot.lane.b32.xlu0 %v4003, 126
    %v4020 = vpop.permute.xlu0 %4019
    %4021 = vrot.lane.b32.xlu0 %v4004, 126
    %v4022 = vpop.permute.xlu0 %4021
    %4023 = vrot.lane.b32.xlu0 %v4005, 126
    %v4024 = vpop.permute.xlu0 %4023
    %4025 = vrot.lane.b32.xlu0 %v4006, 126
    %v4026 = vpop.permute.xlu0 %4025
    %4027 = vrot.lane.b32.xlu0 %v4007, 126
    %v4028 = vpop.permute.xlu0 %4027
    %4029 = vrot.lane.b32.xlu0 %v4008, 126
    %v4030 = vpop.permute.xlu0 %4029
    %4031 = vrot.lane.b32.xlu0 %v4009, 126
    %v4032 = vpop.permute.xlu0 %4031
    %4033 = vrot.lane.b32.xlu0 %v4010, 126
    %v4034 = vpop.permute.xlu0 %4033
    %v4043 = vcombine.low %v4020, %v4028
    %v4044 = vcombine.high %v4020, %v4028
    %v4046 = vunpack.c.l.s4 1983009808
    %v4047 = vunpack.c.0.s8 %v4046
    %v4048 = vlaneseq
    %v4049 = vshrl.u32 %v4048, 7
    %v4050 = vsub.s32 %v4047, %v4049
    %v4051 = vrot.slane %v4043, %v4050
    %v4053 = vunpack.c.l.s4 1983009808
    %v4054 = vunpack.c.0.s8 %v4053
    %v4055 = vlaneseq
    %v4056 = vshrl.u32 %v4055, 7
    %v4057 = vsub.s32 %v4054, %v4056
    %v4058 = vrot.slane %v4044, %v4057
    %v4059 = vcombine.low %v4024, %v4032
    %v4060 = vcombine.high %v4024, %v4032
    %v4062 = vunpack.c.l.s4 1983009808
    %v4063 = vunpack.c.0.s8 %v4062
    %v4064 = vlaneseq
    %v4065 = vshrl.u32 %v4064, 7
    %v4066 = vsub.s32 %v4063, %v4065
    %v4067 = vrot.slane %v4059, %v4066
    %v4069 = vunpack.c.l.s4 1983009808
    %v4070 = vunpack.c.0.s8 %v4069
    %v4071 = vlaneseq
    %v4072 = vshrl.u32 %v4071, 7
    %v4073 = vsub.s32 %v4070, %v4072
    %v4074 = vrot.slane %v4060, %v4073
    %v4075 = vcombine.low %v4051, %v4067
    %v4076 = vcombine.high %v4051, %v4067
    %v4078 = vunpack.c.l.s4 1934713408
    %v4079 = vunpack.c.0.s8 %v4078
    %v4080 = vlaneseq
    %v4081 = vshrl.u32 %v4080, 7
    %v4082 = vsub.s32 %v4079, %v4081
    %v4083 = vrot.slane %v4075, %v4082
    %v4085 = vunpack.c.l.s4 1934713408
    %v4086 = vunpack.c.0.s8 %v4085
    %v4087 = vlaneseq
    %v4088 = vshrl.u32 %v4087, 7
    %v4089 = vsub.s32 %v4086, %v4088
    %v4090 = vrot.slane %v4076, %v4089
    %v4091 = vcombine.low %v4058, %v4074
    %v4092 = vcombine.high %v4058, %v4074
    %v4094 = vunpack.c.l.s4 1934713408
    %v4095 = vunpack.c.0.s8 %v4094
    %v4096 = vlaneseq
    %v4097 = vshrl.u32 %v4096, 7
    %v4098 = vsub.s32 %v4095, %v4097
    %v4099 = vrot.slane %v4091, %v4098
    %v4101 = vunpack.c.l.s4 1934713408
    %v4102 = vunpack.c.0.s8 %v4101
    %v4103 = vlaneseq
    %v4104 = vshrl.u32 %v4103, 7
    %v4105 = vsub.s32 %v4102, %v4104
    %v4106 = vrot.slane %v4092, %v4105
    %v4107 = vcombine.high %v4083, 0.0
    %v4108 = vcombine.high %v4090, 0.0
    %v4109 = vcombine.high %v4099, 0.0
    %v4110 = vcombine.high %v4106, 0.0
    %v4111 = vcombine.low %v4022, %v4030
    %v4112 = vcombine.high %v4022, %v4030
    %v4114 = vunpack.c.l.s4 1983009808
    %v4115 = vunpack.c.0.s8 %v4114
    %v4116 = vlaneseq
    %v4117 = vshrl.u32 %v4116, 7
    %v4118 = vsub.s32 %v4115, %v4117
    %v4119 = vrot.slane %v4111, %v4118
    %v4121 = vunpack.c.l.s4 1983009808
    %v4122 = vunpack.c.0.s8 %v4121
    %v4123 = vlaneseq
    %v4124 = vshrl.u32 %v4123, 7
    %v4125 = vsub.s32 %v4122, %v4124
    %v4126 = vrot.slane %v4112, %v4125
    %v4127 = vcombine.low %v4026, %v4034
    %v4128 = vcombine.high %v4026, %v4034
    %v4130 = vunpack.c.l.s4 1983009808
    %v4131 = vunpack.c.0.s8 %v4130
    %v4132 = vlaneseq
    %v4133 = vshrl.u32 %v4132, 7
    %v4134 = vsub.s32 %v4131, %v4133
    %v4135 = vrot.slane %v4127, %v4134
    %v4137 = vunpack.c.l.s4 1983009808
    %v4138 = vunpack.c.0.s8 %v4137
    %v4139 = vlaneseq
    %v4140 = vshrl.u32 %v4139, 7
    %v4141 = vsub.s32 %v4138, %v4140
    %v4142 = vrot.slane %v4128, %v4141
    %v4143 = vcombine.low %v4119, %v4135
    %v4144 = vcombine.high %v4119, %v4135
    %v4146 = vunpack.c.l.s4 1934713408
    %v4147 = vunpack.c.0.s8 %v4146
    %v4148 = vlaneseq
    %v4149 = vshrl.u32 %v4148, 7
    %v4150 = vsub.s32 %v4147, %v4149
    %v4151 = vrot.slane %v4143, %v4150
    %v4153 = vunpack.c.l.s4 1934713408
    %v4154 = vunpack.c.0.s8 %v4153
    %v4155 = vlaneseq
    %v4156 = vshrl.u32 %v4155, 7
    %v4157 = vsub.s32 %v4154, %v4156
    %v4158 = vrot.slane %v4144, %v4157
    %v4159 = vcombine.low %v4126, %v4142
    %v4160 = vcombine.high %v4126, %v4142
    %v4162 = vunpack.c.l.s4 1934713408
    %v4163 = vunpack.c.0.s8 %v4162
    %v4164 = vlaneseq
    %v4165 = vshrl.u32 %v4164, 7
    %v4166 = vsub.s32 %v4163, %v4165
    %v4167 = vrot.slane %v4159, %v4166
    %v4169 = vunpack.c.l.s4 1934713408
    %v4170 = vunpack.c.0.s8 %v4169
    %v4171 = vlaneseq
    %v4172 = vshrl.u32 %v4171, 7
    %v4173 = vsub.s32 %v4170, %v4172
    %v4174 = vrot.slane %v4160, %v4173
    %v4175 = vcombine.high %v4151, 0.0
    %v4176 = vcombine.high %v4158, 0.0
    %v4177 = vcombine.high %v4167, 0.0
    %v4178 = vcombine.high %v4174, 0.0
    %4180 = vrot.lane.b32.xlu0 %v4107, 16
    %v4181 = vpop.permute.xlu0 %4180
    %4184 = vrot.lane.b32.xlu0 %v4090, 32
    %v4185 = vpop.permute.xlu0 %4184
    %4188 = vrot.lane.b32.xlu0 %v4108, 48
    %v4189 = vpop.permute.xlu0 %4188
    %4192 = vrot.lane.b32.xlu0 %v4099, 64
    %v4193 = vpop.permute.xlu0 %4192
    %4196 = vrot.lane.b32.xlu0 %v4109, 80
    %v4197 = vpop.permute.xlu0 %4196
    %4200 = vrot.lane.b32.xlu0 %v4106, 96
    %v4201 = vpop.permute.xlu0 %4200
    %4204 = vrot.lane.b32.xlu0 %v4110, 112
    %v4205 = vpop.permute.xlu0 %4204
    %4208 = vrot.lane.b32.xlu0 %v4175, 16
    %v4209 = vpop.permute.xlu0 %4208
    %4212 = vrot.lane.b32.xlu0 %v4158, 32
    %v4213 = vpop.permute.xlu0 %4212
    %4216 = vrot.lane.b32.xlu0 %v4176, 48
    %v4217 = vpop.permute.xlu0 %4216
    %4220 = vrot.lane.b32.xlu0 %v4167, 64
    %v4221 = vpop.permute.xlu0 %4220
    %4224 = vrot.lane.b32.xlu0 %v4177, 80
    %v4225 = vpop.permute.xlu0 %4224
    %4228 = vrot.lane.b32.xlu0 %v4174, 96
    %v4229 = vpop.permute.xlu0 %4228
    %4232 = vrot.lane.b32.xlu0 %v4178, 112
    %v4233 = vpop.permute.xlu0 %4232
    %v4235 = vsel %vm372, %v4083, %v4181
    %v4236 = vsel %vm374, %v4235, %v4185
    %v4237 = vsel %vm376, %v4236, %v4189
    %v4238 = vsel %vm378, %v4237, %v4193
    %v4239 = vsel %vm380, %v4238, %v4197
    %v4240 = vsel %vm382, %v4239, %v4201
    %v4241 = vsel %vm384, %v4240, %v4205
    %v4242 = vsel %vm372, %v4151, %v4209
    %v4243 = vsel %vm374, %v4242, %v4213
    %v4244 = vsel %vm376, %v4243, %v4217
    %v4245 = vsel %vm378, %v4244, %v4221
    %v4246 = vsel %vm380, %v4245, %v4225
    %v4247 = vsel %vm382, %v4246, %v4229
    %v4248 = vsel %vm384, %v4247, %v4233
    %4249 = vst [vmem:[#allocation4 + $0x80] sm:$0xf] %v4241
    %4250 = vst [vmem:[#allocation4 + $0x88] sm:$0xf] %v4248
    %v4251 = vld [vmem:[%s163 + $0x2] sm:$0xff]
    %v4252 = vld [vmem:[%s163 + $0xa] sm:$0xff]
    %v4253 = vld [vmem:[%s163 + $0x1a] sm:$0xff]
    %v4254 = vld [vmem:[%s163 + $0x22] sm:$0xff]
    %v4255 = vld [vmem:[%s163 + $0x32] sm:$0xff]
    %v4256 = vld [vmem:[%s163 + $0x3a] sm:$0xff]
    %v4257 = vld [vmem:[%s163 + $0x4a] sm:$0xff]
    %v4258 = vld [vmem:[%s163 + $0x52] sm:$0xff]
    %4267 = vrot.lane.b32.xlu0 %v4251, 126
    %v4268 = vpop.permute.xlu0 %4267
    %4269 = vrot.lane.b32.xlu0 %v4252, 126
    %v4270 = vpop.permute.xlu0 %4269
    %4271 = vrot.lane.b32.xlu0 %v4253, 126
    %v4272 = vpop.permute.xlu0 %4271
    %4273 = vrot.lane.b32.xlu0 %v4254, 126
    %v4274 = vpop.permute.xlu0 %4273
    %4275 = vrot.lane.b32.xlu0 %v4255, 126
    %v4276 = vpop.permute.xlu0 %4275
    %4277 = vrot.lane.b32.xlu0 %v4256, 126
    %v4278 = vpop.permute.xlu0 %4277
    %4279 = vrot.lane.b32.xlu0 %v4257, 126
    %v4280 = vpop.permute.xlu0 %4279
    %4281 = vrot.lane.b32.xlu0 %v4258, 126
    %v4282 = vpop.permute.xlu0 %4281
    %v4291 = vcombine.low %v4268, %v4276
    %v4292 = vcombine.high %v4268, %v4276
    %v4294 = vunpack.c.l.s4 1983009808
    %v4295 = vunpack.c.0.s8 %v4294
    %v4296 = vlaneseq
    %v4297 = vshrl.u32 %v4296, 7
    %v4298 = vsub.s32 %v4295, %v4297
    %v4299 = vrot.slane %v4291, %v4298
    %v4301 = vunpack.c.l.s4 1983009808
    %v4302 = vunpack.c.0.s8 %v4301
    %v4303 = vlaneseq
    %v4304 = vshrl.u32 %v4303, 7
    %v4305 = vsub.s32 %v4302, %v4304
    %v4306 = vrot.slane %v4292, %v4305
    %v4307 = vcombine.low %v4272, %v4280
    %v4308 = vcombine.high %v4272, %v4280
    %v4310 = vunpack.c.l.s4 1983009808
    %v4311 = vunpack.c.0.s8 %v4310
    %v4312 = vlaneseq
    %v4313 = vshrl.u32 %v4312, 7
    %v4314 = vsub.s32 %v4311, %v4313
    %v4315 = vrot.slane %v4307, %v4314
    %v4317 = vunpack.c.l.s4 1983009808
    %v4318 = vunpack.c.0.s8 %v4317
    %v4319 = vlaneseq
    %v4320 = vshrl.u32 %v4319, 7
    %v4321 = vsub.s32 %v4318, %v4320
    %v4322 = vrot.slane %v4308, %v4321
    %v4323 = vcombine.low %v4299, %v4315
    %v4324 = vcombine.high %v4299, %v4315
    %v4326 = vunpack.c.l.s4 1934713408
    %v4327 = vunpack.c.0.s8 %v4326
    %v4328 = vlaneseq
    %v4329 = vshrl.u32 %v4328, 7
    %v4330 = vsub.s32 %v4327, %v4329
    %v4331 = vrot.slane %v4323, %v4330
    %v4333 = vunpack.c.l.s4 1934713408
    %v4334 = vunpack.c.0.s8 %v4333
    %v4335 = vlaneseq
    %v4336 = vshrl.u32 %v4335, 7
    %v4337 = vsub.s32 %v4334, %v4336
    %v4338 = vrot.slane %v4324, %v4337
    %v4339 = vcombine.low %v4306, %v4322
    %v4340 = vcombine.high %v4306, %v4322
    %v4342 = vunpack.c.l.s4 1934713408
    %v4343 = vunpack.c.0.s8 %v4342
    %v4344 = vlaneseq
    %v4345 = vshrl.u32 %v4344, 7
    %v4346 = vsub.s32 %v4343, %v4345
    %v4347 = vrot.slane %v4339, %v4346
    %v4349 = vunpack.c.l.s4 1934713408
    %v4350 = vunpack.c.0.s8 %v4349
    %v4351 = vlaneseq
    %v4352 = vshrl.u32 %v4351, 7
    %v4353 = vsub.s32 %v4350, %v4352
    %v4354 = vrot.slane %v4340, %v4353
    %v4355 = vcombine.high %v4331, 0.0
    %v4356 = vcombine.high %v4338, 0.0
    %v4357 = vcombine.high %v4347, 0.0
    %v4358 = vcombine.high %v4354, 0.0
    %v4359 = vcombine.low %v4270, %v4278
    %v4360 = vcombine.high %v4270, %v4278
    %v4362 = vunpack.c.l.s4 1983009808
    %v4363 = vunpack.c.0.s8 %v4362
    %v4364 = vlaneseq
    %v4365 = vshrl.u32 %v4364, 7
    %v4366 = vsub.s32 %v4363, %v4365
    %v4367 = vrot.slane %v4359, %v4366
    %v4369 = vunpack.c.l.s4 1983009808
    %v4370 = vunpack.c.0.s8 %v4369
    %v4371 = vlaneseq
    %v4372 = vshrl.u32 %v4371, 7
    %v4373 = vsub.s32 %v4370, %v4372
    %v4374 = vrot.slane %v4360, %v4373
    %v4375 = vcombine.low %v4274, %v4282
    %v4376 = vcombine.high %v4274, %v4282
    %v4378 = vunpack.c.l.s4 1983009808
    %v4379 = vunpack.c.0.s8 %v4378
    %v4380 = vlaneseq
    %v4381 = vshrl.u32 %v4380, 7
    %v4382 = vsub.s32 %v4379, %v4381
    %v4383 = vrot.slane %v4375, %v4382
    %v4385 = vunpack.c.l.s4 1983009808
    %v4386 = vunpack.c.0.s8 %v4385
    %v4387 = vlaneseq
    %v4388 = vshrl.u32 %v4387, 7
    %v4389 = vsub.s32 %v4386, %v4388
    %v4390 = vrot.slane %v4376, %v4389
    %v4391 = vcombine.low %v4367, %v4383
    %v4392 = vcombine.high %v4367, %v4383
    %v4394 = vunpack.c.l.s4 1934713408
    %v4395 = vunpack.c.0.s8 %v4394
    %v4396 = vlaneseq
    %v4397 = vshrl.u32 %v4396, 7
    %v4398 = vsub.s32 %v4395, %v4397
    %v4399 = vrot.slane %v4391, %v4398
    %v4401 = vunpack.c.l.s4 1934713408
    %v4402 = vunpack.c.0.s8 %v4401
    %v4403 = vlaneseq
    %v4404 = vshrl.u32 %v4403, 7
    %v4405 = vsub.s32 %v4402, %v4404
    %v4406 = vrot.slane %v4392, %v4405
    %v4407 = vcombine.low %v4374, %v4390
    %v4408 = vcombine.high %v4374, %v4390
    %v4410 = vunpack.c.l.s4 1934713408
    %v4411 = vunpack.c.0.s8 %v4410
    %v4412 = vlaneseq
    %v4413 = vshrl.u32 %v4412, 7
    %v4414 = vsub.s32 %v4411, %v4413
    %v4415 = vrot.slane %v4407, %v4414
    %v4417 = vunpack.c.l.s4 1934713408
    %v4418 = vunpack.c.0.s8 %v4417
    %v4419 = vlaneseq
    %v4420 = vshrl.u32 %v4419, 7
    %v4421 = vsub.s32 %v4418, %v4420
    %v4422 = vrot.slane %v4408, %v4421
    %v4423 = vcombine.high %v4399, 0.0
    %v4424 = vcombine.high %v4406, 0.0
    %v4425 = vcombine.high %v4415, 0.0
    %v4426 = vcombine.high %v4422, 0.0
    %4428 = vrot.lane.b32.xlu0 %v4355, 16
    %v4429 = vpop.permute.xlu0 %4428
    %4432 = vrot.lane.b32.xlu0 %v4338, 32
    %v4433 = vpop.permute.xlu0 %4432
    %4436 = vrot.lane.b32.xlu0 %v4356, 48
    %v4437 = vpop.permute.xlu0 %4436
    %4440 = vrot.lane.b32.xlu0 %v4347, 64
    %v4441 = vpop.permute.xlu0 %4440
    %4444 = vrot.lane.b32.xlu0 %v4357, 80
    %v4445 = vpop.permute.xlu0 %4444
    %4448 = vrot.lane.b32.xlu0 %v4354, 96
    %v4449 = vpop.permute.xlu0 %4448
    %4452 = vrot.lane.b32.xlu0 %v4358, 112
    %v4453 = vpop.permute.xlu0 %4452
    %4456 = vrot.lane.b32.xlu0 %v4423, 16
    %v4457 = vpop.permute.xlu0 %4456
    %4460 = vrot.lane.b32.xlu0 %v4406, 32
    %v4461 = vpop.permute.xlu0 %4460
    %4464 = vrot.lane.b32.xlu0 %v4424, 48
    %v4465 = vpop.permute.xlu0 %4464
    %4468 = vrot.lane.b32.xlu0 %v4415, 64
    %v4469 = vpop.permute.xlu0 %4468
    %4472 = vrot.lane.b32.xlu0 %v4425, 80
    %v4473 = vpop.permute.xlu0 %4472
    %4476 = vrot.lane.b32.xlu0 %v4422, 96
    %v4477 = vpop.permute.xlu0 %4476
    %4480 = vrot.lane.b32.xlu0 %v4426, 112
    %v4481 = vpop.permute.xlu0 %4480
    %v4483 = vsel %vm372, %v4331, %v4429
    %v4484 = vsel %vm374, %v4483, %v4433
    %v4485 = vsel %vm376, %v4484, %v4437
    %v4486 = vsel %vm378, %v4485, %v4441
    %v4487 = vsel %vm380, %v4486, %v4445
    %v4488 = vsel %vm382, %v4487, %v4449
    %v4489 = vsel %vm384, %v4488, %v4453
    %v4490 = vsel %vm372, %v4399, %v4457
    %v4491 = vsel %vm374, %v4490, %v4461
    %v4492 = vsel %vm376, %v4491, %v4465
    %v4493 = vsel %vm378, %v4492, %v4469
    %v4494 = vsel %vm380, %v4493, %v4473
    %v4495 = vsel %vm382, %v4494, %v4477
    %v4496 = vsel %vm384, %v4495, %v4481
    %4497 = vst [vmem:[#allocation4 + $0x90] sm:$0xf] %v4489
    %4498 = vst [vmem:[#allocation4 + $0x98] sm:$0xf] %v4496
    %v4499 = vld [vmem:[%s1] sm:$0xf]
    %v4500 = vld [vmem:[#allocation4] sm:$0xff]
    %v4501 = vld [vmem:[#allocation4 + $0x8] sm:$0xff]
    %v4502 = vld [vmem:[#allocation4 + $0x10] sm:$0xff]
    %v4503 = vld [vmem:[#allocation4 + $0x18] sm:$0xff]
    %v4504 = vld [vmem:[#allocation4 + $0x20] sm:$0xff]
    %v4505 = vld [vmem:[#allocation4 + $0x28] sm:$0xff]
    %v4506 = vld [vmem:[#allocation4 + $0x30] sm:$0xff]
    %v4507 = vld [vmem:[#allocation4 + $0x38] sm:$0xff]
    %v4508 = vld [vmem:[#allocation4 + $0x40] sm:$0xff]
    %v4509 = vld [vmem:[#allocation4 + $0x48] sm:$0xff]
    %v4510 = vld [vmem:[#allocation4 + $0x50] sm:$0xff]
    %v4511 = vld [vmem:[#allocation4 + $0x58] sm:$0xff]
    %v4512 = vld [vmem:[#allocation4 + $0x60] sm:$0xff]
    %v4513 = vld [vmem:[#allocation4 + $0x68] sm:$0xff]
    %v4514 = vld [vmem:[#allocation4 + $0x70] sm:$0xff]
    %v4515 = vld [vmem:[#allocation4 + $0x78] sm:$0xff]
    %v4516 = vld [vmem:[#allocation4 + $0x80] sm:$0xf]
    %v4517 = vld [vmem:[#allocation4 + $0x88] sm:$0xf]
    %v4518 = vld [vmem:[#allocation4 + $0x90] sm:$0xf]
    %v4519 = vld [vmem:[#allocation4 + $0x98] sm:$0xf]
    %v4520 = vpack.c.bf16 %v4504, %v4500
    %v4521 = vpack.c.bf16 %v4505, %v4501
    %v4522 = vpack.c.bf16 %v4506, %v4502
    %v4523 = vpack.c.bf16 %v4507, %v4503
    %v4524 = vpack.c.bf16 %v4512, %v4508
    %v4525 = vpack.c.bf16 %v4513, %v4509
    %v4526 = vpack.c.bf16 %v4514, %v4510
    %v4527 = vpack.c.bf16 %v4515, %v4511
    %v4528 = vpack.c.bf16 %v4516, %v4516
    %v4529 = vpack.c.bf16 %v4517, %v4517
    %v4530 = vpack.c.bf16 %v4518, %v4518
    %v4531 = vpack.c.bf16 %v4519, %v4519
    %vm4532 = vcmask 293888
    %v4534 = vsel %vm4532, %v4499, 0
    %vm4536 = vcmask 1041408
    %v4538 = vsel %vm4536, %v4528, 0
    %v4541 = vsel %vm4536, %v4529, 0
    %v4544 = vsel %vm4536, %v4530, 0
    %v4547 = vsel %vm4536, %v4531, 0
    %4549 = vmatprep.subr.bf16.mxu0 %v4521
    %4550 = vmatpush1.bf16.msra.mxu0 %v4520
    %4551 = vmatprep.subr.bf16.mxu0 %v4525
    %4552 = vmatpush1.bf16.msra.mxu0 %v4524
    %4553 = vmatprep.subr.bf16.mxu0 %v4541
    %4554 = vmatpush1.bf16.msra.mxu0 %v4538
    %4555 = vmatprep.subr.bf16.mxu0 0
    %4556 = vmatpush1.bf16.msra.mxu0 0
    %4557 = vmatprep.subr.bf16.mxu0 0
    %4558 = vmatpush1.bf16.msra.mxu0 0
    %4559 = vmatprep.subr.bf16.mxu0 0
    %4560 = vmatpush1.bf16.msra.mxu0 0
    %4561 = vmatprep.subr.bf16.mxu0 0
    %4562 = vmatpush1.bf16.msra.mxu0 0
    %4563 = vmatprep.subr.bf16.mxu0 0
    %4564 = vmatpush1.bf16.msra.mxu0 0
    %4565 = vmatprep.subr.bf16.mxu0 0
    %4566 = vmatpush1.bf16.msra.mxu0 0
    %4567 = vmatprep.subr.bf16.mxu0 0
    %4568 = vmatpush1.bf16.msra.mxu0 0
    %4569 = vmatprep.subr.bf16.mxu0 0
    %4570 = vmatpush1.bf16.msra.mxu0 0
    %4571 = vmatprep.subr.bf16.mxu0 0
    %4572 = vmatpush1.bf16.msra.mxu0 0
    %4573 = vmatprep.subr.bf16.mxu0 0
    %4574 = vmatpush1.bf16.msra.mxu0 0
    %4575 = vmatprep.subr.bf16.mxu0 0
    %4576 = vmatpush1.bf16.msra.mxu0 0
    %4577 = vmatprep.subr.bf16.mxu0 0
    %4578 = vmatpush1.bf16.msra.mxu0 0
    %4579 = vmatprep.subr.bf16.mxu0 0
    %4580 = vmatpush1.bf16.msra.mxu0 0
    %4581 = vmatprep.mubr.bf16.mxu0 0
    %4582 = vmatmul.mubr.bf16.gmra.mrb[0].mxu0 %v4534
    %v4583 = vpop.f32.mrb[0].mxu0
    %v4584 = vadd.f32 0.0, %v4583
    %v4585 = vpop.f32.mrb[0].mxu0
    %v4586 = vadd.f32 0.0, %v4585
    %v4587 = vpop.f32.mrb[0].mxu0
    %v4588 = vpop.f32.mrb[0].mxu0
    %4589 = vdwg.mxu0
    %4590 = vmatprep.subr.bf16.mxu0 %v4523
    %4591 = vmatpush1.bf16.msra.mxu0 %v4522
    %4592 = vmatprep.subr.bf16.mxu0 %v4527
    %4593 = vmatpush1.bf16.msra.mxu0 %v4526
    %4594 = vmatprep.subr.bf16.mxu0 %v4547
    %4595 = vmatpush1.bf16.msra.mxu0 %v4544
    %4596 = vmatprep.subr.bf16.mxu0 0
    %4597 = vmatpush1.bf16.msra.mxu0 0
    %4598 = vmatprep.subr.bf16.mxu0 0
    %4599 = vmatpush1.bf16.msra.mxu0 0
    %4600 = vmatprep.subr.bf16.mxu0 0
    %4601 = vmatpush1.bf16.msra.mxu0 0
    %4602 = vmatprep.subr.bf16.mxu0 0
    %4603 = vmatpush1.bf16.msra.mxu0 0
    %4604 = vmatprep.subr.bf16.mxu0 0
    %4605 = vmatpush1.bf16.msra.mxu0 0
    %4606 = vmatprep.subr.bf16.mxu0 0
    %4607 = vmatpush1.bf16.msra.mxu0 0
    %4608 = vmatprep.subr.bf16.mxu0 0
    %4609 = vmatpush1.bf16.msra.mxu0 0
    %4610 = vmatprep.subr.bf16.mxu0 0
    %4611 = vmatpush1.bf16.msra.mxu0 0
    %4612 = vmatprep.subr.bf16.mxu0 0
    %4613 = vmatpush1.bf16.msra.mxu0 0
    %4614 = vmatprep.subr.bf16.mxu0 0
    %4615 = vmatpush1.bf16.msra.mxu0 0
    %4616 = vmatprep.subr.bf16.mxu0 0
    %4617 = vmatpush1.bf16.msra.mxu0 0
    %4618 = vmatprep.subr.bf16.mxu0 0
    %4619 = vmatpush1.bf16.msra.mxu0 0
    %4620 = vmatprep.subr.bf16.mxu0 0
    %4621 = vmatpush1.bf16.msra.mxu0 0
    %4622 = vmatprep.mubr.bf16.mxu0 0
    %4623 = vmatmul.mubr.bf16.gmra.mrb[0].mxu0 %v4534
    %v4624 = vpop.f32.mrb[0].mxu0
    %v4625 = vadd.f32 0.0, %v4624
    %v4626 = vpop.f32.mrb[0].mxu0
    %v4627 = vadd.f32 0.0, %v4626
    %v4628 = vpop.f32.mrb[0].mxu0
    %v4629 = vpop.f32.mrb[0].mxu0
    %4630 = vdwg.mxu0
    %v4631 = vadd.f32 %v4584, %v4586
    %v4632 = vadd.f32 %v4631, %v4625
    %v4633 = vadd.f32 %v4632, %v4627
    %4634 = vadd.xlane.f32.xlu0 %v4633
    %v4635 = vpop.xlane.xlu0 %4634
    %v4636 = vmul.f32 %v4635, 0.001953125
    %v4637 = vmul.f32 %v4584, %v4584
    %v4638 = vmul.f32 %v4586, %v4586
    %v4639 = vmul.f32 %v4625, %v4625
    %v4640 = vmul.f32 %v4627, %v4627
    %v4641 = vadd.f32 %v4637, %v4638
    %v4642 = vadd.f32 %v4641, %v4639
    %v4643 = vadd.f32 %v4642, %v4640
    %4644 = vadd.xlane.f32.xlu0 %v4643
    %v4645 = vpop.xlane.xlu0 %4644
    %v4646 = vmul.f32 %v4645, 0.001953125
    %v4647 = vmul.f32 %v4636, %v4636
    %v4648 = vsub.f32 %v4646, %v4647
    %v4649 = vmax.f32 %v4648, 0.0
    %v4650 = vsub.f32 %v4584, %v4636
    %v4651 = vsub.f32 %v4586, %v4636
    %v4652 = vsub.f32 %v4625, %v4636
    %v4653 = vsub.f32 %v4627, %v4636
    %v4654 = vadd.f32 %v4649, 1e-05
    %v4655 = vrsqrt.pop %v4654
    %v4656 = vmul.f32 %v4650, %v4655
    %v4657 = vmul.f32 %v4651, %v4655
    %v4658 = vmul.f32 %v4652, %v4655
    %v4659 = vmul.f32 %v4653, %v4655
    %v4660 = vld [vmem:[%s3] sm:$0xff]
    %4662 = vset.pattern.permute.xlu0 0
    %4663 = vperm.xlu0 %4662, %v4660
    %v4664 = vpop.permute.xlu0 %4663
    %v4666 = vmul.f32 %v4656, %v4664
    %v4667 = vmul.f32 %v4657, %v4664
    %v4668 = vmul.f32 %v4658, %v4664
    %v4669 = vmul.f32 %v4659, %v4664
    %v4670 = vld [vmem:[%s4] sm:$0xff]
    %4672 = vset.pattern.permute.xlu0 0
    %4673 = vperm.xlu0 %4672, %v4670
    %v4674 = vpop.permute.xlu0 %4673
    %v4676 = vadd.f32 %v4666, %v4674
    %v4677 = vadd.f32 %v4667, %v4674
    %v4678 = vadd.f32 %v4668, %v4674
    %v4679 = vadd.f32 %v4669, %v4674
    %v4680 = vmax.f32 %v4676, 0.0
    %v4681 = vmax.f32 %v4677, 0.0
    %v4682 = vmax.f32 %v4678, 0.0
    %v4683 = vmax.f32 %v4679, 0.0
    %4684 = vst.msk [vmem:[#allocation3] sm:$0xff] %vm64, 0.0
    %4685 = vst.msk [vmem:[#allocation3 + $0x8] sm:$0xff] %vm64, 0.0
    %4686 = vst.msk [vmem:[#allocation3 + $0x10] sm:$0x3] %vm67, 0.0
    %4687 = vst.msk [vmem:[#allocation3 + $0x18] sm:$0xff] %vm64, 0.0
    %4688 = vst.msk [vmem:[#allocation3 + $0x20] sm:$0xff] %vm64, 0.0
    %4689 = vst.msk [vmem:[#allocation3 + $0x28] sm:$0x3] %vm67, 0.0
    %4690 = vst.msk [vmem:[#allocation3 + $0x30] sm:$0xff] %vm64, 0.0
    %4691 = vst.msk [vmem:[#allocation3 + $0x38] sm:$0xff] %vm64, 0.0
    %4692 = vst.msk [vmem:[#allocation3 + $0x40] sm:$0x3] %vm67, 0.0
    %4693 = vst.msk [vmem:[#allocation3 + $0x48] sm:$0xff] %vm64, 0.0
    %4694 = vst.msk [vmem:[#allocation3 + $0x50] sm:$0xff] %vm64, 0.0
    %4695 = vst.msk [vmem:[#allocation3 + $0x58] sm:$0x3] %vm67, 0.0
    %4696 = vst.msk [vmem:[#allocation3 + $0x60] sm:$0xff] %vm64, 0.0
    %4697 = vst.msk [vmem:[#allocation3 + $0x68] sm:$0xff] %vm64, 0.0
    %4698 = vst.msk [vmem:[#allocation3 + $0x70] sm:$0x3] %vm67, 0.0
    %4699 = vst.msk [vmem:[#allocation3 + $0x78] sm:$0xff] %vm64, 0.0
    %4700 = vst.msk [vmem:[#allocation3 + $0x80] sm:$0xff] %vm64, 0.0
    %4701 = vst.msk [vmem:[#allocation3 + $0x88] sm:$0x3] %vm67, 0.0
    %4702 = vst.msk [vmem:[#allocation3 + $0x90] sm:$0xff] %vm64, 0.0
    %4703 = vst.msk [vmem:[#allocation3 + $0x98] sm:$0xff] %vm64, 0.0
    %4704 = vst.msk [vmem:[#allocation3 + $0xa0] sm:$0x3] %vm67, 0.0
    %4705 = vst.msk [vmem:[#allocation3 + $0xa8] sm:$0xff] %vm64, 0.0
    %4706 = vst.msk [vmem:[#allocation3 + $0xb0] sm:$0xff] %vm64, 0.0
    %4707 = vst.msk [vmem:[#allocation3 + $0xb8] sm:$0x3] %vm67, 0.0
    %4708 = vst.msk [vmem:[#allocation3 + $0xc0] sm:$0xff] %vm64, 0.0
    %4709 = vst.msk [vmem:[#allocation3 + $0xc8] sm:$0xff] %vm64, 0.0
    %4710 = vst.msk [vmem:[#allocation3 + $0xd0] sm:$0x3] %vm67, 0.0
    %4711 = vst.msk [vmem:[#allocation3 + $0xd8] sm:$0xff] %vm64, 0.0
    %4712 = vst.msk [vmem:[#allocation3 + $0xe0] sm:$0xff] %vm64, 0.0
    %4713 = vst.msk [vmem:[#allocation3 + $0xe8] sm:$0x3] %vm67, 0.0
    %4714 = vst.msk [vmem:[#allocation3 + $0xf0] sm:$0xff] %vm64, 0.0
    %4715 = vst.msk [vmem:[#allocation3 + $0xf8] sm:$0xff] %vm64, 0.0
    %4716 = vst.msk [vmem:[#allocation3 + $0x100] sm:$0x3] %vm67, 0.0
    %4717 = vst.msk [vmem:[#allocation3 + $0x108] sm:$0xff] %vm64, 0.0
    %4718 = vst.msk [vmem:[#allocation3 + $0x110] sm:$0xff] %vm64, 0.0
    %4719 = vst.msk [vmem:[#allocation3 + $0x118] sm:$0x3] %vm67, 0.0
    %4720 = vst.msk [vmem:[#allocation3 + $0x120] sm:$0xff] %vm64, 0.0
    %4721 = vst.msk [vmem:[#allocation3 + $0x128] sm:$0xff] %vm64, 0.0
    %4722 = vst.msk [vmem:[#allocation3 + $0x130] sm:$0x3] %vm67, 0.0
    %4723 = vst.msk [vmem:[#allocation3 + $0x138] sm:$0xff] %vm64, 0.0
    %4724 = vst.msk [vmem:[#allocation3 + $0x140] sm:$0xff] %vm64, 0.0
    %4725 = vst.msk [vmem:[#allocation3 + $0x148] sm:$0x3] %vm67, 0.0
    %4726 = vst.msk [vmem:[#allocation3 + $0x150] sm:$0xff] %vm64, 0.0
    %4727 = vst.msk [vmem:[#allocation3 + $0x158] sm:$0xff] %vm64, 0.0
    %4728 = vst.msk [vmem:[#allocation3 + $0x160] sm:$0x3] %vm67, 0.0
    %4729 = vst.msk [vmem:[#allocation3 + $0x168] sm:$0xff] %vm64, 0.0
    %4730 = vst.msk [vmem:[#allocation3 + $0x170] sm:$0xff] %vm64, 0.0
    %4731 = vst.msk [vmem:[#allocation3 + $0x178] sm:$0x3] %vm67, 0.0
    %4733 = vrot.lane.b32.xlu0 %v4680, 112
    %v4734 = vpop.permute.xlu0 %4733
    %4736 = vrot.lane.b32.xlu0 %v4680, 96
    %v4737 = vpop.permute.xlu0 %4736
    %4739 = vrot.lane.b32.xlu0 %v4680, 80
    %v4740 = vpop.permute.xlu0 %4739
    %4742 = vrot.lane.b32.xlu0 %v4680, 64
    %v4743 = vpop.permute.xlu0 %4742
    %4745 = vrot.lane.b32.xlu0 %v4680, 48
    %v4746 = vpop.permute.xlu0 %4745
    %4748 = vrot.lane.b32.xlu0 %v4680, 32
    %v4749 = vpop.permute.xlu0 %4748
    %4751 = vrot.lane.b32.xlu0 %v4680, 16
    %v4752 = vpop.permute.xlu0 %4751
    %4755 = vrot.lane.b32.xlu0 %v4681, 112
    %v4756 = vpop.permute.xlu0 %4755
    %4758 = vrot.lane.b32.xlu0 %v4681, 96
    %v4759 = vpop.permute.xlu0 %4758
    %4761 = vrot.lane.b32.xlu0 %v4681, 80
    %v4762 = vpop.permute.xlu0 %4761
    %4764 = vrot.lane.b32.xlu0 %v4681, 64
    %v4765 = vpop.permute.xlu0 %4764
    %4767 = vrot.lane.b32.xlu0 %v4681, 48
    %v4768 = vpop.permute.xlu0 %4767
    %4770 = vrot.lane.b32.xlu0 %v4681, 32
    %v4771 = vpop.permute.xlu0 %4770
    %4773 = vrot.lane.b32.xlu0 %v4681, 16
    %v4774 = vpop.permute.xlu0 %4773
    %v4776 = vcombine.low %v4680, %v4737
    %v4777 = vcombine.high %v4680, %v4737
    %v4779 = vunpack.c.l.s4 1983009808
    %v4780 = vunpack.c.0.s8 %v4779
    %v4781 = vlaneseq
    %v4782 = vshrl.u32 %v4781, 7
    %v4783 = vsub.s32 %v4780, %v4782
    %v4784 = vrot.slane %v4776, %v4783
    %v4786 = vunpack.c.l.s4 1983009808
    %v4787 = vunpack.c.0.s8 %v4786
    %v4788 = vlaneseq
    %v4789 = vshrl.u32 %v4788, 7
    %v4790 = vsub.s32 %v4787, %v4789
    %v4791 = vrot.slane %v4777, %v4790
    %v4792 = vcombine.low %v4734, %v4740
    %v4793 = vcombine.high %v4734, %v4740
    %v4795 = vunpack.c.l.s4 1983009808
    %v4796 = vunpack.c.0.s8 %v4795
    %v4797 = vlaneseq
    %v4798 = vshrl.u32 %v4797, 7
    %v4799 = vsub.s32 %v4796, %v4798
    %v4800 = vrot.slane %v4792, %v4799
    %v4802 = vunpack.c.l.s4 1983009808
    %v4803 = vunpack.c.0.s8 %v4802
    %v4804 = vlaneseq
    %v4805 = vshrl.u32 %v4804, 7
    %v4806 = vsub.s32 %v4803, %v4805
    %v4807 = vrot.slane %v4793, %v4806
    %v4808 = vcombine.low %v4743, %v4749
    %v4809 = vcombine.high %v4743, %v4749
    %v4811 = vunpack.c.l.s4 1983009808
    %v4812 = vunpack.c.0.s8 %v4811
    %v4813 = vlaneseq
    %v4814 = vshrl.u32 %v4813, 7
    %v4815 = vsub.s32 %v4812, %v4814
    %v4816 = vrot.slane %v4808, %v4815
    %v4818 = vunpack.c.l.s4 1983009808
    %v4819 = vunpack.c.0.s8 %v4818
    %v4820 = vlaneseq
    %v4821 = vshrl.u32 %v4820, 7
    %v4822 = vsub.s32 %v4819, %v4821
    %v4823 = vrot.slane %v4809, %v4822
    %v4824 = vcombine.low %v4746, %v4752
    %v4825 = vcombine.high %v4746, %v4752
    %v4827 = vunpack.c.l.s4 1983009808
    %v4828 = vunpack.c.0.s8 %v4827
    %v4829 = vlaneseq
    %v4830 = vshrl.u32 %v4829, 7
    %v4831 = vsub.s32 %v4828, %v4830
    %v4832 = vrot.slane %v4824, %v4831
    %v4834 = vunpack.c.l.s4 1983009808
    %v4835 = vunpack.c.0.s8 %v4834
    %v4836 = vlaneseq
    %v4837 = vshrl.u32 %v4836, 7
    %v4838 = vsub.s32 %v4835, %v4837
    %v4839 = vrot.slane %v4825, %v4838
    %v4840 = vcombine.low %v4784, %v4800
    %v4841 = vcombine.high %v4784, %v4800
    %v4843 = vunpack.c.l.s4 1934713408
    %v4844 = vunpack.c.0.s8 %v4843
    %v4845 = vlaneseq
    %v4846 = vshrl.u32 %v4845, 7
    %v4847 = vsub.s32 %v4844, %v4846
    %v4848 = vrot.slane %v4840, %v4847
    %v4850 = vunpack.c.l.s4 1934713408
    %v4851 = vunpack.c.0.s8 %v4850
    %v4852 = vlaneseq
    %v4853 = vshrl.u32 %v4852, 7
    %v4854 = vsub.s32 %v4851, %v4853
    %v4855 = vrot.slane %v4841, %v4854
    %v4856 = vcombine.low %v4791, %v4807
    %v4857 = vcombine.high %v4791, %v4807
    %v4859 = vunpack.c.l.s4 1934713408
    %v4860 = vunpack.c.0.s8 %v4859
    %v4861 = vlaneseq
    %v4862 = vshrl.u32 %v4861, 7
    %v4863 = vsub.s32 %v4860, %v4862
    %v4864 = vrot.slane %v4856, %v4863
    %v4866 = vunpack.c.l.s4 1934713408
    %v4867 = vunpack.c.0.s8 %v4866
    %v4868 = vlaneseq
    %v4869 = vshrl.u32 %v4868, 7
    %v4870 = vsub.s32 %v4867, %v4869
    %v4871 = vrot.slane %v4857, %v4870
    %v4872 = vcombine.low %v4816, %v4832
    %v4873 = vcombine.high %v4816, %v4832
    %v4875 = vunpack.c.l.s4 1934713408
    %v4876 = vunpack.c.0.s8 %v4875
    %v4877 = vlaneseq
    %v4878 = vshrl.u32 %v4877, 7
    %v4879 = vsub.s32 %v4876, %v4878
    %v4880 = vrot.slane %v4872, %v4879
    %v4882 = vunpack.c.l.s4 1934713408
    %v4883 = vunpack.c.0.s8 %v4882
    %v4884 = vlaneseq
    %v4885 = vshrl.u32 %v4884, 7
    %v4886 = vsub.s32 %v4883, %v4885
    %v4887 = vrot.slane %v4873, %v4886
    %v4888 = vcombine.low %v4823, %v4839
    %v4889 = vcombine.high %v4823, %v4839
    %v4891 = vunpack.c.l.s4 1934713408
    %v4892 = vunpack.c.0.s8 %v4891
    %v4893 = vlaneseq
    %v4894 = vshrl.u32 %v4893, 7
    %v4895 = vsub.s32 %v4892, %v4894
    %v4896 = vrot.slane %v4888, %v4895
    %v4898 = vunpack.c.l.s4 1934713408
    %v4899 = vunpack.c.0.s8 %v4898
    %v4900 = vlaneseq
    %v4901 = vshrl.u32 %v4900, 7
    %v4902 = vsub.s32 %v4899, %v4901
    %v4903 = vrot.slane %v4889, %v4902
    %v4904 = vcombine.low %v4848, %v4880
    %v4905 = vcombine.high %v4848, %v4880
    %v4906 = vcombine.low %v4855, %v4887
    %v4907 = vcombine.high %v4855, %v4887
    %v4908 = vcombine.low %v4864, %v4896
    %v4909 = vcombine.high %v4864, %v4896
    %v4910 = vcombine.low %v4871, %v4903
    %v4911 = vcombine.high %v4871, %v4903
    %v4912 = vcombine.low %v4681, %v4759
    %v4913 = vcombine.high %v4681, %v4759
    %v4915 = vunpack.c.l.s4 1983009808
    %v4916 = vunpack.c.0.s8 %v4915
    %v4917 = vlaneseq
    %v4918 = vshrl.u32 %v4917, 7
    %v4919 = vsub.s32 %v4916, %v4918
    %v4920 = vrot.slane %v4912, %v4919
    %v4922 = vunpack.c.l.s4 1983009808
    %v4923 = vunpack.c.0.s8 %v4922
    %v4924 = vlaneseq
    %v4925 = vshrl.u32 %v4924, 7
    %v4926 = vsub.s32 %v4923, %v4925
    %v4927 = vrot.slane %v4913, %v4926
    %v4928 = vcombine.low %v4756, %v4762
    %v4929 = vcombine.high %v4756, %v4762
    %v4931 = vunpack.c.l.s4 1983009808
    %v4932 = vunpack.c.0.s8 %v4931
    %v4933 = vlaneseq
    %v4934 = vshrl.u32 %v4933, 7
    %v4935 = vsub.s32 %v4932, %v4934
    %v4936 = vrot.slane %v4928, %v4935
    %v4938 = vunpack.c.l.s4 1983009808
    %v4939 = vunpack.c.0.s8 %v4938
    %v4940 = vlaneseq
    %v4941 = vshrl.u32 %v4940, 7
    %v4942 = vsub.s32 %v4939, %v4941
    %v4943 = vrot.slane %v4929, %v4942
    %v4944 = vcombine.low %v4765, %v4771
    %v4945 = vcombine.high %v4765, %v4771
    %v4947 = vunpack.c.l.s4 1983009808
    %v4948 = vunpack.c.0.s8 %v4947
    %v4949 = vlaneseq
    %v4950 = vshrl.u32 %v4949, 7
    %v4951 = vsub.s32 %v4948, %v4950
    %v4952 = vrot.slane %v4944, %v4951
    %v4954 = vunpack.c.l.s4 1983009808
    %v4955 = vunpack.c.0.s8 %v4954
    %v4956 = vlaneseq
    %v4957 = vshrl.u32 %v4956, 7
    %v4958 = vsub.s32 %v4955, %v4957
    %v4959 = vrot.slane %v4945, %v4958
    %v4960 = vcombine.low %v4768, %v4774
    %v4961 = vcombine.high %v4768, %v4774
    %v4963 = vunpack.c.l.s4 1983009808
    %v4964 = vunpack.c.0.s8 %v4963
    %v4965 = vlaneseq
    %v4966 = vshrl.u32 %v4965, 7
    %v4967 = vsub.s32 %v4964, %v4966
    %v4968 = vrot.slane %v4960, %v4967
    %v4970 = vunpack.c.l.s4 1983009808
    %v4971 = vunpack.c.0.s8 %v4970
    %v4972 = vlaneseq
    %v4973 = vshrl.u32 %v4972, 7
    %v4974 = vsub.s32 %v4971, %v4973
    %v4975 = vrot.slane %v4961, %v4974
    %v4976 = vcombine.low %v4920, %v4936
    %v4977 = vcombine.high %v4920, %v4936
    %v4979 = vunpack.c.l.s4 1934713408
    %v4980 = vunpack.c.0.s8 %v4979
    %v4981 = vlaneseq
    %v4982 = vshrl.u32 %v4981, 7
    %v4983 = vsub.s32 %v4980, %v4982
    %v4984 = vrot.slane %v4976, %v4983
    %v4986 = vunpack.c.l.s4 1934713408
    %v4987 = vunpack.c.0.s8 %v4986
    %v4988 = vlaneseq
    %v4989 = vshrl.u32 %v4988, 7
    %v4990 = vsub.s32 %v4987, %v4989
    %v4991 = vrot.slane %v4977, %v4990
    %v4992 = vcombine.low %v4927, %v4943
    %v4993 = vcombine.high %v4927, %v4943
    %v4995 = vunpack.c.l.s4 1934713408
    %v4996 = vunpack.c.0.s8 %v4995
    %v4997 = vlaneseq
    %v4998 = vshrl.u32 %v4997, 7
    %v4999 = vsub.s32 %v4996, %v4998
    %v5000 = vrot.slane %v4992, %v4999
    %v5002 = vunpack.c.l.s4 1934713408
    %v5003 = vunpack.c.0.s8 %v5002
    %v5004 = vlaneseq
    %v5005 = vshrl.u32 %v5004, 7
    %v5006 = vsub.s32 %v5003, %v5005
    %v5007 = vrot.slane %v4993, %v5006
    %v5008 = vcombine.low %v4952, %v4968
    %v5009 = vcombine.high %v4952, %v4968
    %v5011 = vunpack.c.l.s4 1934713408
    %v5012 = vunpack.c.0.s8 %v5011
    %v5013 = vlaneseq
    %v5014 = vshrl.u32 %v5013, 7
    %v5015 = vsub.s32 %v5012, %v5014
    %v5016 = vrot.slane %v5008, %v5015
    %v5018 = vunpack.c.l.s4 1934713408
    %v5019 = vunpack.c.0.s8 %v5018
    %v5020 = vlaneseq
    %v5021 = vshrl.u32 %v5020, 7
    %v5022 = vsub.s32 %v5019, %v5021
    %v5023 = vrot.slane %v5009, %v5022
    %v5024 = vcombine.low %v4959, %v4975
    %v5025 = vcombine.high %v4959, %v4975
    %v5027 = vunpack.c.l.s4 1934713408
    %v5028 = vunpack.c.0.s8 %v5027
    %v5029 = vlaneseq
    %v5030 = vshrl.u32 %v5029, 7
    %v5031 = vsub.s32 %v5028, %v5030
    %v5032 = vrot.slane %v5024, %v5031
    %v5034 = vunpack.c.l.s4 1934713408
    %v5035 = vunpack.c.0.s8 %v5034
    %v5036 = vlaneseq
    %v5037 = vshrl.u32 %v5036, 7
    %v5038 = vsub.s32 %v5035, %v5037
    %v5039 = vrot.slane %v5025, %v5038
    %v5040 = vcombine.low %v4984, %v5016
    %v5041 = vcombine.high %v4984, %v5016
    %v5042 = vcombine.low %v4991, %v5023
    %v5043 = vcombine.high %v4991, %v5023
    %v5044 = vcombine.low %v5000, %v5032
    %v5045 = vcombine.high %v5000, %v5032
    %v5046 = vcombine.low %v5007, %v5039
    %v5047 = vcombine.high %v5007, %v5039
    %5064 = vrot.lane.b32.xlu0 %v4904, 1
    %v5065 = vpop.permute.xlu0 %5064
    %5066 = vrot.lane.b32.xlu0 %v5040, 1
    %v5067 = vpop.permute.xlu0 %5066
    %5068 = vrot.lane.b32.xlu0 %v4905, 1
    %v5069 = vpop.permute.xlu0 %5068
    %5070 = vrot.lane.b32.xlu0 %v5041, 1
    %v5071 = vpop.permute.xlu0 %5070
    %5072 = vrot.lane.b32.xlu0 %v4906, 1
    %v5073 = vpop.permute.xlu0 %5072
    %5074 = vrot.lane.b32.xlu0 %v5042, 1
    %v5075 = vpop.permute.xlu0 %5074
    %5076 = vrot.lane.b32.xlu0 %v4907, 1
    %v5077 = vpop.permute.xlu0 %5076
    %5078 = vrot.lane.b32.xlu0 %v5043, 1
    %v5079 = vpop.permute.xlu0 %5078
    %5080 = vrot.lane.b32.xlu0 %v4908, 1
    %v5081 = vpop.permute.xlu0 %5080
    %5082 = vrot.lane.b32.xlu0 %v5044, 1
    %v5083 = vpop.permute.xlu0 %5082
    %5084 = vrot.lane.b32.xlu0 %v4909, 1
    %v5085 = vpop.permute.xlu0 %5084
    %5086 = vrot.lane.b32.xlu0 %v5045, 1
    %v5087 = vpop.permute.xlu0 %5086
    %5088 = vrot.lane.b32.xlu0 %v4910, 1
    %v5089 = vpop.permute.xlu0 %5088
    %5090 = vrot.lane.b32.xlu0 %v5046, 1
    %v5091 = vpop.permute.xlu0 %5090
    %5092 = vrot.lane.b32.xlu0 %v4911, 1
    %v5093 = vpop.permute.xlu0 %5092
    %5094 = vrot.lane.b32.xlu0 %v5047, 1
    %v5095 = vpop.permute.xlu0 %5094
    %5112 = vst.msk [vmem:[#allocation3 + $0x1] sm:$0xff] %vm122, %v5065
    %5113 = vst.msk [vmem:[#allocation3 + $0x9] sm:$0xff] %vm122, %v5067
    %5114 = vst.msk [vmem:[#allocation3 + $0x19] sm:$0xff] %vm122, %v5069
    %5115 = vst.msk [vmem:[#allocation3 + $0x21] sm:$0xff] %vm122, %v5071
    %5116 = vst.msk [vmem:[#allocation3 + $0x31] sm:$0xff] %vm122, %v5073
    %5117 = vst.msk [vmem:[#allocation3 + $0x39] sm:$0xff] %vm122, %v5075
    %5118 = vst.msk [vmem:[#allocation3 + $0x49] sm:$0xff] %vm122, %v5077
    %5119 = vst.msk [vmem:[#allocation3 + $0x51] sm:$0xff] %vm122, %v5079
    %5120 = vst.msk [vmem:[#allocation3 + $0x61] sm:$0xff] %vm122, %v5081
    %5121 = vst.msk [vmem:[#allocation3 + $0x69] sm:$0xff] %vm122, %v5083
    %5122 = vst.msk [vmem:[#allocation3 + $0x79] sm:$0xff] %vm122, %v5085
    %5123 = vst.msk [vmem:[#allocation3 + $0x81] sm:$0xff] %vm122, %v5087
    %5124 = vst.msk [vmem:[#allocation3 + $0x91] sm:$0xff] %vm122, %v5089
    %5125 = vst.msk [vmem:[#allocation3 + $0x99] sm:$0xff] %vm122, %v5091
    %5126 = vst.msk [vmem:[#allocation3 + $0xa9] sm:$0xff] %vm122, %v5093
    %5127 = vst.msk [vmem:[#allocation3 + $0xb1] sm:$0xff] %vm122, %v5095
    %5129 = vrot.lane.b32.xlu0 %v4682, 112
    %v5130 = vpop.permute.xlu0 %5129
    %5132 = vrot.lane.b32.xlu0 %v4682, 96
    %v5133 = vpop.permute.xlu0 %5132
    %5135 = vrot.lane.b32.xlu0 %v4682, 80
    %v5136 = vpop.permute.xlu0 %5135
    %5138 = vrot.lane.b32.xlu0 %v4682, 64
    %v5139 = vpop.permute.xlu0 %5138
    %5141 = vrot.lane.b32.xlu0 %v4682, 48
    %v5142 = vpop.permute.xlu0 %5141
    %5144 = vrot.lane.b32.xlu0 %v4682, 32
    %v5145 = vpop.permute.xlu0 %5144
    %5147 = vrot.lane.b32.xlu0 %v4682, 16
    %v5148 = vpop.permute.xlu0 %5147
    %5151 = vrot.lane.b32.xlu0 %v4683, 112
    %v5152 = vpop.permute.xlu0 %5151
    %5154 = vrot.lane.b32.xlu0 %v4683, 96
    %v5155 = vpop.permute.xlu0 %5154
    %5157 = vrot.lane.b32.xlu0 %v4683, 80
    %v5158 = vpop.permute.xlu0 %5157
    %5160 = vrot.lane.b32.xlu0 %v4683, 64
    %v5161 = vpop.permute.xlu0 %5160
    %5163 = vrot.lane.b32.xlu0 %v4683, 48
    %v5164 = vpop.permute.xlu0 %5163
    %5166 = vrot.lane.b32.xlu0 %v4683, 32
    %v5167 = vpop.permute.xlu0 %5166
    %5169 = vrot.lane.b32.xlu0 %v4683, 16
    %v5170 = vpop.permute.xlu0 %5169
    %v5172 = vcombine.low %v4682, %v5133
    %v5173 = vcombine.high %v4682, %v5133
    %v5175 = vunpack.c.l.s4 1983009808
    %v5176 = vunpack.c.0.s8 %v5175
    %v5177 = vlaneseq
    %v5178 = vshrl.u32 %v5177, 7
    %v5179 = vsub.s32 %v5176, %v5178
    %v5180 = vrot.slane %v5172, %v5179
    %v5182 = vunpack.c.l.s4 1983009808
    %v5183 = vunpack.c.0.s8 %v5182
    %v5184 = vlaneseq
    %v5185 = vshrl.u32 %v5184, 7
    %v5186 = vsub.s32 %v5183, %v5185
    %v5187 = vrot.slane %v5173, %v5186
    %v5188 = vcombine.low %v5130, %v5136
    %v5189 = vcombine.high %v5130, %v5136
    %v5191 = vunpack.c.l.s4 1983009808
    %v5192 = vunpack.c.0.s8 %v5191
    %v5193 = vlaneseq
    %v5194 = vshrl.u32 %v5193, 7
    %v5195 = vsub.s32 %v5192, %v5194
    %v5196 = vrot.slane %v5188, %v5195
    %v5198 = vunpack.c.l.s4 1983009808
    %v5199 = vunpack.c.0.s8 %v5198
    %v5200 = vlaneseq
    %v5201 = vshrl.u32 %v5200, 7
    %v5202 = vsub.s32 %v5199, %v5201
    %v5203 = vrot.slane %v5189, %v5202
    %v5204 = vcombine.low %v5139, %v5145
    %v5205 = vcombine.high %v5139, %v5145
    %v5207 = vunpack.c.l.s4 1983009808
    %v5208 = vunpack.c.0.s8 %v5207
    %v5209 = vlaneseq
    %v5210 = vshrl.u32 %v5209, 7
    %v5211 = vsub.s32 %v5208, %v5210
    %v5212 = vrot.slane %v5204, %v5211
    %v5214 = vunpack.c.l.s4 1983009808
    %v5215 = vunpack.c.0.s8 %v5214
    %v5216 = vlaneseq
    %v5217 = vshrl.u32 %v5216, 7
    %v5218 = vsub.s32 %v5215, %v5217
    %v5219 = vrot.slane %v5205, %v5218
    %v5220 = vcombine.low %v5142, %v5148
    %v5221 = vcombine.high %v5142, %v5148
    %v5223 = vunpack.c.l.s4 1983009808
    %v5224 = vunpack.c.0.s8 %v5223
    %v5225 = vlaneseq
    %v5226 = vshrl.u32 %v5225, 7
    %v5227 = vsub.s32 %v5224, %v5226
    %v5228 = vrot.slane %v5220, %v5227
    %v5230 = vunpack.c.l.s4 1983009808
    %v5231 = vunpack.c.0.s8 %v5230
    %v5232 = vlaneseq
    %v5233 = vshrl.u32 %v5232, 7
    %v5234 = vsub.s32 %v5231, %v5233
    %v5235 = vrot.slane %v5221, %v5234
    %v5236 = vcombine.low %v5180, %v5196
    %v5237 = vcombine.high %v5180, %v5196
    %v5239 = vunpack.c.l.s4 1934713408
    %v5240 = vunpack.c.0.s8 %v5239
    %v5241 = vlaneseq
    %v5242 = vshrl.u32 %v5241, 7
    %v5243 = vsub.s32 %v5240, %v5242
    %v5244 = vrot.slane %v5236, %v5243
    %v5246 = vunpack.c.l.s4 1934713408
    %v5247 = vunpack.c.0.s8 %v5246
    %v5248 = vlaneseq
    %v5249 = vshrl.u32 %v5248, 7
    %v5250 = vsub.s32 %v5247, %v5249
    %v5251 = vrot.slane %v5237, %v5250
    %v5252 = vcombine.low %v5187, %v5203
    %v5253 = vcombine.high %v5187, %v5203
    %v5255 = vunpack.c.l.s4 1934713408
    %v5256 = vunpack.c.0.s8 %v5255
    %v5257 = vlaneseq
    %v5258 = vshrl.u32 %v5257, 7
    %v5259 = vsub.s32 %v5256, %v5258
    %v5260 = vrot.slane %v5252, %v5259
    %v5262 = vunpack.c.l.s4 1934713408
    %v5263 = vunpack.c.0.s8 %v5262
    %v5264 = vlaneseq
    %v5265 = vshrl.u32 %v5264, 7
    %v5266 = vsub.s32 %v5263, %v5265
    %v5267 = vrot.slane %v5253, %v5266
    %v5268 = vcombine.low %v5212, %v5228
    %v5269 = vcombine.high %v5212, %v5228
    %v5271 = vunpack.c.l.s4 1934713408
    %v5272 = vunpack.c.0.s8 %v5271
    %v5273 = vlaneseq
    %v5274 = vshrl.u32 %v5273, 7
    %v5275 = vsub.s32 %v5272, %v5274
    %v5276 = vrot.slane %v5268, %v5275
    %v5278 = vunpack.c.l.s4 1934713408
    %v5279 = vunpack.c.0.s8 %v5278
    %v5280 = vlaneseq
    %v5281 = vshrl.u32 %v5280, 7
    %v5282 = vsub.s32 %v5279, %v5281
    %v5283 = vrot.slane %v5269, %v5282
    %v5284 = vcombine.low %v5219, %v5235
    %v5285 = vcombine.high %v5219, %v5235
    %v5287 = vunpack.c.l.s4 1934713408
    %v5288 = vunpack.c.0.s8 %v5287
    %v5289 = vlaneseq
    %v5290 = vshrl.u32 %v5289, 7
    %v5291 = vsub.s32 %v5288, %v5290
    %v5292 = vrot.slane %v5284, %v5291
    %v5294 = vunpack.c.l.s4 1934713408
    %v5295 = vunpack.c.0.s8 %v5294
    %v5296 = vlaneseq
    %v5297 = vshrl.u32 %v5296, 7
    %v5298 = vsub.s32 %v5295, %v5297
    %v5299 = vrot.slane %v5285, %v5298
    %v5300 = vcombine.low %v5244, %v5276
    %v5301 = vcombine.high %v5244, %v5276
    %v5302 = vcombine.low %v5251, %v5283
    %v5303 = vcombine.high %v5251, %v5283
    %v5304 = vcombine.low %v5260, %v5292
    %v5305 = vcombine.high %v5260, %v5292
    %v5306 = vcombine.low %v5267, %v5299
    %v5307 = vcombine.high %v5267, %v5299
    %v5308 = vcombine.low %v4683, %v5155
    %v5309 = vcombine.high %v4683, %v5155
    %v5311 = vunpack.c.l.s4 1983009808
    %v5312 = vunpack.c.0.s8 %v5311
    %v5313 = vlaneseq
    %v5314 = vshrl.u32 %v5313, 7
    %v5315 = vsub.s32 %v5312, %v5314
    %v5316 = vrot.slane %v5308, %v5315
    %v5318 = vunpack.c.l.s4 1983009808
    %v5319 = vunpack.c.0.s8 %v5318
    %v5320 = vlaneseq
    %v5321 = vshrl.u32 %v5320, 7
    %v5322 = vsub.s32 %v5319, %v5321
    %v5323 = vrot.slane %v5309, %v5322
    %v5324 = vcombine.low %v5152, %v5158
    %v5325 = vcombine.high %v5152, %v5158
    %v5327 = vunpack.c.l.s4 1983009808
    %v5328 = vunpack.c.0.s8 %v5327
    %v5329 = vlaneseq
    %v5330 = vshrl.u32 %v5329, 7
    %v5331 = vsub.s32 %v5328, %v5330
    %v5332 = vrot.slane %v5324, %v5331
    %v5334 = vunpack.c.l.s4 1983009808
    %v5335 = vunpack.c.0.s8 %v5334
    %v5336 = vlaneseq
    %v5337 = vshrl.u32 %v5336, 7
    %v5338 = vsub.s32 %v5335, %v5337
    %v5339 = vrot.slane %v5325, %v5338
    %v5340 = vcombine.low %v5161, %v5167
    %v5341 = vcombine.high %v5161, %v5167
    %v5343 = vunpack.c.l.s4 1983009808
    %v5344 = vunpack.c.0.s8 %v5343
    %v5345 = vlaneseq
    %v5346 = vshrl.u32 %v5345, 7
    %v5347 = vsub.s32 %v5344, %v5346
    %v5348 = vrot.slane %v5340, %v5347
    %v5350 = vunpack.c.l.s4 1983009808
    %v5351 = vunpack.c.0.s8 %v5350
    %v5352 = vlaneseq
    %v5353 = vshrl.u32 %v5352, 7
    %v5354 = vsub.s32 %v5351, %v5353
    %v5355 = vrot.slane %v5341, %v5354
    %v5356 = vcombine.low %v5164, %v5170
    %v5357 = vcombine.high %v5164, %v5170
    %v5359 = vunpack.c.l.s4 1983009808
    %v5360 = vunpack.c.0.s8 %v5359
    %v5361 = vlaneseq
    %v5362 = vshrl.u32 %v5361, 7
    %v5363 = vsub.s32 %v5360, %v5362
    %v5364 = vrot.slane %v5356, %v5363
    %v5366 = vunpack.c.l.s4 1983009808
    %v5367 = vunpack.c.0.s8 %v5366
    %v5368 = vlaneseq
    %v5369 = vshrl.u32 %v5368, 7
    %v5370 = vsub.s32 %v5367, %v5369
    %v5371 = vrot.slane %v5357, %v5370
    %v5372 = vcombine.low %v5316, %v5332
    %v5373 = vcombine.high %v5316, %v5332
    %v5375 = vunpack.c.l.s4 1934713408
    %v5376 = vunpack.c.0.s8 %v5375
    %v5377 = vlaneseq
    %v5378 = vshrl.u32 %v5377, 7
    %v5379 = vsub.s32 %v5376, %v5378
    %v5380 = vrot.slane %v5372, %v5379
    %v5382 = vunpack.c.l.s4 1934713408
    %v5383 = vunpack.c.0.s8 %v5382
    %v5384 = vlaneseq
    %v5385 = vshrl.u32 %v5384, 7
    %v5386 = vsub.s32 %v5383, %v5385
    %v5387 = vrot.slane %v5373, %v5386
    %v5388 = vcombine.low %v5323, %v5339
    %v5389 = vcombine.high %v5323, %v5339
    %v5391 = vunpack.c.l.s4 1934713408
    %v5392 = vunpack.c.0.s8 %v5391
    %v5393 = vlaneseq
    %v5394 = vshrl.u32 %v5393, 7
    %v5395 = vsub.s32 %v5392, %v5394
    %v5396 = vrot.slane %v5388, %v5395
    %v5398 = vunpack.c.l.s4 1934713408
    %v5399 = vunpack.c.0.s8 %v5398
    %v5400 = vlaneseq
    %v5401 = vshrl.u32 %v5400, 7
    %v5402 = vsub.s32 %v5399, %v5401
    %v5403 = vrot.slane %v5389, %v5402
    %v5404 = vcombine.low %v5348, %v5364
    %v5405 = vcombine.high %v5348, %v5364
    %v5407 = vunpack.c.l.s4 1934713408
    %v5408 = vunpack.c.0.s8 %v5407
    %v5409 = vlaneseq
    %v5410 = vshrl.u32 %v5409, 7
    %v5411 = vsub.s32 %v5408, %v5410
    %v5412 = vrot.slane %v5404, %v5411
    %v5414 = vunpack.c.l.s4 1934713408
    %v5415 = vunpack.c.0.s8 %v5414
    %v5416 = vlaneseq
    %v5417 = vshrl.u32 %v5416, 7
    %v5418 = vsub.s32 %v5415, %v5417
    %v5419 = vrot.slane %v5405, %v5418
    %v5420 = vcombine.low %v5355, %v5371
    %v5421 = vcombine.high %v5355, %v5371
    %v5423 = vunpack.c.l.s4 1934713408
    %v5424 = vunpack.c.0.s8 %v5423
    %v5425 = vlaneseq
    %v5426 = vshrl.u32 %v5425, 7
    %v5427 = vsub.s32 %v5424, %v5426
    %v5428 = vrot.slane %v5420, %v5427
    %v5430 = vunpack.c.l.s4 1934713408
    %v5431 = vunpack.c.0.s8 %v5430
    %v5432 = vlaneseq
    %v5433 = vshrl.u32 %v5432, 7
    %v5434 = vsub.s32 %v5431, %v5433
    %v5435 = vrot.slane %v5421, %v5434
    %v5436 = vcombine.low %v5380, %v5412
    %v5437 = vcombine.high %v5380, %v5412
    %v5438 = vcombine.low %v5387, %v5419
    %v5439 = vcombine.high %v5387, %v5419
    %v5440 = vcombine.low %v5396, %v5428
    %v5441 = vcombine.high %v5396, %v5428
    %v5442 = vcombine.low %v5403, %v5435
    %v5443 = vcombine.high %v5403, %v5435
    %5460 = vrot.lane.b32.xlu0 %v5300, 1
    %v5461 = vpop.permute.xlu0 %5460
    %5462 = vrot.lane.b32.xlu0 %v5436, 1
    %v5463 = vpop.permute.xlu0 %5462
    %5464 = vrot.lane.b32.xlu0 %v5301, 1
    %v5465 = vpop.permute.xlu0 %5464
    %5466 = vrot.lane.b32.xlu0 %v5437, 1
    %v5467 = vpop.permute.xlu0 %5466
    %5468 = vrot.lane.b32.xlu0 %v5302, 1
    %v5469 = vpop.permute.xlu0 %5468
    %5470 = vrot.lane.b32.xlu0 %v5438, 1
    %v5471 = vpop.permute.xlu0 %5470
    %5472 = vrot.lane.b32.xlu0 %v5303, 1
    %v5473 = vpop.permute.xlu0 %5472
    %5474 = vrot.lane.b32.xlu0 %v5439, 1
    %v5475 = vpop.permute.xlu0 %5474
    %5476 = vrot.lane.b32.xlu0 %v5304, 1
    %v5477 = vpop.permute.xlu0 %5476
    %5478 = vrot.lane.b32.xlu0 %v5440, 1
    %v5479 = vpop.permute.xlu0 %5478
    %5480 = vrot.lane.b32.xlu0 %v5305, 1
    %v5481 = vpop.permute.xlu0 %5480
    %5482 = vrot.lane.b32.xlu0 %v5441, 1
    %v5483 = vpop.permute.xlu0 %5482
    %5484 = vrot.lane.b32.xlu0 %v5306, 1
    %v5485 = vpop.permute.xlu0 %5484
    %5486 = vrot.lane.b32.xlu0 %v5442, 1
    %v5487 = vpop.permute.xlu0 %5486
    %5488 = vrot.lane.b32.xlu0 %v5307, 1
    %v5489 = vpop.permute.xlu0 %5488
    %5490 = vrot.lane.b32.xlu0 %v5443, 1
    %v5491 = vpop.permute.xlu0 %5490
    %s5508 = scalar_lea.vmem [#allocation3], 192
    %5509 = vst.msk [vmem:[%s5508 + $0x1] sm:$0xff] %vm122, %v5461
    %5510 = vst.msk [vmem:[%s5508 + $0x9] sm:$0xff] %vm122, %v5463
    %5511 = vst.msk [vmem:[%s5508 + $0x19] sm:$0xff] %vm122, %v5465
    %5512 = vst.msk [vmem:[%s5508 + $0x21] sm:$0xff] %vm122, %v5467
    %5513 = vst.msk [vmem:[%s5508 + $0x31] sm:$0xff] %vm122, %v5469
    %5514 = vst.msk [vmem:[%s5508 + $0x39] sm:$0xff] %vm122, %v5471
    %5515 = vst.msk [vmem:[%s5508 + $0x49] sm:$0xff] %vm122, %v5473
    %5516 = vst.msk [vmem:[%s5508 + $0x51] sm:$0xff] %vm122, %v5475
    %5517 = vst.msk [vmem:[%s5508 + $0x61] sm:$0xff] %vm122, %v5477
    %5518 = vst.msk [vmem:[%s5508 + $0x69] sm:$0xff] %vm122, %v5479
    %5519 = vst.msk [vmem:[%s5508 + $0x79] sm:$0xff] %vm122, %v5481
    %5520 = vst.msk [vmem:[%s5508 + $0x81] sm:$0xff] %vm122, %v5483
    %5521 = vst.msk [vmem:[%s5508 + $0x91] sm:$0xff] %vm122, %v5485
    %5522 = vst.msk [vmem:[%s5508 + $0x99] sm:$0xff] %vm122, %v5487
    %5523 = vst.msk [vmem:[%s5508 + $0xa9] sm:$0xff] %vm122, %v5489
    %5524 = vst.msk [vmem:[%s5508 + $0xb1] sm:$0xff] %vm122, %v5491
    %v5525 = vld [vmem:[#allocation3] sm:$0xff]
    %v5526 = vld [vmem:[#allocation3 + $0x8] sm:$0xff]
    %v5527 = vld [vmem:[#allocation3 + $0x18] sm:$0xff]
    %v5528 = vld [vmem:[#allocation3 + $0x20] sm:$0xff]
    %v5529 = vld [vmem:[#allocation3 + $0x30] sm:$0xff]
    %v5530 = vld [vmem:[#allocation3 + $0x38] sm:$0xff]
    %v5531 = vld [vmem:[#allocation3 + $0x48] sm:$0xff]
    %v5532 = vld [vmem:[#allocation3 + $0x50] sm:$0xff]
    %v5533 = vld [vmem:[#allocation3 + $0x60] sm:$0xff]
    %v5534 = vld [vmem:[#allocation3 + $0x68] sm:$0xff]
    %v5535 = vld [vmem:[#allocation3 + $0x78] sm:$0xff]
    %v5536 = vld [vmem:[#allocation3 + $0x80] sm:$0xff]
    %v5537 = vld [vmem:[#allocation3 + $0x90] sm:$0xff]
    %v5538 = vld [vmem:[#allocation3 + $0x98] sm:$0xff]
    %v5539 = vld [vmem:[#allocation3 + $0xa8] sm:$0xff]
    %v5540 = vld [vmem:[#allocation3 + $0xb0] sm:$0xff]
    %v5541 = vcombine.low %v5525, %v5529
    %v5542 = vcombine.high %v5525, %v5529
    %v5544 = vunpack.c.l.s4 1983009808
    %v5545 = vunpack.c.0.s8 %v5544
    %v5546 = vlaneseq
    %v5547 = vshrl.u32 %v5546, 7
    %v5548 = vsub.s32 %v5545, %v5547
    %v5549 = vrot.slane %v5541, %v5548
    %v5551 = vunpack.c.l.s4 1983009808
    %v5552 = vunpack.c.0.s8 %v5551
    %v5553 = vlaneseq
    %v5554 = vshrl.u32 %v5553, 7
    %v5555 = vsub.s32 %v5552, %v5554
    %v5556 = vrot.slane %v5542, %v5555
    %v5557 = vcombine.low %v5527, %v5531
    %v5558 = vcombine.high %v5527, %v5531
    %v5560 = vunpack.c.l.s4 1983009808
    %v5561 = vunpack.c.0.s8 %v5560
    %v5562 = vlaneseq
    %v5563 = vshrl.u32 %v5562, 7
    %v5564 = vsub.s32 %v5561, %v5563
    %v5565 = vrot.slane %v5557, %v5564
    %v5567 = vunpack.c.l.s4 1983009808
    %v5568 = vunpack.c.0.s8 %v5567
    %v5569 = vlaneseq
    %v5570 = vshrl.u32 %v5569, 7
    %v5571 = vsub.s32 %v5568, %v5570
    %v5572 = vrot.slane %v5558, %v5571
    %v5573 = vcombine.low %v5533, %v5537
    %v5574 = vcombine.high %v5533, %v5537
    %v5576 = vunpack.c.l.s4 1983009808
    %v5577 = vunpack.c.0.s8 %v5576
    %v5578 = vlaneseq
    %v5579 = vshrl.u32 %v5578, 7
    %v5580 = vsub.s32 %v5577, %v5579
    %v5581 = vrot.slane %v5573, %v5580
    %v5583 = vunpack.c.l.s4 1983009808
    %v5584 = vunpack.c.0.s8 %v5583
    %v5585 = vlaneseq
    %v5586 = vshrl.u32 %v5585, 7
    %v5587 = vsub.s32 %v5584, %v5586
    %v5588 = vrot.slane %v5574, %v5587
    %v5589 = vcombine.low %v5535, %v5539
    %v5590 = vcombine.high %v5535, %v5539
    %v5592 = vunpack.c.l.s4 1983009808
    %v5593 = vunpack.c.0.s8 %v5592
    %v5594 = vlaneseq
    %v5595 = vshrl.u32 %v5594, 7
    %v5596 = vsub.s32 %v5593, %v5595
    %v5597 = vrot.slane %v5589, %v5596
    %v5599 = vunpack.c.l.s4 1983009808
    %v5600 = vunpack.c.0.s8 %v5599
    %v5601 = vlaneseq
    %v5602 = vshrl.u32 %v5601, 7
    %v5603 = vsub.s32 %v5600, %v5602
    %v5604 = vrot.slane %v5590, %v5603
    %v5605 = vcombine.low %v5549, %v5565
    %v5606 = vcombine.high %v5549, %v5565
    %v5608 = vunpack.c.l.s4 1934713408
    %v5609 = vunpack.c.0.s8 %v5608
    %v5610 = vlaneseq
    %v5611 = vshrl.u32 %v5610, 7
    %v5612 = vsub.s32 %v5609, %v5611
    %v5613 = vrot.slane %v5605, %v5612
    %v5615 = vunpack.c.l.s4 1934713408
    %v5616 = vunpack.c.0.s8 %v5615
    %v5617 = vlaneseq
    %v5618 = vshrl.u32 %v5617, 7
    %v5619 = vsub.s32 %v5616, %v5618
    %v5620 = vrot.slane %v5606, %v5619
    %v5621 = vcombine.low %v5556, %v5572
    %v5622 = vcombine.high %v5556, %v5572
    %v5624 = vunpack.c.l.s4 1934713408
    %v5625 = vunpack.c.0.s8 %v5624
    %v5626 = vlaneseq
    %v5627 = vshrl.u32 %v5626, 7
    %v5628 = vsub.s32 %v5625, %v5627
    %v5629 = vrot.slane %v5621, %v5628
    %v5631 = vunpack.c.l.s4 1934713408
    %v5632 = vunpack.c.0.s8 %v5631
    %v5633 = vlaneseq
    %v5634 = vshrl.u32 %v5633, 7
    %v5635 = vsub.s32 %v5632, %v5634
    %v5636 = vrot.slane %v5622, %v5635
    %v5637 = vcombine.low %v5581, %v5597
    %v5638 = vcombine.high %v5581, %v5597
    %v5640 = vunpack.c.l.s4 1934713408
    %v5641 = vunpack.c.0.s8 %v5640
    %v5642 = vlaneseq
    %v5643 = vshrl.u32 %v5642, 7
    %v5644 = vsub.s32 %v5641, %v5643
    %v5645 = vrot.slane %v5637, %v5644
    %v5647 = vunpack.c.l.s4 1934713408
    %v5648 = vunpack.c.0.s8 %v5647
    %v5649 = vlaneseq
    %v5650 = vshrl.u32 %v5649, 7
    %v5651 = vsub.s32 %v5648, %v5650
    %v5652 = vrot.slane %v5638, %v5651
    %v5653 = vcombine.low %v5588, %v5604
    %v5654 = vcombine.high %v5588, %v5604
    %v5656 = vunpack.c.l.s4 1934713408
    %v5657 = vunpack.c.0.s8 %v5656
    %v5658 = vlaneseq
    %v5659 = vshrl.u32 %v5658, 7
    %v5660 = vsub.s32 %v5657, %v5659
    %v5661 = vrot.slane %v5653, %v5660
    %v5663 = vunpack.c.l.s4 1934713408
    %v5664 = vunpack.c.0.s8 %v5663
    %v5665 = vlaneseq
    %v5666 = vshrl.u32 %v5665, 7
    %v5667 = vsub.s32 %v5664, %v5666
    %v5668 = vrot.slane %v5654, %v5667
    %v5669 = vcombine.low %v5613, %v5645
    %v5670 = vcombine.high %v5613, %v5645
    %v5671 = vcombine.low %v5620, %v5652
    %v5672 = vcombine.high %v5620, %v5652
    %v5673 = vcombine.low %v5629, %v5661
    %v5674 = vcombine.high %v5629, %v5661
    %v5675 = vcombine.low %v5636, %v5668
    %v5676 = vcombine.high %v5636, %v5668
    %v5677 = vcombine.low %v5526, %v5530
    %v5678 = vcombine.high %v5526, %v5530
    %v5680 = vunpack.c.l.s4 1983009808
    %v5681 = vunpack.c.0.s8 %v5680
    %v5682 = vlaneseq
    %v5683 = vshrl.u32 %v5682, 7
    %v5684 = vsub.s32 %v5681, %v5683
    %v5685 = vrot.slane %v5677, %v5684
    %v5687 = vunpack.c.l.s4 1983009808
    %v5688 = vunpack.c.0.s8 %v5687
    %v5689 = vlaneseq
    %v5690 = vshrl.u32 %v5689, 7
    %v5691 = vsub.s32 %v5688, %v5690
    %v5692 = vrot.slane %v5678, %v5691
    %v5693 = vcombine.low %v5528, %v5532
    %v5694 = vcombine.high %v5528, %v5532
    %v5696 = vunpack.c.l.s4 1983009808
    %v5697 = vunpack.c.0.s8 %v5696
    %v5698 = vlaneseq
    %v5699 = vshrl.u32 %v5698, 7
    %v5700 = vsub.s32 %v5697, %v5699
    %v5701 = vrot.slane %v5693, %v5700
    %v5703 = vunpack.c.l.s4 1983009808
    %v5704 = vunpack.c.0.s8 %v5703
    %v5705 = vlaneseq
    %v5706 = vshrl.u32 %v5705, 7
    %v5707 = vsub.s32 %v5704, %v5706
    %v5708 = vrot.slane %v5694, %v5707
    %v5709 = vcombine.low %v5534, %v5538
    %v5710 = vcombine.high %v5534, %v5538
    %v5712 = vunpack.c.l.s4 1983009808
    %v5713 = vunpack.c.0.s8 %v5712
    %v5714 = vlaneseq
    %v5715 = vshrl.u32 %v5714, 7
    %v5716 = vsub.s32 %v5713, %v5715
    %v5717 = vrot.slane %v5709, %v5716
    %v5719 = vunpack.c.l.s4 1983009808
    %v5720 = vunpack.c.0.s8 %v5719
    %v5721 = vlaneseq
    %v5722 = vshrl.u32 %v5721, 7
    %v5723 = vsub.s32 %v5720, %v5722
    %v5724 = vrot.slane %v5710, %v5723
    %v5725 = vcombine.low %v5536, %v5540
    %v5726 = vcombine.high %v5536, %v5540
    %v5728 = vunpack.c.l.s4 1983009808
    %v5729 = vunpack.c.0.s8 %v5728
    %v5730 = vlaneseq
    %v5731 = vshrl.u32 %v5730, 7
    %v5732 = vsub.s32 %v5729, %v5731
    %v5733 = vrot.slane %v5725, %v5732
    %v5735 = vunpack.c.l.s4 1983009808
    %v5736 = vunpack.c.0.s8 %v5735
    %v5737 = vlaneseq
    %v5738 = vshrl.u32 %v5737, 7
    %v5739 = vsub.s32 %v5736, %v5738
    %v5740 = vrot.slane %v5726, %v5739
    %v5741 = vcombine.low %v5685, %v5701
    %v5742 = vcombine.high %v5685, %v5701
    %v5744 = vunpack.c.l.s4 1934713408
    %v5745 = vunpack.c.0.s8 %v5744
    %v5746 = vlaneseq
    %v5747 = vshrl.u32 %v5746, 7
    %v5748 = vsub.s32 %v5745, %v5747
    %v5749 = vrot.slane %v5741, %v5748
    %v5751 = vunpack.c.l.s4 1934713408
    %v5752 = vunpack.c.0.s8 %v5751
    %v5753 = vlaneseq
    %v5754 = vshrl.u32 %v5753, 7
    %v5755 = vsub.s32 %v5752, %v5754
    %v5756 = vrot.slane %v5742, %v5755
    %v5757 = vcombine.low %v5692, %v5708
    %v5758 = vcombine.high %v5692, %v5708
    %v5760 = vunpack.c.l.s4 1934713408
    %v5761 = vunpack.c.0.s8 %v5760
    %v5762 = vlaneseq
    %v5763 = vshrl.u32 %v5762, 7
    %v5764 = vsub.s32 %v5761, %v5763
    %v5765 = vrot.slane %v5757, %v5764
    %v5767 = vunpack.c.l.s4 1934713408
    %v5768 = vunpack.c.0.s8 %v5767
    %v5769 = vlaneseq
    %v5770 = vshrl.u32 %v5769, 7
    %v5771 = vsub.s32 %v5768, %v5770
    %v5772 = vrot.slane %v5758, %v5771
    %v5773 = vcombine.low %v5717, %v5733
    %v5774 = vcombine.high %v5717, %v5733
    %v5776 = vunpack.c.l.s4 1934713408
    %v5777 = vunpack.c.0.s8 %v5776
    %v5778 = vlaneseq
    %v5779 = vshrl.u32 %v5778, 7
    %v5780 = vsub.s32 %v5777, %v5779
    %v5781 = vrot.slane %v5773, %v5780
    %v5783 = vunpack.c.l.s4 1934713408
    %v5784 = vunpack.c.0.s8 %v5783
    %v5785 = vlaneseq
    %v5786 = vshrl.u32 %v5785, 7
    %v5787 = vsub.s32 %v5784, %v5786
    %v5788 = vrot.slane %v5774, %v5787
    %v5789 = vcombine.low %v5724, %v5740
    %v5790 = vcombine.high %v5724, %v5740
    %v5792 = vunpack.c.l.s4 1934713408
    %v5793 = vunpack.c.0.s8 %v5792
    %v5794 = vlaneseq
    %v5795 = vshrl.u32 %v5794, 7
    %v5796 = vsub.s32 %v5793, %v5795
    %v5797 = vrot.slane %v5789, %v5796
    %v5799 = vunpack.c.l.s4 1934713408
    %v5800 = vunpack.c.0.s8 %v5799
    %v5801 = vlaneseq
    %v5802 = vshrl.u32 %v5801, 7
    %v5803 = vsub.s32 %v5800, %v5802
    %v5804 = vrot.slane %v5790, %v5803
    %v5805 = vcombine.low %v5749, %v5781
    %v5806 = vcombine.high %v5749, %v5781
    %v5807 = vcombine.low %v5756, %v5788
    %v5808 = vcombine.high %v5756, %v5788
    %v5809 = vcombine.low %v5765, %v5797
    %v5810 = vcombine.high %v5765, %v5797
    %v5811 = vcombine.low %v5772, %v5804
    %v5812 = vcombine.high %v5772, %v5804
    %5814 = vrot.lane.b32.xlu0 %v5670, 16
    %v5815 = vpop.permute.xlu0 %5814
    %5818 = vrot.lane.b32.xlu0 %v5671, 32
    %v5819 = vpop.permute.xlu0 %5818
    %5822 = vrot.lane.b32.xlu0 %v5672, 48
    %v5823 = vpop.permute.xlu0 %5822
    %5826 = vrot.lane.b32.xlu0 %v5673, 64
    %v5827 = vpop.permute.xlu0 %5826
    %5830 = vrot.lane.b32.xlu0 %v5674, 80
    %v5831 = vpop.permute.xlu0 %5830
    %5834 = vrot.lane.b32.xlu0 %v5675, 96
    %v5835 = vpop.permute.xlu0 %5834
    %5838 = vrot.lane.b32.xlu0 %v5676, 112
    %v5839 = vpop.permute.xlu0 %5838
    %5842 = vrot.lane.b32.xlu0 %v5806, 16
    %v5843 = vpop.permute.xlu0 %5842
    %5846 = vrot.lane.b32.xlu0 %v5807, 32
    %v5847 = vpop.permute.xlu0 %5846
    %5850 = vrot.lane.b32.xlu0 %v5808, 48
    %v5851 = vpop.permute.xlu0 %5850
    %5854 = vrot.lane.b32.xlu0 %v5809, 64
    %v5855 = vpop.permute.xlu0 %5854
    %5858 = vrot.lane.b32.xlu0 %v5810, 80
    %v5859 = vpop.permute.xlu0 %5858
    %5862 = vrot.lane.b32.xlu0 %v5811, 96
    %v5863 = vpop.permute.xlu0 %5862
    %5866 = vrot.lane.b32.xlu0 %v5812, 112
    %v5867 = vpop.permute.xlu0 %5866
    %v5869 = vsel %vm372, %v5669, %v5815
    %v5870 = vsel %vm374, %v5869, %v5819
    %v5871 = vsel %vm376, %v5870, %v5823
    %v5872 = vsel %vm378, %v5871, %v5827
    %v5873 = vsel %vm380, %v5872, %v5831
    %v5874 = vsel %vm382, %v5873, %v5835
    %v5875 = vsel %vm384, %v5874, %v5839
    %v5876 = vsel %vm372, %v5805, %v5843
    %v5877 = vsel %vm374, %v5876, %v5847
    %v5878 = vsel %vm376, %v5877, %v5851
    %v5879 = vsel %vm378, %v5878, %v5855
    %v5880 = vsel %vm380, %v5879, %v5859
    %v5881 = vsel %vm382, %v5880, %v5863
    %v5882 = vsel %vm384, %v5881, %v5867
    %5883 = vst [vmem:[#allocation5] sm:$0xff] %v5875
    %5884 = vst [vmem:[#allocation5 + $0x8] sm:$0xff] %v5882
    %v5885 = vld [vmem:[%s5508] sm:$0xff]
    %v5886 = vld [vmem:[%s5508 + $0x8] sm:$0xff]
    %v5887 = vld [vmem:[%s5508 + $0x18] sm:$0xff]
    %v5888 = vld [vmem:[%s5508 + $0x20] sm:$0xff]
    %v5889 = vld [vmem:[%s5508 + $0x30] sm:$0xff]
    %v5890 = vld [vmem:[%s5508 + $0x38] sm:$0xff]
    %v5891 = vld [vmem:[%s5508 + $0x48] sm:$0xff]
    %v5892 = vld [vmem:[%s5508 + $0x50] sm:$0xff]
    %v5893 = vld [vmem:[%s5508 + $0x60] sm:$0xff]
    %v5894 = vld [vmem:[%s5508 + $0x68] sm:$0xff]
    %v5895 = vld [vmem:[%s5508 + $0x78] sm:$0xff]
    %v5896 = vld [vmem:[%s5508 + $0x80] sm:$0xff]
    %v5897 = vld [vmem:[%s5508 + $0x90] sm:$0xff]
    %v5898 = vld [vmem:[%s5508 + $0x98] sm:$0xff]
    %v5899 = vld [vmem:[%s5508 + $0xa8] sm:$0xff]
    %v5900 = vld [vmem:[%s5508 + $0xb0] sm:$0xff]
    %v5901 = vcombine.low %v5885, %v5889
    %v5902 = vcombine.high %v5885, %v5889
    %v5904 = vunpack.c.l.s4 1983009808
    %v5905 = vunpack.c.0.s8 %v5904
    %v5906 = vlaneseq
    %v5907 = vshrl.u32 %v5906, 7
    %v5908 = vsub.s32 %v5905, %v5907
    %v5909 = vrot.slane %v5901, %v5908
    %v5911 = vunpack.c.l.s4 1983009808
    %v5912 = vunpack.c.0.s8 %v5911
    %v5913 = vlaneseq
    %v5914 = vshrl.u32 %v5913, 7
    %v5915 = vsub.s32 %v5912, %v5914
    %v5916 = vrot.slane %v5902, %v5915
    %v5917 = vcombine.low %v5887, %v5891
    %v5918 = vcombine.high %v5887, %v5891
    %v5920 = vunpack.c.l.s4 1983009808
    %v5921 = vunpack.c.0.s8 %v5920
    %v5922 = vlaneseq
    %v5923 = vshrl.u32 %v5922, 7
    %v5924 = vsub.s32 %v5921, %v5923
    %v5925 = vrot.slane %v5917, %v5924
    %v5927 = vunpack.c.l.s4 1983009808
    %v5928 = vunpack.c.0.s8 %v5927
    %v5929 = vlaneseq
    %v5930 = vshrl.u32 %v5929, 7
    %v5931 = vsub.s32 %v5928, %v5930
    %v5932 = vrot.slane %v5918, %v5931
    %v5933 = vcombine.low %v5893, %v5897
    %v5934 = vcombine.high %v5893, %v5897
    %v5936 = vunpack.c.l.s4 1983009808
    %v5937 = vunpack.c.0.s8 %v5936
    %v5938 = vlaneseq
    %v5939 = vshrl.u32 %v5938, 7
    %v5940 = vsub.s32 %v5937, %v5939
    %v5941 = vrot.slane %v5933, %v5940
    %v5943 = vunpack.c.l.s4 1983009808
    %v5944 = vunpack.c.0.s8 %v5943
    %v5945 = vlaneseq
    %v5946 = vshrl.u32 %v5945, 7
    %v5947 = vsub.s32 %v5944, %v5946
    %v5948 = vrot.slane %v5934, %v5947
    %v5949 = vcombine.low %v5895, %v5899
    %v5950 = vcombine.high %v5895, %v5899
    %v5952 = vunpack.c.l.s4 1983009808
    %v5953 = vunpack.c.0.s8 %v5952
    %v5954 = vlaneseq
    %v5955 = vshrl.u32 %v5954, 7
    %v5956 = vsub.s32 %v5953, %v5955
    %v5957 = vrot.slane %v5949, %v5956
    %v5959 = vunpack.c.l.s4 1983009808
    %v5960 = vunpack.c.0.s8 %v5959
    %v5961 = vlaneseq
    %v5962 = vshrl.u32 %v5961, 7
    %v5963 = vsub.s32 %v5960, %v5962
    %v5964 = vrot.slane %v5950, %v5963
    %v5965 = vcombine.low %v5909, %v5925
    %v5966 = vcombine.high %v5909, %v5925
    %v5968 = vunpack.c.l.s4 1934713408
    %v5969 = vunpack.c.0.s8 %v5968
    %v5970 = vlaneseq
    %v5971 = vshrl.u32 %v5970, 7
    %v5972 = vsub.s32 %v5969, %v5971
    %v5973 = vrot.slane %v5965, %v5972
    %v5975 = vunpack.c.l.s4 1934713408
    %v5976 = vunpack.c.0.s8 %v5975
    %v5977 = vlaneseq
    %v5978 = vshrl.u32 %v5977, 7
    %v5979 = vsub.s32 %v5976, %v5978
    %v5980 = vrot.slane %v5966, %v5979
    %v5981 = vcombine.low %v5916, %v5932
    %v5982 = vcombine.high %v5916, %v5932
    %v5984 = vunpack.c.l.s4 1934713408
    %v5985 = vunpack.c.0.s8 %v5984
    %v5986 = vlaneseq
    %v5987 = vshrl.u32 %v5986, 7
    %v5988 = vsub.s32 %v5985, %v5987
    %v5989 = vrot.slane %v5981, %v5988
    %v5991 = vunpack.c.l.s4 1934713408
    %v5992 = vunpack.c.0.s8 %v5991
    %v5993 = vlaneseq
    %v5994 = vshrl.u32 %v5993, 7
    %v5995 = vsub.s32 %v5992, %v5994
    %v5996 = vrot.slane %v5982, %v5995
    %v5997 = vcombine.low %v5941, %v5957
    %v5998 = vcombine.high %v5941, %v5957
    %v6000 = vunpack.c.l.s4 1934713408
    %v6001 = vunpack.c.0.s8 %v6000
    %v6002 = vlaneseq
    %v6003 = vshrl.u32 %v6002, 7
    %v6004 = vsub.s32 %v6001, %v6003
    %v6005 = vrot.slane %v5997, %v6004
    %v6007 = vunpack.c.l.s4 1934713408
    %v6008 = vunpack.c.0.s8 %v6007
    %v6009 = vlaneseq
    %v6010 = vshrl.u32 %v6009, 7
    %v6011 = vsub.s32 %v6008, %v6010
    %v6012 = vrot.slane %v5998, %v6011
    %v6013 = vcombine.low %v5948, %v5964
    %v6014 = vcombine.high %v5948, %v5964
    %v6016 = vunpack.c.l.s4 1934713408
    %v6017 = vunpack.c.0.s8 %v6016
    %v6018 = vlaneseq
    %v6019 = vshrl.u32 %v6018, 7
    %v6020 = vsub.s32 %v6017, %v6019
    %v6021 = vrot.slane %v6013, %v6020
    %v6023 = vunpack.c.l.s4 1934713408
    %v6024 = vunpack.c.0.s8 %v6023
    %v6025 = vlaneseq
    %v6026 = vshrl.u32 %v6025, 7
    %v6027 = vsub.s32 %v6024, %v6026
    %v6028 = vrot.slane %v6014, %v6027
    %v6029 = vcombine.low %v5973, %v6005
    %v6030 = vcombine.high %v5973, %v6005
    %v6031 = vcombine.low %v5980, %v6012
    %v6032 = vcombine.high %v5980, %v6012
    %v6033 = vcombine.low %v5989, %v6021
    %v6034 = vcombine.high %v5989, %v6021
    %v6035 = vcombine.low %v5996, %v6028
    %v6036 = vcombine.high %v5996, %v6028
    %v6037 = vcombine.low %v5886, %v5890
    %v6038 = vcombine.high %v5886, %v5890
    %v6040 = vunpack.c.l.s4 1983009808
    %v6041 = vunpack.c.0.s8 %v6040
    %v6042 = vlaneseq
    %v6043 = vshrl.u32 %v6042, 7
    %v6044 = vsub.s32 %v6041, %v6043
    %v6045 = vrot.slane %v6037, %v6044
    %v6047 = vunpack.c.l.s4 1983009808
    %v6048 = vunpack.c.0.s8 %v6047
    %v6049 = vlaneseq
    %v6050 = vshrl.u32 %v6049, 7
    %v6051 = vsub.s32 %v6048, %v6050
    %v6052 = vrot.slane %v6038, %v6051
    %v6053 = vcombine.low %v5888, %v5892
    %v6054 = vcombine.high %v5888, %v5892
    %v6056 = vunpack.c.l.s4 1983009808
    %v6057 = vunpack.c.0.s8 %v6056
    %v6058 = vlaneseq
    %v6059 = vshrl.u32 %v6058, 7
    %v6060 = vsub.s32 %v6057, %v6059
    %v6061 = vrot.slane %v6053, %v6060
    %v6063 = vunpack.c.l.s4 1983009808
    %v6064 = vunpack.c.0.s8 %v6063
    %v6065 = vlaneseq
    %v6066 = vshrl.u32 %v6065, 7
    %v6067 = vsub.s32 %v6064, %v6066
    %v6068 = vrot.slane %v6054, %v6067
    %v6069 = vcombine.low %v5894, %v5898
    %v6070 = vcombine.high %v5894, %v5898
    %v6072 = vunpack.c.l.s4 1983009808
    %v6073 = vunpack.c.0.s8 %v6072
    %v6074 = vlaneseq
    %v6075 = vshrl.u32 %v6074, 7
    %v6076 = vsub.s32 %v6073, %v6075
    %v6077 = vrot.slane %v6069, %v6076
    %v6079 = vunpack.c.l.s4 1983009808
    %v6080 = vunpack.c.0.s8 %v6079
    %v6081 = vlaneseq
    %v6082 = vshrl.u32 %v6081, 7
    %v6083 = vsub.s32 %v6080, %v6082
    %v6084 = vrot.slane %v6070, %v6083
    %v6085 = vcombine.low %v5896, %v5900
    %v6086 = vcombine.high %v5896, %v5900
    %v6088 = vunpack.c.l.s4 1983009808
    %v6089 = vunpack.c.0.s8 %v6088
    %v6090 = vlaneseq
    %v6091 = vshrl.u32 %v6090, 7
    %v6092 = vsub.s32 %v6089, %v6091
    %v6093 = vrot.slane %v6085, %v6092
    %v6095 = vunpack.c.l.s4 1983009808
    %v6096 = vunpack.c.0.s8 %v6095
    %v6097 = vlaneseq
    %v6098 = vshrl.u32 %v6097, 7
    %v6099 = vsub.s32 %v6096, %v6098
    %v6100 = vrot.slane %v6086, %v6099
    %v6101 = vcombine.low %v6045, %v6061
    %v6102 = vcombine.high %v6045, %v6061
    %v6104 = vunpack.c.l.s4 1934713408
    %v6105 = vunpack.c.0.s8 %v6104
    %v6106 = vlaneseq
    %v6107 = vshrl.u32 %v6106, 7
    %v6108 = vsub.s32 %v6105, %v6107
    %v6109 = vrot.slane %v6101, %v6108
    %v6111 = vunpack.c.l.s4 1934713408
    %v6112 = vunpack.c.0.s8 %v6111
    %v6113 = vlaneseq
    %v6114 = vshrl.u32 %v6113, 7
    %v6115 = vsub.s32 %v6112, %v6114
    %v6116 = vrot.slane %v6102, %v6115
    %v6117 = vcombine.low %v6052, %v6068
    %v6118 = vcombine.high %v6052, %v6068
    %v6120 = vunpack.c.l.s4 1934713408
    %v6121 = vunpack.c.0.s8 %v6120
    %v6122 = vlaneseq
    %v6123 = vshrl.u32 %v6122, 7
    %v6124 = vsub.s32 %v6121, %v6123
    %v6125 = vrot.slane %v6117, %v6124
    %v6127 = vunpack.c.l.s4 1934713408
    %v6128 = vunpack.c.0.s8 %v6127
    %v6129 = vlaneseq
    %v6130 = vshrl.u32 %v6129, 7
    %v6131 = vsub.s32 %v6128, %v6130
    %v6132 = vrot.slane %v6118, %v6131
    %v6133 = vcombine.low %v6077, %v6093
    %v6134 = vcombine.high %v6077, %v6093
    %v6136 = vunpack.c.l.s4 1934713408
    %v6137 = vunpack.c.0.s8 %v6136
    %v6138 = vlaneseq
    %v6139 = vshrl.u32 %v6138, 7
    %v6140 = vsub.s32 %v6137, %v6139
    %v6141 = vrot.slane %v6133, %v6140
    %v6143 = vunpack.c.l.s4 1934713408
    %v6144 = vunpack.c.0.s8 %v6143
    %v6145 = vlaneseq
    %v6146 = vshrl.u32 %v6145, 7
    %v6147 = vsub.s32 %v6144, %v6146
    %v6148 = vrot.slane %v6134, %v6147
    %v6149 = vcombine.low %v6084, %v6100
    %v6150 = vcombine.high %v6084, %v6100
    %v6152 = vunpack.c.l.s4 1934713408
    %v6153 = vunpack.c.0.s8 %v6152
    %v6154 = vlaneseq
    %v6155 = vshrl.u32 %v6154, 7
    %v6156 = vsub.s32 %v6153, %v6155
    %v6157 = vrot.slane %v6149, %v6156
    %v6159 = vunpack.c.l.s4 1934713408
    %v6160 = vunpack.c.0.s8 %v6159
    %v6161 = vlaneseq
    %v6162 = vshrl.u32 %v6161, 7
    %v6163 = vsub.s32 %v6160, %v6162
    %v6164 = vrot.slane %v6150, %v6163
    %v6165 = vcombine.low %v6109, %v6141
    %v6166 = vcombine.high %v6109, %v6141
    %v6167 = vcombine.low %v6116, %v6148
    %v6168 = vcombine.high %v6116, %v6148
    %v6169 = vcombine.low %v6125, %v6157
    %v6170 = vcombine.high %v6125, %v6157
    %v6171 = vcombine.low %v6132, %v6164
    %v6172 = vcombine.high %v6132, %v6164
    %6174 = vrot.lane.b32.xlu0 %v6030, 16
    %v6175 = vpop.permute.xlu0 %6174
    %6178 = vrot.lane.b32.xlu0 %v6031, 32
    %v6179 = vpop.permute.xlu0 %6178
    %6182 = vrot.lane.b32.xlu0 %v6032, 48
    %v6183 = vpop.permute.xlu0 %6182
    %6186 = vrot.lane.b32.xlu0 %v6033, 64
    %v6187 = vpop.permute.xlu0 %6186
    %6190 = vrot.lane.b32.xlu0 %v6034, 80
    %v6191 = vpop.permute.xlu0 %6190
    %6194 = vrot.lane.b32.xlu0 %v6035, 96
    %v6195 = vpop.permute.xlu0 %6194
    %6198 = vrot.lane.b32.xlu0 %v6036, 112
    %v6199 = vpop.permute.xlu0 %6198
    %6202 = vrot.lane.b32.xlu0 %v6166, 16
    %v6203 = vpop.permute.xlu0 %6202
    %6206 = vrot.lane.b32.xlu0 %v6167, 32
    %v6207 = vpop.permute.xlu0 %6206
    %6210 = vrot.lane.b32.xlu0 %v6168, 48
    %v6211 = vpop.permute.xlu0 %6210
    %6214 = vrot.lane.b32.xlu0 %v6169, 64
    %v6215 = vpop.permute.xlu0 %6214
    %6218 = vrot.lane.b32.xlu0 %v6170, 80
    %v6219 = vpop.permute.xlu0 %6218
    %6222 = vrot.lane.b32.xlu0 %v6171, 96
    %v6223 = vpop.permute.xlu0 %6222
    %6226 = vrot.lane.b32.xlu0 %v6172, 112
    %v6227 = vpop.permute.xlu0 %6226
    %v6229 = vsel %vm372, %v6029, %v6175
    %v6230 = vsel %vm374, %v6229, %v6179
    %v6231 = vsel %vm376, %v6230, %v6183
    %v6232 = vsel %vm378, %v6231, %v6187
    %v6233 = vsel %vm380, %v6232, %v6191
    %v6234 = vsel %vm382, %v6233, %v6195
    %v6235 = vsel %vm384, %v6234, %v6199
    %v6236 = vsel %vm372, %v6165, %v6203
    %v6237 = vsel %vm374, %v6236, %v6207
    %v6238 = vsel %vm376, %v6237, %v6211
    %v6239 = vsel %vm378, %v6238, %v6215
    %v6240 = vsel %vm380, %v6239, %v6219
    %v6241 = vsel %vm382, %v6240, %v6223
    %v6242 = vsel %vm384, %v6241, %v6227
    %6243 = vst [vmem:[#allocation5 + $0x10] sm:$0xff] %v6235
    %6244 = vst [vmem:[#allocation5 + $0x18] sm:$0xff] %v6242
    %v6245 = vld [vmem:[#allocation3] sm:$0xff]
    %v6246 = vld [vmem:[#allocation3 + $0x8] sm:$0xff]
    %v6247 = vld [vmem:[#allocation3 + $0x18] sm:$0xff]
    %v6248 = vld [vmem:[#allocation3 + $0x20] sm:$0xff]
    %v6249 = vld [vmem:[#allocation3 + $0x30] sm:$0xff]
    %v6250 = vld [vmem:[#allocation3 + $0x38] sm:$0xff]
    %v6251 = vld [vmem:[#allocation3 + $0x48] sm:$0xff]
    %v6252 = vld [vmem:[#allocation3 + $0x50] sm:$0xff]
    %v6253 = vld [vmem:[#allocation3 + $0x60] sm:$0xff]
    %v6254 = vld [vmem:[#allocation3 + $0x68] sm:$0xff]
    %v6255 = vld [vmem:[#allocation3 + $0x78] sm:$0xff]
    %v6256 = vld [vmem:[#allocation3 + $0x80] sm:$0xff]
    %v6257 = vld [vmem:[#allocation3 + $0x90] sm:$0xff]
    %v6258 = vld [vmem:[#allocation3 + $0x98] sm:$0xff]
    %v6259 = vld [vmem:[#allocation3 + $0xa8] sm:$0xff]
    %v6260 = vld [vmem:[#allocation3 + $0xb0] sm:$0xff]
    %6277 = vrot.lane.b32.xlu0 %v6245, 127
    %v6278 = vpop.permute.xlu0 %6277
    %6279 = vrot.lane.b32.xlu0 %v6246, 127
    %v6280 = vpop.permute.xlu0 %6279
    %6281 = vrot.lane.b32.xlu0 %v6247, 127
    %v6282 = vpop.permute.xlu0 %6281
    %6283 = vrot.lane.b32.xlu0 %v6248, 127
    %v6284 = vpop.permute.xlu0 %6283
    %6285 = vrot.lane.b32.xlu0 %v6249, 127
    %v6286 = vpop.permute.xlu0 %6285
    %6287 = vrot.lane.b32.xlu0 %v6250, 127
    %v6288 = vpop.permute.xlu0 %6287
    %6289 = vrot.lane.b32.xlu0 %v6251, 127
    %v6290 = vpop.permute.xlu0 %6289
    %6291 = vrot.lane.b32.xlu0 %v6252, 127
    %v6292 = vpop.permute.xlu0 %6291
    %6293 = vrot.lane.b32.xlu0 %v6253, 127
    %v6294 = vpop.permute.xlu0 %6293
    %6295 = vrot.lane.b32.xlu0 %v6254, 127
    %v6296 = vpop.permute.xlu0 %6295
    %6297 = vrot.lane.b32.xlu0 %v6255, 127
    %v6298 = vpop.permute.xlu0 %6297
    %6299 = vrot.lane.b32.xlu0 %v6256, 127
    %v6300 = vpop.permute.xlu0 %6299
    %6301 = vrot.lane.b32.xlu0 %v6257, 127
    %v6302 = vpop.permute.xlu0 %6301
    %6303 = vrot.lane.b32.xlu0 %v6258, 127
    %v6304 = vpop.permute.xlu0 %6303
    %6305 = vrot.lane.b32.xlu0 %v6259, 127
    %v6306 = vpop.permute.xlu0 %6305
    %6307 = vrot.lane.b32.xlu0 %v6260, 127
    %v6308 = vpop.permute.xlu0 %6307
    %v6325 = vcombine.low %v6278, %v6286
    %v6326 = vcombine.high %v6278, %v6286
    %v6328 = vunpack.c.l.s4 1983009808
    %v6329 = vunpack.c.0.s8 %v6328
    %v6330 = vlaneseq
    %v6331 = vshrl.u32 %v6330, 7
    %v6332 = vsub.s32 %v6329, %v6331
    %v6333 = vrot.slane %v6325, %v6332
    %v6335 = vunpack.c.l.s4 1983009808
    %v6336 = vunpack.c.0.s8 %v6335
    %v6337 = vlaneseq
    %v6338 = vshrl.u32 %v6337, 7
    %v6339 = vsub.s32 %v6336, %v6338
    %v6340 = vrot.slane %v6326, %v6339
    %v6341 = vcombine.low %v6282, %v6290
    %v6342 = vcombine.high %v6282, %v6290
    %v6344 = vunpack.c.l.s4 1983009808
    %v6345 = vunpack.c.0.s8 %v6344
    %v6346 = vlaneseq
    %v6347 = vshrl.u32 %v6346, 7
    %v6348 = vsub.s32 %v6345, %v6347
    %v6349 = vrot.slane %v6341, %v6348
    %v6351 = vunpack.c.l.s4 1983009808
    %v6352 = vunpack.c.0.s8 %v6351
    %v6353 = vlaneseq
    %v6354 = vshrl.u32 %v6353, 7
    %v6355 = vsub.s32 %v6352, %v6354
    %v6356 = vrot.slane %v6342, %v6355
    %v6357 = vcombine.low %v6294, %v6302
    %v6358 = vcombine.high %v6294, %v6302
    %v6360 = vunpack.c.l.s4 1983009808
    %v6361 = vunpack.c.0.s8 %v6360
    %v6362 = vlaneseq
    %v6363 = vshrl.u32 %v6362, 7
    %v6364 = vsub.s32 %v6361, %v6363
    %v6365 = vrot.slane %v6357, %v6364
    %v6367 = vunpack.c.l.s4 1983009808
    %v6368 = vunpack.c.0.s8 %v6367
    %v6369 = vlaneseq
    %v6370 = vshrl.u32 %v6369, 7
    %v6371 = vsub.s32 %v6368, %v6370
    %v6372 = vrot.slane %v6358, %v6371
    %v6373 = vcombine.low %v6298, %v6306
    %v6374 = vcombine.high %v6298, %v6306
    %v6376 = vunpack.c.l.s4 1983009808
    %v6377 = vunpack.c.0.s8 %v6376
    %v6378 = vlaneseq
    %v6379 = vshrl.u32 %v6378, 7
    %v6380 = vsub.s32 %v6377, %v6379
    %v6381 = vrot.slane %v6373, %v6380
    %v6383 = vunpack.c.l.s4 1983009808
    %v6384 = vunpack.c.0.s8 %v6383
    %v6385 = vlaneseq
    %v6386 = vshrl.u32 %v6385, 7
    %v6387 = vsub.s32 %v6384, %v6386
    %v6388 = vrot.slane %v6374, %v6387
    %v6389 = vcombine.low %v6333, %v6349
    %v6390 = vcombine.high %v6333, %v6349
    %v6392 = vunpack.c.l.s4 1934713408
    %v6393 = vunpack.c.0.s8 %v6392
    %v6394 = vlaneseq
    %v6395 = vshrl.u32 %v6394, 7
    %v6396 = vsub.s32 %v6393, %v6395
    %v6397 = vrot.slane %v6389, %v6396
    %v6399 = vunpack.c.l.s4 1934713408
    %v6400 = vunpack.c.0.s8 %v6399
    %v6401 = vlaneseq
    %v6402 = vshrl.u32 %v6401, 7
    %v6403 = vsub.s32 %v6400, %v6402
    %v6404 = vrot.slane %v6390, %v6403
    %v6405 = vcombine.low %v6340, %v6356
    %v6406 = vcombine.high %v6340, %v6356
    %v6408 = vunpack.c.l.s4 1934713408
    %v6409 = vunpack.c.0.s8 %v6408
    %v6410 = vlaneseq
    %v6411 = vshrl.u32 %v6410, 7
    %v6412 = vsub.s32 %v6409, %v6411
    %v6413 = vrot.slane %v6405, %v6412
    %v6415 = vunpack.c.l.s4 1934713408
    %v6416 = vunpack.c.0.s8 %v6415
    %v6417 = vlaneseq
    %v6418 = vshrl.u32 %v6417, 7
    %v6419 = vsub.s32 %v6416, %v6418
    %v6420 = vrot.slane %v6406, %v6419
    %v6421 = vcombine.low %v6365, %v6381
    %v6422 = vcombine.high %v6365, %v6381
    %v6424 = vunpack.c.l.s4 1934713408
    %v6425 = vunpack.c.0.s8 %v6424
    %v6426 = vlaneseq
    %v6427 = vshrl.u32 %v6426, 7
    %v6428 = vsub.s32 %v6425, %v6427
    %v6429 = vrot.slane %v6421, %v6428
    %v6431 = vunpack.c.l.s4 1934713408
    %v6432 = vunpack.c.0.s8 %v6431
    %v6433 = vlaneseq
    %v6434 = vshrl.u32 %v6433, 7
    %v6435 = vsub.s32 %v6432, %v6434
    %v6436 = vrot.slane %v6422, %v6435
    %v6437 = vcombine.low %v6372, %v6388
    %v6438 = vcombine.high %v6372, %v6388
    %v6440 = vunpack.c.l.s4 1934713408
    %v6441 = vunpack.c.0.s8 %v6440
    %v6442 = vlaneseq
    %v6443 = vshrl.u32 %v6442, 7
    %v6444 = vsub.s32 %v6441, %v6443
    %v6445 = vrot.slane %v6437, %v6444
    %v6447 = vunpack.c.l.s4 1934713408
    %v6448 = vunpack.c.0.s8 %v6447
    %v6449 = vlaneseq
    %v6450 = vshrl.u32 %v6449, 7
    %v6451 = vsub.s32 %v6448, %v6450
    %v6452 = vrot.slane %v6438, %v6451
    %v6453 = vcombine.low %v6397, %v6429
    %v6454 = vcombine.high %v6397, %v6429
    %v6455 = vcombine.low %v6404, %v6436
    %v6456 = vcombine.high %v6404, %v6436
    %v6457 = vcombine.low %v6413, %v6445
    %v6458 = vcombine.high %v6413, %v6445
    %v6459 = vcombine.low %v6420, %v6452
    %v6460 = vcombine.high %v6420, %v6452
    %v6461 = vcombine.low %v6280, %v6288
    %v6462 = vcombine.high %v6280, %v6288
    %v6464 = vunpack.c.l.s4 1983009808
    %v6465 = vunpack.c.0.s8 %v6464
    %v6466 = vlaneseq
    %v6467 = vshrl.u32 %v6466, 7
    %v6468 = vsub.s32 %v6465, %v6467
    %v6469 = vrot.slane %v6461, %v6468
    %v6471 = vunpack.c.l.s4 1983009808
    %v6472 = vunpack.c.0.s8 %v6471
    %v6473 = vlaneseq
    %v6474 = vshrl.u32 %v6473, 7
    %v6475 = vsub.s32 %v6472, %v6474
    %v6476 = vrot.slane %v6462, %v6475
    %v6477 = vcombine.low %v6284, %v6292
    %v6478 = vcombine.high %v6284, %v6292
    %v6480 = vunpack.c.l.s4 1983009808
    %v6481 = vunpack.c.0.s8 %v6480
    %v6482 = vlaneseq
    %v6483 = vshrl.u32 %v6482, 7
    %v6484 = vsub.s32 %v6481, %v6483
    %v6485 = vrot.slane %v6477, %v6484
    %v6487 = vunpack.c.l.s4 1983009808
    %v6488 = vunpack.c.0.s8 %v6487
    %v6489 = vlaneseq
    %v6490 = vshrl.u32 %v6489, 7
    %v6491 = vsub.s32 %v6488, %v6490
    %v6492 = vrot.slane %v6478, %v6491
    %v6493 = vcombine.low %v6296, %v6304
    %v6494 = vcombine.high %v6296, %v6304
    %v6496 = vunpack.c.l.s4 1983009808
    %v6497 = vunpack.c.0.s8 %v6496
    %v6498 = vlaneseq
    %v6499 = vshrl.u32 %v6498, 7
    %v6500 = vsub.s32 %v6497, %v6499
    %v6501 = vrot.slane %v6493, %v6500
    %v6503 = vunpack.c.l.s4 1983009808
    %v6504 = vunpack.c.0.s8 %v6503
    %v6505 = vlaneseq
    %v6506 = vshrl.u32 %v6505, 7
    %v6507 = vsub.s32 %v6504, %v6506
    %v6508 = vrot.slane %v6494, %v6507
    %v6509 = vcombine.low %v6300, %v6308
    %v6510 = vcombine.high %v6300, %v6308
    %v6512 = vunpack.c.l.s4 1983009808
    %v6513 = vunpack.c.0.s8 %v6512
    %v6514 = vlaneseq
    %v6515 = vshrl.u32 %v6514, 7
    %v6516 = vsub.s32 %v6513, %v6515
    %v6517 = vrot.slane %v6509, %v6516
    %v6519 = vunpack.c.l.s4 1983009808
    %v6520 = vunpack.c.0.s8 %v6519
    %v6521 = vlaneseq
    %v6522 = vshrl.u32 %v6521, 7
    %v6523 = vsub.s32 %v6520, %v6522
    %v6524 = vrot.slane %v6510, %v6523
    %v6525 = vcombine.low %v6469, %v6485
    %v6526 = vcombine.high %v6469, %v6485
    %v6528 = vunpack.c.l.s4 1934713408
    %v6529 = vunpack.c.0.s8 %v6528
    %v6530 = vlaneseq
    %v6531 = vshrl.u32 %v6530, 7
    %v6532 = vsub.s32 %v6529, %v6531
    %v6533 = vrot.slane %v6525, %v6532
    %v6535 = vunpack.c.l.s4 1934713408
    %v6536 = vunpack.c.0.s8 %v6535
    %v6537 = vlaneseq
    %v6538 = vshrl.u32 %v6537, 7
    %v6539 = vsub.s32 %v6536, %v6538
    %v6540 = vrot.slane %v6526, %v6539
    %v6541 = vcombine.low %v6476, %v6492
    %v6542 = vcombine.high %v6476, %v6492
    %v6544 = vunpack.c.l.s4 1934713408
    %v6545 = vunpack.c.0.s8 %v6544
    %v6546 = vlaneseq
    %v6547 = vshrl.u32 %v6546, 7
    %v6548 = vsub.s32 %v6545, %v6547
    %v6549 = vrot.slane %v6541, %v6548
    %v6551 = vunpack.c.l.s4 1934713408
    %v6552 = vunpack.c.0.s8 %v6551
    %v6553 = vlaneseq
    %v6554 = vshrl.u32 %v6553, 7
    %v6555 = vsub.s32 %v6552, %v6554
    %v6556 = vrot.slane %v6542, %v6555
    %v6557 = vcombine.low %v6501, %v6517
    %v6558 = vcombine.high %v6501, %v6517
    %v6560 = vunpack.c.l.s4 1934713408
    %v6561 = vunpack.c.0.s8 %v6560
    %v6562 = vlaneseq
    %v6563 = vshrl.u32 %v6562, 7
    %v6564 = vsub.s32 %v6561, %v6563
    %v6565 = vrot.slane %v6557, %v6564
    %v6567 = vunpack.c.l.s4 1934713408
    %v6568 = vunpack.c.0.s8 %v6567
    %v6569 = vlaneseq
    %v6570 = vshrl.u32 %v6569, 7
    %v6571 = vsub.s32 %v6568, %v6570
    %v6572 = vrot.slane %v6558, %v6571
    %v6573 = vcombine.low %v6508, %v6524
    %v6574 = vcombine.high %v6508, %v6524
    %v6576 = vunpack.c.l.s4 1934713408
    %v6577 = vunpack.c.0.s8 %v6576
    %v6578 = vlaneseq
    %v6579 = vshrl.u32 %v6578, 7
    %v6580 = vsub.s32 %v6577, %v6579
    %v6581 = vrot.slane %v6573, %v6580
    %v6583 = vunpack.c.l.s4 1934713408
    %v6584 = vunpack.c.0.s8 %v6583
    %v6585 = vlaneseq
    %v6586 = vshrl.u32 %v6585, 7
    %v6587 = vsub.s32 %v6584, %v6586
    %v6588 = vrot.slane %v6574, %v6587
    %v6589 = vcombine.low %v6533, %v6565
    %v6590 = vcombine.high %v6533, %v6565
    %v6591 = vcombine.low %v6540, %v6572
    %v6592 = vcombine.high %v6540, %v6572
    %v6593 = vcombine.low %v6549, %v6581
    %v6594 = vcombine.high %v6549, %v6581
    %v6595 = vcombine.low %v6556, %v6588
    %v6596 = vcombine.high %v6556, %v6588
    %6598 = vrot.lane.b32.xlu0 %v6454, 16
    %v6599 = vpop.permute.xlu0 %6598
    %6602 = vrot.lane.b32.xlu0 %v6455, 32
    %v6603 = vpop.permute.xlu0 %6602
    %6606 = vrot.lane.b32.xlu0 %v6456, 48
    %v6607 = vpop.permute.xlu0 %6606
    %6610 = vrot.lane.b32.xlu0 %v6457, 64
    %v6611 = vpop.permute.xlu0 %6610
    %6614 = vrot.lane.b32.xlu0 %v6458, 80
    %v6615 = vpop.permute.xlu0 %6614
    %6618 = vrot.lane.b32.xlu0 %v6459, 96
    %v6619 = vpop.permute.xlu0 %6618
    %6622 = vrot.lane.b32.xlu0 %v6460, 112
    %v6623 = vpop.permute.xlu0 %6622
    %6626 = vrot.lane.b32.xlu0 %v6590, 16
    %v6627 = vpop.permute.xlu0 %6626
    %6630 = vrot.lane.b32.xlu0 %v6591, 32
    %v6631 = vpop.permute.xlu0 %6630
    %6634 = vrot.lane.b32.xlu0 %v6592, 48
    %v6635 = vpop.permute.xlu0 %6634
    %6638 = vrot.lane.b32.xlu0 %v6593, 64
    %v6639 = vpop.permute.xlu0 %6638
    %6642 = vrot.lane.b32.xlu0 %v6594, 80
    %v6643 = vpop.permute.xlu0 %6642
    %6646 = vrot.lane.b32.xlu0 %v6595, 96
    %v6647 = vpop.permute.xlu0 %6646
    %6650 = vrot.lane.b32.xlu0 %v6596, 112
    %v6651 = vpop.permute.xlu0 %6650
    %v6653 = vsel %vm372, %v6453, %v6599
    %v6654 = vsel %vm374, %v6653, %v6603
    %v6655 = vsel %vm376, %v6654, %v6607
    %v6656 = vsel %vm378, %v6655, %v6611
    %v6657 = vsel %vm380, %v6656, %v6615
    %v6658 = vsel %vm382, %v6657, %v6619
    %v6659 = vsel %vm384, %v6658, %v6623
    %v6660 = vsel %vm372, %v6589, %v6627
    %v6661 = vsel %vm374, %v6660, %v6631
    %v6662 = vsel %vm376, %v6661, %v6635
    %v6663 = vsel %vm378, %v6662, %v6639
    %v6664 = vsel %vm380, %v6663, %v6643
    %v6665 = vsel %vm382, %v6664, %v6647
    %v6666 = vsel %vm384, %v6665, %v6651
    %6667 = vst [vmem:[#allocation5 + $0x20] sm:$0xff] %v6659
    %6668 = vst [vmem:[#allocation5 + $0x28] sm:$0xff] %v6666
    %v6669 = vld [vmem:[%s5508] sm:$0xff]
    %v6670 = vld [vmem:[%s5508 + $0x8] sm:$0xff]
    %v6671 = vld [vmem:[%s5508 + $0x18] sm:$0xff]
    %v6672 = vld [vmem:[%s5508 + $0x20] sm:$0xff]
    %v6673 = vld [vmem:[%s5508 + $0x30] sm:$0xff]
    %v6674 = vld [vmem:[%s5508 + $0x38] sm:$0xff]
    %v6675 = vld [vmem:[%s5508 + $0x48] sm:$0xff]
    %v6676 = vld [vmem:[%s5508 + $0x50] sm:$0xff]
    %v6677 = vld [vmem:[%s5508 + $0x60] sm:$0xff]
    %v6678 = vld [vmem:[%s5508 + $0x68] sm:$0xff]
    %v6679 = vld [vmem:[%s5508 + $0x78] sm:$0xff]
    %v6680 = vld [vmem:[%s5508 + $0x80] sm:$0xff]
    %v6681 = vld [vmem:[%s5508 + $0x90] sm:$0xff]
    %v6682 = vld [vmem:[%s5508 + $0x98] sm:$0xff]
    %v6683 = vld [vmem:[%s5508 + $0xa8] sm:$0xff]
    %v6684 = vld [vmem:[%s5508 + $0xb0] sm:$0xff]
    %6701 = vrot.lane.b32.xlu0 %v6669, 127
    %v6702 = vpop.permute.xlu0 %6701
    %6703 = vrot.lane.b32.xlu0 %v6670, 127
    %v6704 = vpop.permute.xlu0 %6703
    %6705 = vrot.lane.b32.xlu0 %v6671, 127
    %v6706 = vpop.permute.xlu0 %6705
    %6707 = vrot.lane.b32.xlu0 %v6672, 127
    %v6708 = vpop.permute.xlu0 %6707
    %6709 = vrot.lane.b32.xlu0 %v6673, 127
    %v6710 = vpop.permute.xlu0 %6709
    %6711 = vrot.lane.b32.xlu0 %v6674, 127
    %v6712 = vpop.permute.xlu0 %6711
    %6713 = vrot.lane.b32.xlu0 %v6675, 127
    %v6714 = vpop.permute.xlu0 %6713
    %6715 = vrot.lane.b32.xlu0 %v6676, 127
    %v6716 = vpop.permute.xlu0 %6715
    %6717 = vrot.lane.b32.xlu0 %v6677, 127
    %v6718 = vpop.permute.xlu0 %6717
    %6719 = vrot.lane.b32.xlu0 %v6678, 127
    %v6720 = vpop.permute.xlu0 %6719
    %6721 = vrot.lane.b32.xlu0 %v6679, 127
    %v6722 = vpop.permute.xlu0 %6721
    %6723 = vrot.lane.b32.xlu0 %v6680, 127
    %v6724 = vpop.permute.xlu0 %6723
    %6725 = vrot.lane.b32.xlu0 %v6681, 127
    %v6726 = vpop.permute.xlu0 %6725
    %6727 = vrot.lane.b32.xlu0 %v6682, 127
    %v6728 = vpop.permute.xlu0 %6727
    %6729 = vrot.lane.b32.xlu0 %v6683, 127
    %v6730 = vpop.permute.xlu0 %6729
    %6731 = vrot.lane.b32.xlu0 %v6684, 127
    %v6732 = vpop.permute.xlu0 %6731
    %v6749 = vcombine.low %v6702, %v6710
    %v6750 = vcombine.high %v6702, %v6710
    %v6752 = vunpack.c.l.s4 1983009808
    %v6753 = vunpack.c.0.s8 %v6752
    %v6754 = vlaneseq
    %v6755 = vshrl.u32 %v6754, 7
    %v6756 = vsub.s32 %v6753, %v6755
    %v6757 = vrot.slane %v6749, %v6756
    %v6759 = vunpack.c.l.s4 1983009808
    %v6760 = vunpack.c.0.s8 %v6759
    %v6761 = vlaneseq
    %v6762 = vshrl.u32 %v6761, 7
    %v6763 = vsub.s32 %v6760, %v6762
    %v6764 = vrot.slane %v6750, %v6763
    %v6765 = vcombine.low %v6706, %v6714
    %v6766 = vcombine.high %v6706, %v6714
    %v6768 = vunpack.c.l.s4 1983009808
    %v6769 = vunpack.c.0.s8 %v6768
    %v6770 = vlaneseq
    %v6771 = vshrl.u32 %v6770, 7
    %v6772 = vsub.s32 %v6769, %v6771
    %v6773 = vrot.slane %v6765, %v6772
    %v6775 = vunpack.c.l.s4 1983009808
    %v6776 = vunpack.c.0.s8 %v6775
    %v6777 = vlaneseq
    %v6778 = vshrl.u32 %v6777, 7
    %v6779 = vsub.s32 %v6776, %v6778
    %v6780 = vrot.slane %v6766, %v6779
    %v6781 = vcombine.low %v6718, %v6726
    %v6782 = vcombine.high %v6718, %v6726
    %v6784 = vunpack.c.l.s4 1983009808
    %v6785 = vunpack.c.0.s8 %v6784
    %v6786 = vlaneseq
    %v6787 = vshrl.u32 %v6786, 7
    %v6788 = vsub.s32 %v6785, %v6787
    %v6789 = vrot.slane %v6781, %v6788
    %v6791 = vunpack.c.l.s4 1983009808
    %v6792 = vunpack.c.0.s8 %v6791
    %v6793 = vlaneseq
    %v6794 = vshrl.u32 %v6793, 7
    %v6795 = vsub.s32 %v6792, %v6794
    %v6796 = vrot.slane %v6782, %v6795
    %v6797 = vcombine.low %v6722, %v6730
    %v6798 = vcombine.high %v6722, %v6730
    %v6800 = vunpack.c.l.s4 1983009808
    %v6801 = vunpack.c.0.s8 %v6800
    %v6802 = vlaneseq
    %v6803 = vshrl.u32 %v6802, 7
    %v6804 = vsub.s32 %v6801, %v6803
    %v6805 = vrot.slane %v6797, %v6804
    %v6807 = vunpack.c.l.s4 1983009808
    %v6808 = vunpack.c.0.s8 %v6807
    %v6809 = vlaneseq
    %v6810 = vshrl.u32 %v6809, 7
    %v6811 = vsub.s32 %v6808, %v6810
    %v6812 = vrot.slane %v6798, %v6811
    %v6813 = vcombine.low %v6757, %v6773
    %v6814 = vcombine.high %v6757, %v6773
    %v6816 = vunpack.c.l.s4 1934713408
    %v6817 = vunpack.c.0.s8 %v6816
    %v6818 = vlaneseq
    %v6819 = vshrl.u32 %v6818, 7
    %v6820 = vsub.s32 %v6817, %v6819
    %v6821 = vrot.slane %v6813, %v6820
    %v6823 = vunpack.c.l.s4 1934713408
    %v6824 = vunpack.c.0.s8 %v6823
    %v6825 = vlaneseq
    %v6826 = vshrl.u32 %v6825, 7
    %v6827 = vsub.s32 %v6824, %v6826
    %v6828 = vrot.slane %v6814, %v6827
    %v6829 = vcombine.low %v6764, %v6780
    %v6830 = vcombine.high %v6764, %v6780
    %v6832 = vunpack.c.l.s4 1934713408
    %v6833 = vunpack.c.0.s8 %v6832
    %v6834 = vlaneseq
    %v6835 = vshrl.u32 %v6834, 7
    %v6836 = vsub.s32 %v6833, %v6835
    %v6837 = vrot.slane %v6829, %v6836
    %v6839 = vunpack.c.l.s4 1934713408
    %v6840 = vunpack.c.0.s8 %v6839
    %v6841 = vlaneseq
    %v6842 = vshrl.u32 %v6841, 7
    %v6843 = vsub.s32 %v6840, %v6842
    %v6844 = vrot.slane %v6830, %v6843
    %v6845 = vcombine.low %v6789, %v6805
    %v6846 = vcombine.high %v6789, %v6805
    %v6848 = vunpack.c.l.s4 1934713408
    %v6849 = vunpack.c.0.s8 %v6848
    %v6850 = vlaneseq
    %v6851 = vshrl.u32 %v6850, 7
    %v6852 = vsub.s32 %v6849, %v6851
    %v6853 = vrot.slane %v6845, %v6852
    %v6855 = vunpack.c.l.s4 1934713408
    %v6856 = vunpack.c.0.s8 %v6855
    %v6857 = vlaneseq
    %v6858 = vshrl.u32 %v6857, 7
    %v6859 = vsub.s32 %v6856, %v6858
    %v6860 = vrot.slane %v6846, %v6859
    %v6861 = vcombine.low %v6796, %v6812
    %v6862 = vcombine.high %v6796, %v6812
    %v6864 = vunpack.c.l.s4 1934713408
    %v6865 = vunpack.c.0.s8 %v6864
    %v6866 = vlaneseq
    %v6867 = vshrl.u32 %v6866, 7
    %v6868 = vsub.s32 %v6865, %v6867
    %v6869 = vrot.slane %v6861, %v6868
    %v6871 = vunpack.c.l.s4 1934713408
    %v6872 = vunpack.c.0.s8 %v6871
    %v6873 = vlaneseq
    %v6874 = vshrl.u32 %v6873, 7
    %v6875 = vsub.s32 %v6872, %v6874
    %v6876 = vrot.slane %v6862, %v6875
    %v6877 = vcombine.low %v6821, %v6853
    %v6878 = vcombine.high %v6821, %v6853
    %v6879 = vcombine.low %v6828, %v6860
    %v6880 = vcombine.high %v6828, %v6860
    %v6881 = vcombine.low %v6837, %v6869
    %v6882 = vcombine.high %v6837, %v6869
    %v6883 = vcombine.low %v6844, %v6876
    %v6884 = vcombine.high %v6844, %v6876
    %v6885 = vcombine.low %v6704, %v6712
    %v6886 = vcombine.high %v6704, %v6712
    %v6888 = vunpack.c.l.s4 1983009808
    %v6889 = vunpack.c.0.s8 %v6888
    %v6890 = vlaneseq
    %v6891 = vshrl.u32 %v6890, 7
    %v6892 = vsub.s32 %v6889, %v6891
    %v6893 = vrot.slane %v6885, %v6892
    %v6895 = vunpack.c.l.s4 1983009808
    %v6896 = vunpack.c.0.s8 %v6895
    %v6897 = vlaneseq
    %v6898 = vshrl.u32 %v6897, 7
    %v6899 = vsub.s32 %v6896, %v6898
    %v6900 = vrot.slane %v6886, %v6899
    %v6901 = vcombine.low %v6708, %v6716
    %v6902 = vcombine.high %v6708, %v6716
    %v6904 = vunpack.c.l.s4 1983009808
    %v6905 = vunpack.c.0.s8 %v6904
    %v6906 = vlaneseq
    %v6907 = vshrl.u32 %v6906, 7
    %v6908 = vsub.s32 %v6905, %v6907
    %v6909 = vrot.slane %v6901, %v6908
    %v6911 = vunpack.c.l.s4 1983009808
    %v6912 = vunpack.c.0.s8 %v6911
    %v6913 = vlaneseq
    %v6914 = vshrl.u32 %v6913, 7
    %v6915 = vsub.s32 %v6912, %v6914
    %v6916 = vrot.slane %v6902, %v6915
    %v6917 = vcombine.low %v6720, %v6728
    %v6918 = vcombine.high %v6720, %v6728
    %v6920 = vunpack.c.l.s4 1983009808
    %v6921 = vunpack.c.0.s8 %v6920
    %v6922 = vlaneseq
    %v6923 = vshrl.u32 %v6922, 7
    %v6924 = vsub.s32 %v6921, %v6923
    %v6925 = vrot.slane %v6917, %v6924
    %v6927 = vunpack.c.l.s4 1983009808
    %v6928 = vunpack.c.0.s8 %v6927
    %v6929 = vlaneseq
    %v6930 = vshrl.u32 %v6929, 7
    %v6931 = vsub.s32 %v6928, %v6930
    %v6932 = vrot.slane %v6918, %v6931
    %v6933 = vcombine.low %v6724, %v6732
    %v6934 = vcombine.high %v6724, %v6732
    %v6936 = vunpack.c.l.s4 1983009808
    %v6937 = vunpack.c.0.s8 %v6936
    %v6938 = vlaneseq
    %v6939 = vshrl.u32 %v6938, 7
    %v6940 = vsub.s32 %v6937, %v6939
    %v6941 = vrot.slane %v6933, %v6940
    %v6943 = vunpack.c.l.s4 1983009808
    %v6944 = vunpack.c.0.s8 %v6943
    %v6945 = vlaneseq
    %v6946 = vshrl.u32 %v6945, 7
    %v6947 = vsub.s32 %v6944, %v6946
    %v6948 = vrot.slane %v6934, %v6947
    %v6949 = vcombine.low %v6893, %v6909
    %v6950 = vcombine.high %v6893, %v6909
    %v6952 = vunpack.c.l.s4 1934713408
    %v6953 = vunpack.c.0.s8 %v6952
    %v6954 = vlaneseq
    %v6955 = vshrl.u32 %v6954, 7
    %v6956 = vsub.s32 %v6953, %v6955
    %v6957 = vrot.slane %v6949, %v6956
    %v6959 = vunpack.c.l.s4 1934713408
    %v6960 = vunpack.c.0.s8 %v6959
    %v6961 = vlaneseq
    %v6962 = vshrl.u32 %v6961, 7
    %v6963 = vsub.s32 %v6960, %v6962
    %v6964 = vrot.slane %v6950, %v6963
    %v6965 = vcombine.low %v6900, %v6916
    %v6966 = vcombine.high %v6900, %v6916
    %v6968 = vunpack.c.l.s4 1934713408
    %v6969 = vunpack.c.0.s8 %v6968
    %v6970 = vlaneseq
    %v6971 = vshrl.u32 %v6970, 7
    %v6972 = vsub.s32 %v6969, %v6971
    %v6973 = vrot.slane %v6965, %v6972
    %v6975 = vunpack.c.l.s4 1934713408
    %v6976 = vunpack.c.0.s8 %v6975
    %v6977 = vlaneseq
    %v6978 = vshrl.u32 %v6977, 7
    %v6979 = vsub.s32 %v6976, %v6978
    %v6980 = vrot.slane %v6966, %v6979
    %v6981 = vcombine.low %v6925, %v6941
    %v6982 = vcombine.high %v6925, %v6941
    %v6984 = vunpack.c.l.s4 1934713408
    %v6985 = vunpack.c.0.s8 %v6984
    %v6986 = vlaneseq
    %v6987 = vshrl.u32 %v6986, 7
    %v6988 = vsub.s32 %v6985, %v6987
    %v6989 = vrot.slane %v6981, %v6988
    %v6991 = vunpack.c.l.s4 1934713408
    %v6992 = vunpack.c.0.s8 %v6991
    %v6993 = vlaneseq
    %v6994 = vshrl.u32 %v6993, 7
    %v6995 = vsub.s32 %v6992, %v6994
    %v6996 = vrot.slane %v6982, %v6995
    %v6997 = vcombine.low %v6932, %v6948
    %v6998 = vcombine.high %v6932, %v6948
    %v7000 = vunpack.c.l.s4 1934713408
    %v7001 = vunpack.c.0.s8 %v7000
    %v7002 = vlaneseq
    %v7003 = vshrl.u32 %v7002, 7
    %v7004 = vsub.s32 %v7001, %v7003
    %v7005 = vrot.slane %v6997, %v7004
    %v7007 = vunpack.c.l.s4 1934713408
    %v7008 = vunpack.c.0.s8 %v7007
    %v7009 = vlaneseq
    %v7010 = vshrl.u32 %v7009, 7
    %v7011 = vsub.s32 %v7008, %v7010
    %v7012 = vrot.slane %v6998, %v7011
    %v7013 = vcombine.low %v6957, %v6989
    %v7014 = vcombine.high %v6957, %v6989
    %v7015 = vcombine.low %v6964, %v6996
    %v7016 = vcombine.high %v6964, %v6996
    %v7017 = vcombine.low %v6973, %v7005
    %v7018 = vcombine.high %v6973, %v7005
    %v7019 = vcombine.low %v6980, %v7012
    %v7020 = vcombine.high %v6980, %v7012
    %7022 = vrot.lane.b32.xlu0 %v6878, 16
    %v7023 = vpop.permute.xlu0 %7022
    %7026 = vrot.lane.b32.xlu0 %v6879, 32
    %v7027 = vpop.permute.xlu0 %7026
    %7030 = vrot.lane.b32.xlu0 %v6880, 48
    %v7031 = vpop.permute.xlu0 %7030
    %7034 = vrot.lane.b32.xlu0 %v6881, 64
    %v7035 = vpop.permute.xlu0 %7034
    %7038 = vrot.lane.b32.xlu0 %v6882, 80
    %v7039 = vpop.permute.xlu0 %7038
    %7042 = vrot.lane.b32.xlu0 %v6883, 96
    %v7043 = vpop.permute.xlu0 %7042
    %7046 = vrot.lane.b32.xlu0 %v6884, 112
    %v7047 = vpop.permute.xlu0 %7046
    %7050 = vrot.lane.b32.xlu0 %v7014, 16
    %v7051 = vpop.permute.xlu0 %7050
    %7054 = vrot.lane.b32.xlu0 %v7015, 32
    %v7055 = vpop.permute.xlu0 %7054
    %7058 = vrot.lane.b32.xlu0 %v7016, 48
    %v7059 = vpop.permute.xlu0 %7058
    %7062 = vrot.lane.b32.xlu0 %v7017, 64
    %v7063 = vpop.permute.xlu0 %7062
    %7066 = vrot.lane.b32.xlu0 %v7018, 80
    %v7067 = vpop.permute.xlu0 %7066
    %7070 = vrot.lane.b32.xlu0 %v7019, 96
    %v7071 = vpop.permute.xlu0 %7070
    %7074 = vrot.lane.b32.xlu0 %v7020, 112
    %v7075 = vpop.permute.xlu0 %7074
    %v7077 = vsel %vm372, %v6877, %v7023
    %v7078 = vsel %vm374, %v7077, %v7027
    %v7079 = vsel %vm376, %v7078, %v7031
    %v7080 = vsel %vm378, %v7079, %v7035
    %v7081 = vsel %vm380, %v7080, %v7039
    %v7082 = vsel %vm382, %v7081, %v7043
    %v7083 = vsel %vm384, %v7082, %v7047
    %v7084 = vsel %vm372, %v7013, %v7051
    %v7085 = vsel %vm374, %v7084, %v7055
    %v7086 = vsel %vm376, %v7085, %v7059
    %v7087 = vsel %vm378, %v7086, %v7063
    %v7088 = vsel %vm380, %v7087, %v7067
    %v7089 = vsel %vm382, %v7088, %v7071
    %v7090 = vsel %vm384, %v7089, %v7075
    %7091 = vst [vmem:[#allocation5 + $0x30] sm:$0xff] %v7083
    %7092 = vst [vmem:[#allocation5 + $0x38] sm:$0xff] %v7090
    %v7093 = vld [vmem:[#allocation3] sm:$0xff]
    %v7094 = vld [vmem:[#allocation3 + $0x8] sm:$0xff]
    %v7095 = vld [vmem:[#allocation3 + $0x18] sm:$0xff]
    %v7096 = vld [vmem:[#allocation3 + $0x20] sm:$0xff]
    %v7097 = vld [vmem:[#allocation3 + $0x30] sm:$0xff]
    %v7098 = vld [vmem:[#allocation3 + $0x38] sm:$0xff]
    %v7099 = vld [vmem:[#allocation3 + $0x48] sm:$0xff]
    %v7100 = vld [vmem:[#allocation3 + $0x50] sm:$0xff]
    %v7101 = vld [vmem:[#allocation3 + $0x60] sm:$0xff]
    %v7102 = vld [vmem:[#allocation3 + $0x68] sm:$0xff]
    %v7103 = vld [vmem:[#allocation3 + $0x78] sm:$0xff]
    %v7104 = vld [vmem:[#allocation3 + $0x80] sm:$0xff]
    %v7105 = vld [vmem:[#allocation3 + $0x90] sm:$0xff]
    %v7106 = vld [vmem:[#allocation3 + $0x98] sm:$0xff]
    %v7107 = vld [vmem:[#allocation3 + $0xa8] sm:$0xff]
    %v7108 = vld [vmem:[#allocation3 + $0xb0] sm:$0xff]
    %7125 = vrot.lane.b32.xlu0 %v7093, 126
    %v7126 = vpop.permute.xlu0 %7125
    %7127 = vrot.lane.b32.xlu0 %v7094, 126
    %v7128 = vpop.permute.xlu0 %7127
    %7129 = vrot.lane.b32.xlu0 %v7095, 126
    %v7130 = vpop.permute.xlu0 %7129
    %7131 = vrot.lane.b32.xlu0 %v7096, 126
    %v7132 = vpop.permute.xlu0 %7131
    %7133 = vrot.lane.b32.xlu0 %v7097, 126
    %v7134 = vpop.permute.xlu0 %7133
    %7135 = vrot.lane.b32.xlu0 %v7098, 126
    %v7136 = vpop.permute.xlu0 %7135
    %7137 = vrot.lane.b32.xlu0 %v7099, 126
    %v7138 = vpop.permute.xlu0 %7137
    %7139 = vrot.lane.b32.xlu0 %v7100, 126
    %v7140 = vpop.permute.xlu0 %7139
    %7141 = vrot.lane.b32.xlu0 %v7101, 126
    %v7142 = vpop.permute.xlu0 %7141
    %7143 = vrot.lane.b32.xlu0 %v7102, 126
    %v7144 = vpop.permute.xlu0 %7143
    %7145 = vrot.lane.b32.xlu0 %v7103, 126
    %v7146 = vpop.permute.xlu0 %7145
    %7147 = vrot.lane.b32.xlu0 %v7104, 126
    %v7148 = vpop.permute.xlu0 %7147
    %7149 = vrot.lane.b32.xlu0 %v7105, 126
    %v7150 = vpop.permute.xlu0 %7149
    %7151 = vrot.lane.b32.xlu0 %v7106, 126
    %v7152 = vpop.permute.xlu0 %7151
    %7153 = vrot.lane.b32.xlu0 %v7107, 126
    %v7154 = vpop.permute.xlu0 %7153
    %7155 = vrot.lane.b32.xlu0 %v7108, 126
    %v7156 = vpop.permute.xlu0 %7155
    %v7173 = vcombine.low %v7126, %v7134
    %v7174 = vcombine.high %v7126, %v7134
    %v7176 = vunpack.c.l.s4 1983009808
    %v7177 = vunpack.c.0.s8 %v7176
    %v7178 = vlaneseq
    %v7179 = vshrl.u32 %v7178, 7
    %v7180 = vsub.s32 %v7177, %v7179
    %v7181 = vrot.slane %v7173, %v7180
    %v7183 = vunpack.c.l.s4 1983009808
    %v7184 = vunpack.c.0.s8 %v7183
    %v7185 = vlaneseq
    %v7186 = vshrl.u32 %v7185, 7
    %v7187 = vsub.s32 %v7184, %v7186
    %v7188 = vrot.slane %v7174, %v7187
    %v7189 = vcombine.low %v7130, %v7138
    %v7190 = vcombine.high %v7130, %v7138
    %v7192 = vunpack.c.l.s4 1983009808
    %v7193 = vunpack.c.0.s8 %v7192
    %v7194 = vlaneseq
    %v7195 = vshrl.u32 %v7194, 7
    %v7196 = vsub.s32 %v7193, %v7195
    %v7197 = vrot.slane %v7189, %v7196
    %v7199 = vunpack.c.l.s4 1983009808
    %v7200 = vunpack.c.0.s8 %v7199
    %v7201 = vlaneseq
    %v7202 = vshrl.u32 %v7201, 7
    %v7203 = vsub.s32 %v7200, %v7202
    %v7204 = vrot.slane %v7190, %v7203
    %v7205 = vcombine.low %v7142, %v7150
    %v7206 = vcombine.high %v7142, %v7150
    %v7208 = vunpack.c.l.s4 1983009808
    %v7209 = vunpack.c.0.s8 %v7208
    %v7210 = vlaneseq
    %v7211 = vshrl.u32 %v7210, 7
    %v7212 = vsub.s32 %v7209, %v7211
    %v7213 = vrot.slane %v7205, %v7212
    %v7215 = vunpack.c.l.s4 1983009808
    %v7216 = vunpack.c.0.s8 %v7215
    %v7217 = vlaneseq
    %v7218 = vshrl.u32 %v7217, 7
    %v7219 = vsub.s32 %v7216, %v7218
    %v7220 = vrot.slane %v7206, %v7219
    %v7221 = vcombine.low %v7146, %v7154
    %v7222 = vcombine.high %v7146, %v7154
    %v7224 = vunpack.c.l.s4 1983009808
    %v7225 = vunpack.c.0.s8 %v7224
    %v7226 = vlaneseq
    %v7227 = vshrl.u32 %v7226, 7
    %v7228 = vsub.s32 %v7225, %v7227
    %v7229 = vrot.slane %v7221, %v7228
    %v7231 = vunpack.c.l.s4 1983009808
    %v7232 = vunpack.c.0.s8 %v7231
    %v7233 = vlaneseq
    %v7234 = vshrl.u32 %v7233, 7
    %v7235 = vsub.s32 %v7232, %v7234
    %v7236 = vrot.slane %v7222, %v7235
    %v7237 = vcombine.low %v7181, %v7197
    %v7238 = vcombine.high %v7181, %v7197
    %v7240 = vunpack.c.l.s4 1934713408
    %v7241 = vunpack.c.0.s8 %v7240
    %v7242 = vlaneseq
    %v7243 = vshrl.u32 %v7242, 7
    %v7244 = vsub.s32 %v7241, %v7243
    %v7245 = vrot.slane %v7237, %v7244
    %v7247 = vunpack.c.l.s4 1934713408
    %v7248 = vunpack.c.0.s8 %v7247
    %v7249 = vlaneseq
    %v7250 = vshrl.u32 %v7249, 7
    %v7251 = vsub.s32 %v7248, %v7250
    %v7252 = vrot.slane %v7238, %v7251
    %v7253 = vcombine.low %v7188, %v7204
    %v7254 = vcombine.high %v7188, %v7204
    %v7256 = vunpack.c.l.s4 1934713408
    %v7257 = vunpack.c.0.s8 %v7256
    %v7258 = vlaneseq
    %v7259 = vshrl.u32 %v7258, 7
    %v7260 = vsub.s32 %v7257, %v7259
    %v7261 = vrot.slane %v7253, %v7260
    %v7263 = vunpack.c.l.s4 1934713408
    %v7264 = vunpack.c.0.s8 %v7263
    %v7265 = vlaneseq
    %v7266 = vshrl.u32 %v7265, 7
    %v7267 = vsub.s32 %v7264, %v7266
    %v7268 = vrot.slane %v7254, %v7267
    %v7269 = vcombine.low %v7213, %v7229
    %v7270 = vcombine.high %v7213, %v7229
    %v7272 = vunpack.c.l.s4 1934713408
    %v7273 = vunpack.c.0.s8 %v7272
    %v7274 = vlaneseq
    %v7275 = vshrl.u32 %v7274, 7
    %v7276 = vsub.s32 %v7273, %v7275
    %v7277 = vrot.slane %v7269, %v7276
    %v7279 = vunpack.c.l.s4 1934713408
    %v7280 = vunpack.c.0.s8 %v7279
    %v7281 = vlaneseq
    %v7282 = vshrl.u32 %v7281, 7
    %v7283 = vsub.s32 %v7280, %v7282
    %v7284 = vrot.slane %v7270, %v7283
    %v7285 = vcombine.low %v7220, %v7236
    %v7286 = vcombine.high %v7220, %v7236
    %v7288 = vunpack.c.l.s4 1934713408
    %v7289 = vunpack.c.0.s8 %v7288
    %v7290 = vlaneseq
    %v7291 = vshrl.u32 %v7290, 7
    %v7292 = vsub.s32 %v7289, %v7291
    %v7293 = vrot.slane %v7285, %v7292
    %v7295 = vunpack.c.l.s4 1934713408
    %v7296 = vunpack.c.0.s8 %v7295
    %v7297 = vlaneseq
    %v7298 = vshrl.u32 %v7297, 7
    %v7299 = vsub.s32 %v7296, %v7298
    %v7300 = vrot.slane %v7286, %v7299
    %v7301 = vcombine.low %v7245, %v7277
    %v7302 = vcombine.high %v7245, %v7277
    %v7303 = vcombine.low %v7252, %v7284
    %v7304 = vcombine.high %v7252, %v7284
    %v7305 = vcombine.low %v7261, %v7293
    %v7306 = vcombine.high %v7261, %v7293
    %v7307 = vcombine.low %v7268, %v7300
    %v7308 = vcombine.high %v7268, %v7300
    %v7309 = vcombine.low %v7128, %v7136
    %v7310 = vcombine.high %v7128, %v7136
    %v7312 = vunpack.c.l.s4 1983009808
    %v7313 = vunpack.c.0.s8 %v7312
    %v7314 = vlaneseq
    %v7315 = vshrl.u32 %v7314, 7
    %v7316 = vsub.s32 %v7313, %v7315
    %v7317 = vrot.slane %v7309, %v7316
    %v7319 = vunpack.c.l.s4 1983009808
    %v7320 = vunpack.c.0.s8 %v7319
    %v7321 = vlaneseq
    %v7322 = vshrl.u32 %v7321, 7
    %v7323 = vsub.s32 %v7320, %v7322
    %v7324 = vrot.slane %v7310, %v7323
    %v7325 = vcombine.low %v7132, %v7140
    %v7326 = vcombine.high %v7132, %v7140
    %v7328 = vunpack.c.l.s4 1983009808
    %v7329 = vunpack.c.0.s8 %v7328
    %v7330 = vlaneseq
    %v7331 = vshrl.u32 %v7330, 7
    %v7332 = vsub.s32 %v7329, %v7331
    %v7333 = vrot.slane %v7325, %v7332
    %v7335 = vunpack.c.l.s4 1983009808
    %v7336 = vunpack.c.0.s8 %v7335
    %v7337 = vlaneseq
    %v7338 = vshrl.u32 %v7337, 7
    %v7339 = vsub.s32 %v7336, %v7338
    %v7340 = vrot.slane %v7326, %v7339
    %v7341 = vcombine.low %v7144, %v7152
    %v7342 = vcombine.high %v7144, %v7152
    %v7344 = vunpack.c.l.s4 1983009808
    %v7345 = vunpack.c.0.s8 %v7344
    %v7346 = vlaneseq
    %v7347 = vshrl.u32 %v7346, 7
    %v7348 = vsub.s32 %v7345, %v7347
    %v7349 = vrot.slane %v7341, %v7348
    %v7351 = vunpack.c.l.s4 1983009808
    %v7352 = vunpack.c.0.s8 %v7351
    %v7353 = vlaneseq
    %v7354 = vshrl.u32 %v7353, 7
    %v7355 = vsub.s32 %v7352, %v7354
    %v7356 = vrot.slane %v7342, %v7355
    %v7357 = vcombine.low %v7148, %v7156
    %v7358 = vcombine.high %v7148, %v7156
    %v7360 = vunpack.c.l.s4 1983009808
    %v7361 = vunpack.c.0.s8 %v7360
    %v7362 = vlaneseq
    %v7363 = vshrl.u32 %v7362, 7
    %v7364 = vsub.s32 %v7361, %v7363
    %v7365 = vrot.slane %v7357, %v7364
    %v7367 = vunpack.c.l.s4 1983009808
    %v7368 = vunpack.c.0.s8 %v7367
    %v7369 = vlaneseq
    %v7370 = vshrl.u32 %v7369, 7
    %v7371 = vsub.s32 %v7368, %v7370
    %v7372 = vrot.slane %v7358, %v7371
    %v7373 = vcombine.low %v7317, %v7333
    %v7374 = vcombine.high %v7317, %v7333
    %v7376 = vunpack.c.l.s4 1934713408
    %v7377 = vunpack.c.0.s8 %v7376
    %v7378 = vlaneseq
    %v7379 = vshrl.u32 %v7378, 7
    %v7380 = vsub.s32 %v7377, %v7379
    %v7381 = vrot.slane %v7373, %v7380
    %v7383 = vunpack.c.l.s4 1934713408
    %v7384 = vunpack.c.0.s8 %v7383
    %v7385 = vlaneseq
    %v7386 = vshrl.u32 %v7385, 7
    %v7387 = vsub.s32 %v7384, %v7386
    %v7388 = vrot.slane %v7374, %v7387
    %v7389 = vcombine.low %v7324, %v7340
    %v7390 = vcombine.high %v7324, %v7340
    %v7392 = vunpack.c.l.s4 1934713408
    %v7393 = vunpack.c.0.s8 %v7392
    %v7394 = vlaneseq
    %v7395 = vshrl.u32 %v7394, 7
    %v7396 = vsub.s32 %v7393, %v7395
    %v7397 = vrot.slane %v7389, %v7396
    %v7399 = vunpack.c.l.s4 1934713408
    %v7400 = vunpack.c.0.s8 %v7399
    %v7401 = vlaneseq
    %v7402 = vshrl.u32 %v7401, 7
    %v7403 = vsub.s32 %v7400, %v7402
    %v7404 = vrot.slane %v7390, %v7403
    %v7405 = vcombine.low %v7349, %v7365
    %v7406 = vcombine.high %v7349, %v7365
    %v7408 = vunpack.c.l.s4 1934713408
    %v7409 = vunpack.c.0.s8 %v7408
    %v7410 = vlaneseq
    %v7411 = vshrl.u32 %v7410, 7
    %v7412 = vsub.s32 %v7409, %v7411
    %v7413 = vrot.slane %v7405, %v7412
    %v7415 = vunpack.c.l.s4 1934713408
    %v7416 = vunpack.c.0.s8 %v7415
    %v7417 = vlaneseq
    %v7418 = vshrl.u32 %v7417, 7
    %v7419 = vsub.s32 %v7416, %v7418
    %v7420 = vrot.slane %v7406, %v7419
    %v7421 = vcombine.low %v7356, %v7372
    %v7422 = vcombine.high %v7356, %v7372
    %v7424 = vunpack.c.l.s4 1934713408
    %v7425 = vunpack.c.0.s8 %v7424
    %v7426 = vlaneseq
    %v7427 = vshrl.u32 %v7426, 7
    %v7428 = vsub.s32 %v7425, %v7427
    %v7429 = vrot.slane %v7421, %v7428
    %v7431 = vunpack.c.l.s4 1934713408
    %v7432 = vunpack.c.0.s8 %v7431
    %v7433 = vlaneseq
    %v7434 = vshrl.u32 %v7433, 7
    %v7435 = vsub.s32 %v7432, %v7434
    %v7436 = vrot.slane %v7422, %v7435
    %v7437 = vcombine.low %v7381, %v7413
    %v7438 = vcombine.high %v7381, %v7413
    %v7439 = vcombine.low %v7388, %v7420
    %v7440 = vcombine.high %v7388, %v7420
    %v7441 = vcombine.low %v7397, %v7429
    %v7442 = vcombine.high %v7397, %v7429
    %v7443 = vcombine.low %v7404, %v7436
    %v7444 = vcombine.high %v7404, %v7436
    %7446 = vrot.lane.b32.xlu0 %v7302, 16
    %v7447 = vpop.permute.xlu0 %7446
    %7450 = vrot.lane.b32.xlu0 %v7303, 32
    %v7451 = vpop.permute.xlu0 %7450
    %7454 = vrot.lane.b32.xlu0 %v7304, 48
    %v7455 = vpop.permute.xlu0 %7454
    %7458 = vrot.lane.b32.xlu0 %v7305, 64
    %v7459 = vpop.permute.xlu0 %7458
    %7462 = vrot.lane.b32.xlu0 %v7306, 80
    %v7463 = vpop.permute.xlu0 %7462
    %7466 = vrot.lane.b32.xlu0 %v7307, 96
    %v7467 = vpop.permute.xlu0 %7466
    %7470 = vrot.lane.b32.xlu0 %v7308, 112
    %v7471 = vpop.permute.xlu0 %7470
    %7474 = vrot.lane.b32.xlu0 %v7438, 16
    %v7475 = vpop.permute.xlu0 %7474
    %7478 = vrot.lane.b32.xlu0 %v7439, 32
    %v7479 = vpop.permute.xlu0 %7478
    %7482 = vrot.lane.b32.xlu0 %v7440, 48
    %v7483 = vpop.permute.xlu0 %7482
    %7486 = vrot.lane.b32.xlu0 %v7441, 64
    %v7487 = vpop.permute.xlu0 %7486
    %7490 = vrot.lane.b32.xlu0 %v7442, 80
    %v7491 = vpop.permute.xlu0 %7490
    %7494 = vrot.lane.b32.xlu0 %v7443, 96
    %v7495 = vpop.permute.xlu0 %7494
    %7498 = vrot.lane.b32.xlu0 %v7444, 112
    %v7499 = vpop.permute.xlu0 %7498
    %v7501 = vsel %vm372, %v7301, %v7447
    %v7502 = vsel %vm374, %v7501, %v7451
    %v7503 = vsel %vm376, %v7502, %v7455
    %v7504 = vsel %vm378, %v7503, %v7459
    %v7505 = vsel %vm380, %v7504, %v7463
    %v7506 = vsel %vm382, %v7505, %v7467
    %v7507 = vsel %vm384, %v7506, %v7471
    %v7508 = vsel %vm372, %v7437, %v7475
    %v7509 = vsel %vm374, %v7508, %v7479
    %v7510 = vsel %vm376, %v7509, %v7483
    %v7511 = vsel %vm378, %v7510, %v7487
    %v7512 = vsel %vm380, %v7511, %v7491
    %v7513 = vsel %vm382, %v7512, %v7495
    %v7514 = vsel %vm384, %v7513, %v7499
    %7515 = vst [vmem:[#allocation5 + $0x40] sm:$0xff] %v7507
    %7516 = vst [vmem:[#allocation5 + $0x48] sm:$0xff] %v7514
    %v7517 = vld [vmem:[%s5508] sm:$0xff]
    %v7518 = vld [vmem:[%s5508 + $0x8] sm:$0xff]
    %v7519 = vld [vmem:[%s5508 + $0x18] sm:$0xff]
    %v7520 = vld [vmem:[%s5508 + $0x20] sm:$0xff]
    %v7521 = vld [vmem:[%s5508 + $0x30] sm:$0xff]
    %v7522 = vld [vmem:[%s5508 + $0x38] sm:$0xff]
    %v7523 = vld [vmem:[%s5508 + $0x48] sm:$0xff]
    %v7524 = vld [vmem:[%s5508 + $0x50] sm:$0xff]
    %v7525 = vld [vmem:[%s5508 + $0x60] sm:$0xff]
    %v7526 = vld [vmem:[%s5508 + $0x68] sm:$0xff]
    %v7527 = vld [vmem:[%s5508 + $0x78] sm:$0xff]
    %v7528 = vld [vmem:[%s5508 + $0x80] sm:$0xff]
    %v7529 = vld [vmem:[%s5508 + $0x90] sm:$0xff]
    %v7530 = vld [vmem:[%s5508 + $0x98] sm:$0xff]
    %v7531 = vld [vmem:[%s5508 + $0xa8] sm:$0xff]
    %v7532 = vld [vmem:[%s5508 + $0xb0] sm:$0xff]
    %7549 = vrot.lane.b32.xlu0 %v7517, 126
    %v7550 = vpop.permute.xlu0 %7549
    %7551 = vrot.lane.b32.xlu0 %v7518, 126
    %v7552 = vpop.permute.xlu0 %7551
    %7553 = vrot.lane.b32.xlu0 %v7519, 126
    %v7554 = vpop.permute.xlu0 %7553
    %7555 = vrot.lane.b32.xlu0 %v7520, 126
    %v7556 = vpop.permute.xlu0 %7555
    %7557 = vrot.lane.b32.xlu0 %v7521, 126
    %v7558 = vpop.permute.xlu0 %7557
    %7559 = vrot.lane.b32.xlu0 %v7522, 126
    %v7560 = vpop.permute.xlu0 %7559
    %7561 = vrot.lane.b32.xlu0 %v7523, 126
    %v7562 = vpop.permute.xlu0 %7561
    %7563 = vrot.lane.b32.xlu0 %v7524, 126
    %v7564 = vpop.permute.xlu0 %7563
    %7565 = vrot.lane.b32.xlu0 %v7525, 126
    %v7566 = vpop.permute.xlu0 %7565
    %7567 = vrot.lane.b32.xlu0 %v7526, 126
    %v7568 = vpop.permute.xlu0 %7567
    %7569 = vrot.lane.b32.xlu0 %v7527, 126
    %v7570 = vpop.permute.xlu0 %7569
    %7571 = vrot.lane.b32.xlu0 %v7528, 126
    %v7572 = vpop.permute.xlu0 %7571
    %7573 = vrot.lane.b32.xlu0 %v7529, 126
    %v7574 = vpop.permute.xlu0 %7573
    %7575 = vrot.lane.b32.xlu0 %v7530, 126
    %v7576 = vpop.permute.xlu0 %7575
    %7577 = vrot.lane.b32.xlu0 %v7531, 126
    %v7578 = vpop.permute.xlu0 %7577
    %7579 = vrot.lane.b32.xlu0 %v7532, 126
    %v7580 = vpop.permute.xlu0 %7579
    %v7597 = vcombine.low %v7550, %v7558
    %v7598 = vcombine.high %v7550, %v7558
    %v7600 = vunpack.c.l.s4 1983009808
    %v7601 = vunpack.c.0.s8 %v7600
    %v7602 = vlaneseq
    %v7603 = vshrl.u32 %v7602, 7
    %v7604 = vsub.s32 %v7601, %v7603
    %v7605 = vrot.slane %v7597, %v7604
    %v7607 = vunpack.c.l.s4 1983009808
    %v7608 = vunpack.c.0.s8 %v7607
    %v7609 = vlaneseq
    %v7610 = vshrl.u32 %v7609, 7
    %v7611 = vsub.s32 %v7608, %v7610
    %v7612 = vrot.slane %v7598, %v7611
    %v7613 = vcombine.low %v7554, %v7562
    %v7614 = vcombine.high %v7554, %v7562
    %v7616 = vunpack.c.l.s4 1983009808
    %v7617 = vunpack.c.0.s8 %v7616
    %v7618 = vlaneseq
    %v7619 = vshrl.u32 %v7618, 7
    %v7620 = vsub.s32 %v7617, %v7619
    %v7621 = vrot.slane %v7613, %v7620
    %v7623 = vunpack.c.l.s4 1983009808
    %v7624 = vunpack.c.0.s8 %v7623
    %v7625 = vlaneseq
    %v7626 = vshrl.u32 %v7625, 7
    %v7627 = vsub.s32 %v7624, %v7626
    %v7628 = vrot.slane %v7614, %v7627
    %v7629 = vcombine.low %v7566, %v7574
    %v7630 = vcombine.high %v7566, %v7574
    %v7632 = vunpack.c.l.s4 1983009808
    %v7633 = vunpack.c.0.s8 %v7632
    %v7634 = vlaneseq
    %v7635 = vshrl.u32 %v7634, 7
    %v7636 = vsub.s32 %v7633, %v7635
    %v7637 = vrot.slane %v7629, %v7636
    %v7639 = vunpack.c.l.s4 1983009808
    %v7640 = vunpack.c.0.s8 %v7639
    %v7641 = vlaneseq
    %v7642 = vshrl.u32 %v7641, 7
    %v7643 = vsub.s32 %v7640, %v7642
    %v7644 = vrot.slane %v7630, %v7643
    %v7645 = vcombine.low %v7570, %v7578
    %v7646 = vcombine.high %v7570, %v7578
    %v7648 = vunpack.c.l.s4 1983009808
    %v7649 = vunpack.c.0.s8 %v7648
    %v7650 = vlaneseq
    %v7651 = vshrl.u32 %v7650, 7
    %v7652 = vsub.s32 %v7649, %v7651
    %v7653 = vrot.slane %v7645, %v7652
    %v7655 = vunpack.c.l.s4 1983009808
    %v7656 = vunpack.c.0.s8 %v7655
    %v7657 = vlaneseq
    %v7658 = vshrl.u32 %v7657, 7
    %v7659 = vsub.s32 %v7656, %v7658
    %v7660 = vrot.slane %v7646, %v7659
    %v7661 = vcombine.low %v7605, %v7621
    %v7662 = vcombine.high %v7605, %v7621
    %v7664 = vunpack.c.l.s4 1934713408
    %v7665 = vunpack.c.0.s8 %v7664
    %v7666 = vlaneseq
    %v7667 = vshrl.u32 %v7666, 7
    %v7668 = vsub.s32 %v7665, %v7667
    %v7669 = vrot.slane %v7661, %v7668
    %v7671 = vunpack.c.l.s4 1934713408
    %v7672 = vunpack.c.0.s8 %v7671
    %v7673 = vlaneseq
    %v7674 = vshrl.u32 %v7673, 7
    %v7675 = vsub.s32 %v7672, %v7674
    %v7676 = vrot.slane %v7662, %v7675
    %v7677 = vcombine.low %v7612, %v7628
    %v7678 = vcombine.high %v7612, %v7628
    %v7680 = vunpack.c.l.s4 1934713408
    %v7681 = vunpack.c.0.s8 %v7680
    %v7682 = vlaneseq
    %v7683 = vshrl.u32 %v7682, 7
    %v7684 = vsub.s32 %v7681, %v7683
    %v7685 = vrot.slane %v7677, %v7684
    %v7687 = vunpack.c.l.s4 1934713408
    %v7688 = vunpack.c.0.s8 %v7687
    %v7689 = vlaneseq
    %v7690 = vshrl.u32 %v7689, 7
    %v7691 = vsub.s32 %v7688, %v7690
    %v7692 = vrot.slane %v7678, %v7691
    %v7693 = vcombine.low %v7637, %v7653
    %v7694 = vcombine.high %v7637, %v7653
    %v7696 = vunpack.c.l.s4 1934713408
    %v7697 = vunpack.c.0.s8 %v7696
    %v7698 = vlaneseq
    %v7699 = vshrl.u32 %v7698, 7
    %v7700 = vsub.s32 %v7697, %v7699
    %v7701 = vrot.slane %v7693, %v7700
    %v7703 = vunpack.c.l.s4 1934713408
    %v7704 = vunpack.c.0.s8 %v7703
    %v7705 = vlaneseq
    %v7706 = vshrl.u32 %v7705, 7
    %v7707 = vsub.s32 %v7704, %v7706
    %v7708 = vrot.slane %v7694, %v7707
    %v7709 = vcombine.low %v7644, %v7660
    %v7710 = vcombine.high %v7644, %v7660
    %v7712 = vunpack.c.l.s4 1934713408
    %v7713 = vunpack.c.0.s8 %v7712
    %v7714 = vlaneseq
    %v7715 = vshrl.u32 %v7714, 7
    %v7716 = vsub.s32 %v7713, %v7715
    %v7717 = vrot.slane %v7709, %v7716
    %v7719 = vunpack.c.l.s4 1934713408
    %v7720 = vunpack.c.0.s8 %v7719
    %v7721 = vlaneseq
    %v7722 = vshrl.u32 %v7721, 7
    %v7723 = vsub.s32 %v7720, %v7722
    %v7724 = vrot.slane %v7710, %v7723
    %v7725 = vcombine.low %v7669, %v7701
    %v7726 = vcombine.high %v7669, %v7701
    %v7727 = vcombine.low %v7676, %v7708
    %v7728 = vcombine.high %v7676, %v7708
    %v7729 = vcombine.low %v7685, %v7717
    %v7730 = vcombine.high %v7685, %v7717
    %v7731 = vcombine.low %v7692, %v7724
    %v7732 = vcombine.high %v7692, %v7724
    %v7733 = vcombine.low %v7552, %v7560
    %v7734 = vcombine.high %v7552, %v7560
    %v7736 = vunpack.c.l.s4 1983009808
    %v7737 = vunpack.c.0.s8 %v7736
    %v7738 = vlaneseq
    %v7739 = vshrl.u32 %v7738, 7
    %v7740 = vsub.s32 %v7737, %v7739
    %v7741 = vrot.slane %v7733, %v7740
    %v7743 = vunpack.c.l.s4 1983009808
    %v7744 = vunpack.c.0.s8 %v7743
    %v7745 = vlaneseq
    %v7746 = vshrl.u32 %v7745, 7
    %v7747 = vsub.s32 %v7744, %v7746
    %v7748 = vrot.slane %v7734, %v7747
    %v7749 = vcombine.low %v7556, %v7564
    %v7750 = vcombine.high %v7556, %v7564
    %v7752 = vunpack.c.l.s4 1983009808
    %v7753 = vunpack.c.0.s8 %v7752
    %v7754 = vlaneseq
    %v7755 = vshrl.u32 %v7754, 7
    %v7756 = vsub.s32 %v7753, %v7755
    %v7757 = vrot.slane %v7749, %v7756
    %v7759 = vunpack.c.l.s4 1983009808
    %v7760 = vunpack.c.0.s8 %v7759
    %v7761 = vlaneseq
    %v7762 = vshrl.u32 %v7761, 7
    %v7763 = vsub.s32 %v7760, %v7762
    %v7764 = vrot.slane %v7750, %v7763
    %v7765 = vcombine.low %v7568, %v7576
    %v7766 = vcombine.high %v7568, %v7576
    %v7768 = vunpack.c.l.s4 1983009808
    %v7769 = vunpack.c.0.s8 %v7768
    %v7770 = vlaneseq
    %v7771 = vshrl.u32 %v7770, 7
    %v7772 = vsub.s32 %v7769, %v7771
    %v7773 = vrot.slane %v7765, %v7772
    %v7775 = vunpack.c.l.s4 1983009808
    %v7776 = vunpack.c.0.s8 %v7775
    %v7777 = vlaneseq
    %v7778 = vshrl.u32 %v7777, 7
    %v7779 = vsub.s32 %v7776, %v7778
    %v7780 = vrot.slane %v7766, %v7779
    %v7781 = vcombine.low %v7572, %v7580
    %v7782 = vcombine.high %v7572, %v7580
    %v7784 = vunpack.c.l.s4 1983009808
    %v7785 = vunpack.c.0.s8 %v7784
    %v7786 = vlaneseq
    %v7787 = vshrl.u32 %v7786, 7
    %v7788 = vsub.s32 %v7785, %v7787
    %v7789 = vrot.slane %v7781, %v7788
    %v7791 = vunpack.c.l.s4 1983009808
    %v7792 = vunpack.c.0.s8 %v7791
    %v7793 = vlaneseq
    %v7794 = vshrl.u32 %v7793, 7
    %v7795 = vsub.s32 %v7792, %v7794
    %v7796 = vrot.slane %v7782, %v7795
    %v7797 = vcombine.low %v7741, %v7757
    %v7798 = vcombine.high %v7741, %v7757
    %v7800 = vunpack.c.l.s4 1934713408
    %v7801 = vunpack.c.0.s8 %v7800
    %v7802 = vlaneseq
    %v7803 = vshrl.u32 %v7802, 7
    %v7804 = vsub.s32 %v7801, %v7803
    %v7805 = vrot.slane %v7797, %v7804
    %v7807 = vunpack.c.l.s4 1934713408
    %v7808 = vunpack.c.0.s8 %v7807
    %v7809 = vlaneseq
    %v7810 = vshrl.u32 %v7809, 7
    %v7811 = vsub.s32 %v7808, %v7810
    %v7812 = vrot.slane %v7798, %v7811
    %v7813 = vcombine.low %v7748, %v7764
    %v7814 = vcombine.high %v7748, %v7764
    %v7816 = vunpack.c.l.s4 1934713408
    %v7817 = vunpack.c.0.s8 %v7816
    %v7818 = vlaneseq
    %v7819 = vshrl.u32 %v7818, 7
    %v7820 = vsub.s32 %v7817, %v7819
    %v7821 = vrot.slane %v7813, %v7820
    %v7823 = vunpack.c.l.s4 1934713408
    %v7824 = vunpack.c.0.s8 %v7823
    %v7825 = vlaneseq
    %v7826 = vshrl.u32 %v7825, 7
    %v7827 = vsub.s32 %v7824, %v7826
    %v7828 = vrot.slane %v7814, %v7827
    %v7829 = vcombine.low %v7773, %v7789
    %v7830 = vcombine.high %v7773, %v7789
    %v7832 = vunpack.c.l.s4 1934713408
    %v7833 = vunpack.c.0.s8 %v7832
    %v7834 = vlaneseq
    %v7835 = vshrl.u32 %v7834, 7
    %v7836 = vsub.s32 %v7833, %v7835
    %v7837 = vrot.slane %v7829, %v7836
    %v7839 = vunpack.c.l.s4 1934713408
    %v7840 = vunpack.c.0.s8 %v7839
    %v7841 = vlaneseq
    %v7842 = vshrl.u32 %v7841, 7
    %v7843 = vsub.s32 %v7840, %v7842
    %v7844 = vrot.slane %v7830, %v7843
    %v7845 = vcombine.low %v7780, %v7796
    %v7846 = vcombine.high %v7780, %v7796
    %v7848 = vunpack.c.l.s4 1934713408
    %v7849 = vunpack.c.0.s8 %v7848
    %v7850 = vlaneseq
    %v7851 = vshrl.u32 %v7850, 7
    %v7852 = vsub.s32 %v7849, %v7851
    %v7853 = vrot.slane %v7845, %v7852
    %v7855 = vunpack.c.l.s4 1934713408
    %v7856 = vunpack.c.0.s8 %v7855
    %v7857 = vlaneseq
    %v7858 = vshrl.u32 %v7857, 7
    %v7859 = vsub.s32 %v7856, %v7858
    %v7860 = vrot.slane %v7846, %v7859
    %v7861 = vcombine.low %v7805, %v7837
    %v7862 = vcombine.high %v7805, %v7837
    %v7863 = vcombine.low %v7812, %v7844
    %v7864 = vcombine.high %v7812, %v7844
    %v7865 = vcombine.low %v7821, %v7853
    %v7866 = vcombine.high %v7821, %v7853
    %v7867 = vcombine.low %v7828, %v7860
    %v7868 = vcombine.high %v7828, %v7860
    %7870 = vrot.lane.b32.xlu0 %v7726, 16
    %v7871 = vpop.permute.xlu0 %7870
    %7874 = vrot.lane.b32.xlu0 %v7727, 32
    %v7875 = vpop.permute.xlu0 %7874
    %7878 = vrot.lane.b32.xlu0 %v7728, 48
    %v7879 = vpop.permute.xlu0 %7878
    %7882 = vrot.lane.b32.xlu0 %v7729, 64
    %v7883 = vpop.permute.xlu0 %7882
    %7886 = vrot.lane.b32.xlu0 %v7730, 80
    %v7887 = vpop.permute.xlu0 %7886
    %7890 = vrot.lane.b32.xlu0 %v7731, 96
    %v7891 = vpop.permute.xlu0 %7890
    %7894 = vrot.lane.b32.xlu0 %v7732, 112
    %v7895 = vpop.permute.xlu0 %7894
    %7898 = vrot.lane.b32.xlu0 %v7862, 16
    %v7899 = vpop.permute.xlu0 %7898
    %7902 = vrot.lane.b32.xlu0 %v7863, 32
    %v7903 = vpop.permute.xlu0 %7902
    %7906 = vrot.lane.b32.xlu0 %v7864, 48
    %v7907 = vpop.permute.xlu0 %7906
    %7910 = vrot.lane.b32.xlu0 %v7865, 64
    %v7911 = vpop.permute.xlu0 %7910
    %7914 = vrot.lane.b32.xlu0 %v7866, 80
    %v7915 = vpop.permute.xlu0 %7914
    %7918 = vrot.lane.b32.xlu0 %v7867, 96
    %v7919 = vpop.permute.xlu0 %7918
    %7922 = vrot.lane.b32.xlu0 %v7868, 112
    %v7923 = vpop.permute.xlu0 %7922
    %v7925 = vsel %vm372, %v7725, %v7871
    %v7926 = vsel %vm374, %v7925, %v7875
    %v7927 = vsel %vm376, %v7926, %v7879
    %v7928 = vsel %vm378, %v7927, %v7883
    %v7929 = vsel %vm380, %v7928, %v7887
    %v7930 = vsel %vm382, %v7929, %v7891
    %v7931 = vsel %vm384, %v7930, %v7895
    %v7932 = vsel %vm372, %v7861, %v7899
    %v7933 = vsel %vm374, %v7932, %v7903
    %v7934 = vsel %vm376, %v7933, %v7907
    %v7935 = vsel %vm378, %v7934, %v7911
    %v7936 = vsel %vm380, %v7935, %v7915
    %v7937 = vsel %vm382, %v7936, %v7919
    %v7938 = vsel %vm384, %v7937, %v7923
    %7939 = vst [vmem:[#allocation5 + $0x50] sm:$0xff] %v7931
    %7940 = vst [vmem:[#allocation5 + $0x58] sm:$0xff] %v7938
    %v7941 = vld [vmem:[#allocation3 + $0x1] sm:$0xff]
    %v7942 = vld [vmem:[#allocation3 + $0x9] sm:$0xff]
    %v7943 = vld [vmem:[#allocation3 + $0x19] sm:$0xff]
    %v7944 = vld [vmem:[#allocation3 + $0x21] sm:$0xff]
    %v7945 = vld [vmem:[#allocation3 + $0x31] sm:$0xff]
    %v7946 = vld [vmem:[#allocation3 + $0x39] sm:$0xff]
    %v7947 = vld [vmem:[#allocation3 + $0x49] sm:$0xff]
    %v7948 = vld [vmem:[#allocation3 + $0x51] sm:$0xff]
    %v7949 = vld [vmem:[#allocation3 + $0x61] sm:$0xff]
    %v7950 = vld [vmem:[#allocation3 + $0x69] sm:$0xff]
    %v7951 = vld [vmem:[#allocation3 + $0x79] sm:$0xff]
    %v7952 = vld [vmem:[#allocation3 + $0x81] sm:$0xff]
    %v7953 = vld [vmem:[#allocation3 + $0x91] sm:$0xff]
    %v7954 = vld [vmem:[#allocation3 + $0x99] sm:$0xff]
    %v7955 = vld [vmem:[#allocation3 + $0xa9] sm:$0xff]
    %v7956 = vld [vmem:[#allocation3 + $0xb1] sm:$0xff]
    %v7957 = vcombine.low %v7941, %v7945
    %v7958 = vcombine.high %v7941, %v7945
    %v7960 = vunpack.c.l.s4 1983009808
    %v7961 = vunpack.c.0.s8 %v7960
    %v7962 = vlaneseq
    %v7963 = vshrl.u32 %v7962, 7
    %v7964 = vsub.s32 %v7961, %v7963
    %v7965 = vrot.slane %v7957, %v7964
    %v7967 = vunpack.c.l.s4 1983009808
    %v7968 = vunpack.c.0.s8 %v7967
    %v7969 = vlaneseq
    %v7970 = vshrl.u32 %v7969, 7
    %v7971 = vsub.s32 %v7968, %v7970
    %v7972 = vrot.slane %v7958, %v7971
    %v7973 = vcombine.low %v7943, %v7947
    %v7974 = vcombine.high %v7943, %v7947
    %v7976 = vunpack.c.l.s4 1983009808
    %v7977 = vunpack.c.0.s8 %v7976
    %v7978 = vlaneseq
    %v7979 = vshrl.u32 %v7978, 7
    %v7980 = vsub.s32 %v7977, %v7979
    %v7981 = vrot.slane %v7973, %v7980
    %v7983 = vunpack.c.l.s4 1983009808
    %v7984 = vunpack.c.0.s8 %v7983
    %v7985 = vlaneseq
    %v7986 = vshrl.u32 %v7985, 7
    %v7987 = vsub.s32 %v7984, %v7986
    %v7988 = vrot.slane %v7974, %v7987
    %v7989 = vcombine.low %v7949, %v7953
    %v7990 = vcombine.high %v7949, %v7953
    %v7992 = vunpack.c.l.s4 1983009808
    %v7993 = vunpack.c.0.s8 %v7992
    %v7994 = vlaneseq
    %v7995 = vshrl.u32 %v7994, 7
    %v7996 = vsub.s32 %v7993, %v7995
    %v7997 = vrot.slane %v7989, %v7996
    %v7999 = vunpack.c.l.s4 1983009808
    %v8000 = vunpack.c.0.s8 %v7999
    %v8001 = vlaneseq
    %v8002 = vshrl.u32 %v8001, 7
    %v8003 = vsub.s32 %v8000, %v8002
    %v8004 = vrot.slane %v7990, %v8003
    %v8005 = vcombine.low %v7951, %v7955
    %v8006 = vcombine.high %v7951, %v7955
    %v8008 = vunpack.c.l.s4 1983009808
    %v8009 = vunpack.c.0.s8 %v8008
    %v8010 = vlaneseq
    %v8011 = vshrl.u32 %v8010, 7
    %v8012 = vsub.s32 %v8009, %v8011
    %v8013 = vrot.slane %v8005, %v8012
    %v8015 = vunpack.c.l.s4 1983009808
    %v8016 = vunpack.c.0.s8 %v8015
    %v8017 = vlaneseq
    %v8018 = vshrl.u32 %v8017, 7
    %v8019 = vsub.s32 %v8016, %v8018
    %v8020 = vrot.slane %v8006, %v8019
    %v8021 = vcombine.low %v7965, %v7981
    %v8022 = vcombine.high %v7965, %v7981
    %v8024 = vunpack.c.l.s4 1934713408
    %v8025 = vunpack.c.0.s8 %v8024
    %v8026 = vlaneseq
    %v8027 = vshrl.u32 %v8026, 7
    %v8028 = vsub.s32 %v8025, %v8027
    %v8029 = vrot.slane %v8021, %v8028
    %v8031 = vunpack.c.l.s4 1934713408
    %v8032 = vunpack.c.0.s8 %v8031
    %v8033 = vlaneseq
    %v8034 = vshrl.u32 %v8033, 7
    %v8035 = vsub.s32 %v8032, %v8034
    %v8036 = vrot.slane %v8022, %v8035
    %v8037 = vcombine.low %v7972, %v7988
    %v8038 = vcombine.high %v7972, %v7988
    %v8040 = vunpack.c.l.s4 1934713408
    %v8041 = vunpack.c.0.s8 %v8040
    %v8042 = vlaneseq
    %v8043 = vshrl.u32 %v8042, 7
    %v8044 = vsub.s32 %v8041, %v8043
    %v8045 = vrot.slane %v8037, %v8044
    %v8047 = vunpack.c.l.s4 1934713408
    %v8048 = vunpack.c.0.s8 %v8047
    %v8049 = vlaneseq
    %v8050 = vshrl.u32 %v8049, 7
    %v8051 = vsub.s32 %v8048, %v8050
    %v8052 = vrot.slane %v8038, %v8051
    %v8053 = vcombine.low %v7997, %v8013
    %v8054 = vcombine.high %v7997, %v8013
    %v8056 = vunpack.c.l.s4 1934713408
    %v8057 = vunpack.c.0.s8 %v8056
    %v8058 = vlaneseq
    %v8059 = vshrl.u32 %v8058, 7
    %v8060 = vsub.s32 %v8057, %v8059
    %v8061 = vrot.slane %v8053, %v8060
    %v8063 = vunpack.c.l.s4 1934713408
    %v8064 = vunpack.c.0.s8 %v8063
    %v8065 = vlaneseq
    %v8066 = vshrl.u32 %v8065, 7
    %v8067 = vsub.s32 %v8064, %v8066
    %v8068 = vrot.slane %v8054, %v8067
    %v8069 = vcombine.low %v8004, %v8020
    %v8070 = vcombine.high %v8004, %v8020
    %v8072 = vunpack.c.l.s4 1934713408
    %v8073 = vunpack.c.0.s8 %v8072
    %v8074 = vlaneseq
    %v8075 = vshrl.u32 %v8074, 7
    %v8076 = vsub.s32 %v8073, %v8075
    %v8077 = vrot.slane %v8069, %v8076
    %v8079 = vunpack.c.l.s4 1934713408
    %v8080 = vunpack.c.0.s8 %v8079
    %v8081 = vlaneseq
    %v8082 = vshrl.u32 %v8081, 7
    %v8083 = vsub.s32 %v8080, %v8082
    %v8084 = vrot.slane %v8070, %v8083
    %v8085 = vcombine.low %v8029, %v8061
    %v8086 = vcombine.high %v8029, %v8061
    %v8087 = vcombine.low %v8036, %v8068
    %v8088 = vcombine.high %v8036, %v8068
    %v8089 = vcombine.low %v8045, %v8077
    %v8090 = vcombine.high %v8045, %v8077
    %v8091 = vcombine.low %v8052, %v8084
    %v8092 = vcombine.high %v8052, %v8084
    %v8093 = vcombine.low %v7942, %v7946
    %v8094 = vcombine.high %v7942, %v7946
    %v8096 = vunpack.c.l.s4 1983009808
    %v8097 = vunpack.c.0.s8 %v8096
    %v8098 = vlaneseq
    %v8099 = vshrl.u32 %v8098, 7
    %v8100 = vsub.s32 %v8097, %v8099
    %v8101 = vrot.slane %v8093, %v8100
    %v8103 = vunpack.c.l.s4 1983009808
    %v8104 = vunpack.c.0.s8 %v8103
    %v8105 = vlaneseq
    %v8106 = vshrl.u32 %v8105, 7
    %v8107 = vsub.s32 %v8104, %v8106
    %v8108 = vrot.slane %v8094, %v8107
    %v8109 = vcombine.low %v7944, %v7948
    %v8110 = vcombine.high %v7944, %v7948
    %v8112 = vunpack.c.l.s4 1983009808
    %v8113 = vunpack.c.0.s8 %v8112
    %v8114 = vlaneseq
    %v8115 = vshrl.u32 %v8114, 7
    %v8116 = vsub.s32 %v8113, %v8115
    %v8117 = vrot.slane %v8109, %v8116
    %v8119 = vunpack.c.l.s4 1983009808
    %v8120 = vunpack.c.0.s8 %v8119
    %v8121 = vlaneseq
    %v8122 = vshrl.u32 %v8121, 7
    %v8123 = vsub.s32 %v8120, %v8122
    %v8124 = vrot.slane %v8110, %v8123
    %v8125 = vcombine.low %v7950, %v7954
    %v8126 = vcombine.high %v7950, %v7954
    %v8128 = vunpack.c.l.s4 1983009808
    %v8129 = vunpack.c.0.s8 %v8128
    %v8130 = vlaneseq
    %v8131 = vshrl.u32 %v8130, 7
    %v8132 = vsub.s32 %v8129, %v8131
    %v8133 = vrot.slane %v8125, %v8132
    %v8135 = vunpack.c.l.s4 1983009808
    %v8136 = vunpack.c.0.s8 %v8135
    %v8137 = vlaneseq
    %v8138 = vshrl.u32 %v8137, 7
    %v8139 = vsub.s32 %v8136, %v8138
    %v8140 = vrot.slane %v8126, %v8139
    %v8141 = vcombine.low %v7952, %v7956
    %v8142 = vcombine.high %v7952, %v7956
    %v8144 = vunpack.c.l.s4 1983009808
    %v8145 = vunpack.c.0.s8 %v8144
    %v8146 = vlaneseq
    %v8147 = vshrl.u32 %v8146, 7
    %v8148 = vsub.s32 %v8145, %v8147
    %v8149 = vrot.slane %v8141, %v8148
    %v8151 = vunpack.c.l.s4 1983009808
    %v8152 = vunpack.c.0.s8 %v8151
    %v8153 = vlaneseq
    %v8154 = vshrl.u32 %v8153, 7
    %v8155 = vsub.s32 %v8152, %v8154
    %v8156 = vrot.slane %v8142, %v8155
    %v8157 = vcombine.low %v8101, %v8117
    %v8158 = vcombine.high %v8101, %v8117
    %v8160 = vunpack.c.l.s4 1934713408
    %v8161 = vunpack.c.0.s8 %v8160
    %v8162 = vlaneseq
    %v8163 = vshrl.u32 %v8162, 7
    %v8164 = vsub.s32 %v8161, %v8163
    %v8165 = vrot.slane %v8157, %v8164
    %v8167 = vunpack.c.l.s4 1934713408
    %v8168 = vunpack.c.0.s8 %v8167
    %v8169 = vlaneseq
    %v8170 = vshrl.u32 %v8169, 7
    %v8171 = vsub.s32 %v8168, %v8170
    %v8172 = vrot.slane %v8158, %v8171
    %v8173 = vcombine.low %v8108, %v8124
    %v8174 = vcombine.high %v8108, %v8124
    %v8176 = vunpack.c.l.s4 1934713408
    %v8177 = vunpack.c.0.s8 %v8176
    %v8178 = vlaneseq
    %v8179 = vshrl.u32 %v8178, 7
    %v8180 = vsub.s32 %v8177, %v8179
    %v8181 = vrot.slane %v8173, %v8180
    %v8183 = vunpack.c.l.s4 1934713408
    %v8184 = vunpack.c.0.s8 %v8183
    %v8185 = vlaneseq
    %v8186 = vshrl.u32 %v8185, 7
    %v8187 = vsub.s32 %v8184, %v8186
    %v8188 = vrot.slane %v8174, %v8187
    %v8189 = vcombine.low %v8133, %v8149
    %v8190 = vcombine.high %v8133, %v8149
    %v8192 = vunpack.c.l.s4 1934713408
    %v8193 = vunpack.c.0.s8 %v8192
    %v8194 = vlaneseq
    %v8195 = vshrl.u32 %v8194, 7
    %v8196 = vsub.s32 %v8193, %v8195
    %v8197 = vrot.slane %v8189, %v8196
    %v8199 = vunpack.c.l.s4 1934713408
    %v8200 = vunpack.c.0.s8 %v8199
    %v8201 = vlaneseq
    %v8202 = vshrl.u32 %v8201, 7
    %v8203 = vsub.s32 %v8200, %v8202
    %v8204 = vrot.slane %v8190, %v8203
    %v8205 = vcombine.low %v8140, %v8156
    %v8206 = vcombine.high %v8140, %v8156
    %v8208 = vunpack.c.l.s4 1934713408
    %v8209 = vunpack.c.0.s8 %v8208
    %v8210 = vlaneseq
    %v8211 = vshrl.u32 %v8210, 7
    %v8212 = vsub.s32 %v8209, %v8211
    %v8213 = vrot.slane %v8205, %v8212
    %v8215 = vunpack.c.l.s4 1934713408
    %v8216 = vunpack.c.0.s8 %v8215
    %v8217 = vlaneseq
    %v8218 = vshrl.u32 %v8217, 7
    %v8219 = vsub.s32 %v8216, %v8218
    %v8220 = vrot.slane %v8206, %v8219
    %v8221 = vcombine.low %v8165, %v8197
    %v8222 = vcombine.high %v8165, %v8197
    %v8223 = vcombine.low %v8172, %v8204
    %v8224 = vcombine.high %v8172, %v8204
    %v8225 = vcombine.low %v8181, %v8213
    %v8226 = vcombine.high %v8181, %v8213
    %v8227 = vcombine.low %v8188, %v8220
    %v8228 = vcombine.high %v8188, %v8220
    %8230 = vrot.lane.b32.xlu0 %v8086, 16
    %v8231 = vpop.permute.xlu0 %8230
    %8234 = vrot.lane.b32.xlu0 %v8087, 32
    %v8235 = vpop.permute.xlu0 %8234
    %8238 = vrot.lane.b32.xlu0 %v8088, 48
    %v8239 = vpop.permute.xlu0 %8238
    %8242 = vrot.lane.b32.xlu0 %v8089, 64
    %v8243 = vpop.permute.xlu0 %8242
    %8246 = vrot.lane.b32.xlu0 %v8090, 80
    %v8247 = vpop.permute.xlu0 %8246
    %8250 = vrot.lane.b32.xlu0 %v8091, 96
    %v8251 = vpop.permute.xlu0 %8250
    %8254 = vrot.lane.b32.xlu0 %v8092, 112
    %v8255 = vpop.permute.xlu0 %8254
    %8258 = vrot.lane.b32.xlu0 %v8222, 16
    %v8259 = vpop.permute.xlu0 %8258
    %8262 = vrot.lane.b32.xlu0 %v8223, 32
    %v8263 = vpop.permute.xlu0 %8262
    %8266 = vrot.lane.b32.xlu0 %v8224, 48
    %v8267 = vpop.permute.xlu0 %8266
    %8270 = vrot.lane.b32.xlu0 %v8225, 64
    %v8271 = vpop.permute.xlu0 %8270
    %8274 = vrot.lane.b32.xlu0 %v8226, 80
    %v8275 = vpop.permute.xlu0 %8274
    %8278 = vrot.lane.b32.xlu0 %v8227, 96
    %v8279 = vpop.permute.xlu0 %8278
    %8282 = vrot.lane.b32.xlu0 %v8228, 112
    %v8283 = vpop.permute.xlu0 %8282
    %v8285 = vsel %vm372, %v8085, %v8231
    %v8286 = vsel %vm374, %v8285, %v8235
    %v8287 = vsel %vm376, %v8286, %v8239
    %v8288 = vsel %vm378, %v8287, %v8243
    %v8289 = vsel %vm380, %v8288, %v8247
    %v8290 = vsel %vm382, %v8289, %v8251
    %v8291 = vsel %vm384, %v8290, %v8255
    %v8292 = vsel %vm372, %v8221, %v8259
    %v8293 = vsel %vm374, %v8292, %v8263
    %v8294 = vsel %vm376, %v8293, %v8267
    %v8295 = vsel %vm378, %v8294, %v8271
    %v8296 = vsel %vm380, %v8295, %v8275
    %v8297 = vsel %vm382, %v8296, %v8279
    %v8298 = vsel %vm384, %v8297, %v8283
    %8299 = vst [vmem:[#allocation5 + $0x60] sm:$0xff] %v8291
    %8300 = vst [vmem:[#allocation5 + $0x68] sm:$0xff] %v8298
    %v8301 = vld [vmem:[%s5508 + $0x1] sm:$0xff]
    %v8302 = vld [vmem:[%s5508 + $0x9] sm:$0xff]
    %v8303 = vld [vmem:[%s5508 + $0x19] sm:$0xff]
    %v8304 = vld [vmem:[%s5508 + $0x21] sm:$0xff]
    %v8305 = vld [vmem:[%s5508 + $0x31] sm:$0xff]
    %v8306 = vld [vmem:[%s5508 + $0x39] sm:$0xff]
    %v8307 = vld [vmem:[%s5508 + $0x49] sm:$0xff]
    %v8308 = vld [vmem:[%s5508 + $0x51] sm:$0xff]
    %v8309 = vld [vmem:[%s5508 + $0x61] sm:$0xff]
    %v8310 = vld [vmem:[%s5508 + $0x69] sm:$0xff]
    %v8311 = vld [vmem:[%s5508 + $0x79] sm:$0xff]
    %v8312 = vld [vmem:[%s5508 + $0x81] sm:$0xff]
    %v8313 = vld [vmem:[%s5508 + $0x91] sm:$0xff]
    %v8314 = vld [vmem:[%s5508 + $0x99] sm:$0xff]
    %v8315 = vld [vmem:[%s5508 + $0xa9] sm:$0xff]
    %v8316 = vld [vmem:[%s5508 + $0xb1] sm:$0xff]
    %v8317 = vcombine.low %v8301, %v8305
    %v8318 = vcombine.high %v8301, %v8305
    %v8320 = vunpack.c.l.s4 1983009808
    %v8321 = vunpack.c.0.s8 %v8320
    %v8322 = vlaneseq
    %v8323 = vshrl.u32 %v8322, 7
    %v8324 = vsub.s32 %v8321, %v8323
    %v8325 = vrot.slane %v8317, %v8324
    %v8327 = vunpack.c.l.s4 1983009808
    %v8328 = vunpack.c.0.s8 %v8327
    %v8329 = vlaneseq
    %v8330 = vshrl.u32 %v8329, 7
    %v8331 = vsub.s32 %v8328, %v8330
    %v8332 = vrot.slane %v8318, %v8331
    %v8333 = vcombine.low %v8303, %v8307
    %v8334 = vcombine.high %v8303, %v8307
    %v8336 = vunpack.c.l.s4 1983009808
    %v8337 = vunpack.c.0.s8 %v8336
    %v8338 = vlaneseq
    %v8339 = vshrl.u32 %v8338, 7
    %v8340 = vsub.s32 %v8337, %v8339
    %v8341 = vrot.slane %v8333, %v8340
    %v8343 = vunpack.c.l.s4 1983009808
    %v8344 = vunpack.c.0.s8 %v8343
    %v8345 = vlaneseq
    %v8346 = vshrl.u32 %v8345, 7
    %v8347 = vsub.s32 %v8344, %v8346
    %v8348 = vrot.slane %v8334, %v8347
    %v8349 = vcombine.low %v8309, %v8313
    %v8350 = vcombine.high %v8309, %v8313
    %v8352 = vunpack.c.l.s4 1983009808
    %v8353 = vunpack.c.0.s8 %v8352
    %v8354 = vlaneseq
    %v8355 = vshrl.u32 %v8354, 7
    %v8356 = vsub.s32 %v8353, %v8355
    %v8357 = vrot.slane %v8349, %v8356
    %v8359 = vunpack.c.l.s4 1983009808
    %v8360 = vunpack.c.0.s8 %v8359
    %v8361 = vlaneseq
    %v8362 = vshrl.u32 %v8361, 7
    %v8363 = vsub.s32 %v8360, %v8362
    %v8364 = vrot.slane %v8350, %v8363
    %v8365 = vcombine.low %v8311, %v8315
    %v8366 = vcombine.high %v8311, %v8315
    %v8368 = vunpack.c.l.s4 1983009808
    %v8369 = vunpack.c.0.s8 %v8368
    %v8370 = vlaneseq
    %v8371 = vshrl.u32 %v8370, 7
    %v8372 = vsub.s32 %v8369, %v8371
    %v8373 = vrot.slane %v8365, %v8372
    %v8375 = vunpack.c.l.s4 1983009808
    %v8376 = vunpack.c.0.s8 %v8375
    %v8377 = vlaneseq
    %v8378 = vshrl.u32 %v8377, 7
    %v8379 = vsub.s32 %v8376, %v8378
    %v8380 = vrot.slane %v8366, %v8379
    %v8381 = vcombine.low %v8325, %v8341
    %v8382 = vcombine.high %v8325, %v8341
    %v8384 = vunpack.c.l.s4 1934713408
    %v8385 = vunpack.c.0.s8 %v8384
    %v8386 = vlaneseq
    %v8387 = vshrl.u32 %v8386, 7
    %v8388 = vsub.s32 %v8385, %v8387
    %v8389 = vrot.slane %v8381, %v8388
    %v8391 = vunpack.c.l.s4 1934713408
    %v8392 = vunpack.c.0.s8 %v8391
    %v8393 = vlaneseq
    %v8394 = vshrl.u32 %v8393, 7
    %v8395 = vsub.s32 %v8392, %v8394
    %v8396 = vrot.slane %v8382, %v8395
    %v8397 = vcombine.low %v8332, %v8348
    %v8398 = vcombine.high %v8332, %v8348
    %v8400 = vunpack.c.l.s4 1934713408
    %v8401 = vunpack.c.0.s8 %v8400
    %v8402 = vlaneseq
    %v8403 = vshrl.u32 %v8402, 7
    %v8404 = vsub.s32 %v8401, %v8403
    %v8405 = vrot.slane %v8397, %v8404
    %v8407 = vunpack.c.l.s4 1934713408
    %v8408 = vunpack.c.0.s8 %v8407
    %v8409 = vlaneseq
    %v8410 = vshrl.u32 %v8409, 7
    %v8411 = vsub.s32 %v8408, %v8410
    %v8412 = vrot.slane %v8398, %v8411
    %v8413 = vcombine.low %v8357, %v8373
    %v8414 = vcombine.high %v8357, %v8373
    %v8416 = vunpack.c.l.s4 1934713408
    %v8417 = vunpack.c.0.s8 %v8416
    %v8418 = vlaneseq
    %v8419 = vshrl.u32 %v8418, 7
    %v8420 = vsub.s32 %v8417, %v8419
    %v8421 = vrot.slane %v8413, %v8420
    %v8423 = vunpack.c.l.s4 1934713408
    %v8424 = vunpack.c.0.s8 %v8423
    %v8425 = vlaneseq
    %v8426 = vshrl.u32 %v8425, 7
    %v8427 = vsub.s32 %v8424, %v8426
    %v8428 = vrot.slane %v8414, %v8427
    %v8429 = vcombine.low %v8364, %v8380
    %v8430 = vcombine.high %v8364, %v8380
    %v8432 = vunpack.c.l.s4 1934713408
    %v8433 = vunpack.c.0.s8 %v8432
    %v8434 = vlaneseq
    %v8435 = vshrl.u32 %v8434, 7
    %v8436 = vsub.s32 %v8433, %v8435
    %v8437 = vrot.slane %v8429, %v8436
    %v8439 = vunpack.c.l.s4 1934713408
    %v8440 = vunpack.c.0.s8 %v8439
    %v8441 = vlaneseq
    %v8442 = vshrl.u32 %v8441, 7
    %v8443 = vsub.s32 %v8440, %v8442
    %v8444 = vrot.slane %v8430, %v8443
    %v8445 = vcombine.low %v8389, %v8421
    %v8446 = vcombine.high %v8389, %v8421
    %v8447 = vcombine.low %v8396, %v8428
    %v8448 = vcombine.high %v8396, %v8428
    %v8449 = vcombine.low %v8405, %v8437
    %v8450 = vcombine.high %v8405, %v8437
    %v8451 = vcombine.low %v8412, %v8444
    %v8452 = vcombine.high %v8412, %v8444
    %v8453 = vcombine.low %v8302, %v8306
    %v8454 = vcombine.high %v8302, %v8306
    %v8456 = vunpack.c.l.s4 1983009808
    %v8457 = vunpack.c.0.s8 %v8456
    %v8458 = vlaneseq
    %v8459 = vshrl.u32 %v8458, 7
    %v8460 = vsub.s32 %v8457, %v8459
    %v8461 = vrot.slane %v8453, %v8460
    %v8463 = vunpack.c.l.s4 1983009808
    %v8464 = vunpack.c.0.s8 %v8463
    %v8465 = vlaneseq
    %v8466 = vshrl.u32 %v8465, 7
    %v8467 = vsub.s32 %v8464, %v8466
    %v8468 = vrot.slane %v8454, %v8467
    %v8469 = vcombine.low %v8304, %v8308
    %v8470 = vcombine.high %v8304, %v8308
    %v8472 = vunpack.c.l.s4 1983009808
    %v8473 = vunpack.c.0.s8 %v8472
    %v8474 = vlaneseq
    %v8475 = vshrl.u32 %v8474, 7
    %v8476 = vsub.s32 %v8473, %v8475
    %v8477 = vrot.slane %v8469, %v8476
    %v8479 = vunpack.c.l.s4 1983009808
    %v8480 = vunpack.c.0.s8 %v8479
    %v8481 = vlaneseq
    %v8482 = vshrl.u32 %v8481, 7
    %v8483 = vsub.s32 %v8480, %v8482
    %v8484 = vrot.slane %v8470, %v8483
    %v8485 = vcombine.low %v8310, %v8314
    %v8486 = vcombine.high %v8310, %v8314
    %v8488 = vunpack.c.l.s4 1983009808
    %v8489 = vunpack.c.0.s8 %v8488
    %v8490 = vlaneseq
    %v8491 = vshrl.u32 %v8490, 7
    %v8492 = vsub.s32 %v8489, %v8491
    %v8493 = vrot.slane %v8485, %v8492
    %v8495 = vunpack.c.l.s4 1983009808
    %v8496 = vunpack.c.0.s8 %v8495
    %v8497 = vlaneseq
    %v8498 = vshrl.u32 %v8497, 7
    %v8499 = vsub.s32 %v8496, %v8498
    %v8500 = vrot.slane %v8486, %v8499
    %v8501 = vcombine.low %v8312, %v8316
    %v8502 = vcombine.high %v8312, %v8316
    %v8504 = vunpack.c.l.s4 1983009808
    %v8505 = vunpack.c.0.s8 %v8504
    %v8506 = vlaneseq
    %v8507 = vshrl.u32 %v8506, 7
    %v8508 = vsub.s32 %v8505, %v8507
    %v8509 = vrot.slane %v8501, %v8508
    %v8511 = vunpack.c.l.s4 1983009808
    %v8512 = vunpack.c.0.s8 %v8511
    %v8513 = vlaneseq
    %v8514 = vshrl.u32 %v8513, 7
    %v8515 = vsub.s32 %v8512, %v8514
    %v8516 = vrot.slane %v8502, %v8515
    %v8517 = vcombine.low %v8461, %v8477
    %v8518 = vcombine.high %v8461, %v8477
    %v8520 = vunpack.c.l.s4 1934713408
    %v8521 = vunpack.c.0.s8 %v8520
    %v8522 = vlaneseq
    %v8523 = vshrl.u32 %v8522, 7
    %v8524 = vsub.s32 %v8521, %v8523
    %v8525 = vrot.slane %v8517, %v8524
    %v8527 = vunpack.c.l.s4 1934713408
    %v8528 = vunpack.c.0.s8 %v8527
    %v8529 = vlaneseq
    %v8530 = vshrl.u32 %v8529, 7
    %v8531 = vsub.s32 %v8528, %v8530
    %v8532 = vrot.slane %v8518, %v8531
    %v8533 = vcombine.low %v8468, %v8484
    %v8534 = vcombine.high %v8468, %v8484
    %v8536 = vunpack.c.l.s4 1934713408
    %v8537 = vunpack.c.0.s8 %v8536
    %v8538 = vlaneseq
    %v8539 = vshrl.u32 %v8538, 7
    %v8540 = vsub.s32 %v8537, %v8539
    %v8541 = vrot.slane %v8533, %v8540
    %v8543 = vunpack.c.l.s4 1934713408
    %v8544 = vunpack.c.0.s8 %v8543
    %v8545 = vlaneseq
    %v8546 = vshrl.u32 %v8545, 7
    %v8547 = vsub.s32 %v8544, %v8546
    %v8548 = vrot.slane %v8534, %v8547
    %v8549 = vcombine.low %v8493, %v8509
    %v8550 = vcombine.high %v8493, %v8509
    %v8552 = vunpack.c.l.s4 1934713408
    %v8553 = vunpack.c.0.s8 %v8552
    %v8554 = vlaneseq
    %v8555 = vshrl.u32 %v8554, 7
    %v8556 = vsub.s32 %v8553, %v8555
    %v8557 = vrot.slane %v8549, %v8556
    %v8559 = vunpack.c.l.s4 1934713408
    %v8560 = vunpack.c.0.s8 %v8559
    %v8561 = vlaneseq
    %v8562 = vshrl.u32 %v8561, 7
    %v8563 = vsub.s32 %v8560, %v8562
    %v8564 = vrot.slane %v8550, %v8563
    %v8565 = vcombine.low %v8500, %v8516
    %v8566 = vcombine.high %v8500, %v8516
    %v8568 = vunpack.c.l.s4 1934713408
    %v8569 = vunpack.c.0.s8 %v8568
    %v8570 = vlaneseq
    %v8571 = vshrl.u32 %v8570, 7
    %v8572 = vsub.s32 %v8569, %v8571
    %v8573 = vrot.slane %v8565, %v8572
    %v8575 = vunpack.c.l.s4 1934713408
    %v8576 = vunpack.c.0.s8 %v8575
    %v8577 = vlaneseq
    %v8578 = vshrl.u32 %v8577, 7
    %v8579 = vsub.s32 %v8576, %v8578
    %v8580 = vrot.slane %v8566, %v8579
    %v8581 = vcombine.low %v8525, %v8557
    %v8582 = vcombine.high %v8525, %v8557
    %v8583 = vcombine.low %v8532, %v8564
    %v8584 = vcombine.high %v8532, %v8564
    %v8585 = vcombine.low %v8541, %v8573
    %v8586 = vcombine.high %v8541, %v8573
    %v8587 = vcombine.low %v8548, %v8580
    %v8588 = vcombine.high %v8548, %v8580
    %8590 = vrot.lane.b32.xlu0 %v8446, 16
    %v8591 = vpop.permute.xlu0 %8590
    %8594 = vrot.lane.b32.xlu0 %v8447, 32
    %v8595 = vpop.permute.xlu0 %8594
    %8598 = vrot.lane.b32.xlu0 %v8448, 48
    %v8599 = vpop.permute.xlu0 %8598
    %8602 = vrot.lane.b32.xlu0 %v8449, 64
    %v8603 = vpop.permute.xlu0 %8602
    %8606 = vrot.lane.b32.xlu0 %v8450, 80
    %v8607 = vpop.permute.xlu0 %8606
    %8610 = vrot.lane.b32.xlu0 %v8451, 96
    %v8611 = vpop.permute.xlu0 %8610
    %8614 = vrot.lane.b32.xlu0 %v8452, 112
    %v8615 = vpop.permute.xlu0 %8614
    %8618 = vrot.lane.b32.xlu0 %v8582, 16
    %v8619 = vpop.permute.xlu0 %8618
    %8622 = vrot.lane.b32.xlu0 %v8583, 32
    %v8623 = vpop.permute.xlu0 %8622
    %8626 = vrot.lane.b32.xlu0 %v8584, 48
    %v8627 = vpop.permute.xlu0 %8626
    %8630 = vrot.lane.b32.xlu0 %v8585, 64
    %v8631 = vpop.permute.xlu0 %8630
    %8634 = vrot.lane.b32.xlu0 %v8586, 80
    %v8635 = vpop.permute.xlu0 %8634
    %8638 = vrot.lane.b32.xlu0 %v8587, 96
    %v8639 = vpop.permute.xlu0 %8638
    %8642 = vrot.lane.b32.xlu0 %v8588, 112
    %v8643 = vpop.permute.xlu0 %8642
    %v8645 = vsel %vm372, %v8445, %v8591
    %v8646 = vsel %vm374, %v8645, %v8595
    %v8647 = vsel %vm376, %v8646, %v8599
    %v8648 = vsel %vm378, %v8647, %v8603
    %v8649 = vsel %vm380, %v8648, %v8607
    %v8650 = vsel %vm382, %v8649, %v8611
    %v8651 = vsel %vm384, %v8650, %v8615
    %v8652 = vsel %vm372, %v8581, %v8619
    %v8653 = vsel %vm374, %v8652, %v8623
    %v8654 = vsel %vm376, %v8653, %v8627
    %v8655 = vsel %vm378, %v8654, %v8631
    %v8656 = vsel %vm380, %v8655, %v8635
    %v8657 = vsel %vm382, %v8656, %v8639
    %v8658 = vsel %vm384, %v8657, %v8643
    %8659 = vst [vmem:[#allocation5 + $0x70] sm:$0xff] %v8651
    %8660 = vst [vmem:[#allocation5 + $0x78] sm:$0xff] %v8658
    %v8661 = vld [vmem:[#allocation3 + $0x1] sm:$0xff]
    %v8662 = vld [vmem:[#allocation3 + $0x9] sm:$0xff]
    %v8663 = vld [vmem:[#allocation3 + $0x19] sm:$0xff]
    %v8664 = vld [vmem:[#allocation3 + $0x21] sm:$0xff]
    %v8665 = vld [vmem:[#allocation3 + $0x31] sm:$0xff]
    %v8666 = vld [vmem:[#allocation3 + $0x39] sm:$0xff]
    %v8667 = vld [vmem:[#allocation3 + $0x49] sm:$0xff]
    %v8668 = vld [vmem:[#allocation3 + $0x51] sm:$0xff]
    %v8669 = vld [vmem:[#allocation3 + $0x61] sm:$0xff]
    %v8670 = vld [vmem:[#allocation3 + $0x69] sm:$0xff]
    %v8671 = vld [vmem:[#allocation3 + $0x79] sm:$0xff]
    %v8672 = vld [vmem:[#allocation3 + $0x81] sm:$0xff]
    %v8673 = vld [vmem:[#allocation3 + $0x91] sm:$0xff]
    %v8674 = vld [vmem:[#allocation3 + $0x99] sm:$0xff]
    %v8675 = vld [vmem:[#allocation3 + $0xa9] sm:$0xff]
    %v8676 = vld [vmem:[#allocation3 + $0xb1] sm:$0xff]
    %8693 = vrot.lane.b32.xlu0 %v8661, 127
    %v8694 = vpop.permute.xlu0 %8693
    %8695 = vrot.lane.b32.xlu0 %v8662, 127
    %v8696 = vpop.permute.xlu0 %8695
    %8697 = vrot.lane.b32.xlu0 %v8663, 127
    %v8698 = vpop.permute.xlu0 %8697
    %8699 = vrot.lane.b32.xlu0 %v8664, 127
    %v8700 = vpop.permute.xlu0 %8699
    %8701 = vrot.lane.b32.xlu0 %v8665, 127
    %v8702 = vpop.permute.xlu0 %8701
    %8703 = vrot.lane.b32.xlu0 %v8666, 127
    %v8704 = vpop.permute.xlu0 %8703
    %8705 = vrot.lane.b32.xlu0 %v8667, 127
    %v8706 = vpop.permute.xlu0 %8705
    %8707 = vrot.lane.b32.xlu0 %v8668, 127
    %v8708 = vpop.permute.xlu0 %8707
    %8709 = vrot.lane.b32.xlu0 %v8669, 127
    %v8710 = vpop.permute.xlu0 %8709
    %8711 = vrot.lane.b32.xlu0 %v8670, 127
    %v8712 = vpop.permute.xlu0 %8711
    %8713 = vrot.lane.b32.xlu0 %v8671, 127
    %v8714 = vpop.permute.xlu0 %8713
    %8715 = vrot.lane.b32.xlu0 %v8672, 127
    %v8716 = vpop.permute.xlu0 %8715
    %8717 = vrot.lane.b32.xlu0 %v8673, 127
    %v8718 = vpop.permute.xlu0 %8717
    %8719 = vrot.lane.b32.xlu0 %v8674, 127
    %v8720 = vpop.permute.xlu0 %8719
    %8721 = vrot.lane.b32.xlu0 %v8675, 127
    %v8722 = vpop.permute.xlu0 %8721
    %8723 = vrot.lane.b32.xlu0 %v8676, 127
    %v8724 = vpop.permute.xlu0 %8723
    %v8741 = vcombine.low %v8694, %v8702
    %v8742 = vcombine.high %v8694, %v8702
    %v8744 = vunpack.c.l.s4 1983009808
    %v8745 = vunpack.c.0.s8 %v8744
    %v8746 = vlaneseq
    %v8747 = vshrl.u32 %v8746, 7
    %v8748 = vsub.s32 %v8745, %v8747
    %v8749 = vrot.slane %v8741, %v8748
    %v8751 = vunpack.c.l.s4 1983009808
    %v8752 = vunpack.c.0.s8 %v8751
    %v8753 = vlaneseq
    %v8754 = vshrl.u32 %v8753, 7
    %v8755 = vsub.s32 %v8752, %v8754
    %v8756 = vrot.slane %v8742, %v8755
    %v8757 = vcombine.low %v8698, %v8706
    %v8758 = vcombine.high %v8698, %v8706
    %v8760 = vunpack.c.l.s4 1983009808
    %v8761 = vunpack.c.0.s8 %v8760
    %v8762 = vlaneseq
    %v8763 = vshrl.u32 %v8762, 7
    %v8764 = vsub.s32 %v8761, %v8763
    %v8765 = vrot.slane %v8757, %v8764
    %v8767 = vunpack.c.l.s4 1983009808
    %v8768 = vunpack.c.0.s8 %v8767
    %v8769 = vlaneseq
    %v8770 = vshrl.u32 %v8769, 7
    %v8771 = vsub.s32 %v8768, %v8770
    %v8772 = vrot.slane %v8758, %v8771
    %v8773 = vcombine.low %v8710, %v8718
    %v8774 = vcombine.high %v8710, %v8718
    %v8776 = vunpack.c.l.s4 1983009808
    %v8777 = vunpack.c.0.s8 %v8776
    %v8778 = vlaneseq
    %v8779 = vshrl.u32 %v8778, 7
    %v8780 = vsub.s32 %v8777, %v8779
    %v8781 = vrot.slane %v8773, %v8780
    %v8783 = vunpack.c.l.s4 1983009808
    %v8784 = vunpack.c.0.s8 %v8783
    %v8785 = vlaneseq
    %v8786 = vshrl.u32 %v8785, 7
    %v8787 = vsub.s32 %v8784, %v8786
    %v8788 = vrot.slane %v8774, %v8787
    %v8789 = vcombine.low %v8714, %v8722
    %v8790 = vcombine.high %v8714, %v8722
    %v8792 = vunpack.c.l.s4 1983009808
    %v8793 = vunpack.c.0.s8 %v8792
    %v8794 = vlaneseq
    %v8795 = vshrl.u32 %v8794, 7
    %v8796 = vsub.s32 %v8793, %v8795
    %v8797 = vrot.slane %v8789, %v8796
    %v8799 = vunpack.c.l.s4 1983009808
    %v8800 = vunpack.c.0.s8 %v8799
    %v8801 = vlaneseq
    %v8802 = vshrl.u32 %v8801, 7
    %v8803 = vsub.s32 %v8800, %v8802
    %v8804 = vrot.slane %v8790, %v8803
    %v8805 = vcombine.low %v8749, %v8765
    %v8806 = vcombine.high %v8749, %v8765
    %v8808 = vunpack.c.l.s4 1934713408
    %v8809 = vunpack.c.0.s8 %v8808
    %v8810 = vlaneseq
    %v8811 = vshrl.u32 %v8810, 7
    %v8812 = vsub.s32 %v8809, %v8811
    %v8813 = vrot.slane %v8805, %v8812
    %v8815 = vunpack.c.l.s4 1934713408
    %v8816 = vunpack.c.0.s8 %v8815
    %v8817 = vlaneseq
    %v8818 = vshrl.u32 %v8817, 7
    %v8819 = vsub.s32 %v8816, %v8818
    %v8820 = vrot.slane %v8806, %v8819
    %v8821 = vcombine.low %v8756, %v8772
    %v8822 = vcombine.high %v8756, %v8772
    %v8824 = vunpack.c.l.s4 1934713408
    %v8825 = vunpack.c.0.s8 %v8824
    %v8826 = vlaneseq
    %v8827 = vshrl.u32 %v8826, 7
    %v8828 = vsub.s32 %v8825, %v8827
    %v8829 = vrot.slane %v8821, %v8828
    %v8831 = vunpack.c.l.s4 1934713408
    %v8832 = vunpack.c.0.s8 %v8831
    %v8833 = vlaneseq
    %v8834 = vshrl.u32 %v8833, 7
    %v8835 = vsub.s32 %v8832, %v8834
    %v8836 = vrot.slane %v8822, %v8835
    %v8837 = vcombine.low %v8781, %v8797
    %v8838 = vcombine.high %v8781, %v8797
    %v8840 = vunpack.c.l.s4 1934713408
    %v8841 = vunpack.c.0.s8 %v8840
    %v8842 = vlaneseq
    %v8843 = vshrl.u32 %v8842, 7
    %v8844 = vsub.s32 %v8841, %v8843
    %v8845 = vrot.slane %v8837, %v8844
    %v8847 = vunpack.c.l.s4 1934713408
    %v8848 = vunpack.c.0.s8 %v8847
    %v8849 = vlaneseq
    %v8850 = vshrl.u32 %v8849, 7
    %v8851 = vsub.s32 %v8848, %v8850
    %v8852 = vrot.slane %v8838, %v8851
    %v8853 = vcombine.low %v8788, %v8804
    %v8854 = vcombine.high %v8788, %v8804
    %v8856 = vunpack.c.l.s4 1934713408
    %v8857 = vunpack.c.0.s8 %v8856
    %v8858 = vlaneseq
    %v8859 = vshrl.u32 %v8858, 7
    %v8860 = vsub.s32 %v8857, %v8859
    %v8861 = vrot.slane %v8853, %v8860
    %v8863 = vunpack.c.l.s4 1934713408
    %v8864 = vunpack.c.0.s8 %v8863
    %v8865 = vlaneseq
    %v8866 = vshrl.u32 %v8865, 7
    %v8867 = vsub.s32 %v8864, %v8866
    %v8868 = vrot.slane %v8854, %v8867
    %v8869 = vcombine.low %v8813, %v8845
    %v8870 = vcombine.high %v8813, %v8845
    %v8871 = vcombine.low %v8820, %v8852
    %v8872 = vcombine.high %v8820, %v8852
    %v8873 = vcombine.low %v8829, %v8861
    %v8874 = vcombine.high %v8829, %v8861
    %v8875 = vcombine.low %v8836, %v8868
    %v8876 = vcombine.high %v8836, %v8868
    %v8877 = vcombine.low %v8696, %v8704
    %v8878 = vcombine.high %v8696, %v8704
    %v8880 = vunpack.c.l.s4 1983009808
    %v8881 = vunpack.c.0.s8 %v8880
    %v8882 = vlaneseq
    %v8883 = vshrl.u32 %v8882, 7
    %v8884 = vsub.s32 %v8881, %v8883
    %v8885 = vrot.slane %v8877, %v8884
    %v8887 = vunpack.c.l.s4 1983009808
    %v8888 = vunpack.c.0.s8 %v8887
    %v8889 = vlaneseq
    %v8890 = vshrl.u32 %v8889, 7
    %v8891 = vsub.s32 %v8888, %v8890
    %v8892 = vrot.slane %v8878, %v8891
    %v8893 = vcombine.low %v8700, %v8708
    %v8894 = vcombine.high %v8700, %v8708
    %v8896 = vunpack.c.l.s4 1983009808
    %v8897 = vunpack.c.0.s8 %v8896
    %v8898 = vlaneseq
    %v8899 = vshrl.u32 %v8898, 7
    %v8900 = vsub.s32 %v8897, %v8899
    %v8901 = vrot.slane %v8893, %v8900
    %v8903 = vunpack.c.l.s4 1983009808
    %v8904 = vunpack.c.0.s8 %v8903
    %v8905 = vlaneseq
    %v8906 = vshrl.u32 %v8905, 7
    %v8907 = vsub.s32 %v8904, %v8906
    %v8908 = vrot.slane %v8894, %v8907
    %v8909 = vcombine.low %v8712, %v8720
    %v8910 = vcombine.high %v8712, %v8720
    %v8912 = vunpack.c.l.s4 1983009808
    %v8913 = vunpack.c.0.s8 %v8912
    %v8914 = vlaneseq
    %v8915 = vshrl.u32 %v8914, 7
    %v8916 = vsub.s32 %v8913, %v8915
    %v8917 = vrot.slane %v8909, %v8916
    %v8919 = vunpack.c.l.s4 1983009808
    %v8920 = vunpack.c.0.s8 %v8919
    %v8921 = vlaneseq
    %v8922 = vshrl.u32 %v8921, 7
    %v8923 = vsub.s32 %v8920, %v8922
    %v8924 = vrot.slane %v8910, %v8923
    %v8925 = vcombine.low %v8716, %v8724
    %v8926 = vcombine.high %v8716, %v8724
    %v8928 = vunpack.c.l.s4 1983009808
    %v8929 = vunpack.c.0.s8 %v8928
    %v8930 = vlaneseq
    %v8931 = vshrl.u32 %v8930, 7
    %v8932 = vsub.s32 %v8929, %v8931
    %v8933 = vrot.slane %v8925, %v8932
    %v8935 = vunpack.c.l.s4 1983009808
    %v8936 = vunpack.c.0.s8 %v8935
    %v8937 = vlaneseq
    %v8938 = vshrl.u32 %v8937, 7
    %v8939 = vsub.s32 %v8936, %v8938
    %v8940 = vrot.slane %v8926, %v8939
    %v8941 = vcombine.low %v8885, %v8901
    %v8942 = vcombine.high %v8885, %v8901
    %v8944 = vunpack.c.l.s4 1934713408
    %v8945 = vunpack.c.0.s8 %v8944
    %v8946 = vlaneseq
    %v8947 = vshrl.u32 %v8946, 7
    %v8948 = vsub.s32 %v8945, %v8947
    %v8949 = vrot.slane %v8941, %v8948
    %v8951 = vunpack.c.l.s4 1934713408
    %v8952 = vunpack.c.0.s8 %v8951
    %v8953 = vlaneseq
    %v8954 = vshrl.u32 %v8953, 7
    %v8955 = vsub.s32 %v8952, %v8954
    %v8956 = vrot.slane %v8942, %v8955
    %v8957 = vcombine.low %v8892, %v8908
    %v8958 = vcombine.high %v8892, %v8908
    %v8960 = vunpack.c.l.s4 1934713408
    %v8961 = vunpack.c.0.s8 %v8960
    %v8962 = vlaneseq
    %v8963 = vshrl.u32 %v8962, 7
    %v8964 = vsub.s32 %v8961, %v8963
    %v8965 = vrot.slane %v8957, %v8964
    %v8967 = vunpack.c.l.s4 1934713408
    %v8968 = vunpack.c.0.s8 %v8967
    %v8969 = vlaneseq
    %v8970 = vshrl.u32 %v8969, 7
    %v8971 = vsub.s32 %v8968, %v8970
    %v8972 = vrot.slane %v8958, %v8971
    %v8973 = vcombine.low %v8917, %v8933
    %v8974 = vcombine.high %v8917, %v8933
    %v8976 = vunpack.c.l.s4 1934713408
    %v8977 = vunpack.c.0.s8 %v8976
    %v8978 = vlaneseq
    %v8979 = vshrl.u32 %v8978, 7
    %v8980 = vsub.s32 %v8977, %v8979
    %v8981 = vrot.slane %v8973, %v8980
    %v8983 = vunpack.c.l.s4 1934713408
    %v8984 = vunpack.c.0.s8 %v8983
    %v8985 = vlaneseq
    %v8986 = vshrl.u32 %v8985, 7
    %v8987 = vsub.s32 %v8984, %v8986
    %v8988 = vrot.slane %v8974, %v8987
    %v8989 = vcombine.low %v8924, %v8940
    %v8990 = vcombine.high %v8924, %v8940
    %v8992 = vunpack.c.l.s4 1934713408
    %v8993 = vunpack.c.0.s8 %v8992
    %v8994 = vlaneseq
    %v8995 = vshrl.u32 %v8994, 7
    %v8996 = vsub.s32 %v8993, %v8995
    %v8997 = vrot.slane %v8989, %v8996
    %v8999 = vunpack.c.l.s4 1934713408
    %v9000 = vunpack.c.0.s8 %v8999
    %v9001 = vlaneseq
    %v9002 = vshrl.u32 %v9001, 7
    %v9003 = vsub.s32 %v9000, %v9002
    %v9004 = vrot.slane %v8990, %v9003
    %v9005 = vcombine.low %v8949, %v8981
    %v9006 = vcombine.high %v8949, %v8981
    %v9007 = vcombine.low %v8956, %v8988
    %v9008 = vcombine.high %v8956, %v8988
    %v9009 = vcombine.low %v8965, %v8997
    %v9010 = vcombine.high %v8965, %v8997
    %v9011 = vcombine.low %v8972, %v9004
    %v9012 = vcombine.high %v8972, %v9004
    %9014 = vrot.lane.b32.xlu0 %v8870, 16
    %v9015 = vpop.permute.xlu0 %9014
    %9018 = vrot.lane.b32.xlu0 %v8871, 32
    %v9019 = vpop.permute.xlu0 %9018
    %9022 = vrot.lane.b32.xlu0 %v8872, 48
    %v9023 = vpop.permute.xlu0 %9022
    %9026 = vrot.lane.b32.xlu0 %v8873, 64
    %v9027 = vpop.permute.xlu0 %9026
    %9030 = vrot.lane.b32.xlu0 %v8874, 80
    %v9031 = vpop.permute.xlu0 %9030
    %9034 = vrot.lane.b32.xlu0 %v8875, 96
    %v9035 = vpop.permute.xlu0 %9034
    %9038 = vrot.lane.b32.xlu0 %v8876, 112
    %v9039 = vpop.permute.xlu0 %9038
    %9042 = vrot.lane.b32.xlu0 %v9006, 16
    %v9043 = vpop.permute.xlu0 %9042
    %9046 = vrot.lane.b32.xlu0 %v9007, 32
    %v9047 = vpop.permute.xlu0 %9046
    %9050 = vrot.lane.b32.xlu0 %v9008, 48
    %v9051 = vpop.permute.xlu0 %9050
    %9054 = vrot.lane.b32.xlu0 %v9009, 64
    %v9055 = vpop.permute.xlu0 %9054
    %9058 = vrot.lane.b32.xlu0 %v9010, 80
    %v9059 = vpop.permute.xlu0 %9058
    %9062 = vrot.lane.b32.xlu0 %v9011, 96
    %v9063 = vpop.permute.xlu0 %9062
    %9066 = vrot.lane.b32.xlu0 %v9012, 112
    %v9067 = vpop.permute.xlu0 %9066
    %v9069 = vsel %vm372, %v8869, %v9015
    %v9070 = vsel %vm374, %v9069, %v9019
    %v9071 = vsel %vm376, %v9070, %v9023
    %v9072 = vsel %vm378, %v9071, %v9027
    %v9073 = vsel %vm380, %v9072, %v9031
    %v9074 = vsel %vm382, %v9073, %v9035
    %v9075 = vsel %vm384, %v9074, %v9039
    %v9076 = vsel %vm372, %v9005, %v9043
    %v9077 = vsel %vm374, %v9076, %v9047
    %v9078 = vsel %vm376, %v9077, %v9051
    %v9079 = vsel %vm378, %v9078, %v9055
    %v9080 = vsel %vm380, %v9079, %v9059
    %v9081 = vsel %vm382, %v9080, %v9063
    %v9082 = vsel %vm384, %v9081, %v9067
    %9083 = vst [vmem:[#allocation5 + $0x80] sm:$0xff] %v9075
    %9084 = vst [vmem:[#allocation5 + $0x88] sm:$0xff] %v9082
    %v9085 = vld [vmem:[%s5508 + $0x1] sm:$0xff]
    %v9086 = vld [vmem:[%s5508 + $0x9] sm:$0xff]
    %v9087 = vld [vmem:[%s5508 + $0x19] sm:$0xff]
    %v9088 = vld [vmem:[%s5508 + $0x21] sm:$0xff]
    %v9089 = vld [vmem:[%s5508 + $0x31] sm:$0xff]
    %v9090 = vld [vmem:[%s5508 + $0x39] sm:$0xff]
    %v9091 = vld [vmem:[%s5508 + $0x49] sm:$0xff]
    %v9092 = vld [vmem:[%s5508 + $0x51] sm:$0xff]
    %v9093 = vld [vmem:[%s5508 + $0x61] sm:$0xff]
    %v9094 = vld [vmem:[%s5508 + $0x69] sm:$0xff]
    %v9095 = vld [vmem:[%s5508 + $0x79] sm:$0xff]
    %v9096 = vld [vmem:[%s5508 + $0x81] sm:$0xff]
    %v9097 = vld [vmem:[%s5508 + $0x91] sm:$0xff]
    %v9098 = vld [vmem:[%s5508 + $0x99] sm:$0xff]
    %v9099 = vld [vmem:[%s5508 + $0xa9] sm:$0xff]
    %v9100 = vld [vmem:[%s5508 + $0xb1] sm:$0xff]
    %9117 = vrot.lane.b32.xlu0 %v9085, 127
    %v9118 = vpop.permute.xlu0 %9117
    %9119 = vrot.lane.b32.xlu0 %v9086, 127
    %v9120 = vpop.permute.xlu0 %9119
    %9121 = vrot.lane.b32.xlu0 %v9087, 127
    %v9122 = vpop.permute.xlu0 %9121
    %9123 = vrot.lane.b32.xlu0 %v9088, 127
    %v9124 = vpop.permute.xlu0 %9123
    %9125 = vrot.lane.b32.xlu0 %v9089, 127
    %v9126 = vpop.permute.xlu0 %9125
    %9127 = vrot.lane.b32.xlu0 %v9090, 127
    %v9128 = vpop.permute.xlu0 %9127
    %9129 = vrot.lane.b32.xlu0 %v9091, 127
    %v9130 = vpop.permute.xlu0 %9129
    %9131 = vrot.lane.b32.xlu0 %v9092, 127
    %v9132 = vpop.permute.xlu0 %9131
    %9133 = vrot.lane.b32.xlu0 %v9093, 127
    %v9134 = vpop.permute.xlu0 %9133
    %9135 = vrot.lane.b32.xlu0 %v9094, 127
    %v9136 = vpop.permute.xlu0 %9135
    %9137 = vrot.lane.b32.xlu0 %v9095, 127
    %v9138 = vpop.permute.xlu0 %9137
    %9139 = vrot.lane.b32.xlu0 %v9096, 127
    %v9140 = vpop.permute.xlu0 %9139
    %9141 = vrot.lane.b32.xlu0 %v9097, 127
    %v9142 = vpop.permute.xlu0 %9141
    %9143 = vrot.lane.b32.xlu0 %v9098, 127
    %v9144 = vpop.permute.xlu0 %9143
    %9145 = vrot.lane.b32.xlu0 %v9099, 127
    %v9146 = vpop.permute.xlu0 %9145
    %9147 = vrot.lane.b32.xlu0 %v9100, 127
    %v9148 = vpop.permute.xlu0 %9147
    %v9165 = vcombine.low %v9118, %v9126
    %v9166 = vcombine.high %v9118, %v9126
    %v9168 = vunpack.c.l.s4 1983009808
    %v9169 = vunpack.c.0.s8 %v9168
    %v9170 = vlaneseq
    %v9171 = vshrl.u32 %v9170, 7
    %v9172 = vsub.s32 %v9169, %v9171
    %v9173 = vrot.slane %v9165, %v9172
    %v9175 = vunpack.c.l.s4 1983009808
    %v9176 = vunpack.c.0.s8 %v9175
    %v9177 = vlaneseq
    %v9178 = vshrl.u32 %v9177, 7
    %v9179 = vsub.s32 %v9176, %v9178
    %v9180 = vrot.slane %v9166, %v9179
    %v9181 = vcombine.low %v9122, %v9130
    %v9182 = vcombine.high %v9122, %v9130
    %v9184 = vunpack.c.l.s4 1983009808
    %v9185 = vunpack.c.0.s8 %v9184
    %v9186 = vlaneseq
    %v9187 = vshrl.u32 %v9186, 7
    %v9188 = vsub.s32 %v9185, %v9187
    %v9189 = vrot.slane %v9181, %v9188
    %v9191 = vunpack.c.l.s4 1983009808
    %v9192 = vunpack.c.0.s8 %v9191
    %v9193 = vlaneseq
    %v9194 = vshrl.u32 %v9193, 7
    %v9195 = vsub.s32 %v9192, %v9194
    %v9196 = vrot.slane %v9182, %v9195
    %v9197 = vcombine.low %v9134, %v9142
    %v9198 = vcombine.high %v9134, %v9142
    %v9200 = vunpack.c.l.s4 1983009808
    %v9201 = vunpack.c.0.s8 %v9200
    %v9202 = vlaneseq
    %v9203 = vshrl.u32 %v9202, 7
    %v9204 = vsub.s32 %v9201, %v9203
    %v9205 = vrot.slane %v9197, %v9204
    %v9207 = vunpack.c.l.s4 1983009808
    %v9208 = vunpack.c.0.s8 %v9207
    %v9209 = vlaneseq
    %v9210 = vshrl.u32 %v9209, 7
    %v9211 = vsub.s32 %v9208, %v9210
    %v9212 = vrot.slane %v9198, %v9211
    %v9213 = vcombine.low %v9138, %v9146
    %v9214 = vcombine.high %v9138, %v9146
    %v9216 = vunpack.c.l.s4 1983009808
    %v9217 = vunpack.c.0.s8 %v9216
    %v9218 = vlaneseq
    %v9219 = vshrl.u32 %v9218, 7
    %v9220 = vsub.s32 %v9217, %v9219
    %v9221 = vrot.slane %v9213, %v9220
    %v9223 = vunpack.c.l.s4 1983009808
    %v9224 = vunpack.c.0.s8 %v9223
    %v9225 = vlaneseq
    %v9226 = vshrl.u32 %v9225, 7
    %v9227 = vsub.s32 %v9224, %v9226
    %v9228 = vrot.slane %v9214, %v9227
    %v9229 = vcombine.low %v9173, %v9189
    %v9230 = vcombine.high %v9173, %v9189
    %v9232 = vunpack.c.l.s4 1934713408
    %v9233 = vunpack.c.0.s8 %v9232
    %v9234 = vlaneseq
    %v9235 = vshrl.u32 %v9234, 7
    %v9236 = vsub.s32 %v9233, %v9235
    %v9237 = vrot.slane %v9229, %v9236
    %v9239 = vunpack.c.l.s4 1934713408
    %v9240 = vunpack.c.0.s8 %v9239
    %v9241 = vlaneseq
    %v9242 = vshrl.u32 %v9241, 7
    %v9243 = vsub.s32 %v9240, %v9242
    %v9244 = vrot.slane %v9230, %v9243
    %v9245 = vcombine.low %v9180, %v9196
    %v9246 = vcombine.high %v9180, %v9196
    %v9248 = vunpack.c.l.s4 1934713408
    %v9249 = vunpack.c.0.s8 %v9248
    %v9250 = vlaneseq
    %v9251 = vshrl.u32 %v9250, 7
    %v9252 = vsub.s32 %v9249, %v9251
    %v9253 = vrot.slane %v9245, %v9252
    %v9255 = vunpack.c.l.s4 1934713408
    %v9256 = vunpack.c.0.s8 %v9255
    %v9257 = vlaneseq
    %v9258 = vshrl.u32 %v9257, 7
    %v9259 = vsub.s32 %v9256, %v9258
    %v9260 = vrot.slane %v9246, %v9259
    %v9261 = vcombine.low %v9205, %v9221
    %v9262 = vcombine.high %v9205, %v9221
    %v9264 = vunpack.c.l.s4 1934713408
    %v9265 = vunpack.c.0.s8 %v9264
    %v9266 = vlaneseq
    %v9267 = vshrl.u32 %v9266, 7
    %v9268 = vsub.s32 %v9265, %v9267
    %v9269 = vrot.slane %v9261, %v9268
    %v9271 = vunpack.c.l.s4 1934713408
    %v9272 = vunpack.c.0.s8 %v9271
    %v9273 = vlaneseq
    %v9274 = vshrl.u32 %v9273, 7
    %v9275 = vsub.s32 %v9272, %v9274
    %v9276 = vrot.slane %v9262, %v9275
    %v9277 = vcombine.low %v9212, %v9228
    %v9278 = vcombine.high %v9212, %v9228
    %v9280 = vunpack.c.l.s4 1934713408
    %v9281 = vunpack.c.0.s8 %v9280
    %v9282 = vlaneseq
    %v9283 = vshrl.u32 %v9282, 7
    %v9284 = vsub.s32 %v9281, %v9283
    %v9285 = vrot.slane %v9277, %v9284
    %v9287 = vunpack.c.l.s4 1934713408
    %v9288 = vunpack.c.0.s8 %v9287
    %v9289 = vlaneseq
    %v9290 = vshrl.u32 %v9289, 7
    %v9291 = vsub.s32 %v9288, %v9290
    %v9292 = vrot.slane %v9278, %v9291
    %v9293 = vcombine.low %v9237, %v9269
    %v9294 = vcombine.high %v9237, %v9269
    %v9295 = vcombine.low %v9244, %v9276
    %v9296 = vcombine.high %v9244, %v9276
    %v9297 = vcombine.low %v9253, %v9285
    %v9298 = vcombine.high %v9253, %v9285
    %v9299 = vcombine.low %v9260, %v9292
    %v9300 = vcombine.high %v9260, %v9292
    %v9301 = vcombine.low %v9120, %v9128
    %v9302 = vcombine.high %v9120, %v9128
    %v9304 = vunpack.c.l.s4 1983009808
    %v9305 = vunpack.c.0.s8 %v9304
    %v9306 = vlaneseq
    %v9307 = vshrl.u32 %v9306, 7
    %v9308 = vsub.s32 %v9305, %v9307
    %v9309 = vrot.slane %v9301, %v9308
    %v9311 = vunpack.c.l.s4 1983009808
    %v9312 = vunpack.c.0.s8 %v9311
    %v9313 = vlaneseq
    %v9314 = vshrl.u32 %v9313, 7
    %v9315 = vsub.s32 %v9312, %v9314
    %v9316 = vrot.slane %v9302, %v9315
    %v9317 = vcombine.low %v9124, %v9132
    %v9318 = vcombine.high %v9124, %v9132
    %v9320 = vunpack.c.l.s4 1983009808
    %v9321 = vunpack.c.0.s8 %v9320
    %v9322 = vlaneseq
    %v9323 = vshrl.u32 %v9322, 7
    %v9324 = vsub.s32 %v9321, %v9323
    %v9325 = vrot.slane %v9317, %v9324
    %v9327 = vunpack.c.l.s4 1983009808
    %v9328 = vunpack.c.0.s8 %v9327
    %v9329 = vlaneseq
    %v9330 = vshrl.u32 %v9329, 7
    %v9331 = vsub.s32 %v9328, %v9330
    %v9332 = vrot.slane %v9318, %v9331
    %v9333 = vcombine.low %v9136, %v9144
    %v9334 = vcombine.high %v9136, %v9144
    %v9336 = vunpack.c.l.s4 1983009808
    %v9337 = vunpack.c.0.s8 %v9336
    %v9338 = vlaneseq
    %v9339 = vshrl.u32 %v9338, 7
    %v9340 = vsub.s32 %v9337, %v9339
    %v9341 = vrot.slane %v9333, %v9340
    %v9343 = vunpack.c.l.s4 1983009808
    %v9344 = vunpack.c.0.s8 %v9343
    %v9345 = vlaneseq
    %v9346 = vshrl.u32 %v9345, 7
    %v9347 = vsub.s32 %v9344, %v9346
    %v9348 = vrot.slane %v9334, %v9347
    %v9349 = vcombine.low %v9140, %v9148
    %v9350 = vcombine.high %v9140, %v9148
    %v9352 = vunpack.c.l.s4 1983009808
    %v9353 = vunpack.c.0.s8 %v9352
    %v9354 = vlaneseq
    %v9355 = vshrl.u32 %v9354, 7
    %v9356 = vsub.s32 %v9353, %v9355
    %v9357 = vrot.slane %v9349, %v9356
    %v9359 = vunpack.c.l.s4 1983009808
    %v9360 = vunpack.c.0.s8 %v9359
    %v9361 = vlaneseq
    %v9362 = vshrl.u32 %v9361, 7
    %v9363 = vsub.s32 %v9360, %v9362
    %v9364 = vrot.slane %v9350, %v9363
    %v9365 = vcombine.low %v9309, %v9325
    %v9366 = vcombine.high %v9309, %v9325
    %v9368 = vunpack.c.l.s4 1934713408
    %v9369 = vunpack.c.0.s8 %v9368
    %v9370 = vlaneseq
    %v9371 = vshrl.u32 %v9370, 7
    %v9372 = vsub.s32 %v9369, %v9371
    %v9373 = vrot.slane %v9365, %v9372
    %v9375 = vunpack.c.l.s4 1934713408
    %v9376 = vunpack.c.0.s8 %v9375
    %v9377 = vlaneseq
    %v9378 = vshrl.u32 %v9377, 7
    %v9379 = vsub.s32 %v9376, %v9378
    %v9380 = vrot.slane %v9366, %v9379
    %v9381 = vcombine.low %v9316, %v9332
    %v9382 = vcombine.high %v9316, %v9332
    %v9384 = vunpack.c.l.s4 1934713408
    %v9385 = vunpack.c.0.s8 %v9384
    %v9386 = vlaneseq
    %v9387 = vshrl.u32 %v9386, 7
    %v9388 = vsub.s32 %v9385, %v9387
    %v9389 = vrot.slane %v9381, %v9388
    %v9391 = vunpack.c.l.s4 1934713408
    %v9392 = vunpack.c.0.s8 %v9391
    %v9393 = vlaneseq
    %v9394 = vshrl.u32 %v9393, 7
    %v9395 = vsub.s32 %v9392, %v9394
    %v9396 = vrot.slane %v9382, %v9395
    %v9397 = vcombine.low %v9341, %v9357
    %v9398 = vcombine.high %v9341, %v9357
    %v9400 = vunpack.c.l.s4 1934713408
    %v9401 = vunpack.c.0.s8 %v9400
    %v9402 = vlaneseq
    %v9403 = vshrl.u32 %v9402, 7
    %v9404 = vsub.s32 %v9401, %v9403
    %v9405 = vrot.slane %v9397, %v9404
    %v9407 = vunpack.c.l.s4 1934713408
    %v9408 = vunpack.c.0.s8 %v9407
    %v9409 = vlaneseq
    %v9410 = vshrl.u32 %v9409, 7
    %v9411 = vsub.s32 %v9408, %v9410
    %v9412 = vrot.slane %v9398, %v9411
    %v9413 = vcombine.low %v9348, %v9364
    %v9414 = vcombine.high %v9348, %v9364
    %v9416 = vunpack.c.l.s4 1934713408
    %v9417 = vunpack.c.0.s8 %v9416
    %v9418 = vlaneseq
    %v9419 = vshrl.u32 %v9418, 7
    %v9420 = vsub.s32 %v9417, %v9419
    %v9421 = vrot.slane %v9413, %v9420
    %v9423 = vunpack.c.l.s4 1934713408
    %v9424 = vunpack.c.0.s8 %v9423
    %v9425 = vlaneseq
    %v9426 = vshrl.u32 %v9425, 7
    %v9427 = vsub.s32 %v9424, %v9426
    %v9428 = vrot.slane %v9414, %v9427
    %v9429 = vcombine.low %v9373, %v9405
    %v9430 = vcombine.high %v9373, %v9405
    %v9431 = vcombine.low %v9380, %v9412
    %v9432 = vcombine.high %v9380, %v9412
    %v9433 = vcombine.low %v9389, %v9421
    %v9434 = vcombine.high %v9389, %v9421
    %v9435 = vcombine.low %v9396, %v9428
    %v9436 = vcombine.high %v9396, %v9428
    %9438 = vrot.lane.b32.xlu0 %v9294, 16
    %v9439 = vpop.permute.xlu0 %9438
    %9442 = vrot.lane.b32.xlu0 %v9295, 32
    %v9443 = vpop.permute.xlu0 %9442
    %9446 = vrot.lane.b32.xlu0 %v9296, 48
    %v9447 = vpop.permute.xlu0 %9446
    %9450 = vrot.lane.b32.xlu0 %v9297, 64
    %v9451 = vpop.permute.xlu0 %9450
    %9454 = vrot.lane.b32.xlu0 %v9298, 80
    %v9455 = vpop.permute.xlu0 %9454
    %9458 = vrot.lane.b32.xlu0 %v9299, 96
    %v9459 = vpop.permute.xlu0 %9458
    %9462 = vrot.lane.b32.xlu0 %v9300, 112
    %v9463 = vpop.permute.xlu0 %9462
    %9466 = vrot.lane.b32.xlu0 %v9430, 16
    %v9467 = vpop.permute.xlu0 %9466
    %9470 = vrot.lane.b32.xlu0 %v9431, 32
    %v9471 = vpop.permute.xlu0 %9470
    %9474 = vrot.lane.b32.xlu0 %v9432, 48
    %v9475 = vpop.permute.xlu0 %9474
    %9478 = vrot.lane.b32.xlu0 %v9433, 64
    %v9479 = vpop.permute.xlu0 %9478
    %9482 = vrot.lane.b32.xlu0 %v9434, 80
    %v9483 = vpop.permute.xlu0 %9482
    %9486 = vrot.lane.b32.xlu0 %v9435, 96
    %v9487 = vpop.permute.xlu0 %9486
    %9490 = vrot.lane.b32.xlu0 %v9436, 112
    %v9491 = vpop.permute.xlu0 %9490
    %v9493 = vsel %vm372, %v9293, %v9439
    %v9494 = vsel %vm374, %v9493, %v9443
    %v9495 = vsel %vm376, %v9494, %v9447
    %v9496 = vsel %vm378, %v9495, %v9451
    %v9497 = vsel %vm380, %v9496, %v9455
    %v9498 = vsel %vm382, %v9497, %v9459
    %v9499 = vsel %vm384, %v9498, %v9463
    %v9500 = vsel %vm372, %v9429, %v9467
    %v9501 = vsel %vm374, %v9500, %v9471
    %v9502 = vsel %vm376, %v9501, %v9475
    %v9503 = vsel %vm378, %v9502, %v9479
    %v9504 = vsel %vm380, %v9503, %v9483
    %v9505 = vsel %vm382, %v9504, %v9487
    %v9506 = vsel %vm384, %v9505, %v9491
    %9507 = vst [vmem:[#allocation5 + $0x90] sm:$0xff] %v9499
    %9508 = vst [vmem:[#allocation5 + $0x98] sm:$0xff] %v9506
    %v9509 = vld [vmem:[#allocation3 + $0x1] sm:$0xff]
    %v9510 = vld [vmem:[#allocation3 + $0x9] sm:$0xff]
    %v9511 = vld [vmem:[#allocation3 + $0x19] sm:$0xff]
    %v9512 = vld [vmem:[#allocation3 + $0x21] sm:$0xff]
    %v9513 = vld [vmem:[#allocation3 + $0x31] sm:$0xff]
    %v9514 = vld [vmem:[#allocation3 + $0x39] sm:$0xff]
    %v9515 = vld [vmem:[#allocation3 + $0x49] sm:$0xff]
    %v9516 = vld [vmem:[#allocation3 + $0x51] sm:$0xff]
    %v9517 = vld [vmem:[#allocation3 + $0x61] sm:$0xff]
    %v9518 = vld [vmem:[#allocation3 + $0x69] sm:$0xff]
    %v9519 = vld [vmem:[#allocation3 + $0x79] sm:$0xff]
    %v9520 = vld [vmem:[#allocation3 + $0x81] sm:$0xff]
    %v9521 = vld [vmem:[#allocation3 + $0x91] sm:$0xff]
    %v9522 = vld [vmem:[#allocation3 + $0x99] sm:$0xff]
    %v9523 = vld [vmem:[#allocation3 + $0xa9] sm:$0xff]
    %v9524 = vld [vmem:[#allocation3 + $0xb1] sm:$0xff]
    %9541 = vrot.lane.b32.xlu0 %v9509, 126
    %v9542 = vpop.permute.xlu0 %9541
    %9543 = vrot.lane.b32.xlu0 %v9510, 126
    %v9544 = vpop.permute.xlu0 %9543
    %9545 = vrot.lane.b32.xlu0 %v9511, 126
    %v9546 = vpop.permute.xlu0 %9545
    %9547 = vrot.lane.b32.xlu0 %v9512, 126
    %v9548 = vpop.permute.xlu0 %9547
    %9549 = vrot.lane.b32.xlu0 %v9513, 126
    %v9550 = vpop.permute.xlu0 %9549
    %9551 = vrot.lane.b32.xlu0 %v9514, 126
    %v9552 = vpop.permute.xlu0 %9551
    %9553 = vrot.lane.b32.xlu0 %v9515, 126
    %v9554 = vpop.permute.xlu0 %9553
    %9555 = vrot.lane.b32.xlu0 %v9516, 126
    %v9556 = vpop.permute.xlu0 %9555
    %9557 = vrot.lane.b32.xlu0 %v9517, 126
    %v9558 = vpop.permute.xlu0 %9557
    %9559 = vrot.lane.b32.xlu0 %v9518, 126
    %v9560 = vpop.permute.xlu0 %9559
    %9561 = vrot.lane.b32.xlu0 %v9519, 126
    %v9562 = vpop.permute.xlu0 %9561
    %9563 = vrot.lane.b32.xlu0 %v9520, 126
    %v9564 = vpop.permute.xlu0 %9563
    %9565 = vrot.lane.b32.xlu0 %v9521, 126
    %v9566 = vpop.permute.xlu0 %9565
    %9567 = vrot.lane.b32.xlu0 %v9522, 126
    %v9568 = vpop.permute.xlu0 %9567
    %9569 = vrot.lane.b32.xlu0 %v9523, 126
    %v9570 = vpop.permute.xlu0 %9569
    %9571 = vrot.lane.b32.xlu0 %v9524, 126
    %v9572 = vpop.permute.xlu0 %9571
    %v9589 = vcombine.low %v9542, %v9550
    %v9590 = vcombine.high %v9542, %v9550
    %v9592 = vunpack.c.l.s4 1983009808
    %v9593 = vunpack.c.0.s8 %v9592
    %v9594 = vlaneseq
    %v9595 = vshrl.u32 %v9594, 7
    %v9596 = vsub.s32 %v9593, %v9595
    %v9597 = vrot.slane %v9589, %v9596
    %v9599 = vunpack.c.l.s4 1983009808
    %v9600 = vunpack.c.0.s8 %v9599
    %v9601 = vlaneseq
    %v9602 = vshrl.u32 %v9601, 7
    %v9603 = vsub.s32 %v9600, %v9602
    %v9604 = vrot.slane %v9590, %v9603
    %v9605 = vcombine.low %v9546, %v9554
    %v9606 = vcombine.high %v9546, %v9554
    %v9608 = vunpack.c.l.s4 1983009808
    %v9609 = vunpack.c.0.s8 %v9608
    %v9610 = vlaneseq
    %v9611 = vshrl.u32 %v9610, 7
    %v9612 = vsub.s32 %v9609, %v9611
    %v9613 = vrot.slane %v9605, %v9612
    %v9615 = vunpack.c.l.s4 1983009808
    %v9616 = vunpack.c.0.s8 %v9615
    %v9617 = vlaneseq
    %v9618 = vshrl.u32 %v9617, 7
    %v9619 = vsub.s32 %v9616, %v9618
    %v9620 = vrot.slane %v9606, %v9619
    %v9621 = vcombine.low %v9558, %v9566
    %v9622 = vcombine.high %v9558, %v9566
    %v9624 = vunpack.c.l.s4 1983009808
    %v9625 = vunpack.c.0.s8 %v9624
    %v9626 = vlaneseq
    %v9627 = vshrl.u32 %v9626, 7
    %v9628 = vsub.s32 %v9625, %v9627
    %v9629 = vrot.slane %v9621, %v9628
    %v9631 = vunpack.c.l.s4 1983009808
    %v9632 = vunpack.c.0.s8 %v9631
    %v9633 = vlaneseq
    %v9634 = vshrl.u32 %v9633, 7
    %v9635 = vsub.s32 %v9632, %v9634
    %v9636 = vrot.slane %v9622, %v9635
    %v9637 = vcombine.low %v9562, %v9570
    %v9638 = vcombine.high %v9562, %v9570
    %v9640 = vunpack.c.l.s4 1983009808
    %v9641 = vunpack.c.0.s8 %v9640
    %v9642 = vlaneseq
    %v9643 = vshrl.u32 %v9642, 7
    %v9644 = vsub.s32 %v9641, %v9643
    %v9645 = vrot.slane %v9637, %v9644
    %v9647 = vunpack.c.l.s4 1983009808
    %v9648 = vunpack.c.0.s8 %v9647
    %v9649 = vlaneseq
    %v9650 = vshrl.u32 %v9649, 7
    %v9651 = vsub.s32 %v9648, %v9650
    %v9652 = vrot.slane %v9638, %v9651
    %v9653 = vcombine.low %v9597, %v9613
    %v9654 = vcombine.high %v9597, %v9613
    %v9656 = vunpack.c.l.s4 1934713408
    %v9657 = vunpack.c.0.s8 %v9656
    %v9658 = vlaneseq
    %v9659 = vshrl.u32 %v9658, 7
    %v9660 = vsub.s32 %v9657, %v9659
    %v9661 = vrot.slane %v9653, %v9660
    %v9663 = vunpack.c.l.s4 1934713408
    %v9664 = vunpack.c.0.s8 %v9663
    %v9665 = vlaneseq
    %v9666 = vshrl.u32 %v9665, 7
    %v9667 = vsub.s32 %v9664, %v9666
    %v9668 = vrot.slane %v9654, %v9667
    %v9669 = vcombine.low %v9604, %v9620
    %v9670 = vcombine.high %v9604, %v9620
    %v9672 = vunpack.c.l.s4 1934713408
    %v9673 = vunpack.c.0.s8 %v9672
    %v9674 = vlaneseq
    %v9675 = vshrl.u32 %v9674, 7
    %v9676 = vsub.s32 %v9673, %v9675
    %v9677 = vrot.slane %v9669, %v9676
    %v9679 = vunpack.c.l.s4 1934713408
    %v9680 = vunpack.c.0.s8 %v9679
    %v9681 = vlaneseq
    %v9682 = vshrl.u32 %v9681, 7
    %v9683 = vsub.s32 %v9680, %v9682
    %v9684 = vrot.slane %v9670, %v9683
    %v9685 = vcombine.low %v9629, %v9645
    %v9686 = vcombine.high %v9629, %v9645
    %v9688 = vunpack.c.l.s4 1934713408
    %v9689 = vunpack.c.0.s8 %v9688
    %v9690 = vlaneseq
    %v9691 = vshrl.u32 %v9690, 7
    %v9692 = vsub.s32 %v9689, %v9691
    %v9693 = vrot.slane %v9685, %v9692
    %v9695 = vunpack.c.l.s4 1934713408
    %v9696 = vunpack.c.0.s8 %v9695
    %v9697 = vlaneseq
    %v9698 = vshrl.u32 %v9697, 7
    %v9699 = vsub.s32 %v9696, %v9698
    %v9700 = vrot.slane %v9686, %v9699
    %v9701 = vcombine.low %v9636, %v9652
    %v9702 = vcombine.high %v9636, %v9652
    %v9704 = vunpack.c.l.s4 1934713408
    %v9705 = vunpack.c.0.s8 %v9704
    %v9706 = vlaneseq
    %v9707 = vshrl.u32 %v9706, 7
    %v9708 = vsub.s32 %v9705, %v9707
    %v9709 = vrot.slane %v9701, %v9708
    %v9711 = vunpack.c.l.s4 1934713408
    %v9712 = vunpack.c.0.s8 %v9711
    %v9713 = vlaneseq
    %v9714 = vshrl.u32 %v9713, 7
    %v9715 = vsub.s32 %v9712, %v9714
    %v9716 = vrot.slane %v9702, %v9715
    %v9717 = vcombine.low %v9661, %v9693
    %v9718 = vcombine.high %v9661, %v9693
    %v9719 = vcombine.low %v9668, %v9700
    %v9720 = vcombine.high %v9668, %v9700
    %v9721 = vcombine.low %v9677, %v9709
    %v9722 = vcombine.high %v9677, %v9709
    %v9723 = vcombine.low %v9684, %v9716
    %v9724 = vcombine.high %v9684, %v9716
    %v9725 = vcombine.low %v9544, %v9552
    %v9726 = vcombine.high %v9544, %v9552
    %v9728 = vunpack.c.l.s4 1983009808
    %v9729 = vunpack.c.0.s8 %v9728
    %v9730 = vlaneseq
    %v9731 = vshrl.u32 %v9730, 7
    %v9732 = vsub.s32 %v9729, %v9731
    %v9733 = vrot.slane %v9725, %v9732
    %v9735 = vunpack.c.l.s4 1983009808
    %v9736 = vunpack.c.0.s8 %v9735
    %v9737 = vlaneseq
    %v9738 = vshrl.u32 %v9737, 7
    %v9739 = vsub.s32 %v9736, %v9738
    %v9740 = vrot.slane %v9726, %v9739
    %v9741 = vcombine.low %v9548, %v9556
    %v9742 = vcombine.high %v9548, %v9556
    %v9744 = vunpack.c.l.s4 1983009808
    %v9745 = vunpack.c.0.s8 %v9744
    %v9746 = vlaneseq
    %v9747 = vshrl.u32 %v9746, 7
    %v9748 = vsub.s32 %v9745, %v9747
    %v9749 = vrot.slane %v9741, %v9748
    %v9751 = vunpack.c.l.s4 1983009808
    %v9752 = vunpack.c.0.s8 %v9751
    %v9753 = vlaneseq
    %v9754 = vshrl.u32 %v9753, 7
    %v9755 = vsub.s32 %v9752, %v9754
    %v9756 = vrot.slane %v9742, %v9755
    %v9757 = vcombine.low %v9560, %v9568
    %v9758 = vcombine.high %v9560, %v9568
    %v9760 = vunpack.c.l.s4 1983009808
    %v9761 = vunpack.c.0.s8 %v9760
    %v9762 = vlaneseq
    %v9763 = vshrl.u32 %v9762, 7
    %v9764 = vsub.s32 %v9761, %v9763
    %v9765 = vrot.slane %v9757, %v9764
    %v9767 = vunpack.c.l.s4 1983009808
    %v9768 = vunpack.c.0.s8 %v9767
    %v9769 = vlaneseq
    %v9770 = vshrl.u32 %v9769, 7
    %v9771 = vsub.s32 %v9768, %v9770
    %v9772 = vrot.slane %v9758, %v9771
    %v9773 = vcombine.low %v9564, %v9572
    %v9774 = vcombine.high %v9564, %v9572
    %v9776 = vunpack.c.l.s4 1983009808
    %v9777 = vunpack.c.0.s8 %v9776
    %v9778 = vlaneseq
    %v9779 = vshrl.u32 %v9778, 7
    %v9780 = vsub.s32 %v9777, %v9779
    %v9781 = vrot.slane %v9773, %v9780
    %v9783 = vunpack.c.l.s4 1983009808
    %v9784 = vunpack.c.0.s8 %v9783
    %v9785 = vlaneseq
    %v9786 = vshrl.u32 %v9785, 7
    %v9787 = vsub.s32 %v9784, %v9786
    %v9788 = vrot.slane %v9774, %v9787
    %v9789 = vcombine.low %v9733, %v9749
    %v9790 = vcombine.high %v9733, %v9749
    %v9792 = vunpack.c.l.s4 1934713408
    %v9793 = vunpack.c.0.s8 %v9792
    %v9794 = vlaneseq
    %v9795 = vshrl.u32 %v9794, 7
    %v9796 = vsub.s32 %v9793, %v9795
    %v9797 = vrot.slane %v9789, %v9796
    %v9799 = vunpack.c.l.s4 1934713408
    %v9800 = vunpack.c.0.s8 %v9799
    %v9801 = vlaneseq
    %v9802 = vshrl.u32 %v9801, 7
    %v9803 = vsub.s32 %v9800, %v9802
    %v9804 = vrot.slane %v9790, %v9803
    %v9805 = vcombine.low %v9740, %v9756
    %v9806 = vcombine.high %v9740, %v9756
    %v9808 = vunpack.c.l.s4 1934713408
    %v9809 = vunpack.c.0.s8 %v9808
    %v9810 = vlaneseq
    %v9811 = vshrl.u32 %v9810, 7
    %v9812 = vsub.s32 %v9809, %v9811
    %v9813 = vrot.slane %v9805, %v9812
    %v9815 = vunpack.c.l.s4 1934713408
    %v9816 = vunpack.c.0.s8 %v9815
    %v9817 = vlaneseq
    %v9818 = vshrl.u32 %v9817, 7
    %v9819 = vsub.s32 %v9816, %v9818
    %v9820 = vrot.slane %v9806, %v9819
    %v9821 = vcombine.low %v9765, %v9781
    %v9822 = vcombine.high %v9765, %v9781
    %v9824 = vunpack.c.l.s4 1934713408
    %v9825 = vunpack.c.0.s8 %v9824
    %v9826 = vlaneseq
    %v9827 = vshrl.u32 %v9826, 7
    %v9828 = vsub.s32 %v9825, %v9827
    %v9829 = vrot.slane %v9821, %v9828
    %v9831 = vunpack.c.l.s4 1934713408
    %v9832 = vunpack.c.0.s8 %v9831
    %v9833 = vlaneseq
    %v9834 = vshrl.u32 %v9833, 7
    %v9835 = vsub.s32 %v9832, %v9834
    %v9836 = vrot.slane %v9822, %v9835
    %v9837 = vcombine.low %v9772, %v9788
    %v9838 = vcombine.high %v9772, %v9788
    %v9840 = vunpack.c.l.s4 1934713408
    %v9841 = vunpack.c.0.s8 %v9840
    %v9842 = vlaneseq
    %v9843 = vshrl.u32 %v9842, 7
    %v9844 = vsub.s32 %v9841, %v9843
    %v9845 = vrot.slane %v9837, %v9844
    %v9847 = vunpack.c.l.s4 1934713408
    %v9848 = vunpack.c.0.s8 %v9847
    %v9849 = vlaneseq
    %v9850 = vshrl.u32 %v9849, 7
    %v9851 = vsub.s32 %v9848, %v9850
    %v9852 = vrot.slane %v9838, %v9851
    %v9853 = vcombine.low %v9797, %v9829
    %v9854 = vcombine.high %v9797, %v9829
    %v9855 = vcombine.low %v9804, %v9836
    %v9856 = vcombine.high %v9804, %v9836
    %v9857 = vcombine.low %v9813, %v9845
    %v9858 = vcombine.high %v9813, %v9845
    %v9859 = vcombine.low %v9820, %v9852
    %v9860 = vcombine.high %v9820, %v9852
    %9862 = vrot.lane.b32.xlu0 %v9718, 16
    %v9863 = vpop.permute.xlu0 %9862
    %9866 = vrot.lane.b32.xlu0 %v9719, 32
    %v9867 = vpop.permute.xlu0 %9866
    %9870 = vrot.lane.b32.xlu0 %v9720, 48
    %v9871 = vpop.permute.xlu0 %9870
    %9874 = vrot.lane.b32.xlu0 %v9721, 64
    %v9875 = vpop.permute.xlu0 %9874
    %9878 = vrot.lane.b32.xlu0 %v9722, 80
    %v9879 = vpop.permute.xlu0 %9878
    %9882 = vrot.lane.b32.xlu0 %v9723, 96
    %v9883 = vpop.permute.xlu0 %9882
    %9886 = vrot.lane.b32.xlu0 %v9724, 112
    %v9887 = vpop.permute.xlu0 %9886
    %9890 = vrot.lane.b32.xlu0 %v9854, 16
    %v9891 = vpop.permute.xlu0 %9890
    %9894 = vrot.lane.b32.xlu0 %v9855, 32
    %v9895 = vpop.permute.xlu0 %9894
    %9898 = vrot.lane.b32.xlu0 %v9856, 48
    %v9899 = vpop.permute.xlu0 %9898
    %9902 = vrot.lane.b32.xlu0 %v9857, 64
    %v9903 = vpop.permute.xlu0 %9902
    %9906 = vrot.lane.b32.xlu0 %v9858, 80
    %v9907 = vpop.permute.xlu0 %9906
    %9910 = vrot.lane.b32.xlu0 %v9859, 96
    %v9911 = vpop.permute.xlu0 %9910
    %9914 = vrot.lane.b32.xlu0 %v9860, 112
    %v9915 = vpop.permute.xlu0 %9914
    %v9917 = vsel %vm372, %v9717, %v9863
    %v9918 = vsel %vm374, %v9917, %v9867
    %v9919 = vsel %vm376, %v9918, %v9871
    %v9920 = vsel %vm378, %v9919, %v9875
    %v9921 = vsel %vm380, %v9920, %v9879
    %v9922 = vsel %vm382, %v9921, %v9883
    %v9923 = vsel %vm384, %v9922, %v9887
    %v9924 = vsel %vm372, %v9853, %v9891
    %v9925 = vsel %vm374, %v9924, %v9895
    %v9926 = vsel %vm376, %v9925, %v9899
    %v9927 = vsel %vm378, %v9926, %v9903
    %v9928 = vsel %vm380, %v9927, %v9907
    %v9929 = vsel %vm382, %v9928, %v9911
    %v9930 = vsel %vm384, %v9929, %v9915
    %9931 = vst [vmem:[#allocation5 + $0xa0] sm:$0xff] %v9923
    %9932 = vst [vmem:[#allocation5 + $0xa8] sm:$0xff] %v9930
    %v9933 = vld [vmem:[%s5508 + $0x1] sm:$0xff]
    %v9934 = vld [vmem:[%s5508 + $0x9] sm:$0xff]
    %v9935 = vld [vmem:[%s5508 + $0x19] sm:$0xff]
    %v9936 = vld [vmem:[%s5508 + $0x21] sm:$0xff]
    %v9937 = vld [vmem:[%s5508 + $0x31] sm:$0xff]
    %v9938 = vld [vmem:[%s5508 + $0x39] sm:$0xff]
    %v9939 = vld [vmem:[%s5508 + $0x49] sm:$0xff]
    %v9940 = vld [vmem:[%s5508 + $0x51] sm:$0xff]
    %v9941 = vld [vmem:[%s5508 + $0x61] sm:$0xff]
    %v9942 = vld [vmem:[%s5508 + $0x69] sm:$0xff]
    %v9943 = vld [vmem:[%s5508 + $0x79] sm:$0xff]
    %v9944 = vld [vmem:[%s5508 + $0x81] sm:$0xff]
    %v9945 = vld [vmem:[%s5508 + $0x91] sm:$0xff]
    %v9946 = vld [vmem:[%s5508 + $0x99] sm:$0xff]
    %v9947 = vld [vmem:[%s5508 + $0xa9] sm:$0xff]
    %v9948 = vld [vmem:[%s5508 + $0xb1] sm:$0xff]
    %9965 = vrot.lane.b32.xlu0 %v9933, 126
    %v9966 = vpop.permute.xlu0 %9965
    %9967 = vrot.lane.b32.xlu0 %v9934, 126
    %v9968 = vpop.permute.xlu0 %9967
    %9969 = vrot.lane.b32.xlu0 %v9935, 126
    %v9970 = vpop.permute.xlu0 %9969
    %9971 = vrot.lane.b32.xlu0 %v9936, 126
    %v9972 = vpop.permute.xlu0 %9971
    %9973 = vrot.lane.b32.xlu0 %v9937, 126
    %v9974 = vpop.permute.xlu0 %9973
    %9975 = vrot.lane.b32.xlu0 %v9938, 126
    %v9976 = vpop.permute.xlu0 %9975
    %9977 = vrot.lane.b32.xlu0 %v9939, 126
    %v9978 = vpop.permute.xlu0 %9977
    %9979 = vrot.lane.b32.xlu0 %v9940, 126
    %v9980 = vpop.permute.xlu0 %9979
    %9981 = vrot.lane.b32.xlu0 %v9941, 126
    %v9982 = vpop.permute.xlu0 %9981
    %9983 = vrot.lane.b32.xlu0 %v9942, 126
    %v9984 = vpop.permute.xlu0 %9983
    %9985 = vrot.lane.b32.xlu0 %v9943, 126
    %v9986 = vpop.permute.xlu0 %9985
    %9987 = vrot.lane.b32.xlu0 %v9944, 126
    %v9988 = vpop.permute.xlu0 %9987
    %9989 = vrot.lane.b32.xlu0 %v9945, 126
    %v9990 = vpop.permute.xlu0 %9989
    %9991 = vrot.lane.b32.xlu0 %v9946, 126
    %v9992 = vpop.permute.xlu0 %9991
    %9993 = vrot.lane.b32.xlu0 %v9947, 126
    %v9994 = vpop.permute.xlu0 %9993
    %9995 = vrot.lane.b32.xlu0 %v9948, 126
    %v9996 = vpop.permute.xlu0 %9995
    %v10013 = vcombine.low %v9966, %v9974
    %v10014 = vcombine.high %v9966, %v9974
    %v10016 = vunpack.c.l.s4 1983009808
    %v10017 = vunpack.c.0.s8 %v10016
    %v10018 = vlaneseq
    %v10019 = vshrl.u32 %v10018, 7
    %v10020 = vsub.s32 %v10017, %v10019
    %v10021 = vrot.slane %v10013, %v10020
    %v10023 = vunpack.c.l.s4 1983009808
    %v10024 = vunpack.c.0.s8 %v10023
    %v10025 = vlaneseq
    %v10026 = vshrl.u32 %v10025, 7
    %v10027 = vsub.s32 %v10024, %v10026
    %v10028 = vrot.slane %v10014, %v10027
    %v10029 = vcombine.low %v9970, %v9978
    %v10030 = vcombine.high %v9970, %v9978
    %v10032 = vunpack.c.l.s4 1983009808
    %v10033 = vunpack.c.0.s8 %v10032
    %v10034 = vlaneseq
    %v10035 = vshrl.u32 %v10034, 7
    %v10036 = vsub.s32 %v10033, %v10035
    %v10037 = vrot.slane %v10029, %v10036
    %v10039 = vunpack.c.l.s4 1983009808
    %v10040 = vunpack.c.0.s8 %v10039
    %v10041 = vlaneseq
    %v10042 = vshrl.u32 %v10041, 7
    %v10043 = vsub.s32 %v10040, %v10042
    %v10044 = vrot.slane %v10030, %v10043
    %v10045 = vcombine.low %v9982, %v9990
    %v10046 = vcombine.high %v9982, %v9990
    %v10048 = vunpack.c.l.s4 1983009808
    %v10049 = vunpack.c.0.s8 %v10048
    %v10050 = vlaneseq
    %v10051 = vshrl.u32 %v10050, 7
    %v10052 = vsub.s32 %v10049, %v10051
    %v10053 = vrot.slane %v10045, %v10052
    %v10055 = vunpack.c.l.s4 1983009808
    %v10056 = vunpack.c.0.s8 %v10055
    %v10057 = vlaneseq
    %v10058 = vshrl.u32 %v10057, 7
    %v10059 = vsub.s32 %v10056, %v10058
    %v10060 = vrot.slane %v10046, %v10059
    %v10061 = vcombine.low %v9986, %v9994
    %v10062 = vcombine.high %v9986, %v9994
    %v10064 = vunpack.c.l.s4 1983009808
    %v10065 = vunpack.c.0.s8 %v10064
    %v10066 = vlaneseq
    %v10067 = vshrl.u32 %v10066, 7
    %v10068 = vsub.s32 %v10065, %v10067
    %v10069 = vrot.slane %v10061, %v10068
    %v10071 = vunpack.c.l.s4 1983009808
    %v10072 = vunpack.c.0.s8 %v10071
    %v10073 = vlaneseq
    %v10074 = vshrl.u32 %v10073, 7
    %v10075 = vsub.s32 %v10072, %v10074
    %v10076 = vrot.slane %v10062, %v10075
    %v10077 = vcombine.low %v10021, %v10037
    %v10078 = vcombine.high %v10021, %v10037
    %v10080 = vunpack.c.l.s4 1934713408
    %v10081 = vunpack.c.0.s8 %v10080
    %v10082 = vlaneseq
    %v10083 = vshrl.u32 %v10082, 7
    %v10084 = vsub.s32 %v10081, %v10083
    %v10085 = vrot.slane %v10077, %v10084
    %v10087 = vunpack.c.l.s4 1934713408
    %v10088 = vunpack.c.0.s8 %v10087
    %v10089 = vlaneseq
    %v10090 = vshrl.u32 %v10089, 7
    %v10091 = vsub.s32 %v10088, %v10090
    %v10092 = vrot.slane %v10078, %v10091
    %v10093 = vcombine.low %v10028, %v10044
    %v10094 = vcombine.high %v10028, %v10044
    %v10096 = vunpack.c.l.s4 1934713408
    %v10097 = vunpack.c.0.s8 %v10096
    %v10098 = vlaneseq
    %v10099 = vshrl.u32 %v10098, 7
    %v10100 = vsub.s32 %v10097, %v10099
    %v10101 = vrot.slane %v10093, %v10100
    %v10103 = vunpack.c.l.s4 1934713408
    %v10104 = vunpack.c.0.s8 %v10103
    %v10105 = vlaneseq
    %v10106 = vshrl.u32 %v10105, 7
    %v10107 = vsub.s32 %v10104, %v10106
    %v10108 = vrot.slane %v10094, %v10107
    %v10109 = vcombine.low %v10053, %v10069
    %v10110 = vcombine.high %v10053, %v10069
    %v10112 = vunpack.c.l.s4 1934713408
    %v10113 = vunpack.c.0.s8 %v10112
    %v10114 = vlaneseq
    %v10115 = vshrl.u32 %v10114, 7
    %v10116 = vsub.s32 %v10113, %v10115
    %v10117 = vrot.slane %v10109, %v10116
    %v10119 = vunpack.c.l.s4 1934713408
    %v10120 = vunpack.c.0.s8 %v10119
    %v10121 = vlaneseq
    %v10122 = vshrl.u32 %v10121, 7
    %v10123 = vsub.s32 %v10120, %v10122
    %v10124 = vrot.slane %v10110, %v10123
    %v10125 = vcombine.low %v10060, %v10076
    %v10126 = vcombine.high %v10060, %v10076
    %v10128 = vunpack.c.l.s4 1934713408
    %v10129 = vunpack.c.0.s8 %v10128
    %v10130 = vlaneseq
    %v10131 = vshrl.u32 %v10130, 7
    %v10132 = vsub.s32 %v10129, %v10131
    %v10133 = vrot.slane %v10125, %v10132
    %v10135 = vunpack.c.l.s4 1934713408
    %v10136 = vunpack.c.0.s8 %v10135
    %v10137 = vlaneseq
    %v10138 = vshrl.u32 %v10137, 7
    %v10139 = vsub.s32 %v10136, %v10138
    %v10140 = vrot.slane %v10126, %v10139
    %v10141 = vcombine.low %v10085, %v10117
    %v10142 = vcombine.high %v10085, %v10117
    %v10143 = vcombine.low %v10092, %v10124
    %v10144 = vcombine.high %v10092, %v10124
    %v10145 = vcombine.low %v10101, %v10133
    %v10146 = vcombine.high %v10101, %v10133
    %v10147 = vcombine.low %v10108, %v10140
    %v10148 = vcombine.high %v10108, %v10140
    %v10149 = vcombine.low %v9968, %v9976
    %v10150 = vcombine.high %v9968, %v9976
    %v10152 = vunpack.c.l.s4 1983009808
    %v10153 = vunpack.c.0.s8 %v10152
    %v10154 = vlaneseq
    %v10155 = vshrl.u32 %v10154, 7
    %v10156 = vsub.s32 %v10153, %v10155
    %v10157 = vrot.slane %v10149, %v10156
    %v10159 = vunpack.c.l.s4 1983009808
    %v10160 = vunpack.c.0.s8 %v10159
    %v10161 = vlaneseq
    %v10162 = vshrl.u32 %v10161, 7
    %v10163 = vsub.s32 %v10160, %v10162
    %v10164 = vrot.slane %v10150, %v10163
    %v10165 = vcombine.low %v9972, %v9980
    %v10166 = vcombine.high %v9972, %v9980
    %v10168 = vunpack.c.l.s4 1983009808
    %v10169 = vunpack.c.0.s8 %v10168
    %v10170 = vlaneseq
    %v10171 = vshrl.u32 %v10170, 7
    %v10172 = vsub.s32 %v10169, %v10171
    %v10173 = vrot.slane %v10165, %v10172
    %v10175 = vunpack.c.l.s4 1983009808
    %v10176 = vunpack.c.0.s8 %v10175
    %v10177 = vlaneseq
    %v10178 = vshrl.u32 %v10177, 7
    %v10179 = vsub.s32 %v10176, %v10178
    %v10180 = vrot.slane %v10166, %v10179
    %v10181 = vcombine.low %v9984, %v9992
    %v10182 = vcombine.high %v9984, %v9992
    %v10184 = vunpack.c.l.s4 1983009808
    %v10185 = vunpack.c.0.s8 %v10184
    %v10186 = vlaneseq
    %v10187 = vshrl.u32 %v10186, 7
    %v10188 = vsub.s32 %v10185, %v10187
    %v10189 = vrot.slane %v10181, %v10188
    %v10191 = vunpack.c.l.s4 1983009808
    %v10192 = vunpack.c.0.s8 %v10191
    %v10193 = vlaneseq
    %v10194 = vshrl.u32 %v10193, 7
    %v10195 = vsub.s32 %v10192, %v10194
    %v10196 = vrot.slane %v10182, %v10195
    %v10197 = vcombine.low %v9988, %v9996
    %v10198 = vcombine.high %v9988, %v9996
    %v10200 = vunpack.c.l.s4 1983009808
    %v10201 = vunpack.c.0.s8 %v10200
    %v10202 = vlaneseq
    %v10203 = vshrl.u32 %v10202, 7
    %v10204 = vsub.s32 %v10201, %v10203
    %v10205 = vrot.slane %v10197, %v10204
    %v10207 = vunpack.c.l.s4 1983009808
    %v10208 = vunpack.c.0.s8 %v10207
    %v10209 = vlaneseq
    %v10210 = vshrl.u32 %v10209, 7
    %v10211 = vsub.s32 %v10208, %v10210
    %v10212 = vrot.slane %v10198, %v10211
    %v10213 = vcombine.low %v10157, %v10173
    %v10214 = vcombine.high %v10157, %v10173
    %v10216 = vunpack.c.l.s4 1934713408
    %v10217 = vunpack.c.0.s8 %v10216
    %v10218 = vlaneseq
    %v10219 = vshrl.u32 %v10218, 7
    %v10220 = vsub.s32 %v10217, %v10219
    %v10221 = vrot.slane %v10213, %v10220
    %v10223 = vunpack.c.l.s4 1934713408
    %v10224 = vunpack.c.0.s8 %v10223
    %v10225 = vlaneseq
    %v10226 = vshrl.u32 %v10225, 7
    %v10227 = vsub.s32 %v10224, %v10226
    %v10228 = vrot.slane %v10214, %v10227
    %v10229 = vcombine.low %v10164, %v10180
    %v10230 = vcombine.high %v10164, %v10180
    %v10232 = vunpack.c.l.s4 1934713408
    %v10233 = vunpack.c.0.s8 %v10232
    %v10234 = vlaneseq
    %v10235 = vshrl.u32 %v10234, 7
    %v10236 = vsub.s32 %v10233, %v10235
    %v10237 = vrot.slane %v10229, %v10236
    %v10239 = vunpack.c.l.s4 1934713408
    %v10240 = vunpack.c.0.s8 %v10239
    %v10241 = vlaneseq
    %v10242 = vshrl.u32 %v10241, 7
    %v10243 = vsub.s32 %v10240, %v10242
    %v10244 = vrot.slane %v10230, %v10243
    %v10245 = vcombine.low %v10189, %v10205
    %v10246 = vcombine.high %v10189, %v10205
    %v10248 = vunpack.c.l.s4 1934713408
    %v10249 = vunpack.c.0.s8 %v10248
    %v10250 = vlaneseq
    %v10251 = vshrl.u32 %v10250, 7
    %v10252 = vsub.s32 %v10249, %v10251
    %v10253 = vrot.slane %v10245, %v10252
    %v10255 = vunpack.c.l.s4 1934713408
    %v10256 = vunpack.c.0.s8 %v10255
    %v10257 = vlaneseq
    %v10258 = vshrl.u32 %v10257, 7
    %v10259 = vsub.s32 %v10256, %v10258
    %v10260 = vrot.slane %v10246, %v10259
    %v10261 = vcombine.low %v10196, %v10212
    %v10262 = vcombine.high %v10196, %v10212
    %v10264 = vunpack.c.l.s4 1934713408
    %v10265 = vunpack.c.0.s8 %v10264
    %v10266 = vlaneseq
    %v10267 = vshrl.u32 %v10266, 7
    %v10268 = vsub.s32 %v10265, %v10267
    %v10269 = vrot.slane %v10261, %v10268
    %v10271 = vunpack.c.l.s4 1934713408
    %v10272 = vunpack.c.0.s8 %v10271
    %v10273 = vlaneseq
    %v10274 = vshrl.u32 %v10273, 7
    %v10275 = vsub.s32 %v10272, %v10274
    %v10276 = vrot.slane %v10262, %v10275
    %v10277 = vcombine.low %v10221, %v10253
    %v10278 = vcombine.high %v10221, %v10253
    %v10279 = vcombine.low %v10228, %v10260
    %v10280 = vcombine.high %v10228, %v10260
    %v10281 = vcombine.low %v10237, %v10269
    %v10282 = vcombine.high %v10237, %v10269
    %v10283 = vcombine.low %v10244, %v10276
    %v10284 = vcombine.high %v10244, %v10276
    %10286 = vrot.lane.b32.xlu0 %v10142, 16
    %v10287 = vpop.permute.xlu0 %10286
    %10290 = vrot.lane.b32.xlu0 %v10143, 32
    %v10291 = vpop.permute.xlu0 %10290
    %10294 = vrot.lane.b32.xlu0 %v10144, 48
    %v10295 = vpop.permute.xlu0 %10294
    %10298 = vrot.lane.b32.xlu0 %v10145, 64
    %v10299 = vpop.permute.xlu0 %10298
    %10302 = vrot.lane.b32.xlu0 %v10146, 80
    %v10303 = vpop.permute.xlu0 %10302
    %10306 = vrot.lane.b32.xlu0 %v10147, 96
    %v10307 = vpop.permute.xlu0 %10306
    %10310 = vrot.lane.b32.xlu0 %v10148, 112
    %v10311 = vpop.permute.xlu0 %10310
    %10314 = vrot.lane.b32.xlu0 %v10278, 16
    %v10315 = vpop.permute.xlu0 %10314
    %10318 = vrot.lane.b32.xlu0 %v10279, 32
    %v10319 = vpop.permute.xlu0 %10318
    %10322 = vrot.lane.b32.xlu0 %v10280, 48
    %v10323 = vpop.permute.xlu0 %10322
    %10326 = vrot.lane.b32.xlu0 %v10281, 64
    %v10327 = vpop.permute.xlu0 %10326
    %10330 = vrot.lane.b32.xlu0 %v10282, 80
    %v10331 = vpop.permute.xlu0 %10330
    %10334 = vrot.lane.b32.xlu0 %v10283, 96
    %v10335 = vpop.permute.xlu0 %10334
    %10338 = vrot.lane.b32.xlu0 %v10284, 112
    %v10339 = vpop.permute.xlu0 %10338
    %v10341 = vsel %vm372, %v10141, %v10287
    %v10342 = vsel %vm374, %v10341, %v10291
    %v10343 = vsel %vm376, %v10342, %v10295
    %v10344 = vsel %vm378, %v10343, %v10299
    %v10345 = vsel %vm380, %v10344, %v10303
    %v10346 = vsel %vm382, %v10345, %v10307
    %v10347 = vsel %vm384, %v10346, %v10311
    %v10348 = vsel %vm372, %v10277, %v10315
    %v10349 = vsel %vm374, %v10348, %v10319
    %v10350 = vsel %vm376, %v10349, %v10323
    %v10351 = vsel %vm378, %v10350, %v10327
    %v10352 = vsel %vm380, %v10351, %v10331
    %v10353 = vsel %vm382, %v10352, %v10335
    %v10354 = vsel %vm384, %v10353, %v10339
    %10355 = vst [vmem:[#allocation5 + $0xb0] sm:$0xff] %v10347
    %10356 = vst [vmem:[#allocation5 + $0xb8] sm:$0xff] %v10354
    %v10357 = vld [vmem:[#allocation3 + $0x2] sm:$0xff]
    %v10358 = vld [vmem:[#allocation3 + $0xa] sm:$0xff]
    %v10359 = vld [vmem:[#allocation3 + $0x1a] sm:$0xff]
    %v10360 = vld [vmem:[#allocation3 + $0x22] sm:$0xff]
    %v10361 = vld [vmem:[#allocation3 + $0x32] sm:$0xff]
    %v10362 = vld [vmem:[#allocation3 + $0x3a] sm:$0xff]
    %v10363 = vld [vmem:[#allocation3 + $0x4a] sm:$0xff]
    %v10364 = vld [vmem:[#allocation3 + $0x52] sm:$0xff]
    %v10365 = vld [vmem:[#allocation3 + $0x62] sm:$0xff]
    %v10366 = vld [vmem:[#allocation3 + $0x6a] sm:$0xff]
    %v10367 = vld [vmem:[#allocation3 + $0x7a] sm:$0xff]
    %v10368 = vld [vmem:[#allocation3 + $0x82] sm:$0xff]
    %v10369 = vld [vmem:[#allocation3 + $0x92] sm:$0xff]
    %v10370 = vld [vmem:[#allocation3 + $0x9a] sm:$0xff]
    %v10371 = vld [vmem:[#allocation3 + $0xaa] sm:$0xff]
    %v10372 = vld [vmem:[#allocation3 + $0xb2] sm:$0xff]
    %v10373 = vcombine.low %v10357, %v10361
    %v10374 = vcombine.high %v10357, %v10361
    %v10376 = vunpack.c.l.s4 1983009808
    %v10377 = vunpack.c.0.s8 %v10376
    %v10378 = vlaneseq
    %v10379 = vshrl.u32 %v10378, 7
    %v10380 = vsub.s32 %v10377, %v10379
    %v10381 = vrot.slane %v10373, %v10380
    %v10383 = vunpack.c.l.s4 1983009808
    %v10384 = vunpack.c.0.s8 %v10383
    %v10385 = vlaneseq
    %v10386 = vshrl.u32 %v10385, 7
    %v10387 = vsub.s32 %v10384, %v10386
    %v10388 = vrot.slane %v10374, %v10387
    %v10389 = vcombine.low %v10359, %v10363
    %v10390 = vcombine.high %v10359, %v10363
    %v10392 = vunpack.c.l.s4 1983009808
    %v10393 = vunpack.c.0.s8 %v10392
    %v10394 = vlaneseq
    %v10395 = vshrl.u32 %v10394, 7
    %v10396 = vsub.s32 %v10393, %v10395
    %v10397 = vrot.slane %v10389, %v10396
    %v10399 = vunpack.c.l.s4 1983009808
    %v10400 = vunpack.c.0.s8 %v10399
    %v10401 = vlaneseq
    %v10402 = vshrl.u32 %v10401, 7
    %v10403 = vsub.s32 %v10400, %v10402
    %v10404 = vrot.slane %v10390, %v10403
    %v10405 = vcombine.low %v10365, %v10369
    %v10406 = vcombine.high %v10365, %v10369
    %v10408 = vunpack.c.l.s4 1983009808
    %v10409 = vunpack.c.0.s8 %v10408
    %v10410 = vlaneseq
    %v10411 = vshrl.u32 %v10410, 7
    %v10412 = vsub.s32 %v10409, %v10411
    %v10413 = vrot.slane %v10405, %v10412
    %v10415 = vunpack.c.l.s4 1983009808
    %v10416 = vunpack.c.0.s8 %v10415
    %v10417 = vlaneseq
    %v10418 = vshrl.u32 %v10417, 7
    %v10419 = vsub.s32 %v10416, %v10418
    %v10420 = vrot.slane %v10406, %v10419
    %v10421 = vcombine.low %v10367, %v10371
    %v10422 = vcombine.high %v10367, %v10371
    %v10424 = vunpack.c.l.s4 1983009808
    %v10425 = vunpack.c.0.s8 %v10424
    %v10426 = vlaneseq
    %v10427 = vshrl.u32 %v10426, 7
    %v10428 = vsub.s32 %v10425, %v10427
    %v10429 = vrot.slane %v10421, %v10428
    %v10431 = vunpack.c.l.s4 1983009808
    %v10432 = vunpack.c.0.s8 %v10431
    %v10433 = vlaneseq
    %v10434 = vshrl.u32 %v10433, 7
    %v10435 = vsub.s32 %v10432, %v10434
    %v10436 = vrot.slane %v10422, %v10435
    %v10437 = vcombine.low %v10381, %v10397
    %v10438 = vcombine.high %v10381, %v10397
    %v10440 = vunpack.c.l.s4 1934713408
    %v10441 = vunpack.c.0.s8 %v10440
    %v10442 = vlaneseq
    %v10443 = vshrl.u32 %v10442, 7
    %v10444 = vsub.s32 %v10441, %v10443
    %v10445 = vrot.slane %v10437, %v10444
    %v10447 = vunpack.c.l.s4 1934713408
    %v10448 = vunpack.c.0.s8 %v10447
    %v10449 = vlaneseq
    %v10450 = vshrl.u32 %v10449, 7
    %v10451 = vsub.s32 %v10448, %v10450
    %v10452 = vrot.slane %v10438, %v10451
    %v10453 = vcombine.low %v10388, %v10404
    %v10454 = vcombine.high %v10388, %v10404
    %v10456 = vunpack.c.l.s4 1934713408
    %v10457 = vunpack.c.0.s8 %v10456
    %v10458 = vlaneseq
    %v10459 = vshrl.u32 %v10458, 7
    %v10460 = vsub.s32 %v10457, %v10459
    %v10461 = vrot.slane %v10453, %v10460
    %v10463 = vunpack.c.l.s4 1934713408
    %v10464 = vunpack.c.0.s8 %v10463
    %v10465 = vlaneseq
    %v10466 = vshrl.u32 %v10465, 7
    %v10467 = vsub.s32 %v10464, %v10466
    %v10468 = vrot.slane %v10454, %v10467
    %v10469 = vcombine.low %v10413, %v10429
    %v10470 = vcombine.high %v10413, %v10429
    %v10472 = vunpack.c.l.s4 1934713408
    %v10473 = vunpack.c.0.s8 %v10472
    %v10474 = vlaneseq
    %v10475 = vshrl.u32 %v10474, 7
    %v10476 = vsub.s32 %v10473, %v10475
    %v10477 = vrot.slane %v10469, %v10476
    %v10479 = vunpack.c.l.s4 1934713408
    %v10480 = vunpack.c.0.s8 %v10479
    %v10481 = vlaneseq
    %v10482 = vshrl.u32 %v10481, 7
    %v10483 = vsub.s32 %v10480, %v10482
    %v10484 = vrot.slane %v10470, %v10483
    %v10485 = vcombine.low %v10420, %v10436
    %v10486 = vcombine.high %v10420, %v10436
    %v10488 = vunpack.c.l.s4 1934713408
    %v10489 = vunpack.c.0.s8 %v10488
    %v10490 = vlaneseq
    %v10491 = vshrl.u32 %v10490, 7
    %v10492 = vsub.s32 %v10489, %v10491
    %v10493 = vrot.slane %v10485, %v10492
    %v10495 = vunpack.c.l.s4 1934713408
    %v10496 = vunpack.c.0.s8 %v10495
    %v10497 = vlaneseq
    %v10498 = vshrl.u32 %v10497, 7
    %v10499 = vsub.s32 %v10496, %v10498
    %v10500 = vrot.slane %v10486, %v10499
    %v10501 = vcombine.low %v10445, %v10477
    %v10502 = vcombine.high %v10445, %v10477
    %v10503 = vcombine.low %v10452, %v10484
    %v10504 = vcombine.high %v10452, %v10484
    %v10505 = vcombine.low %v10461, %v10493
    %v10506 = vcombine.high %v10461, %v10493
    %v10507 = vcombine.low %v10468, %v10500
    %v10508 = vcombine.high %v10468, %v10500
    %v10509 = vcombine.low %v10358, %v10362
    %v10510 = vcombine.high %v10358, %v10362
    %v10512 = vunpack.c.l.s4 1983009808
    %v10513 = vunpack.c.0.s8 %v10512
    %v10514 = vlaneseq
    %v10515 = vshrl.u32 %v10514, 7
    %v10516 = vsub.s32 %v10513, %v10515
    %v10517 = vrot.slane %v10509, %v10516
    %v10519 = vunpack.c.l.s4 1983009808
    %v10520 = vunpack.c.0.s8 %v10519
    %v10521 = vlaneseq
    %v10522 = vshrl.u32 %v10521, 7
    %v10523 = vsub.s32 %v10520, %v10522
    %v10524 = vrot.slane %v10510, %v10523
    %v10525 = vcombine.low %v10360, %v10364
    %v10526 = vcombine.high %v10360, %v10364
    %v10528 = vunpack.c.l.s4 1983009808
    %v10529 = vunpack.c.0.s8 %v10528
    %v10530 = vlaneseq
    %v10531 = vshrl.u32 %v10530, 7
    %v10532 = vsub.s32 %v10529, %v10531
    %v10533 = vrot.slane %v10525, %v10532
    %v10535 = vunpack.c.l.s4 1983009808
    %v10536 = vunpack.c.0.s8 %v10535
    %v10537 = vlaneseq
    %v10538 = vshrl.u32 %v10537, 7
    %v10539 = vsub.s32 %v10536, %v10538
    %v10540 = vrot.slane %v10526, %v10539
    %v10541 = vcombine.low %v10366, %v10370
    %v10542 = vcombine.high %v10366, %v10370
    %v10544 = vunpack.c.l.s4 1983009808
    %v10545 = vunpack.c.0.s8 %v10544
    %v10546 = vlaneseq
    %v10547 = vshrl.u32 %v10546, 7
    %v10548 = vsub.s32 %v10545, %v10547
    %v10549 = vrot.slane %v10541, %v10548
    %v10551 = vunpack.c.l.s4 1983009808
    %v10552 = vunpack.c.0.s8 %v10551
    %v10553 = vlaneseq
    %v10554 = vshrl.u32 %v10553, 7
    %v10555 = vsub.s32 %v10552, %v10554
    %v10556 = vrot.slane %v10542, %v10555
    %v10557 = vcombine.low %v10368, %v10372
    %v10558 = vcombine.high %v10368, %v10372
    %v10560 = vunpack.c.l.s4 1983009808
    %v10561 = vunpack.c.0.s8 %v10560
    %v10562 = vlaneseq
    %v10563 = vshrl.u32 %v10562, 7
    %v10564 = vsub.s32 %v10561, %v10563
    %v10565 = vrot.slane %v10557, %v10564
    %v10567 = vunpack.c.l.s4 1983009808
    %v10568 = vunpack.c.0.s8 %v10567
    %v10569 = vlaneseq
    %v10570 = vshrl.u32 %v10569, 7
    %v10571 = vsub.s32 %v10568, %v10570
    %v10572 = vrot.slane %v10558, %v10571
    %v10573 = vcombine.low %v10517, %v10533
    %v10574 = vcombine.high %v10517, %v10533
    %v10576 = vunpack.c.l.s4 1934713408
    %v10577 = vunpack.c.0.s8 %v10576
    %v10578 = vlaneseq
    %v10579 = vshrl.u32 %v10578, 7
    %v10580 = vsub.s32 %v10577, %v10579
    %v10581 = vrot.slane %v10573, %v10580
    %v10583 = vunpack.c.l.s4 1934713408
    %v10584 = vunpack.c.0.s8 %v10583
    %v10585 = vlaneseq
    %v10586 = vshrl.u32 %v10585, 7
    %v10587 = vsub.s32 %v10584, %v10586
    %v10588 = vrot.slane %v10574, %v10587
    %v10589 = vcombine.low %v10524, %v10540
    %v10590 = vcombine.high %v10524, %v10540
    %v10592 = vunpack.c.l.s4 1934713408
    %v10593 = vunpack.c.0.s8 %v10592
    %v10594 = vlaneseq
    %v10595 = vshrl.u32 %v10594, 7
    %v10596 = vsub.s32 %v10593, %v10595
    %v10597 = vrot.slane %v10589, %v10596
    %v10599 = vunpack.c.l.s4 1934713408
    %v10600 = vunpack.c.0.s8 %v10599
    %v10601 = vlaneseq
    %v10602 = vshrl.u32 %v10601, 7
    %v10603 = vsub.s32 %v10600, %v10602
    %v10604 = vrot.slane %v10590, %v10603
    %v10605 = vcombine.low %v10549, %v10565
    %v10606 = vcombine.high %v10549, %v10565
    %v10608 = vunpack.c.l.s4 1934713408
    %v10609 = vunpack.c.0.s8 %v10608
    %v10610 = vlaneseq
    %v10611 = vshrl.u32 %v10610, 7
    %v10612 = vsub.s32 %v10609, %v10611
    %v10613 = vrot.slane %v10605, %v10612
    %v10615 = vunpack.c.l.s4 1934713408
    %v10616 = vunpack.c.0.s8 %v10615
    %v10617 = vlaneseq
    %v10618 = vshrl.u32 %v10617, 7
    %v10619 = vsub.s32 %v10616, %v10618
    %v10620 = vrot.slane %v10606, %v10619
    %v10621 = vcombine.low %v10556, %v10572
    %v10622 = vcombine.high %v10556, %v10572
    %v10624 = vunpack.c.l.s4 1934713408
    %v10625 = vunpack.c.0.s8 %v10624
    %v10626 = vlaneseq
    %v10627 = vshrl.u32 %v10626, 7
    %v10628 = vsub.s32 %v10625, %v10627
    %v10629 = vrot.slane %v10621, %v10628
    %v10631 = vunpack.c.l.s4 1934713408
    %v10632 = vunpack.c.0.s8 %v10631
    %v10633 = vlaneseq
    %v10634 = vshrl.u32 %v10633, 7
    %v10635 = vsub.s32 %v10632, %v10634
    %v10636 = vrot.slane %v10622, %v10635
    %v10637 = vcombine.low %v10581, %v10613
    %v10638 = vcombine.high %v10581, %v10613
    %v10639 = vcombine.low %v10588, %v10620
    %v10640 = vcombine.high %v10588, %v10620
    %v10641 = vcombine.low %v10597, %v10629
    %v10642 = vcombine.high %v10597, %v10629
    %v10643 = vcombine.low %v10604, %v10636
    %v10644 = vcombine.high %v10604, %v10636
    %10646 = vrot.lane.b32.xlu0 %v10502, 16
    %v10647 = vpop.permute.xlu0 %10646
    %10650 = vrot.lane.b32.xlu0 %v10503, 32
    %v10651 = vpop.permute.xlu0 %10650
    %10654 = vrot.lane.b32.xlu0 %v10504, 48
    %v10655 = vpop.permute.xlu0 %10654
    %10658 = vrot.lane.b32.xlu0 %v10505, 64
    %v10659 = vpop.permute.xlu0 %10658
    %10662 = vrot.lane.b32.xlu0 %v10506, 80
    %v10663 = vpop.permute.xlu0 %10662
    %10666 = vrot.lane.b32.xlu0 %v10507, 96
    %v10667 = vpop.permute.xlu0 %10666
    %10670 = vrot.lane.b32.xlu0 %v10508, 112
    %v10671 = vpop.permute.xlu0 %10670
    %10674 = vrot.lane.b32.xlu0 %v10638, 16
    %v10675 = vpop.permute.xlu0 %10674
    %10678 = vrot.lane.b32.xlu0 %v10639, 32
    %v10679 = vpop.permute.xlu0 %10678
    %10682 = vrot.lane.b32.xlu0 %v10640, 48
    %v10683 = vpop.permute.xlu0 %10682
    %10686 = vrot.lane.b32.xlu0 %v10641, 64
    %v10687 = vpop.permute.xlu0 %10686
    %10690 = vrot.lane.b32.xlu0 %v10642, 80
    %v10691 = vpop.permute.xlu0 %10690
    %10694 = vrot.lane.b32.xlu0 %v10643, 96
    %v10695 = vpop.permute.xlu0 %10694
    %10698 = vrot.lane.b32.xlu0 %v10644, 112
    %v10699 = vpop.permute.xlu0 %10698
    %v10701 = vsel %vm372, %v10501, %v10647
    %v10702 = vsel %vm374, %v10701, %v10651
    %v10703 = vsel %vm376, %v10702, %v10655
    %v10704 = vsel %vm378, %v10703, %v10659
    %v10705 = vsel %vm380, %v10704, %v10663
    %v10706 = vsel %vm382, %v10705, %v10667
    %v10707 = vsel %vm384, %v10706, %v10671
    %v10708 = vsel %vm372, %v10637, %v10675
    %v10709 = vsel %vm374, %v10708, %v10679
    %v10710 = vsel %vm376, %v10709, %v10683
    %v10711 = vsel %vm378, %v10710, %v10687
    %v10712 = vsel %vm380, %v10711, %v10691
    %v10713 = vsel %vm382, %v10712, %v10695
    %v10714 = vsel %vm384, %v10713, %v10699
    %10715 = vst [vmem:[#allocation5 + $0xc0] sm:$0xff] %v10707
    %10716 = vst [vmem:[#allocation5 + $0xc8] sm:$0xff] %v10714
    %v10717 = vld [vmem:[%s5508 + $0x2] sm:$0xff]
    %v10718 = vld [vmem:[%s5508 + $0xa] sm:$0xff]
    %v10719 = vld [vmem:[%s5508 + $0x1a] sm:$0xff]
    %v10720 = vld [vmem:[%s5508 + $0x22] sm:$0xff]
    %v10721 = vld [vmem:[%s5508 + $0x32] sm:$0xff]
    %v10722 = vld [vmem:[%s5508 + $0x3a] sm:$0xff]
    %v10723 = vld [vmem:[%s5508 + $0x4a] sm:$0xff]
    %v10724 = vld [vmem:[%s5508 + $0x52] sm:$0xff]
    %v10725 = vld [vmem:[%s5508 + $0x62] sm:$0xff]
    %v10726 = vld [vmem:[%s5508 + $0x6a] sm:$0xff]
    %v10727 = vld [vmem:[%s5508 + $0x7a] sm:$0xff]
    %v10728 = vld [vmem:[%s5508 + $0x82] sm:$0xff]
    %v10729 = vld [vmem:[%s5508 + $0x92] sm:$0xff]
    %v10730 = vld [vmem:[%s5508 + $0x9a] sm:$0xff]
    %v10731 = vld [vmem:[%s5508 + $0xaa] sm:$0xff]
    %v10732 = vld [vmem:[%s5508 + $0xb2] sm:$0xff]
    %v10733 = vcombine.low %v10717, %v10721
    %v10734 = vcombine.high %v10717, %v10721
    %v10736 = vunpack.c.l.s4 1983009808
    %v10737 = vunpack.c.0.s8 %v10736
    %v10738 = vlaneseq
    %v10739 = vshrl.u32 %v10738, 7
    %v10740 = vsub.s32 %v10737, %v10739
    %v10741 = vrot.slane %v10733, %v10740
    %v10743 = vunpack.c.l.s4 1983009808
    %v10744 = vunpack.c.0.s8 %v10743
    %v10745 = vlaneseq
    %v10746 = vshrl.u32 %v10745, 7
    %v10747 = vsub.s32 %v10744, %v10746
    %v10748 = vrot.slane %v10734, %v10747
    %v10749 = vcombine.low %v10719, %v10723
    %v10750 = vcombine.high %v10719, %v10723
    %v10752 = vunpack.c.l.s4 1983009808
    %v10753 = vunpack.c.0.s8 %v10752
    %v10754 = vlaneseq
    %v10755 = vshrl.u32 %v10754, 7
    %v10756 = vsub.s32 %v10753, %v10755
    %v10757 = vrot.slane %v10749, %v10756
    %v10759 = vunpack.c.l.s4 1983009808
    %v10760 = vunpack.c.0.s8 %v10759
    %v10761 = vlaneseq
    %v10762 = vshrl.u32 %v10761, 7
    %v10763 = vsub.s32 %v10760, %v10762
    %v10764 = vrot.slane %v10750, %v10763
    %v10765 = vcombine.low %v10725, %v10729
    %v10766 = vcombine.high %v10725, %v10729
    %v10768 = vunpack.c.l.s4 1983009808
    %v10769 = vunpack.c.0.s8 %v10768
    %v10770 = vlaneseq
    %v10771 = vshrl.u32 %v10770, 7
    %v10772 = vsub.s32 %v10769, %v10771
    %v10773 = vrot.slane %v10765, %v10772
    %v10775 = vunpack.c.l.s4 1983009808
    %v10776 = vunpack.c.0.s8 %v10775
    %v10777 = vlaneseq
    %v10778 = vshrl.u32 %v10777, 7
    %v10779 = vsub.s32 %v10776, %v10778
    %v10780 = vrot.slane %v10766, %v10779
    %v10781 = vcombine.low %v10727, %v10731
    %v10782 = vcombine.high %v10727, %v10731
    %v10784 = vunpack.c.l.s4 1983009808
    %v10785 = vunpack.c.0.s8 %v10784
    %v10786 = vlaneseq
    %v10787 = vshrl.u32 %v10786, 7
    %v10788 = vsub.s32 %v10785, %v10787
    %v10789 = vrot.slane %v10781, %v10788
    %v10791 = vunpack.c.l.s4 1983009808
    %v10792 = vunpack.c.0.s8 %v10791
    %v10793 = vlaneseq
    %v10794 = vshrl.u32 %v10793, 7
    %v10795 = vsub.s32 %v10792, %v10794
    %v10796 = vrot.slane %v10782, %v10795
    %v10797 = vcombine.low %v10741, %v10757
    %v10798 = vcombine.high %v10741, %v10757
    %v10800 = vunpack.c.l.s4 1934713408
    %v10801 = vunpack.c.0.s8 %v10800
    %v10802 = vlaneseq
    %v10803 = vshrl.u32 %v10802, 7
    %v10804 = vsub.s32 %v10801, %v10803
    %v10805 = vrot.slane %v10797, %v10804
    %v10807 = vunpack.c.l.s4 1934713408
    %v10808 = vunpack.c.0.s8 %v10807
    %v10809 = vlaneseq
    %v10810 = vshrl.u32 %v10809, 7
    %v10811 = vsub.s32 %v10808, %v10810
    %v10812 = vrot.slane %v10798, %v10811
    %v10813 = vcombine.low %v10748, %v10764
    %v10814 = vcombine.high %v10748, %v10764
    %v10816 = vunpack.c.l.s4 1934713408
    %v10817 = vunpack.c.0.s8 %v10816
    %v10818 = vlaneseq
    %v10819 = vshrl.u32 %v10818, 7
    %v10820 = vsub.s32 %v10817, %v10819
    %v10821 = vrot.slane %v10813, %v10820
    %v10823 = vunpack.c.l.s4 1934713408
    %v10824 = vunpack.c.0.s8 %v10823
    %v10825 = vlaneseq
    %v10826 = vshrl.u32 %v10825, 7
    %v10827 = vsub.s32 %v10824, %v10826
    %v10828 = vrot.slane %v10814, %v10827
    %v10829 = vcombine.low %v10773, %v10789
    %v10830 = vcombine.high %v10773, %v10789
    %v10832 = vunpack.c.l.s4 1934713408
    %v10833 = vunpack.c.0.s8 %v10832
    %v10834 = vlaneseq
    %v10835 = vshrl.u32 %v10834, 7
    %v10836 = vsub.s32 %v10833, %v10835
    %v10837 = vrot.slane %v10829, %v10836
    %v10839 = vunpack.c.l.s4 1934713408
    %v10840 = vunpack.c.0.s8 %v10839
    %v10841 = vlaneseq
    %v10842 = vshrl.u32 %v10841, 7
    %v10843 = vsub.s32 %v10840, %v10842
    %v10844 = vrot.slane %v10830, %v10843
    %v10845 = vcombine.low %v10780, %v10796
    %v10846 = vcombine.high %v10780, %v10796
    %v10848 = vunpack.c.l.s4 1934713408
    %v10849 = vunpack.c.0.s8 %v10848
    %v10850 = vlaneseq
    %v10851 = vshrl.u32 %v10850, 7
    %v10852 = vsub.s32 %v10849, %v10851
    %v10853 = vrot.slane %v10845, %v10852
    %v10855 = vunpack.c.l.s4 1934713408
    %v10856 = vunpack.c.0.s8 %v10855
    %v10857 = vlaneseq
    %v10858 = vshrl.u32 %v10857, 7
    %v10859 = vsub.s32 %v10856, %v10858
    %v10860 = vrot.slane %v10846, %v10859
    %v10861 = vcombine.low %v10805, %v10837
    %v10862 = vcombine.high %v10805, %v10837
    %v10863 = vcombine.low %v10812, %v10844
    %v10864 = vcombine.high %v10812, %v10844
    %v10865 = vcombine.low %v10821, %v10853
    %v10866 = vcombine.high %v10821, %v10853
    %v10867 = vcombine.low %v10828, %v10860
    %v10868 = vcombine.high %v10828, %v10860
    %v10869 = vcombine.low %v10718, %v10722
    %v10870 = vcombine.high %v10718, %v10722
    %v10872 = vunpack.c.l.s4 1983009808
    %v10873 = vunpack.c.0.s8 %v10872
    %v10874 = vlaneseq
    %v10875 = vshrl.u32 %v10874, 7
    %v10876 = vsub.s32 %v10873, %v10875
    %v10877 = vrot.slane %v10869, %v10876
    %v10879 = vunpack.c.l.s4 1983009808
    %v10880 = vunpack.c.0.s8 %v10879
    %v10881 = vlaneseq
    %v10882 = vshrl.u32 %v10881, 7
    %v10883 = vsub.s32 %v10880, %v10882
    %v10884 = vrot.slane %v10870, %v10883
    %v10885 = vcombine.low %v10720, %v10724
    %v10886 = vcombine.high %v10720, %v10724
    %v10888 = vunpack.c.l.s4 1983009808
    %v10889 = vunpack.c.0.s8 %v10888
    %v10890 = vlaneseq
    %v10891 = vshrl.u32 %v10890, 7
    %v10892 = vsub.s32 %v10889, %v10891
    %v10893 = vrot.slane %v10885, %v10892
    %v10895 = vunpack.c.l.s4 1983009808
    %v10896 = vunpack.c.0.s8 %v10895
    %v10897 = vlaneseq
    %v10898 = vshrl.u32 %v10897, 7
    %v10899 = vsub.s32 %v10896, %v10898
    %v10900 = vrot.slane %v10886, %v10899
    %v10901 = vcombine.low %v10726, %v10730
    %v10902 = vcombine.high %v10726, %v10730
    %v10904 = vunpack.c.l.s4 1983009808
    %v10905 = vunpack.c.0.s8 %v10904
    %v10906 = vlaneseq
    %v10907 = vshrl.u32 %v10906, 7
    %v10908 = vsub.s32 %v10905, %v10907
    %v10909 = vrot.slane %v10901, %v10908
    %v10911 = vunpack.c.l.s4 1983009808
    %v10912 = vunpack.c.0.s8 %v10911
    %v10913 = vlaneseq
    %v10914 = vshrl.u32 %v10913, 7
    %v10915 = vsub.s32 %v10912, %v10914
    %v10916 = vrot.slane %v10902, %v10915
    %v10917 = vcombine.low %v10728, %v10732
    %v10918 = vcombine.high %v10728, %v10732
    %v10920 = vunpack.c.l.s4 1983009808
    %v10921 = vunpack.c.0.s8 %v10920
    %v10922 = vlaneseq
    %v10923 = vshrl.u32 %v10922, 7
    %v10924 = vsub.s32 %v10921, %v10923
    %v10925 = vrot.slane %v10917, %v10924
    %v10927 = vunpack.c.l.s4 1983009808
    %v10928 = vunpack.c.0.s8 %v10927
    %v10929 = vlaneseq
    %v10930 = vshrl.u32 %v10929, 7
    %v10931 = vsub.s32 %v10928, %v10930
    %v10932 = vrot.slane %v10918, %v10931
    %v10933 = vcombine.low %v10877, %v10893
    %v10934 = vcombine.high %v10877, %v10893
    %v10936 = vunpack.c.l.s4 1934713408
    %v10937 = vunpack.c.0.s8 %v10936
    %v10938 = vlaneseq
    %v10939 = vshrl.u32 %v10938, 7
    %v10940 = vsub.s32 %v10937, %v10939
    %v10941 = vrot.slane %v10933, %v10940
    %v10943 = vunpack.c.l.s4 1934713408
    %v10944 = vunpack.c.0.s8 %v10943
    %v10945 = vlaneseq
    %v10946 = vshrl.u32 %v10945, 7
    %v10947 = vsub.s32 %v10944, %v10946
    %v10948 = vrot.slane %v10934, %v10947
    %v10949 = vcombine.low %v10884, %v10900
    %v10950 = vcombine.high %v10884, %v10900
    %v10952 = vunpack.c.l.s4 1934713408
    %v10953 = vunpack.c.0.s8 %v10952
    %v10954 = vlaneseq
    %v10955 = vshrl.u32 %v10954, 7
    %v10956 = vsub.s32 %v10953, %v10955
    %v10957 = vrot.slane %v10949, %v10956
    %v10959 = vunpack.c.l.s4 1934713408
    %v10960 = vunpack.c.0.s8 %v10959
    %v10961 = vlaneseq
    %v10962 = vshrl.u32 %v10961, 7
    %v10963 = vsub.s32 %v10960, %v10962
    %v10964 = vrot.slane %v10950, %v10963
    %v10965 = vcombine.low %v10909, %v10925
    %v10966 = vcombine.high %v10909, %v10925
    %v10968 = vunpack.c.l.s4 1934713408
    %v10969 = vunpack.c.0.s8 %v10968
    %v10970 = vlaneseq
    %v10971 = vshrl.u32 %v10970, 7
    %v10972 = vsub.s32 %v10969, %v10971
    %v10973 = vrot.slane %v10965, %v10972
    %v10975 = vunpack.c.l.s4 1934713408
    %v10976 = vunpack.c.0.s8 %v10975
    %v10977 = vlaneseq
    %v10978 = vshrl.u32 %v10977, 7
    %v10979 = vsub.s32 %v10976, %v10978
    %v10980 = vrot.slane %v10966, %v10979
    %v10981 = vcombine.low %v10916, %v10932
    %v10982 = vcombine.high %v10916, %v10932
    %v10984 = vunpack.c.l.s4 1934713408
    %v10985 = vunpack.c.0.s8 %v10984
    %v10986 = vlaneseq
    %v10987 = vshrl.u32 %v10986, 7
    %v10988 = vsub.s32 %v10985, %v10987
    %v10989 = vrot.slane %v10981, %v10988
    %v10991 = vunpack.c.l.s4 1934713408
    %v10992 = vunpack.c.0.s8 %v10991
    %v10993 = vlaneseq
    %v10994 = vshrl.u32 %v10993, 7
    %v10995 = vsub.s32 %v10992, %v10994
    %v10996 = vrot.slane %v10982, %v10995
    %v10997 = vcombine.low %v10941, %v10973
    %v10998 = vcombine.high %v10941, %v10973
    %v10999 = vcombine.low %v10948, %v10980
    %v11000 = vcombine.high %v10948, %v10980
    %v11001 = vcombine.low %v10957, %v10989
    %v11002 = vcombine.high %v10957, %v10989
    %v11003 = vcombine.low %v10964, %v10996
    %v11004 = vcombine.high %v10964, %v10996
    %11006 = vrot.lane.b32.xlu0 %v10862, 16
    %v11007 = vpop.permute.xlu0 %11006
    %11010 = vrot.lane.b32.xlu0 %v10863, 32
    %v11011 = vpop.permute.xlu0 %11010
    %11014 = vrot.lane.b32.xlu0 %v10864, 48
    %v11015 = vpop.permute.xlu0 %11014
    %11018 = vrot.lane.b32.xlu0 %v10865, 64
    %v11019 = vpop.permute.xlu0 %11018
    %11022 = vrot.lane.b32.xlu0 %v10866, 80
    %v11023 = vpop.permute.xlu0 %11022
    %11026 = vrot.lane.b32.xlu0 %v10867, 96
    %v11027 = vpop.permute.xlu0 %11026
    %11030 = vrot.lane.b32.xlu0 %v10868, 112
    %v11031 = vpop.permute.xlu0 %11030
    %11034 = vrot.lane.b32.xlu0 %v10998, 16
    %v11035 = vpop.permute.xlu0 %11034
    %11038 = vrot.lane.b32.xlu0 %v10999, 32
    %v11039 = vpop.permute.xlu0 %11038
    %11042 = vrot.lane.b32.xlu0 %v11000, 48
    %v11043 = vpop.permute.xlu0 %11042
    %11046 = vrot.lane.b32.xlu0 %v11001, 64
    %v11047 = vpop.permute.xlu0 %11046
    %11050 = vrot.lane.b32.xlu0 %v11002, 80
    %v11051 = vpop.permute.xlu0 %11050
    %11054 = vrot.lane.b32.xlu0 %v11003, 96
    %v11055 = vpop.permute.xlu0 %11054
    %11058 = vrot.lane.b32.xlu0 %v11004, 112
    %v11059 = vpop.permute.xlu0 %11058
    %v11061 = vsel %vm372, %v10861, %v11007
    %v11062 = vsel %vm374, %v11061, %v11011
    %v11063 = vsel %vm376, %v11062, %v11015
    %v11064 = vsel %vm378, %v11063, %v11019
    %v11065 = vsel %vm380, %v11064, %v11023
    %v11066 = vsel %vm382, %v11065, %v11027
    %v11067 = vsel %vm384, %v11066, %v11031
    %v11068 = vsel %vm372, %v10997, %v11035
    %v11069 = vsel %vm374, %v11068, %v11039
    %v11070 = vsel %vm376, %v11069, %v11043
    %v11071 = vsel %vm378, %v11070, %v11047
    %v11072 = vsel %vm380, %v11071, %v11051
    %v11073 = vsel %vm382, %v11072, %v11055
    %v11074 = vsel %vm384, %v11073, %v11059
    %11075 = vst [vmem:[#allocation5 + $0xd0] sm:$0xff] %v11067
    %11076 = vst [vmem:[#allocation5 + $0xd8] sm:$0xff] %v11074
    %v11077 = vld [vmem:[#allocation3 + $0x2] sm:$0xff]
    %v11078 = vld [vmem:[#allocation3 + $0xa] sm:$0xff]
    %v11079 = vld [vmem:[#allocation3 + $0x1a] sm:$0xff]
    %v11080 = vld [vmem:[#allocation3 + $0x22] sm:$0xff]
    %v11081 = vld [vmem:[#allocation3 + $0x32] sm:$0xff]
    %v11082 = vld [vmem:[#allocation3 + $0x3a] sm:$0xff]
    %v11083 = vld [vmem:[#allocation3 + $0x4a] sm:$0xff]
    %v11084 = vld [vmem:[#allocation3 + $0x52] sm:$0xff]
    %v11085 = vld [vmem:[#allocation3 + $0x62] sm:$0xff]
    %v11086 = vld [vmem:[#allocation3 + $0x6a] sm:$0xff]
    %v11087 = vld [vmem:[#allocation3 + $0x7a] sm:$0xff]
    %v11088 = vld [vmem:[#allocation3 + $0x82] sm:$0xff]
    %v11089 = vld [vmem:[#allocation3 + $0x92] sm:$0xff]
    %v11090 = vld [vmem:[#allocation3 + $0x9a] sm:$0xff]
    %v11091 = vld [vmem:[#allocation3 + $0xaa] sm:$0xff]
    %v11092 = vld [vmem:[#allocation3 + $0xb2] sm:$0xff]
    %11109 = vrot.lane.b32.xlu0 %v11077, 127
    %v11110 = vpop.permute.xlu0 %11109
    %11111 = vrot.lane.b32.xlu0 %v11078, 127
    %v11112 = vpop.permute.xlu0 %11111
    %11113 = vrot.lane.b32.xlu0 %v11079, 127
    %v11114 = vpop.permute.xlu0 %11113
    %11115 = vrot.lane.b32.xlu0 %v11080, 127
    %v11116 = vpop.permute.xlu0 %11115
    %11117 = vrot.lane.b32.xlu0 %v11081, 127
    %v11118 = vpop.permute.xlu0 %11117
    %11119 = vrot.lane.b32.xlu0 %v11082, 127
    %v11120 = vpop.permute.xlu0 %11119
    %11121 = vrot.lane.b32.xlu0 %v11083, 127
    %v11122 = vpop.permute.xlu0 %11121
    %11123 = vrot.lane.b32.xlu0 %v11084, 127
    %v11124 = vpop.permute.xlu0 %11123
    %11125 = vrot.lane.b32.xlu0 %v11085, 127
    %v11126 = vpop.permute.xlu0 %11125
    %11127 = vrot.lane.b32.xlu0 %v11086, 127
    %v11128 = vpop.permute.xlu0 %11127
    %11129 = vrot.lane.b32.xlu0 %v11087, 127
    %v11130 = vpop.permute.xlu0 %11129
    %11131 = vrot.lane.b32.xlu0 %v11088, 127
    %v11132 = vpop.permute.xlu0 %11131
    %11133 = vrot.lane.b32.xlu0 %v11089, 127
    %v11134 = vpop.permute.xlu0 %11133
    %11135 = vrot.lane.b32.xlu0 %v11090, 127
    %v11136 = vpop.permute.xlu0 %11135
    %11137 = vrot.lane.b32.xlu0 %v11091, 127
    %v11138 = vpop.permute.xlu0 %11137
    %11139 = vrot.lane.b32.xlu0 %v11092, 127
    %v11140 = vpop.permute.xlu0 %11139
    %v11157 = vcombine.low %v11110, %v11118
    %v11158 = vcombine.high %v11110, %v11118
    %v11160 = vunpack.c.l.s4 1983009808
    %v11161 = vunpack.c.0.s8 %v11160
    %v11162 = vlaneseq
    %v11163 = vshrl.u32 %v11162, 7
    %v11164 = vsub.s32 %v11161, %v11163
    %v11165 = vrot.slane %v11157, %v11164
    %v11167 = vunpack.c.l.s4 1983009808
    %v11168 = vunpack.c.0.s8 %v11167
    %v11169 = vlaneseq
    %v11170 = vshrl.u32 %v11169, 7
    %v11171 = vsub.s32 %v11168, %v11170
    %v11172 = vrot.slane %v11158, %v11171
    %v11173 = vcombine.low %v11114, %v11122
    %v11174 = vcombine.high %v11114, %v11122
    %v11176 = vunpack.c.l.s4 1983009808
    %v11177 = vunpack.c.0.s8 %v11176
    %v11178 = vlaneseq
    %v11179 = vshrl.u32 %v11178, 7
    %v11180 = vsub.s32 %v11177, %v11179
    %v11181 = vrot.slane %v11173, %v11180
    %v11183 = vunpack.c.l.s4 1983009808
    %v11184 = vunpack.c.0.s8 %v11183
    %v11185 = vlaneseq
    %v11186 = vshrl.u32 %v11185, 7
    %v11187 = vsub.s32 %v11184, %v11186
    %v11188 = vrot.slane %v11174, %v11187
    %v11189 = vcombine.low %v11126, %v11134
    %v11190 = vcombine.high %v11126, %v11134
    %v11192 = vunpack.c.l.s4 1983009808
    %v11193 = vunpack.c.0.s8 %v11192
    %v11194 = vlaneseq
    %v11195 = vshrl.u32 %v11194, 7
    %v11196 = vsub.s32 %v11193, %v11195
    %v11197 = vrot.slane %v11189, %v11196
    %v11199 = vunpack.c.l.s4 1983009808
    %v11200 = vunpack.c.0.s8 %v11199
    %v11201 = vlaneseq
    %v11202 = vshrl.u32 %v11201, 7
    %v11203 = vsub.s32 %v11200, %v11202
    %v11204 = vrot.slane %v11190, %v11203
    %v11205 = vcombine.low %v11130, %v11138
    %v11206 = vcombine.high %v11130, %v11138
    %v11208 = vunpack.c.l.s4 1983009808
    %v11209 = vunpack.c.0.s8 %v11208
    %v11210 = vlaneseq
    %v11211 = vshrl.u32 %v11210, 7
    %v11212 = vsub.s32 %v11209, %v11211
    %v11213 = vrot.slane %v11205, %v11212
    %v11215 = vunpack.c.l.s4 1983009808
    %v11216 = vunpack.c.0.s8 %v11215
    %v11217 = vlaneseq
    %v11218 = vshrl.u32 %v11217, 7
    %v11219 = vsub.s32 %v11216, %v11218
    %v11220 = vrot.slane %v11206, %v11219
    %v11221 = vcombine.low %v11165, %v11181
    %v11222 = vcombine.high %v11165, %v11181
    %v11224 = vunpack.c.l.s4 1934713408
    %v11225 = vunpack.c.0.s8 %v11224
    %v11226 = vlaneseq
    %v11227 = vshrl.u32 %v11226, 7
    %v11228 = vsub.s32 %v11225, %v11227
    %v11229 = vrot.slane %v11221, %v11228
    %v11231 = vunpack.c.l.s4 1934713408
    %v11232 = vunpack.c.0.s8 %v11231
    %v11233 = vlaneseq
    %v11234 = vshrl.u32 %v11233, 7
    %v11235 = vsub.s32 %v11232, %v11234
    %v11236 = vrot.slane %v11222, %v11235
    %v11237 = vcombine.low %v11172, %v11188
    %v11238 = vcombine.high %v11172, %v11188
    %v11240 = vunpack.c.l.s4 1934713408
    %v11241 = vunpack.c.0.s8 %v11240
    %v11242 = vlaneseq
    %v11243 = vshrl.u32 %v11242, 7
    %v11244 = vsub.s32 %v11241, %v11243
    %v11245 = vrot.slane %v11237, %v11244
    %v11247 = vunpack.c.l.s4 1934713408
    %v11248 = vunpack.c.0.s8 %v11247
    %v11249 = vlaneseq
    %v11250 = vshrl.u32 %v11249, 7
    %v11251 = vsub.s32 %v11248, %v11250
    %v11252 = vrot.slane %v11238, %v11251
    %v11253 = vcombine.low %v11197, %v11213
    %v11254 = vcombine.high %v11197, %v11213
    %v11256 = vunpack.c.l.s4 1934713408
    %v11257 = vunpack.c.0.s8 %v11256
    %v11258 = vlaneseq
    %v11259 = vshrl.u32 %v11258, 7
    %v11260 = vsub.s32 %v11257, %v11259
    %v11261 = vrot.slane %v11253, %v11260
    %v11263 = vunpack.c.l.s4 1934713408
    %v11264 = vunpack.c.0.s8 %v11263
    %v11265 = vlaneseq
    %v11266 = vshrl.u32 %v11265, 7
    %v11267 = vsub.s32 %v11264, %v11266
    %v11268 = vrot.slane %v11254, %v11267
    %v11269 = vcombine.low %v11204, %v11220
    %v11270 = vcombine.high %v11204, %v11220
    %v11272 = vunpack.c.l.s4 1934713408
    %v11273 = vunpack.c.0.s8 %v11272
    %v11274 = vlaneseq
    %v11275 = vshrl.u32 %v11274, 7
    %v11276 = vsub.s32 %v11273, %v11275
    %v11277 = vrot.slane %v11269, %v11276
    %v11279 = vunpack.c.l.s4 1934713408
    %v11280 = vunpack.c.0.s8 %v11279
    %v11281 = vlaneseq
    %v11282 = vshrl.u32 %v11281, 7
    %v11283 = vsub.s32 %v11280, %v11282
    %v11284 = vrot.slane %v11270, %v11283
    %v11285 = vcombine.low %v11229, %v11261
    %v11286 = vcombine.high %v11229, %v11261
    %v11287 = vcombine.low %v11236, %v11268
    %v11288 = vcombine.high %v11236, %v11268
    %v11289 = vcombine.low %v11245, %v11277
    %v11290 = vcombine.high %v11245, %v11277
    %v11291 = vcombine.low %v11252, %v11284
    %v11292 = vcombine.high %v11252, %v11284
    %v11293 = vcombine.low %v11112, %v11120
    %v11294 = vcombine.high %v11112, %v11120
    %v11296 = vunpack.c.l.s4 1983009808
    %v11297 = vunpack.c.0.s8 %v11296
    %v11298 = vlaneseq
    %v11299 = vshrl.u32 %v11298, 7
    %v11300 = vsub.s32 %v11297, %v11299
    %v11301 = vrot.slane %v11293, %v11300
    %v11303 = vunpack.c.l.s4 1983009808
    %v11304 = vunpack.c.0.s8 %v11303
    %v11305 = vlaneseq
    %v11306 = vshrl.u32 %v11305, 7
    %v11307 = vsub.s32 %v11304, %v11306
    %v11308 = vrot.slane %v11294, %v11307
    %v11309 = vcombine.low %v11116, %v11124
    %v11310 = vcombine.high %v11116, %v11124
    %v11312 = vunpack.c.l.s4 1983009808
    %v11313 = vunpack.c.0.s8 %v11312
    %v11314 = vlaneseq
    %v11315 = vshrl.u32 %v11314, 7
    %v11316 = vsub.s32 %v11313, %v11315
    %v11317 = vrot.slane %v11309, %v11316
    %v11319 = vunpack.c.l.s4 1983009808
    %v11320 = vunpack.c.0.s8 %v11319
    %v11321 = vlaneseq
    %v11322 = vshrl.u32 %v11321, 7
    %v11323 = vsub.s32 %v11320, %v11322
    %v11324 = vrot.slane %v11310, %v11323
    %v11325 = vcombine.low %v11128, %v11136
    %v11326 = vcombine.high %v11128, %v11136
    %v11328 = vunpack.c.l.s4 1983009808
    %v11329 = vunpack.c.0.s8 %v11328
    %v11330 = vlaneseq
    %v11331 = vshrl.u32 %v11330, 7
    %v11332 = vsub.s32 %v11329, %v11331
    %v11333 = vrot.slane %v11325, %v11332
    %v11335 = vunpack.c.l.s4 1983009808
    %v11336 = vunpack.c.0.s8 %v11335
    %v11337 = vlaneseq
    %v11338 = vshrl.u32 %v11337, 7
    %v11339 = vsub.s32 %v11336, %v11338
    %v11340 = vrot.slane %v11326, %v11339
    %v11341 = vcombine.low %v11132, %v11140
    %v11342 = vcombine.high %v11132, %v11140
    %v11344 = vunpack.c.l.s4 1983009808
    %v11345 = vunpack.c.0.s8 %v11344
    %v11346 = vlaneseq
    %v11347 = vshrl.u32 %v11346, 7
    %v11348 = vsub.s32 %v11345, %v11347
    %v11349 = vrot.slane %v11341, %v11348
    %v11351 = vunpack.c.l.s4 1983009808
    %v11352 = vunpack.c.0.s8 %v11351
    %v11353 = vlaneseq
    %v11354 = vshrl.u32 %v11353, 7
    %v11355 = vsub.s32 %v11352, %v11354
    %v11356 = vrot.slane %v11342, %v11355
    %v11357 = vcombine.low %v11301, %v11317
    %v11358 = vcombine.high %v11301, %v11317
    %v11360 = vunpack.c.l.s4 1934713408
    %v11361 = vunpack.c.0.s8 %v11360
    %v11362 = vlaneseq
    %v11363 = vshrl.u32 %v11362, 7
    %v11364 = vsub.s32 %v11361, %v11363
    %v11365 = vrot.slane %v11357, %v11364
    %v11367 = vunpack.c.l.s4 1934713408
    %v11368 = vunpack.c.0.s8 %v11367
    %v11369 = vlaneseq
    %v11370 = vshrl.u32 %v11369, 7
    %v11371 = vsub.s32 %v11368, %v11370
    %v11372 = vrot.slane %v11358, %v11371
    %v11373 = vcombine.low %v11308, %v11324
    %v11374 = vcombine.high %v11308, %v11324
    %v11376 = vunpack.c.l.s4 1934713408
    %v11377 = vunpack.c.0.s8 %v11376
    %v11378 = vlaneseq
    %v11379 = vshrl.u32 %v11378, 7
    %v11380 = vsub.s32 %v11377, %v11379
    %v11381 = vrot.slane %v11373, %v11380
    %v11383 = vunpack.c.l.s4 1934713408
    %v11384 = vunpack.c.0.s8 %v11383
    %v11385 = vlaneseq
    %v11386 = vshrl.u32 %v11385, 7
    %v11387 = vsub.s32 %v11384, %v11386
    %v11388 = vrot.slane %v11374, %v11387
    %v11389 = vcombine.low %v11333, %v11349
    %v11390 = vcombine.high %v11333, %v11349
    %v11392 = vunpack.c.l.s4 1934713408
    %v11393 = vunpack.c.0.s8 %v11392
    %v11394 = vlaneseq
    %v11395 = vshrl.u32 %v11394, 7
    %v11396 = vsub.s32 %v11393, %v11395
    %v11397 = vrot.slane %v11389, %v11396
    %v11399 = vunpack.c.l.s4 1934713408
    %v11400 = vunpack.c.0.s8 %v11399
    %v11401 = vlaneseq
    %v11402 = vshrl.u32 %v11401, 7
    %v11403 = vsub.s32 %v11400, %v11402
    %v11404 = vrot.slane %v11390, %v11403
    %v11405 = vcombine.low %v11340, %v11356
    %v11406 = vcombine.high %v11340, %v11356
    %v11408 = vunpack.c.l.s4 1934713408
    %v11409 = vunpack.c.0.s8 %v11408
    %v11410 = vlaneseq
    %v11411 = vshrl.u32 %v11410, 7
    %v11412 = vsub.s32 %v11409, %v11411
    %v11413 = vrot.slane %v11405, %v11412
    %v11415 = vunpack.c.l.s4 1934713408
    %v11416 = vunpack.c.0.s8 %v11415
    %v11417 = vlaneseq
    %v11418 = vshrl.u32 %v11417, 7
    %v11419 = vsub.s32 %v11416, %v11418
    %v11420 = vrot.slane %v11406, %v11419
    %v11421 = vcombine.low %v11365, %v11397
    %v11422 = vcombine.high %v11365, %v11397
    %v11423 = vcombine.low %v11372, %v11404
    %v11424 = vcombine.high %v11372, %v11404
    %v11425 = vcombine.low %v11381, %v11413
    %v11426 = vcombine.high %v11381, %v11413
    %v11427 = vcombine.low %v11388, %v11420
    %v11428 = vcombine.high %v11388, %v11420
    %11430 = vrot.lane.b32.xlu0 %v11286, 16
    %v11431 = vpop.permute.xlu0 %11430
    %11434 = vrot.lane.b32.xlu0 %v11287, 32
    %v11435 = vpop.permute.xlu0 %11434
    %11438 = vrot.lane.b32.xlu0 %v11288, 48
    %v11439 = vpop.permute.xlu0 %11438
    %11442 = vrot.lane.b32.xlu0 %v11289, 64
    %v11443 = vpop.permute.xlu0 %11442
    %11446 = vrot.lane.b32.xlu0 %v11290, 80
    %v11447 = vpop.permute.xlu0 %11446
    %11450 = vrot.lane.b32.xlu0 %v11291, 96
    %v11451 = vpop.permute.xlu0 %11450
    %11454 = vrot.lane.b32.xlu0 %v11292, 112
    %v11455 = vpop.permute.xlu0 %11454
    %11458 = vrot.lane.b32.xlu0 %v11422, 16
    %v11459 = vpop.permute.xlu0 %11458
    %11462 = vrot.lane.b32.xlu0 %v11423, 32
    %v11463 = vpop.permute.xlu0 %11462
    %11466 = vrot.lane.b32.xlu0 %v11424, 48
    %v11467 = vpop.permute.xlu0 %11466
    %11470 = vrot.lane.b32.xlu0 %v11425, 64
    %v11471 = vpop.permute.xlu0 %11470
    %11474 = vrot.lane.b32.xlu0 %v11426, 80
    %v11475 = vpop.permute.xlu0 %11474
    %11478 = vrot.lane.b32.xlu0 %v11427, 96
    %v11479 = vpop.permute.xlu0 %11478
    %11482 = vrot.lane.b32.xlu0 %v11428, 112
    %v11483 = vpop.permute.xlu0 %11482
    %v11485 = vsel %vm372, %v11285, %v11431
    %v11486 = vsel %vm374, %v11485, %v11435
    %v11487 = vsel %vm376, %v11486, %v11439
    %v11488 = vsel %vm378, %v11487, %v11443
    %v11489 = vsel %vm380, %v11488, %v11447
    %v11490 = vsel %vm382, %v11489, %v11451
    %v11491 = vsel %vm384, %v11490, %v11455
    %v11492 = vsel %vm372, %v11421, %v11459
    %v11493 = vsel %vm374, %v11492, %v11463
    %v11494 = vsel %vm376, %v11493, %v11467
    %v11495 = vsel %vm378, %v11494, %v11471
    %v11496 = vsel %vm380, %v11495, %v11475
    %v11497 = vsel %vm382, %v11496, %v11479
    %v11498 = vsel %vm384, %v11497, %v11483
    %11499 = vst [vmem:[#allocation5 + $0xe0] sm:$0xff] %v11491
    %11500 = vst [vmem:[#allocation5 + $0xe8] sm:$0xff] %v11498
    %v11501 = vld [vmem:[%s5508 + $0x2] sm:$0xff]
    %v11502 = vld [vmem:[%s5508 + $0xa] sm:$0xff]
    %v11503 = vld [vmem:[%s5508 + $0x1a] sm:$0xff]
    %v11504 = vld [vmem:[%s5508 + $0x22] sm:$0xff]
    %v11505 = vld [vmem:[%s5508 + $0x32] sm:$0xff]
    %v11506 = vld [vmem:[%s5508 + $0x3a] sm:$0xff]
    %v11507 = vld [vmem:[%s5508 + $0x4a] sm:$0xff]
    %v11508 = vld [vmem:[%s5508 + $0x52] sm:$0xff]
    %v11509 = vld [vmem:[%s5508 + $0x62] sm:$0xff]
    %v11510 = vld [vmem:[%s5508 + $0x6a] sm:$0xff]
    %v11511 = vld [vmem:[%s5508 + $0x7a] sm:$0xff]
    %v11512 = vld [vmem:[%s5508 + $0x82] sm:$0xff]
    %v11513 = vld [vmem:[%s5508 + $0x92] sm:$0xff]
    %v11514 = vld [vmem:[%s5508 + $0x9a] sm:$0xff]
    %v11515 = vld [vmem:[%s5508 + $0xaa] sm:$0xff]
    %v11516 = vld [vmem:[%s5508 + $0xb2] sm:$0xff]
    %11533 = vrot.lane.b32.xlu0 %v11501, 127
    %v11534 = vpop.permute.xlu0 %11533
    %11535 = vrot.lane.b32.xlu0 %v11502, 127
    %v11536 = vpop.permute.xlu0 %11535
    %11537 = vrot.lane.b32.xlu0 %v11503, 127
    %v11538 = vpop.permute.xlu0 %11537
    %11539 = vrot.lane.b32.xlu0 %v11504, 127
    %v11540 = vpop.permute.xlu0 %11539
    %11541 = vrot.lane.b32.xlu0 %v11505, 127
    %v11542 = vpop.permute.xlu0 %11541
    %11543 = vrot.lane.b32.xlu0 %v11506, 127
    %v11544 = vpop.permute.xlu0 %11543
    %11545 = vrot.lane.b32.xlu0 %v11507, 127
    %v11546 = vpop.permute.xlu0 %11545
    %11547 = vrot.lane.b32.xlu0 %v11508, 127
    %v11548 = vpop.permute.xlu0 %11547
    %11549 = vrot.lane.b32.xlu0 %v11509, 127
    %v11550 = vpop.permute.xlu0 %11549
    %11551 = vrot.lane.b32.xlu0 %v11510, 127
    %v11552 = vpop.permute.xlu0 %11551
    %11553 = vrot.lane.b32.xlu0 %v11511, 127
    %v11554 = vpop.permute.xlu0 %11553
    %11555 = vrot.lane.b32.xlu0 %v11512, 127
    %v11556 = vpop.permute.xlu0 %11555
    %11557 = vrot.lane.b32.xlu0 %v11513, 127
    %v11558 = vpop.permute.xlu0 %11557
    %11559 = vrot.lane.b32.xlu0 %v11514, 127
    %v11560 = vpop.permute.xlu0 %11559
    %11561 = vrot.lane.b32.xlu0 %v11515, 127
    %v11562 = vpop.permute.xlu0 %11561
    %11563 = vrot.lane.b32.xlu0 %v11516, 127
    %v11564 = vpop.permute.xlu0 %11563
    %v11581 = vcombine.low %v11534, %v11542
    %v11582 = vcombine.high %v11534, %v11542
    %v11584 = vunpack.c.l.s4 1983009808
    %v11585 = vunpack.c.0.s8 %v11584
    %v11586 = vlaneseq
    %v11587 = vshrl.u32 %v11586, 7
    %v11588 = vsub.s32 %v11585, %v11587
    %v11589 = vrot.slane %v11581, %v11588
    %v11591 = vunpack.c.l.s4 1983009808
    %v11592 = vunpack.c.0.s8 %v11591
    %v11593 = vlaneseq
    %v11594 = vshrl.u32 %v11593, 7
    %v11595 = vsub.s32 %v11592, %v11594
    %v11596 = vrot.slane %v11582, %v11595
    %v11597 = vcombine.low %v11538, %v11546
    %v11598 = vcombine.high %v11538, %v11546
    %v11600 = vunpack.c.l.s4 1983009808
    %v11601 = vunpack.c.0.s8 %v11600
    %v11602 = vlaneseq
    %v11603 = vshrl.u32 %v11602, 7
    %v11604 = vsub.s32 %v11601, %v11603
    %v11605 = vrot.slane %v11597, %v11604
    %v11607 = vunpack.c.l.s4 1983009808
    %v11608 = vunpack.c.0.s8 %v11607
    %v11609 = vlaneseq
    %v11610 = vshrl.u32 %v11609, 7
    %v11611 = vsub.s32 %v11608, %v11610
    %v11612 = vrot.slane %v11598, %v11611
    %v11613 = vcombine.low %v11550, %v11558
    %v11614 = vcombine.high %v11550, %v11558
    %v11616 = vunpack.c.l.s4 1983009808
    %v11617 = vunpack.c.0.s8 %v11616
    %v11618 = vlaneseq
    %v11619 = vshrl.u32 %v11618, 7
    %v11620 = vsub.s32 %v11617, %v11619
    %v11621 = vrot.slane %v11613, %v11620
    %v11623 = vunpack.c.l.s4 1983009808
    %v11624 = vunpack.c.0.s8 %v11623
    %v11625 = vlaneseq
    %v11626 = vshrl.u32 %v11625, 7
    %v11627 = vsub.s32 %v11624, %v11626
    %v11628 = vrot.slane %v11614, %v11627
    %v11629 = vcombine.low %v11554, %v11562
    %v11630 = vcombine.high %v11554, %v11562
    %v11632 = vunpack.c.l.s4 1983009808
    %v11633 = vunpack.c.0.s8 %v11632
    %v11634 = vlaneseq
    %v11635 = vshrl.u32 %v11634, 7
    %v11636 = vsub.s32 %v11633, %v11635
    %v11637 = vrot.slane %v11629, %v11636
    %v11639 = vunpack.c.l.s4 1983009808
    %v11640 = vunpack.c.0.s8 %v11639
    %v11641 = vlaneseq
    %v11642 = vshrl.u32 %v11641, 7
    %v11643 = vsub.s32 %v11640, %v11642
    %v11644 = vrot.slane %v11630, %v11643
    %v11645 = vcombine.low %v11589, %v11605
    %v11646 = vcombine.high %v11589, %v11605
    %v11648 = vunpack.c.l.s4 1934713408
    %v11649 = vunpack.c.0.s8 %v11648
    %v11650 = vlaneseq
    %v11651 = vshrl.u32 %v11650, 7
    %v11652 = vsub.s32 %v11649, %v11651
    %v11653 = vrot.slane %v11645, %v11652
    %v11655 = vunpack.c.l.s4 1934713408
    %v11656 = vunpack.c.0.s8 %v11655
    %v11657 = vlaneseq
    %v11658 = vshrl.u32 %v11657, 7
    %v11659 = vsub.s32 %v11656, %v11658
    %v11660 = vrot.slane %v11646, %v11659
    %v11661 = vcombine.low %v11596, %v11612
    %v11662 = vcombine.high %v11596, %v11612
    %v11664 = vunpack.c.l.s4 1934713408
    %v11665 = vunpack.c.0.s8 %v11664
    %v11666 = vlaneseq
    %v11667 = vshrl.u32 %v11666, 7
    %v11668 = vsub.s32 %v11665, %v11667
    %v11669 = vrot.slane %v11661, %v11668
    %v11671 = vunpack.c.l.s4 1934713408
    %v11672 = vunpack.c.0.s8 %v11671
    %v11673 = vlaneseq
    %v11674 = vshrl.u32 %v11673, 7
    %v11675 = vsub.s32 %v11672, %v11674
    %v11676 = vrot.slane %v11662, %v11675
    %v11677 = vcombine.low %v11621, %v11637
    %v11678 = vcombine.high %v11621, %v11637
    %v11680 = vunpack.c.l.s4 1934713408
    %v11681 = vunpack.c.0.s8 %v11680
    %v11682 = vlaneseq
    %v11683 = vshrl.u32 %v11682, 7
    %v11684 = vsub.s32 %v11681, %v11683
    %v11685 = vrot.slane %v11677, %v11684
    %v11687 = vunpack.c.l.s4 1934713408
    %v11688 = vunpack.c.0.s8 %v11687
    %v11689 = vlaneseq
    %v11690 = vshrl.u32 %v11689, 7
    %v11691 = vsub.s32 %v11688, %v11690
    %v11692 = vrot.slane %v11678, %v11691
    %v11693 = vcombine.low %v11628, %v11644
    %v11694 = vcombine.high %v11628, %v11644
    %v11696 = vunpack.c.l.s4 1934713408
    %v11697 = vunpack.c.0.s8 %v11696
    %v11698 = vlaneseq
    %v11699 = vshrl.u32 %v11698, 7
    %v11700 = vsub.s32 %v11697, %v11699
    %v11701 = vrot.slane %v11693, %v11700
    %v11703 = vunpack.c.l.s4 1934713408
    %v11704 = vunpack.c.0.s8 %v11703
    %v11705 = vlaneseq
    %v11706 = vshrl.u32 %v11705, 7
    %v11707 = vsub.s32 %v11704, %v11706
    %v11708 = vrot.slane %v11694, %v11707
    %v11709 = vcombine.low %v11653, %v11685
    %v11710 = vcombine.high %v11653, %v11685
    %v11711 = vcombine.low %v11660, %v11692
    %v11712 = vcombine.high %v11660, %v11692
    %v11713 = vcombine.low %v11669, %v11701
    %v11714 = vcombine.high %v11669, %v11701
    %v11715 = vcombine.low %v11676, %v11708
    %v11716 = vcombine.high %v11676, %v11708
    %v11717 = vcombine.low %v11536, %v11544
    %v11718 = vcombine.high %v11536, %v11544
    %v11720 = vunpack.c.l.s4 1983009808
    %v11721 = vunpack.c.0.s8 %v11720
    %v11722 = vlaneseq
    %v11723 = vshrl.u32 %v11722, 7
    %v11724 = vsub.s32 %v11721, %v11723
    %v11725 = vrot.slane %v11717, %v11724
    %v11727 = vunpack.c.l.s4 1983009808
    %v11728 = vunpack.c.0.s8 %v11727
    %v11729 = vlaneseq
    %v11730 = vshrl.u32 %v11729, 7
    %v11731 = vsub.s32 %v11728, %v11730
    %v11732 = vrot.slane %v11718, %v11731
    %v11733 = vcombine.low %v11540, %v11548
    %v11734 = vcombine.high %v11540, %v11548
    %v11736 = vunpack.c.l.s4 1983009808
    %v11737 = vunpack.c.0.s8 %v11736
    %v11738 = vlaneseq
    %v11739 = vshrl.u32 %v11738, 7
    %v11740 = vsub.s32 %v11737, %v11739
    %v11741 = vrot.slane %v11733, %v11740
    %v11743 = vunpack.c.l.s4 1983009808
    %v11744 = vunpack.c.0.s8 %v11743
    %v11745 = vlaneseq
    %v11746 = vshrl.u32 %v11745, 7
    %v11747 = vsub.s32 %v11744, %v11746
    %v11748 = vrot.slane %v11734, %v11747
    %v11749 = vcombine.low %v11552, %v11560
    %v11750 = vcombine.high %v11552, %v11560
    %v11752 = vunpack.c.l.s4 1983009808
    %v11753 = vunpack.c.0.s8 %v11752
    %v11754 = vlaneseq
    %v11755 = vshrl.u32 %v11754, 7
    %v11756 = vsub.s32 %v11753, %v11755
    %v11757 = vrot.slane %v11749, %v11756
    %v11759 = vunpack.c.l.s4 1983009808
    %v11760 = vunpack.c.0.s8 %v11759
    %v11761 = vlaneseq
    %v11762 = vshrl.u32 %v11761, 7
    %v11763 = vsub.s32 %v11760, %v11762
    %v11764 = vrot.slane %v11750, %v11763
    %v11765 = vcombine.low %v11556, %v11564
    %v11766 = vcombine.high %v11556, %v11564
    %v11768 = vunpack.c.l.s4 1983009808
    %v11769 = vunpack.c.0.s8 %v11768
    %v11770 = vlaneseq
    %v11771 = vshrl.u32 %v11770, 7
    %v11772 = vsub.s32 %v11769, %v11771
    %v11773 = vrot.slane %v11765, %v11772
    %v11775 = vunpack.c.l.s4 1983009808
    %v11776 = vunpack.c.0.s8 %v11775
    %v11777 = vlaneseq
    %v11778 = vshrl.u32 %v11777, 7
    %v11779 = vsub.s32 %v11776, %v11778
    %v11780 = vrot.slane %v11766, %v11779
    %v11781 = vcombine.low %v11725, %v11741
    %v11782 = vcombine.high %v11725, %v11741
    %v11784 = vunpack.c.l.s4 1934713408
    %v11785 = vunpack.c.0.s8 %v11784
    %v11786 = vlaneseq
    %v11787 = vshrl.u32 %v11786, 7
    %v11788 = vsub.s32 %v11785, %v11787
    %v11789 = vrot.slane %v11781, %v11788
    %v11791 = vunpack.c.l.s4 1934713408
    %v11792 = vunpack.c.0.s8 %v11791
    %v11793 = vlaneseq
    %v11794 = vshrl.u32 %v11793, 7
    %v11795 = vsub.s32 %v11792, %v11794
    %v11796 = vrot.slane %v11782, %v11795
    %v11797 = vcombine.low %v11732, %v11748
    %v11798 = vcombine.high %v11732, %v11748
    %v11800 = vunpack.c.l.s4 1934713408
    %v11801 = vunpack.c.0.s8 %v11800
    %v11802 = vlaneseq
    %v11803 = vshrl.u32 %v11802, 7
    %v11804 = vsub.s32 %v11801, %v11803
    %v11805 = vrot.slane %v11797, %v11804
    %v11807 = vunpack.c.l.s4 1934713408
    %v11808 = vunpack.c.0.s8 %v11807
    %v11809 = vlaneseq
    %v11810 = vshrl.u32 %v11809, 7
    %v11811 = vsub.s32 %v11808, %v11810
    %v11812 = vrot.slane %v11798, %v11811
    %v11813 = vcombine.low %v11757, %v11773
    %v11814 = vcombine.high %v11757, %v11773
    %v11816 = vunpack.c.l.s4 1934713408
    %v11817 = vunpack.c.0.s8 %v11816
    %v11818 = vlaneseq
    %v11819 = vshrl.u32 %v11818, 7
    %v11820 = vsub.s32 %v11817, %v11819
    %v11821 = vrot.slane %v11813, %v11820
    %v11823 = vunpack.c.l.s4 1934713408
    %v11824 = vunpack.c.0.s8 %v11823
    %v11825 = vlaneseq
    %v11826 = vshrl.u32 %v11825, 7
    %v11827 = vsub.s32 %v11824, %v11826
    %v11828 = vrot.slane %v11814, %v11827
    %v11829 = vcombine.low %v11764, %v11780
    %v11830 = vcombine.high %v11764, %v11780
    %v11832 = vunpack.c.l.s4 1934713408
    %v11833 = vunpack.c.0.s8 %v11832
    %v11834 = vlaneseq
    %v11835 = vshrl.u32 %v11834, 7
    %v11836 = vsub.s32 %v11833, %v11835
    %v11837 = vrot.slane %v11829, %v11836
    %v11839 = vunpack.c.l.s4 1934713408
    %v11840 = vunpack.c.0.s8 %v11839
    %v11841 = vlaneseq
    %v11842 = vshrl.u32 %v11841, 7
    %v11843 = vsub.s32 %v11840, %v11842
    %v11844 = vrot.slane %v11830, %v11843
    %v11845 = vcombine.low %v11789, %v11821
    %v11846 = vcombine.high %v11789, %v11821
    %v11847 = vcombine.low %v11796, %v11828
    %v11848 = vcombine.high %v11796, %v11828
    %v11849 = vcombine.low %v11805, %v11837
    %v11850 = vcombine.high %v11805, %v11837
    %v11851 = vcombine.low %v11812, %v11844
    %v11852 = vcombine.high %v11812, %v11844
    %11854 = vrot.lane.b32.xlu0 %v11710, 16
    %v11855 = vpop.permute.xlu0 %11854
    %11858 = vrot.lane.b32.xlu0 %v11711, 32
    %v11859 = vpop.permute.xlu0 %11858
    %11862 = vrot.lane.b32.xlu0 %v11712, 48
    %v11863 = vpop.permute.xlu0 %11862
    %11866 = vrot.lane.b32.xlu0 %v11713, 64
    %v11867 = vpop.permute.xlu0 %11866
    %11870 = vrot.lane.b32.xlu0 %v11714, 80
    %v11871 = vpop.permute.xlu0 %11870
    %11874 = vrot.lane.b32.xlu0 %v11715, 96
    %v11875 = vpop.permute.xlu0 %11874
    %11878 = vrot.lane.b32.xlu0 %v11716, 112
    %v11879 = vpop.permute.xlu0 %11878
    %11882 = vrot.lane.b32.xlu0 %v11846, 16
    %v11883 = vpop.permute.xlu0 %11882
    %11886 = vrot.lane.b32.xlu0 %v11847, 32
    %v11887 = vpop.permute.xlu0 %11886
    %11890 = vrot.lane.b32.xlu0 %v11848, 48
    %v11891 = vpop.permute.xlu0 %11890
    %11894 = vrot.lane.b32.xlu0 %v11849, 64
    %v11895 = vpop.permute.xlu0 %11894
    %11898 = vrot.lane.b32.xlu0 %v11850, 80
    %v11899 = vpop.permute.xlu0 %11898
    %11902 = vrot.lane.b32.xlu0 %v11851, 96
    %v11903 = vpop.permute.xlu0 %11902
    %11906 = vrot.lane.b32.xlu0 %v11852, 112
    %v11907 = vpop.permute.xlu0 %11906
    %v11909 = vsel %vm372, %v11709, %v11855
    %v11910 = vsel %vm374, %v11909, %v11859
    %v11911 = vsel %vm376, %v11910, %v11863
    %v11912 = vsel %vm378, %v11911, %v11867
    %v11913 = vsel %vm380, %v11912, %v11871
    %v11914 = vsel %vm382, %v11913, %v11875
    %v11915 = vsel %vm384, %v11914, %v11879
    %v11916 = vsel %vm372, %v11845, %v11883
    %v11917 = vsel %vm374, %v11916, %v11887
    %v11918 = vsel %vm376, %v11917, %v11891
    %v11919 = vsel %vm378, %v11918, %v11895
    %v11920 = vsel %vm380, %v11919, %v11899
    %v11921 = vsel %vm382, %v11920, %v11903
    %v11922 = vsel %vm384, %v11921, %v11907
    %11923 = vst [vmem:[#allocation5 + $0xf0] sm:$0xff] %v11915
    %11924 = vst [vmem:[#allocation5 + $0xf8] sm:$0xff] %v11922
    %v11925 = vld [vmem:[#allocation3 + $0x2] sm:$0xff]
    %v11926 = vld [vmem:[#allocation3 + $0xa] sm:$0xff]
    %v11927 = vld [vmem:[#allocation3 + $0x1a] sm:$0xff]
    %v11928 = vld [vmem:[#allocation3 + $0x22] sm:$0xff]
    %v11929 = vld [vmem:[#allocation3 + $0x32] sm:$0xff]
    %v11930 = vld [vmem:[#allocation3 + $0x3a] sm:$0xff]
    %v11931 = vld [vmem:[#allocation3 + $0x4a] sm:$0xff]
    %v11932 = vld [vmem:[#allocation3 + $0x52] sm:$0xff]
    %v11933 = vld [vmem:[#allocation3 + $0x62] sm:$0xff]
    %v11934 = vld [vmem:[#allocation3 + $0x6a] sm:$0xff]
    %v11935 = vld [vmem:[#allocation3 + $0x7a] sm:$0xff]
    %v11936 = vld [vmem:[#allocation3 + $0x82] sm:$0xff]
    %v11937 = vld [vmem:[#allocation3 + $0x92] sm:$0xff]
    %v11938 = vld [vmem:[#allocation3 + $0x9a] sm:$0xff]
    %v11939 = vld [vmem:[#allocation3 + $0xaa] sm:$0xff]
    %v11940 = vld [vmem:[#allocation3 + $0xb2] sm:$0xff]
    %11957 = vrot.lane.b32.xlu0 %v11925, 126
    %v11958 = vpop.permute.xlu0 %11957
    %11959 = vrot.lane.b32.xlu0 %v11926, 126
    %v11960 = vpop.permute.xlu0 %11959
    %11961 = vrot.lane.b32.xlu0 %v11927, 126
    %v11962 = vpop.permute.xlu0 %11961
    %11963 = vrot.lane.b32.xlu0 %v11928, 126
    %v11964 = vpop.permute.xlu0 %11963
    %11965 = vrot.lane.b32.xlu0 %v11929, 126
    %v11966 = vpop.permute.xlu0 %11965
    %11967 = vrot.lane.b32.xlu0 %v11930, 126
    %v11968 = vpop.permute.xlu0 %11967
    %11969 = vrot.lane.b32.xlu0 %v11931, 126
    %v11970 = vpop.permute.xlu0 %11969
    %11971 = vrot.lane.b32.xlu0 %v11932, 126
    %v11972 = vpop.permute.xlu0 %11971
    %11973 = vrot.lane.b32.xlu0 %v11933, 126
    %v11974 = vpop.permute.xlu0 %11973
    %11975 = vrot.lane.b32.xlu0 %v11934, 126
    %v11976 = vpop.permute.xlu0 %11975
    %11977 = vrot.lane.b32.xlu0 %v11935, 126
    %v11978 = vpop.permute.xlu0 %11977
    %11979 = vrot.lane.b32.xlu0 %v11936, 126
    %v11980 = vpop.permute.xlu0 %11979
    %11981 = vrot.lane.b32.xlu0 %v11937, 126
    %v11982 = vpop.permute.xlu0 %11981
    %11983 = vrot.lane.b32.xlu0 %v11938, 126
    %v11984 = vpop.permute.xlu0 %11983
    %11985 = vrot.lane.b32.xlu0 %v11939, 126
    %v11986 = vpop.permute.xlu0 %11985
    %11987 = vrot.lane.b32.xlu0 %v11940, 126
    %v11988 = vpop.permute.xlu0 %11987
    %v12005 = vcombine.low %v11958, %v11966
    %v12006 = vcombine.high %v11958, %v11966
    %v12008 = vunpack.c.l.s4 1983009808
    %v12009 = vunpack.c.0.s8 %v12008
    %v12010 = vlaneseq
    %v12011 = vshrl.u32 %v12010, 7
    %v12012 = vsub.s32 %v12009, %v12011
    %v12013 = vrot.slane %v12005, %v12012
    %v12015 = vunpack.c.l.s4 1983009808
    %v12016 = vunpack.c.0.s8 %v12015
    %v12017 = vlaneseq
    %v12018 = vshrl.u32 %v12017, 7
    %v12019 = vsub.s32 %v12016, %v12018
    %v12020 = vrot.slane %v12006, %v12019
    %v12021 = vcombine.low %v11962, %v11970
    %v12022 = vcombine.high %v11962, %v11970
    %v12024 = vunpack.c.l.s4 1983009808
    %v12025 = vunpack.c.0.s8 %v12024
    %v12026 = vlaneseq
    %v12027 = vshrl.u32 %v12026, 7
    %v12028 = vsub.s32 %v12025, %v12027
    %v12029 = vrot.slane %v12021, %v12028
    %v12031 = vunpack.c.l.s4 1983009808
    %v12032 = vunpack.c.0.s8 %v12031
    %v12033 = vlaneseq
    %v12034 = vshrl.u32 %v12033, 7
    %v12035 = vsub.s32 %v12032, %v12034
    %v12036 = vrot.slane %v12022, %v12035
    %v12037 = vcombine.low %v11974, %v11982
    %v12038 = vcombine.high %v11974, %v11982
    %v12040 = vunpack.c.l.s4 1983009808
    %v12041 = vunpack.c.0.s8 %v12040
    %v12042 = vlaneseq
    %v12043 = vshrl.u32 %v12042, 7
    %v12044 = vsub.s32 %v12041, %v12043
    %v12045 = vrot.slane %v12037, %v12044
    %v12047 = vunpack.c.l.s4 1983009808
    %v12048 = vunpack.c.0.s8 %v12047
    %v12049 = vlaneseq
    %v12050 = vshrl.u32 %v12049, 7
    %v12051 = vsub.s32 %v12048, %v12050
    %v12052 = vrot.slane %v12038, %v12051
    %v12053 = vcombine.low %v11978, %v11986
    %v12054 = vcombine.high %v11978, %v11986
    %v12056 = vunpack.c.l.s4 1983009808
    %v12057 = vunpack.c.0.s8 %v12056
    %v12058 = vlaneseq
    %v12059 = vshrl.u32 %v12058, 7
    %v12060 = vsub.s32 %v12057, %v12059
    %v12061 = vrot.slane %v12053, %v12060
    %v12063 = vunpack.c.l.s4 1983009808
    %v12064 = vunpack.c.0.s8 %v12063
    %v12065 = vlaneseq
    %v12066 = vshrl.u32 %v12065, 7
    %v12067 = vsub.s32 %v12064, %v12066
    %v12068 = vrot.slane %v12054, %v12067
    %v12069 = vcombine.low %v12013, %v12029
    %v12070 = vcombine.high %v12013, %v12029
    %v12072 = vunpack.c.l.s4 1934713408
    %v12073 = vunpack.c.0.s8 %v12072
    %v12074 = vlaneseq
    %v12075 = vshrl.u32 %v12074, 7
    %v12076 = vsub.s32 %v12073, %v12075
    %v12077 = vrot.slane %v12069, %v12076
    %v12079 = vunpack.c.l.s4 1934713408
    %v12080 = vunpack.c.0.s8 %v12079
    %v12081 = vlaneseq
    %v12082 = vshrl.u32 %v12081, 7
    %v12083 = vsub.s32 %v12080, %v12082
    %v12084 = vrot.slane %v12070, %v12083
    %v12085 = vcombine.low %v12020, %v12036
    %v12086 = vcombine.high %v12020, %v12036
    %v12088 = vunpack.c.l.s4 1934713408
    %v12089 = vunpack.c.0.s8 %v12088
    %v12090 = vlaneseq
    %v12091 = vshrl.u32 %v12090, 7
    %v12092 = vsub.s32 %v12089, %v12091
    %v12093 = vrot.slane %v12085, %v12092
    %v12095 = vunpack.c.l.s4 1934713408
    %v12096 = vunpack.c.0.s8 %v12095
    %v12097 = vlaneseq
    %v12098 = vshrl.u32 %v12097, 7
    %v12099 = vsub.s32 %v12096, %v12098
    %v12100 = vrot.slane %v12086, %v12099
    %v12101 = vcombine.low %v12045, %v12061
    %v12102 = vcombine.high %v12045, %v12061
    %v12104 = vunpack.c.l.s4 1934713408
    %v12105 = vunpack.c.0.s8 %v12104
    %v12106 = vlaneseq
    %v12107 = vshrl.u32 %v12106, 7
    %v12108 = vsub.s32 %v12105, %v12107
    %v12109 = vrot.slane %v12101, %v12108
    %v12111 = vunpack.c.l.s4 1934713408
    %v12112 = vunpack.c.0.s8 %v12111
    %v12113 = vlaneseq
    %v12114 = vshrl.u32 %v12113, 7
    %v12115 = vsub.s32 %v12112, %v12114
    %v12116 = vrot.slane %v12102, %v12115
    %v12117 = vcombine.low %v12052, %v12068
    %v12118 = vcombine.high %v12052, %v12068
    %v12120 = vunpack.c.l.s4 1934713408
    %v12121 = vunpack.c.0.s8 %v12120
    %v12122 = vlaneseq
    %v12123 = vshrl.u32 %v12122, 7
    %v12124 = vsub.s32 %v12121, %v12123
    %v12125 = vrot.slane %v12117, %v12124
    %v12127 = vunpack.c.l.s4 1934713408
    %v12128 = vunpack.c.0.s8 %v12127
    %v12129 = vlaneseq
    %v12130 = vshrl.u32 %v12129, 7
    %v12131 = vsub.s32 %v12128, %v12130
    %v12132 = vrot.slane %v12118, %v12131
    %v12133 = vcombine.low %v12077, %v12109
    %v12134 = vcombine.high %v12077, %v12109
    %v12135 = vcombine.low %v12084, %v12116
    %v12136 = vcombine.high %v12084, %v12116
    %v12137 = vcombine.low %v12093, %v12125
    %v12138 = vcombine.high %v12093, %v12125
    %v12139 = vcombine.low %v12100, %v12132
    %v12140 = vcombine.high %v12100, %v12132
    %v12141 = vcombine.low %v11960, %v11968
    %v12142 = vcombine.high %v11960, %v11968
    %v12144 = vunpack.c.l.s4 1983009808
    %v12145 = vunpack.c.0.s8 %v12144
    %v12146 = vlaneseq
    %v12147 = vshrl.u32 %v12146, 7
    %v12148 = vsub.s32 %v12145, %v12147
    %v12149 = vrot.slane %v12141, %v12148
    %v12151 = vunpack.c.l.s4 1983009808
    %v12152 = vunpack.c.0.s8 %v12151
    %v12153 = vlaneseq
    %v12154 = vshrl.u32 %v12153, 7
    %v12155 = vsub.s32 %v12152, %v12154
    %v12156 = vrot.slane %v12142, %v12155
    %v12157 = vcombine.low %v11964, %v11972
    %v12158 = vcombine.high %v11964, %v11972
    %v12160 = vunpack.c.l.s4 1983009808
    %v12161 = vunpack.c.0.s8 %v12160
    %v12162 = vlaneseq
    %v12163 = vshrl.u32 %v12162, 7
    %v12164 = vsub.s32 %v12161, %v12163
    %v12165 = vrot.slane %v12157, %v12164
    %v12167 = vunpack.c.l.s4 1983009808
    %v12168 = vunpack.c.0.s8 %v12167
    %v12169 = vlaneseq
    %v12170 = vshrl.u32 %v12169, 7
    %v12171 = vsub.s32 %v12168, %v12170
    %v12172 = vrot.slane %v12158, %v12171
    %v12173 = vcombine.low %v11976, %v11984
    %v12174 = vcombine.high %v11976, %v11984
    %v12176 = vunpack.c.l.s4 1983009808
    %v12177 = vunpack.c.0.s8 %v12176
    %v12178 = vlaneseq
    %v12179 = vshrl.u32 %v12178, 7
    %v12180 = vsub.s32 %v12177, %v12179
    %v12181 = vrot.slane %v12173, %v12180
    %v12183 = vunpack.c.l.s4 1983009808
    %v12184 = vunpack.c.0.s8 %v12183
    %v12185 = vlaneseq
    %v12186 = vshrl.u32 %v12185, 7
    %v12187 = vsub.s32 %v12184, %v12186
    %v12188 = vrot.slane %v12174, %v12187
    %v12189 = vcombine.low %v11980, %v11988
    %v12190 = vcombine.high %v11980, %v11988
    %v12192 = vunpack.c.l.s4 1983009808
    %v12193 = vunpack.c.0.s8 %v12192
    %v12194 = vlaneseq
    %v12195 = vshrl.u32 %v12194, 7
    %v12196 = vsub.s32 %v12193, %v12195
    %v12197 = vrot.slane %v12189, %v12196
    %v12199 = vunpack.c.l.s4 1983009808
    %v12200 = vunpack.c.0.s8 %v12199
    %v12201 = vlaneseq
    %v12202 = vshrl.u32 %v12201, 7
    %v12203 = vsub.s32 %v12200, %v12202
    %v12204 = vrot.slane %v12190, %v12203
    %v12205 = vcombine.low %v12149, %v12165
    %v12206 = vcombine.high %v12149, %v12165
    %v12208 = vunpack.c.l.s4 1934713408
    %v12209 = vunpack.c.0.s8 %v12208
    %v12210 = vlaneseq
    %v12211 = vshrl.u32 %v12210, 7
    %v12212 = vsub.s32 %v12209, %v12211
    %v12213 = vrot.slane %v12205, %v12212
    %v12215 = vunpack.c.l.s4 1934713408
    %v12216 = vunpack.c.0.s8 %v12215
    %v12217 = vlaneseq
    %v12218 = vshrl.u32 %v12217, 7
    %v12219 = vsub.s32 %v12216, %v12218
    %v12220 = vrot.slane %v12206, %v12219
    %v12221 = vcombine.low %v12156, %v12172
    %v12222 = vcombine.high %v12156, %v12172
    %v12224 = vunpack.c.l.s4 1934713408
    %v12225 = vunpack.c.0.s8 %v12224
    %v12226 = vlaneseq
    %v12227 = vshrl.u32 %v12226, 7
    %v12228 = vsub.s32 %v12225, %v12227
    %v12229 = vrot.slane %v12221, %v12228
    %v12231 = vunpack.c.l.s4 1934713408
    %v12232 = vunpack.c.0.s8 %v12231
    %v12233 = vlaneseq
    %v12234 = vshrl.u32 %v12233, 7
    %v12235 = vsub.s32 %v12232, %v12234
    %v12236 = vrot.slane %v12222, %v12235
    %v12237 = vcombine.low %v12181, %v12197
    %v12238 = vcombine.high %v12181, %v12197
    %v12240 = vunpack.c.l.s4 1934713408
    %v12241 = vunpack.c.0.s8 %v12240
    %v12242 = vlaneseq
    %v12243 = vshrl.u32 %v12242, 7
    %v12244 = vsub.s32 %v12241, %v12243
    %v12245 = vrot.slane %v12237, %v12244
    %v12247 = vunpack.c.l.s4 1934713408
    %v12248 = vunpack.c.0.s8 %v12247
    %v12249 = vlaneseq
    %v12250 = vshrl.u32 %v12249, 7
    %v12251 = vsub.s32 %v12248, %v12250
    %v12252 = vrot.slane %v12238, %v12251
    %v12253 = vcombine.low %v12188, %v12204
    %v12254 = vcombine.high %v12188, %v12204
    %v12256 = vunpack.c.l.s4 1934713408
    %v12257 = vunpack.c.0.s8 %v12256
    %v12258 = vlaneseq
    %v12259 = vshrl.u32 %v12258, 7
    %v12260 = vsub.s32 %v12257, %v12259
    %v12261 = vrot.slane %v12253, %v12260
    %v12263 = vunpack.c.l.s4 1934713408
    %v12264 = vunpack.c.0.s8 %v12263
    %v12265 = vlaneseq
    %v12266 = vshrl.u32 %v12265, 7
    %v12267 = vsub.s32 %v12264, %v12266
    %v12268 = vrot.slane %v12254, %v12267
    %v12269 = vcombine.low %v12213, %v12245
    %v12270 = vcombine.high %v12213, %v12245
    %v12271 = vcombine.low %v12220, %v12252
    %v12272 = vcombine.high %v12220, %v12252
    %v12273 = vcombine.low %v12229, %v12261
    %v12274 = vcombine.high %v12229, %v12261
    %v12275 = vcombine.low %v12236, %v12268
    %v12276 = vcombine.high %v12236, %v12268
    %12278 = vrot.lane.b32.xlu0 %v12134, 16
    %v12279 = vpop.permute.xlu0 %12278
    %12282 = vrot.lane.b32.xlu0 %v12135, 32
    %v12283 = vpop.permute.xlu0 %12282
    %12286 = vrot.lane.b32.xlu0 %v12136, 48
    %v12287 = vpop.permute.xlu0 %12286
    %12290 = vrot.lane.b32.xlu0 %v12137, 64
    %v12291 = vpop.permute.xlu0 %12290
    %12294 = vrot.lane.b32.xlu0 %v12138, 80
    %v12295 = vpop.permute.xlu0 %12294
    %12298 = vrot.lane.b32.xlu0 %v12139, 96
    %v12299 = vpop.permute.xlu0 %12298
    %12302 = vrot.lane.b32.xlu0 %v12140, 112
    %v12303 = vpop.permute.xlu0 %12302
    %12306 = vrot.lane.b32.xlu0 %v12270, 16
    %v12307 = vpop.permute.xlu0 %12306
    %12310 = vrot.lane.b32.xlu0 %v12271, 32
    %v12311 = vpop.permute.xlu0 %12310
    %12314 = vrot.lane.b32.xlu0 %v12272, 48
    %v12315 = vpop.permute.xlu0 %12314
    %12318 = vrot.lane.b32.xlu0 %v12273, 64
    %v12319 = vpop.permute.xlu0 %12318
    %12322 = vrot.lane.b32.xlu0 %v12274, 80
    %v12323 = vpop.permute.xlu0 %12322
    %12326 = vrot.lane.b32.xlu0 %v12275, 96
    %v12327 = vpop.permute.xlu0 %12326
    %12330 = vrot.lane.b32.xlu0 %v12276, 112
    %v12331 = vpop.permute.xlu0 %12330
    %v12333 = vsel %vm372, %v12133, %v12279
    %v12334 = vsel %vm374, %v12333, %v12283
    %v12335 = vsel %vm376, %v12334, %v12287
    %v12336 = vsel %vm378, %v12335, %v12291
    %v12337 = vsel %vm380, %v12336, %v12295
    %v12338 = vsel %vm382, %v12337, %v12299
    %v12339 = vsel %vm384, %v12338, %v12303
    %v12340 = vsel %vm372, %v12269, %v12307
    %v12341 = vsel %vm374, %v12340, %v12311
    %v12342 = vsel %vm376, %v12341, %v12315
    %v12343 = vsel %vm378, %v12342, %v12319
    %v12344 = vsel %vm380, %v12343, %v12323
    %v12345 = vsel %vm382, %v12344, %v12327
    %v12346 = vsel %vm384, %v12345, %v12331
    %12347 = vst [vmem:[#allocation5 + $0x100] sm:$0xff] %v12339
    %12348 = vst [vmem:[#allocation5 + $0x108] sm:$0xff] %v12346
    %v12349 = vld [vmem:[%s5508 + $0x2] sm:$0xff]
    %v12350 = vld [vmem:[%s5508 + $0xa] sm:$0xff]
    %v12351 = vld [vmem:[%s5508 + $0x1a] sm:$0xff]
    %v12352 = vld [vmem:[%s5508 + $0x22] sm:$0xff]
    %v12353 = vld [vmem:[%s5508 + $0x32] sm:$0xff]
    %v12354 = vld [vmem:[%s5508 + $0x3a] sm:$0xff]
    %v12355 = vld [vmem:[%s5508 + $0x4a] sm:$0xff]
    %v12356 = vld [vmem:[%s5508 + $0x52] sm:$0xff]
    %v12357 = vld [vmem:[%s5508 + $0x62] sm:$0xff]
    %v12358 = vld [vmem:[%s5508 + $0x6a] sm:$0xff]
    %v12359 = vld [vmem:[%s5508 + $0x7a] sm:$0xff]
    %v12360 = vld [vmem:[%s5508 + $0x82] sm:$0xff]
    %v12361 = vld [vmem:[%s5508 + $0x92] sm:$0xff]
    %v12362 = vld [vmem:[%s5508 + $0x9a] sm:$0xff]
    %v12363 = vld [vmem:[%s5508 + $0xaa] sm:$0xff]
    %v12364 = vld [vmem:[%s5508 + $0xb2] sm:$0xff]
    %12381 = vrot.lane.b32.xlu0 %v12349, 126
    %v12382 = vpop.permute.xlu0 %12381
    %12383 = vrot.lane.b32.xlu0 %v12350, 126
    %v12384 = vpop.permute.xlu0 %12383
    %12385 = vrot.lane.b32.xlu0 %v12351, 126
    %v12386 = vpop.permute.xlu0 %12385
    %12387 = vrot.lane.b32.xlu0 %v12352, 126
    %v12388 = vpop.permute.xlu0 %12387
    %12389 = vrot.lane.b32.xlu0 %v12353, 126
    %v12390 = vpop.permute.xlu0 %12389
    %12391 = vrot.lane.b32.xlu0 %v12354, 126
    %v12392 = vpop.permute.xlu0 %12391
    %12393 = vrot.lane.b32.xlu0 %v12355, 126
    %v12394 = vpop.permute.xlu0 %12393
    %12395 = vrot.lane.b32.xlu0 %v12356, 126
    %v12396 = vpop.permute.xlu0 %12395
    %12397 = vrot.lane.b32.xlu0 %v12357, 126
    %v12398 = vpop.permute.xlu0 %12397
    %12399 = vrot.lane.b32.xlu0 %v12358, 126
    %v12400 = vpop.permute.xlu0 %12399
    %12401 = vrot.lane.b32.xlu0 %v12359, 126
    %v12402 = vpop.permute.xlu0 %12401
    %12403 = vrot.lane.b32.xlu0 %v12360, 126
    %v12404 = vpop.permute.xlu0 %12403
    %12405 = vrot.lane.b32.xlu0 %v12361, 126
    %v12406 = vpop.permute.xlu0 %12405
    %12407 = vrot.lane.b32.xlu0 %v12362, 126
    %v12408 = vpop.permute.xlu0 %12407
    %12409 = vrot.lane.b32.xlu0 %v12363, 126
    %v12410 = vpop.permute.xlu0 %12409
    %12411 = vrot.lane.b32.xlu0 %v12364, 126
    %v12412 = vpop.permute.xlu0 %12411
    %v12429 = vcombine.low %v12382, %v12390
    %v12430 = vcombine.high %v12382, %v12390
    %v12432 = vunpack.c.l.s4 1983009808
    %v12433 = vunpack.c.0.s8 %v12432
    %v12434 = vlaneseq
    %v12435 = vshrl.u32 %v12434, 7
    %v12436 = vsub.s32 %v12433, %v12435
    %v12437 = vrot.slane %v12429, %v12436
    %v12439 = vunpack.c.l.s4 1983009808
    %v12440 = vunpack.c.0.s8 %v12439
    %v12441 = vlaneseq
    %v12442 = vshrl.u32 %v12441, 7
    %v12443 = vsub.s32 %v12440, %v12442
    %v12444 = vrot.slane %v12430, %v12443
    %v12445 = vcombine.low %v12386, %v12394
    %v12446 = vcombine.high %v12386, %v12394
    %v12448 = vunpack.c.l.s4 1983009808
    %v12449 = vunpack.c.0.s8 %v12448
    %v12450 = vlaneseq
    %v12451 = vshrl.u32 %v12450, 7
    %v12452 = vsub.s32 %v12449, %v12451
    %v12453 = vrot.slane %v12445, %v12452
    %v12455 = vunpack.c.l.s4 1983009808
    %v12456 = vunpack.c.0.s8 %v12455
    %v12457 = vlaneseq
    %v12458 = vshrl.u32 %v12457, 7
    %v12459 = vsub.s32 %v12456, %v12458
    %v12460 = vrot.slane %v12446, %v12459
    %v12461 = vcombine.low %v12398, %v12406
    %v12462 = vcombine.high %v12398, %v12406
    %v12464 = vunpack.c.l.s4 1983009808
    %v12465 = vunpack.c.0.s8 %v12464
    %v12466 = vlaneseq
    %v12467 = vshrl.u32 %v12466, 7
    %v12468 = vsub.s32 %v12465, %v12467
    %v12469 = vrot.slane %v12461, %v12468
    %v12471 = vunpack.c.l.s4 1983009808
    %v12472 = vunpack.c.0.s8 %v12471
    %v12473 = vlaneseq
    %v12474 = vshrl.u32 %v12473, 7
    %v12475 = vsub.s32 %v12472, %v12474
    %v12476 = vrot.slane %v12462, %v12475
    %v12477 = vcombine.low %v12402, %v12410
    %v12478 = vcombine.high %v12402, %v12410
    %v12480 = vunpack.c.l.s4 1983009808
    %v12481 = vunpack.c.0.s8 %v12480
    %v12482 = vlaneseq
    %v12483 = vshrl.u32 %v12482, 7
    %v12484 = vsub.s32 %v12481, %v12483
    %v12485 = vrot.slane %v12477, %v12484
    %v12487 = vunpack.c.l.s4 1983009808
    %v12488 = vunpack.c.0.s8 %v12487
    %v12489 = vlaneseq
    %v12490 = vshrl.u32 %v12489, 7
    %v12491 = vsub.s32 %v12488, %v12490
    %v12492 = vrot.slane %v12478, %v12491
    %v12493 = vcombine.low %v12437, %v12453
    %v12494 = vcombine.high %v12437, %v12453
    %v12496 = vunpack.c.l.s4 1934713408
    %v12497 = vunpack.c.0.s8 %v12496
    %v12498 = vlaneseq
    %v12499 = vshrl.u32 %v12498, 7
    %v12500 = vsub.s32 %v12497, %v12499
    %v12501 = vrot.slane %v12493, %v12500
    %v12503 = vunpack.c.l.s4 1934713408
    %v12504 = vunpack.c.0.s8 %v12503
    %v12505 = vlaneseq
    %v12506 = vshrl.u32 %v12505, 7
    %v12507 = vsub.s32 %v12504, %v12506
    %v12508 = vrot.slane %v12494, %v12507
    %v12509 = vcombine.low %v12444, %v12460
    %v12510 = vcombine.high %v12444, %v12460
    %v12512 = vunpack.c.l.s4 1934713408
    %v12513 = vunpack.c.0.s8 %v12512
    %v12514 = vlaneseq
    %v12515 = vshrl.u32 %v12514, 7
    %v12516 = vsub.s32 %v12513, %v12515
    %v12517 = vrot.slane %v12509, %v12516
    %v12519 = vunpack.c.l.s4 1934713408
    %v12520 = vunpack.c.0.s8 %v12519
    %v12521 = vlaneseq
    %v12522 = vshrl.u32 %v12521, 7
    %v12523 = vsub.s32 %v12520, %v12522
    %v12524 = vrot.slane %v12510, %v12523
    %v12525 = vcombine.low %v12469, %v12485
    %v12526 = vcombine.high %v12469, %v12485
    %v12528 = vunpack.c.l.s4 1934713408
    %v12529 = vunpack.c.0.s8 %v12528
    %v12530 = vlaneseq
    %v12531 = vshrl.u32 %v12530, 7
    %v12532 = vsub.s32 %v12529, %v12531
    %v12533 = vrot.slane %v12525, %v12532
    %v12535 = vunpack.c.l.s4 1934713408
    %v12536 = vunpack.c.0.s8 %v12535
    %v12537 = vlaneseq
    %v12538 = vshrl.u32 %v12537, 7
    %v12539 = vsub.s32 %v12536, %v12538
    %v12540 = vrot.slane %v12526, %v12539
    %v12541 = vcombine.low %v12476, %v12492
    %v12542 = vcombine.high %v12476, %v12492
    %v12544 = vunpack.c.l.s4 1934713408
    %v12545 = vunpack.c.0.s8 %v12544
    %v12546 = vlaneseq
    %v12547 = vshrl.u32 %v12546, 7
    %v12548 = vsub.s32 %v12545, %v12547
    %v12549 = vrot.slane %v12541, %v12548
    %v12551 = vunpack.c.l.s4 1934713408
    %v12552 = vunpack.c.0.s8 %v12551
    %v12553 = vlaneseq
    %v12554 = vshrl.u32 %v12553, 7
    %v12555 = vsub.s32 %v12552, %v12554
    %v12556 = vrot.slane %v12542, %v12555
    %v12557 = vcombine.low %v12501, %v12533
    %v12558 = vcombine.high %v12501, %v12533
    %v12559 = vcombine.low %v12508, %v12540
    %v12560 = vcombine.high %v12508, %v12540
    %v12561 = vcombine.low %v12517, %v12549
    %v12562 = vcombine.high %v12517, %v12549
    %v12563 = vcombine.low %v12524, %v12556
    %v12564 = vcombine.high %v12524, %v12556
    %v12565 = vcombine.low %v12384, %v12392
    %v12566 = vcombine.high %v12384, %v12392
    %v12568 = vunpack.c.l.s4 1983009808
    %v12569 = vunpack.c.0.s8 %v12568
    %v12570 = vlaneseq
    %v12571 = vshrl.u32 %v12570, 7
    %v12572 = vsub.s32 %v12569, %v12571
    %v12573 = vrot.slane %v12565, %v12572
    %v12575 = vunpack.c.l.s4 1983009808
    %v12576 = vunpack.c.0.s8 %v12575
    %v12577 = vlaneseq
    %v12578 = vshrl.u32 %v12577, 7
    %v12579 = vsub.s32 %v12576, %v12578
    %v12580 = vrot.slane %v12566, %v12579
    %v12581 = vcombine.low %v12388, %v12396
    %v12582 = vcombine.high %v12388, %v12396
    %v12584 = vunpack.c.l.s4 1983009808
    %v12585 = vunpack.c.0.s8 %v12584
    %v12586 = vlaneseq
    %v12587 = vshrl.u32 %v12586, 7
    %v12588 = vsub.s32 %v12585, %v12587
    %v12589 = vrot.slane %v12581, %v12588
    %v12591 = vunpack.c.l.s4 1983009808
    %v12592 = vunpack.c.0.s8 %v12591
    %v12593 = vlaneseq
    %v12594 = vshrl.u32 %v12593, 7
    %v12595 = vsub.s32 %v12592, %v12594
    %v12596 = vrot.slane %v12582, %v12595
    %v12597 = vcombine.low %v12400, %v12408
    %v12598 = vcombine.high %v12400, %v12408
    %v12600 = vunpack.c.l.s4 1983009808
    %v12601 = vunpack.c.0.s8 %v12600
    %v12602 = vlaneseq
    %v12603 = vshrl.u32 %v12602, 7
    %v12604 = vsub.s32 %v12601, %v12603
    %v12605 = vrot.slane %v12597, %v12604
    %v12607 = vunpack.c.l.s4 1983009808
    %v12608 = vunpack.c.0.s8 %v12607
    %v12609 = vlaneseq
    %v12610 = vshrl.u32 %v12609, 7
    %v12611 = vsub.s32 %v12608, %v12610
    %v12612 = vrot.slane %v12598, %v12611
    %v12613 = vcombine.low %v12404, %v12412
    %v12614 = vcombine.high %v12404, %v12412
    %v12616 = vunpack.c.l.s4 1983009808
    %v12617 = vunpack.c.0.s8 %v12616
    %v12618 = vlaneseq
    %v12619 = vshrl.u32 %v12618, 7
    %v12620 = vsub.s32 %v12617, %v12619
    %v12621 = vrot.slane %v12613, %v12620
    %v12623 = vunpack.c.l.s4 1983009808
    %v12624 = vunpack.c.0.s8 %v12623
    %v12625 = vlaneseq
    %v12626 = vshrl.u32 %v12625, 7
    %v12627 = vsub.s32 %v12624, %v12626
    %v12628 = vrot.slane %v12614, %v12627
    %v12629 = vcombine.low %v12573, %v12589
    %v12630 = vcombine.high %v12573, %v12589
    %v12632 = vunpack.c.l.s4 1934713408
    %v12633 = vunpack.c.0.s8 %v12632
    %v12634 = vlaneseq
    %v12635 = vshrl.u32 %v12634, 7
    %v12636 = vsub.s32 %v12633, %v12635
    %v12637 = vrot.slane %v12629, %v12636
    %v12639 = vunpack.c.l.s4 1934713408
    %v12640 = vunpack.c.0.s8 %v12639
    %v12641 = vlaneseq
    %v12642 = vshrl.u32 %v12641, 7
    %v12643 = vsub.s32 %v12640, %v12642
    %v12644 = vrot.slane %v12630, %v12643
    %v12645 = vcombine.low %v12580, %v12596
    %v12646 = vcombine.high %v12580, %v12596
    %v12648 = vunpack.c.l.s4 1934713408
    %v12649 = vunpack.c.0.s8 %v12648
    %v12650 = vlaneseq
    %v12651 = vshrl.u32 %v12650, 7
    %v12652 = vsub.s32 %v12649, %v12651
    %v12653 = vrot.slane %v12645, %v12652
    %v12655 = vunpack.c.l.s4 1934713408
    %v12656 = vunpack.c.0.s8 %v12655
    %v12657 = vlaneseq
    %v12658 = vshrl.u32 %v12657, 7
    %v12659 = vsub.s32 %v12656, %v12658
    %v12660 = vrot.slane %v12646, %v12659
    %v12661 = vcombine.low %v12605, %v12621
    %v12662 = vcombine.high %v12605, %v12621
    %v12664 = vunpack.c.l.s4 1934713408
    %v12665 = vunpack.c.0.s8 %v12664
    %v12666 = vlaneseq
    %v12667 = vshrl.u32 %v12666, 7
    %v12668 = vsub.s32 %v12665, %v12667
    %v12669 = vrot.slane %v12661, %v12668
    %v12671 = vunpack.c.l.s4 1934713408
    %v12672 = vunpack.c.0.s8 %v12671
    %v12673 = vlaneseq
    %v12674 = vshrl.u32 %v12673, 7
    %v12675 = vsub.s32 %v12672, %v12674
    %v12676 = vrot.slane %v12662, %v12675
    %v12677 = vcombine.low %v12612, %v12628
    %v12678 = vcombine.high %v12612, %v12628
    %v12680 = vunpack.c.l.s4 1934713408
    %v12681 = vunpack.c.0.s8 %v12680
    %v12682 = vlaneseq
    %v12683 = vshrl.u32 %v12682, 7
    %v12684 = vsub.s32 %v12681, %v12683
    %v12685 = vrot.slane %v12677, %v12684
    %v12687 = vunpack.c.l.s4 1934713408
    %v12688 = vunpack.c.0.s8 %v12687
    %v12689 = vlaneseq
    %v12690 = vshrl.u32 %v12689, 7
    %v12691 = vsub.s32 %v12688, %v12690
    %v12692 = vrot.slane %v12678, %v12691
    %v12693 = vcombine.low %v12637, %v12669
    %v12694 = vcombine.high %v12637, %v12669
    %v12695 = vcombine.low %v12644, %v12676
    %v12696 = vcombine.high %v12644, %v12676
    %v12697 = vcombine.low %v12653, %v12685
    %v12698 = vcombine.high %v12653, %v12685
    %v12699 = vcombine.low %v12660, %v12692
    %v12700 = vcombine.high %v12660, %v12692
    %12702 = vrot.lane.b32.xlu0 %v12558, 16
    %v12703 = vpop.permute.xlu0 %12702
    %12706 = vrot.lane.b32.xlu0 %v12559, 32
    %v12707 = vpop.permute.xlu0 %12706
    %12710 = vrot.lane.b32.xlu0 %v12560, 48
    %v12711 = vpop.permute.xlu0 %12710
    %12714 = vrot.lane.b32.xlu0 %v12561, 64
    %v12715 = vpop.permute.xlu0 %12714
    %12718 = vrot.lane.b32.xlu0 %v12562, 80
    %v12719 = vpop.permute.xlu0 %12718
    %12722 = vrot.lane.b32.xlu0 %v12563, 96
    %v12723 = vpop.permute.xlu0 %12722
    %12726 = vrot.lane.b32.xlu0 %v12564, 112
    %v12727 = vpop.permute.xlu0 %12726
    %12730 = vrot.lane.b32.xlu0 %v12694, 16
    %v12731 = vpop.permute.xlu0 %12730
    %12734 = vrot.lane.b32.xlu0 %v12695, 32
    %v12735 = vpop.permute.xlu0 %12734
    %12738 = vrot.lane.b32.xlu0 %v12696, 48
    %v12739 = vpop.permute.xlu0 %12738
    %12742 = vrot.lane.b32.xlu0 %v12697, 64
    %v12743 = vpop.permute.xlu0 %12742
    %12746 = vrot.lane.b32.xlu0 %v12698, 80
    %v12747 = vpop.permute.xlu0 %12746
    %12750 = vrot.lane.b32.xlu0 %v12699, 96
    %v12751 = vpop.permute.xlu0 %12750
    %12754 = vrot.lane.b32.xlu0 %v12700, 112
    %v12755 = vpop.permute.xlu0 %12754
    %v12757 = vsel %vm372, %v12557, %v12703
    %v12758 = vsel %vm374, %v12757, %v12707
    %v12759 = vsel %vm376, %v12758, %v12711
    %v12760 = vsel %vm378, %v12759, %v12715
    %v12761 = vsel %vm380, %v12760, %v12719
    %v12762 = vsel %vm382, %v12761, %v12723
    %v12763 = vsel %vm384, %v12762, %v12727
    %v12764 = vsel %vm372, %v12693, %v12731
    %v12765 = vsel %vm374, %v12764, %v12735
    %v12766 = vsel %vm376, %v12765, %v12739
    %v12767 = vsel %vm378, %v12766, %v12743
    %v12768 = vsel %vm380, %v12767, %v12747
    %v12769 = vsel %vm382, %v12768, %v12751
    %v12770 = vsel %vm384, %v12769, %v12755
    %12771 = vst [vmem:[#allocation5 + $0x110] sm:$0xff] %v12763
    %12772 = vst [vmem:[#allocation5 + $0x118] sm:$0xff] %v12770
    %v12773 = vld [vmem:[%s2] sm:$0xf]
    %v12774 = vld [vmem:[#allocation5] sm:$0xff]
    %v12775 = vld [vmem:[#allocation5 + $0x8] sm:$0xff]
    %v12776 = vld [vmem:[#allocation5 + $0x10] sm:$0xff]
    %v12777 = vld [vmem:[#allocation5 + $0x18] sm:$0xff]
    %v12778 = vld [vmem:[#allocation5 + $0x20] sm:$0xff]
    %v12779 = vld [vmem:[#allocation5 + $0x28] sm:$0xff]
    %v12780 = vld [vmem:[#allocation5 + $0x30] sm:$0xff]
    %v12781 = vld [vmem:[#allocation5 + $0x38] sm:$0xff]
    %v12782 = vld [vmem:[#allocation5 + $0x40] sm:$0xff]
    %v12783 = vld [vmem:[#allocation5 + $0x48] sm:$0xff]
    %v12784 = vld [vmem:[#allocation5 + $0x50] sm:$0xff]
    %v12785 = vld [vmem:[#allocation5 + $0x58] sm:$0xff]
    %v12786 = vld [vmem:[#allocation5 + $0x60] sm:$0xff]
    %v12787 = vld [vmem:[#allocation5 + $0x68] sm:$0xff]
    %v12788 = vld [vmem:[#allocation5 + $0x70] sm:$0xff]
    %v12789 = vld [vmem:[#allocation5 + $0x78] sm:$0xff]
    %v12790 = vld [vmem:[#allocation5 + $0x80] sm:$0xff]
    %v12791 = vld [vmem:[#allocation5 + $0x88] sm:$0xff]
    %v12792 = vld [vmem:[#allocation5 + $0x90] sm:$0xff]
    %v12793 = vld [vmem:[#allocation5 + $0x98] sm:$0xff]
    %v12794 = vld [vmem:[#allocation5 + $0xa0] sm:$0xff]
    %v12795 = vld [vmem:[#allocation5 + $0xa8] sm:$0xff]
    %v12796 = vld [vmem:[#allocation5 + $0xb0] sm:$0xff]
    %v12797 = vld [vmem:[#allocation5 + $0xb8] sm:$0xff]
    %v12798 = vld [vmem:[#allocation5 + $0xc0] sm:$0xff]
    %v12799 = vld [vmem:[#allocation5 + $0xc8] sm:$0xff]
    %v12800 = vld [vmem:[#allocation5 + $0xd0] sm:$0xff]
    %v12801 = vld [vmem:[#allocation5 + $0xd8] sm:$0xff]
    %v12802 = vld [vmem:[#allocation5 + $0xe0] sm:$0xff]
    %v12803 = vld [vmem:[#allocation5 + $0xe8] sm:$0xff]
    %v12804 = vld [vmem:[#allocation5 + $0xf0] sm:$0xff]
    %v12805 = vld [vmem:[#allocation5 + $0xf8] sm:$0xff]
    %v12806 = vld [vmem:[#allocation5 + $0x100] sm:$0xff]
    %v12807 = vld [vmem:[#allocation5 + $0x108] sm:$0xff]
    %v12808 = vld [vmem:[#allocation5 + $0x110] sm:$0xff]
    %v12809 = vld [vmem:[#allocation5 + $0x118] sm:$0xff]
    %v12810 = vpack.c.bf16 %v12778, %v12774
    %v12811 = vpack.c.bf16 %v12779, %v12775
    %v12812 = vpack.c.bf16 %v12780, %v12776
    %v12813 = vpack.c.bf16 %v12781, %v12777
    %v12814 = vpack.c.bf16 %v12786, %v12782
    %v12815 = vpack.c.bf16 %v12787, %v12783
    %v12816 = vpack.c.bf16 %v12788, %v12784
    %v12817 = vpack.c.bf16 %v12789, %v12785
    %v12818 = vpack.c.bf16 %v12794, %v12790
    %v12819 = vpack.c.bf16 %v12795, %v12791
    %v12820 = vpack.c.bf16 %v12796, %v12792
    %v12821 = vpack.c.bf16 %v12797, %v12793
    %v12822 = vpack.c.bf16 %v12802, %v12798
    %v12823 = vpack.c.bf16 %v12803, %v12799
    %v12824 = vpack.c.bf16 %v12804, %v12800
    %v12825 = vpack.c.bf16 %v12805, %v12801
    %v12826 = vpack.c.bf16 %v12806, %v12806
    %v12827 = vpack.c.bf16 %v12807, %v12807
    %v12828 = vpack.c.bf16 %v12808, %v12808
    %v12829 = vpack.c.bf16 %v12809, %v12809
    %vm12830 = vcmask 588800
    %v12832 = vsel %vm12830, %v12773, 0
    %vm12834 = vcmask 1043456
    %v12836 = vsel %vm12834, %v12826, 0
    %v12839 = vsel %vm12834, %v12827, 0
    %v12842 = vsel %vm12834, %v12828, 0
    %v12845 = vsel %vm12834, %v12829, 0
    %12847 = vmatprep.subr.bf16.mxu0 %v12811
    %12848 = vmatpush1.bf16.msra.mxu0 %v12810
    %12849 = vmatprep.subr.bf16.mxu0 %v12815
    %12850 = vmatpush1.bf16.msra.mxu0 %v12814
    %12851 = vmatprep.subr.bf16.mxu0 %v12819
    %12852 = vmatpush1.bf16.msra.mxu0 %v12818
    %12853 = vmatprep.subr.bf16.mxu0 %v12823
    %12854 = vmatpush1.bf16.msra.mxu0 %v12822
    %12855 = vmatprep.subr.bf16.mxu0 %v12839
    %12856 = vmatpush1.bf16.msra.mxu0 %v12836
    %12857 = vmatprep.subr.bf16.mxu0 0
    %12858 = vmatpush1.bf16.msra.mxu0 0
    %12859 = vmatprep.subr.bf16.mxu0 0
    %12860 = vmatpush1.bf16.msra.mxu0 0
    %12861 = vmatprep.subr.bf16.mxu0 0
    %12862 = vmatpush1.bf16.msra.mxu0 0
    %12863 = vmatprep.subr.bf16.mxu0 0
    %12864 = vmatpush1.bf16.msra.mxu0 0
    %12865 = vmatprep.subr.bf16.mxu0 0
    %12866 = vmatpush1.bf16.msra.mxu0 0
    %12867 = vmatprep.subr.bf16.mxu0 0
    %12868 = vmatpush1.bf16.msra.mxu0 0
    %12869 = vmatprep.subr.bf16.mxu0 0
    %12870 = vmatpush1.bf16.msra.mxu0 0
    %12871 = vmatprep.subr.bf16.mxu0 0
    %12872 = vmatpush1.bf16.msra.mxu0 0
    %12873 = vmatprep.subr.bf16.mxu0 0
    %12874 = vmatpush1.bf16.msra.mxu0 0
    %12875 = vmatprep.subr.bf16.mxu0 0
    %12876 = vmatpush1.bf16.msra.mxu0 0
    %12877 = vmatprep.subr.bf16.mxu0 0
    %12878 = vmatpush1.bf16.msra.mxu0 0
    %12879 = vmatprep.mubr.bf16.mxu0 0
    %12880 = vmatmul.mubr.bf16.gmra.mrb[0].mxu0 %v12832
    %v12881 = vpop.f32.mrb[0].mxu0
    %v12882 = vadd.f32 0.0, %v12881
    %v12883 = vpop.f32.mrb[0].mxu0
    %v12884 = vadd.f32 0.0, %v12883
    %v12885 = vpop.f32.mrb[0].mxu0
    %v12886 = vpop.f32.mrb[0].mxu0
    %12887 = vdwg.mxu0
    %12888 = vmatprep.subr.bf16.mxu0 %v12813
    %12889 = vmatpush1.bf16.msra.mxu0 %v12812
    %12890 = vmatprep.subr.bf16.mxu0 %v12817
    %12891 = vmatpush1.bf16.msra.mxu0 %v12816
    %12892 = vmatprep.subr.bf16.mxu0 %v12821
    %12893 = vmatpush1.bf16.msra.mxu0 %v12820
    %12894 = vmatprep.subr.bf16.mxu0 %v12825
    %12895 = vmatpush1.bf16.msra.mxu0 %v12824
    %12896 = vmatprep.subr.bf16.mxu0 %v12845
    %12897 = vmatpush1.bf16.msra.mxu0 %v12842
    %12898 = vmatprep.subr.bf16.mxu0 0
    %12899 = vmatpush1.bf16.msra.mxu0 0
    %12900 = vmatprep.subr.bf16.mxu0 0
    %12901 = vmatpush1.bf16.msra.mxu0 0
    %12902 = vmatprep.subr.bf16.mxu0 0
    %12903 = vmatpush1.bf16.msra.mxu0 0
    %12904 = vmatprep.subr.bf16.mxu0 0
    %12905 = vmatpush1.bf16.msra.mxu0 0
    %12906 = vmatprep.subr.bf16.mxu0 0
    %12907 = vmatpush1.bf16.msra.mxu0 0
    %12908 = vmatprep.subr.bf16.mxu0 0
    %12909 = vmatpush1.bf16.msra.mxu0 0
    %12910 = vmatprep.subr.bf16.mxu0 0
    %12911 = vmatpush1.bf16.msra.mxu0 0
    %12912 = vmatprep.subr.bf16.mxu0 0
    %12913 = vmatpush1.bf16.msra.mxu0 0
    %12914 = vmatprep.subr.bf16.mxu0 0
    %12915 = vmatpush1.bf16.msra.mxu0 0
    %12916 = vmatprep.subr.bf16.mxu0 0
    %12917 = vmatpush1.bf16.msra.mxu0 0
    %12918 = vmatprep.subr.bf16.mxu0 0
    %12919 = vmatpush1.bf16.msra.mxu0 0
    %12920 = vmatprep.mubr.bf16.mxu0 0
    %12921 = vmatmul.mubr.bf16.gmra.mrb[0].mxu0 %v12832
    %v12922 = vpop.f32.mrb[0].mxu0
    %v12923 = vadd.f32 0.0, %v12922
    %v12924 = vpop.f32.mrb[0].mxu0
    %v12925 = vadd.f32 0.0, %v12924
    %v12926 = vpop.f32.mrb[0].mxu0
    %v12927 = vpop.f32.mrb[0].mxu0
    %12928 = vdwg.mxu0
    %v12929 = vld [vmem:[#allocation4 + $0x40] sm:$0xf]
    %v12930 = vld [vmem:[#allocation4 + $0x48] sm:$0xf]
    %v12931 = vld [vmem:[#allocation4 + $0x50] sm:$0xf]
    %v12932 = vld [vmem:[#allocation4 + $0x58] sm:$0xf]
    %v12933 = vld [vmem:[%s7] sm:$0xf]
    %v12934 = vpack.c.bf16 %v12929, %v12929
    %v12935 = vpack.c.bf16 %v12930, %v12930
    %v12936 = vpack.c.bf16 %v12931, %v12931
    %v12937 = vpack.c.bf16 %v12932, %v12932
    %v12938 = vld [vmem:[%s8] sm:$0xff]
    %12940 = vset.pattern.permute.xlu0 0
    %12941 = vperm.xlu0 %12940, %v12938
    %v12942 = vpop.permute.xlu0 %12941
    %vm12944 = vcmask 31744
    %v12946 = vsel %vm12944, %v12933, 0
    %v12949 = vsel %vm4536, %v12934, 0
    %v12952 = vsel %vm4536, %v12935, 0
    %v12955 = vsel %vm4536, %v12936, 0
    %v12958 = vsel %vm4536, %v12937, 0
    %12960 = vmatprep.subr.bf16.mxu0 %v12952
    %12961 = vmatpush1.bf16.msra.mxu0 %v12949
    %12962 = vmatprep.subr.bf16.mxu0 0
    %12963 = vmatpush1.bf16.msra.mxu0 0
    %12964 = vmatprep.subr.bf16.mxu0 0
    %12965 = vmatpush1.bf16.msra.mxu0 0
    %12966 = vmatprep.subr.bf16.mxu0 0
    %12967 = vmatpush1.bf16.msra.mxu0 0
    %12968 = vmatprep.subr.bf16.mxu0 0
    %12969 = vmatpush1.bf16.msra.mxu0 0
    %12970 = vmatprep.subr.bf16.mxu0 0
    %12971 = vmatpush1.bf16.msra.mxu0 0
    %12972 = vmatprep.subr.bf16.mxu0 0
    %12973 = vmatpush1.bf16.msra.mxu0 0
    %12974 = vmatprep.subr.bf16.mxu0 0
    %12975 = vmatpush1.bf16.msra.mxu0 0
    %12976 = vmatprep.subr.bf16.mxu0 0
    %12977 = vmatpush1.bf16.msra.mxu0 0
    %12978 = vmatprep.subr.bf16.mxu0 0
    %12979 = vmatpush1.bf16.msra.mxu0 0
    %12980 = vmatprep.subr.bf16.mxu0 0
    %12981 = vmatpush1.bf16.msra.mxu0 0
    %12982 = vmatprep.subr.bf16.mxu0 0
    %12983 = vmatpush1.bf16.msra.mxu0 0
    %12984 = vmatprep.subr.bf16.mxu0 0
    %12985 = vmatpush1.bf16.msra.mxu0 0
    %12986 = vmatprep.subr.bf16.mxu0 0
    %12987 = vmatpush1.bf16.msra.mxu0 0
    %12988 = vmatprep.subr.bf16.mxu0 0
    %12989 = vmatpush1.bf16.msra.mxu0 0
    %12990 = vmatprep.subr.bf16.mxu0 0
    %12991 = vmatpush1.bf16.msra.mxu0 0
    %12992 = vmatprep.mubr.bf16.mxu0 0
    %12993 = vmatmul.mubr.bf16.gmra.mrb[0].mxu0 %v12946
    %v12994 = vpop.f32.mrb[0].mxu0
    %v12995 = vadd.f32 %v12942, %v12994
    %v12996 = vpop.f32.mrb[0].mxu0
    %v12997 = vadd.f32 %v12942, %v12996
    %v12998 = vpop.f32.mrb[0].mxu0
    %v12999 = vpop.f32.mrb[0].mxu0
    %13000 = vdwg.mxu0
    %13001 = vmatprep.subr.bf16.mxu0 %v12958
    %13002 = vmatpush1.bf16.msra.mxu0 %v12955
    %13003 = vmatprep.subr.bf16.mxu0 0
    %13004 = vmatpush1.bf16.msra.mxu0 0
    %13005 = vmatprep.subr.bf16.mxu0 0
    %13006 = vmatpush1.bf16.msra.mxu0 0
    %13007 = vmatprep.subr.bf16.mxu0 0
    %13008 = vmatpush1.bf16.msra.mxu0 0
    %13009 = vmatprep.subr.bf16.mxu0 0
    %13010 = vmatpush1.bf16.msra.mxu0 0
    %13011 = vmatprep.subr.bf16.mxu0 0
    %13012 = vmatpush1.bf16.msra.mxu0 0
    %13013 = vmatprep.subr.bf16.mxu0 0
    %13014 = vmatpush1.bf16.msra.mxu0 0
    %13015 = vmatprep.subr.bf16.mxu0 0
    %13016 = vmatpush1.bf16.msra.mxu0 0
    %13017 = vmatprep.subr.bf16.mxu0 0
    %13018 = vmatpush1.bf16.msra.mxu0 0
    %13019 = vmatprep.subr.bf16.mxu0 0
    %13020 = vmatpush1.bf16.msra.mxu0 0
    %13021 = vmatprep.subr.bf16.mxu0 0
    %13022 = vmatpush1.bf16.msra.mxu0 0
    %13023 = vmatprep.subr.bf16.mxu0 0
    %13024 = vmatpush1.bf16.msra.mxu0 0
    %13025 = vmatprep.subr.bf16.mxu0 0
    %13026 = vmatpush1.bf16.msra.mxu0 0
    %13027 = vmatprep.subr.bf16.mxu0 0
    %13028 = vmatpush1.bf16.msra.mxu0 0
    %13029 = vmatprep.subr.bf16.mxu0 0
    %13030 = vmatpush1.bf16.msra.mxu0 0
    %13031 = vmatprep.subr.bf16.mxu0 0
    %13032 = vmatpush1.bf16.msra.mxu0 0
    %13033 = vmatprep.mubr.bf16.mxu0 0
    %13034 = vmatmul.mubr.bf16.gmra.mrb[0].mxu0 %v12946
    %v13035 = vpop.f32.mrb[0].mxu0
    %v13036 = vadd.f32 %v12942, %v13035
    %v13037 = vpop.f32.mrb[0].mxu0
    %v13038 = vadd.f32 %v12942, %v13037
    %v13039 = vpop.f32.mrb[0].mxu0
    %v13040 = vpop.f32.mrb[0].mxu0
    %13041 = vdwg.mxu0
    %v13042 = vadd.f32 %v12882, %v12884
    %v13043 = vadd.f32 %v13042, %v12923
    %v13044 = vadd.f32 %v13043, %v12925
    %13045 = vadd.xlane.f32.xlu0 %v13044
    %v13046 = vpop.xlane.xlu0 %13045
    %v13047 = vmul.f32 %v13046, 0.001953125
    %v13048 = vmul.f32 %v12882, %v12882
    %v13049 = vmul.f32 %v12884, %v12884
    %v13050 = vmul.f32 %v12923, %v12923
    %v13051 = vmul.f32 %v12925, %v12925
    %v13052 = vadd.f32 %v13048, %v13049
    %v13053 = vadd.f32 %v13052, %v13050
    %v13054 = vadd.f32 %v13053, %v13051
    %13055 = vadd.xlane.f32.xlu0 %v13054
    %v13056 = vpop.xlane.xlu0 %13055
    %v13057 = vmul.f32 %v13056, 0.001953125
    %v13058 = vmul.f32 %v13047, %v13047
    %v13059 = vsub.f32 %v13057, %v13058
    %v13060 = vmax.f32 %v13059, 0.0
    %v13061 = vsub.f32 %v12882, %v13047
    %v13062 = vsub.f32 %v12884, %v13047
    %v13063 = vsub.f32 %v12923, %v13047
    %v13064 = vsub.f32 %v12925, %v13047
    %v13065 = vadd.f32 %v13060, 1e-05
    %v13066 = vrsqrt.pop %v13065
    %v13067 = vmul.f32 %v13061, %v13066
    %v13068 = vmul.f32 %v13062, %v13066
    %v13069 = vmul.f32 %v13063, %v13066
    %v13070 = vmul.f32 %v13064, %v13066
    %v13071 = vld [vmem:[%s5] sm:$0xff]
    %13073 = vset.pattern.permute.xlu0 0
    %13074 = vperm.xlu0 %13073, %v13071
    %v13075 = vpop.permute.xlu0 %13074
    %v13077 = vmul.f32 %v13067, %v13075
    %v13078 = vmul.f32 %v13068, %v13075
    %v13079 = vmul.f32 %v13069, %v13075
    %v13080 = vmul.f32 %v13070, %v13075
    %v13081 = vld [vmem:[%s6] sm:$0xff]
    %13083 = vset.pattern.permute.xlu0 0
    %13084 = vperm.xlu0 %13083, %v13081
    %v13085 = vpop.permute.xlu0 %13084
    %v13087 = vadd.f32 %v13077, %v13085
    %v13088 = vadd.f32 %v13078, %v13085
    %v13089 = vadd.f32 %v13079, %v13085
    %v13090 = vadd.f32 %v13080, %v13085
    %v13091 = vadd.f32 %v13087, %v12995
    %v13092 = vadd.f32 %v13088, %v12997
    %v13093 = vadd.f32 %v13089, %v13036
    %v13094 = vadd.f32 %v13090, %v13038
    %v13095 = vmax.f32 %v13091, 0.0
    %v13096 = vmax.f32 %v13092, 0.0
    %v13097 = vmax.f32 %v13093, 0.0
    %v13098 = vmax.f32 %v13094, 0.0
    %13099 = vst [vmem:[#allocation9] sm:$0xff] %v13095
    %13100 = vst [vmem:[#allocation9 + $0x8] sm:$0xff] %v13096
    %s13101 = scalar_lea.vmem [#allocation9], 16
    %13102 = vst [vmem:[%s13101] sm:$0xff] %v13097
    %13103 = vst [vmem:[%s13101 + $0x8] sm:$0xff] %v13098
    // Predicated region
    $region42: #{tpu_custom_call.1} parent=1 // pred_check
      _
    $region43: #{tpu_custom_call.1} parent=1 // pred_check_branch
      %13105 = sbr.rel (0) target = $region45
    $region44: #{tpu_custom_call.1} parent=1 // pred_region
      %s13107 = ssub.s32 512, 512
      %13108 = vsyncadd [#allocation8], %s13107
      %s13109 = sshll.u32 [#allocation9], 4
      %s13110 = int_to_ptr.vmem [resolvable:$true] %s13109
      %13115 = dma.vmem_to_hbm [thread:$0]  %s13110, 512, %s9, [#allocation8], 256, 256, 16
    $region45: #{tpu_custom_call.1} parent=1 // pred_fallthru
      _
    // Predicated region
    $region46: #{tpu_custom_call.1} parent=1 // pred_check
      _
    $region47: #{tpu_custom_call.1} parent=1 // pred_check_branch
      %13117 = sbr.rel (0) target = $region49
    $region48: #{tpu_custom_call.1} parent=1 // pred_region
      %13118 = dma.done [#allocation8], 512
    $region49: #{tpu_custom_call.1} parent=1 // pred_fallthru
      _
    %13119 = vsyncpa [#allocation7], 1
    %13120 = vsyncpa [#allocation8], 1

</llo_original>
